<compile_context>
chip_gen: v7x
topology: tpu7x:2x2x1
jax: 0.10.0
libtpu: 0.0.40
codegen_flags: <defaults>
</compile_context>

<pallas_src>
import jax
import jax.numpy as jnp
from jax import lax
from jax.experimental import pallas as pl
from jax.experimental.pallas import tpu as pltpu


# ----------------------------------------------------------------------------
# Chip query: does this chip shard "parallel" grid axes across >1 TensorCore?
# ----------------------------------------------------------------------------
def _multi_tensorcore_chip():
    try:
        kind = jax.devices()[0].device_kind.lower()
    except Exception:
        return False
    # v7x has 2 TensorCores per chip; v4/v5p megacore also split parallel axes.
    return any(tag in kind for tag in ("v7", "7x", "v4", "v5p"))


_MULTI_TC = _multi_tensorcore_chip()


# ----------------------------------------------------------------------------
# Kernel 1: lane-dense patch-conv matmul   O(Co, M) = W(Co, K) @ Xt(K, M) + b
# ----------------------------------------------------------------------------
def _convmm_kernel(xt_ref, w_ref, b_ref, o_ref):
    acc = jnp.dot(w_ref[...], xt_ref[...], preferred_element_type=jnp.float32)
    o_ref[...] = (acc + b_ref[...]).astype(o_ref.dtype)


def _pick_tm(m, cap=4096, min_blocks=1):
    """Largest multiple of 128 dividing m, <= cap, giving >= min_blocks blocks.

    Lane-dense tiles (multiples of 128) stay close to the HBM roofline; the
    min_blocks clamp is only applied on multi-TensorCore chips so single-TC
    v5e/v6e don't pay a split overhead that only benefits v7x.  (Cap 4096 keeps
    the worst-case double-buffered footprint ~9 MiB, under every generation's
    default scoped-VMEM limit; raise cap + vmem_limit_bytes for big batches.)
    Falls back to a single full block for tiny / ragged m.
    """
    limit = min(cap, m if min_blocks <= 1 else max(128, m // min_blocks))
    best = 0
    t = 128
    while t <= limit:
        if m % t == 0:
            best = t
        t += 128
    return best if best else m


def conv1_matmul(xt, w, b):
    """xt: (K, M) bf16, w: (Co, K) bf16, b: (Co,) f32  ->  (Co, M) bf16."""
    k_dim, m = xt.shape
    co = w.shape[0]
    tm = _pick_tm(m, min_blocks=2 if _MULTI_TC else 1)
    b2 = b.reshape(co, 1).astype(jnp.float32)
    # w / b have constant index_maps, so the pipeline copies them into VMEM
    # only once (no per-step re-DMA).
    return pl.pallas_call(
        _convmm_kernel,
        out_shape=jax.ShapeDtypeStruct((co, m), jnp.bfloat16),
        grid_spec=pltpu.PrefetchScalarGridSpec(
            num_scalar_prefetch=0,
            grid=(m // tm,),
            in_specs=[
                pl.BlockSpec((k_dim, tm), lambda i: (0, i)),
                pl.BlockSpec((co, k_dim), lambda i: (0, 0)),
                pl.BlockSpec((co, 1), lambda i: (0, 0)),
            ],
            out_specs=pl.BlockSpec((co, tm), lambda i: (0, i)),
        ),
        compiler_params=pltpu.CompilerParams(
            dimension_semantics=("parallel",)
        ),
    )(xt, w, b2)


# ----------------------------------------------------------------------------
# Kernel 2: fused tail — conv2 (both branches) + folded conv3/gather/Linear
# ----------------------------------------------------------------------------
_K3 = 4                        # conv3 kernel/stride (both branches)
_HW2 = 16                      # conv2 output spatial extent (both branches)
_HW3 = _HW2 // _K3             # conv3 output spatial extent (4)
_M2 = _HW2 * _HW2              # conv2 output positions per sample (256)


def _tail_kernel(x1_ref, x2_ref, w21_ref, b21_ref, w22_ref, b22_ref,
                 u1_ref, u2_ref, c0_ref, o_ref):
    f32 = jnp.float32
    # conv2 of both branches for this sample: bf16 operands, f32 accumulation.
    a21 = jnp.dot(w21_ref[...], x1_ref[...],
                  preferred_element_type=f32) + b21_ref[...]       # (8, 256)
    a22 = jnp.dot(w22_ref[...], x2_ref[...],
                  preferred_element_type=f32) + b22_ref[...]       # (32, 256)
    # conv3 + patch gather + Linear(512,1) are affine (no activations in the
    # module), folded into the precomputed elementwise weights U1/U2 + c0.
    t1 = jnp.sum(u1_ref[...] * a21, axis=1, keepdims=True)         # (8, 1)
    t2 = jnp.sum(u2_ref[...] * a22, axis=1, keepdims=True)         # (32, 1)
    tot = (jnp.sum(t1, axis=0, keepdims=True)
           + jnp.sum(t2, axis=0, keepdims=True))                   # (1, 1)
    # (1,1) output block -> masked store; harmless at this size.
    o_ref[...] = tot + c0_ref[...]


def _fold_conv3_fc(w3, fw):
    """Fold conv3 (kernel==stride==4) + its slice of Linear(512,1) into a
    single elementwise weight U (C2, 256) over the conv2 output, so that per
    sample:  sum_{c3,p} fw[c3,p] * conv3(A2)[c3,p]  ==  sum(U * A2).

    w3: (16, C2, 4, 4) conv3 weight;  fw: (16, 16) fc-weight slice [c3, p].
    """
    fw3 = fw.reshape(16, _HW3, _HW3)                      # [c3, ho, wo]
    # u[c2, ho, dy, wo, dx] = sum_c3 fw[c3, ho, wo] * w3[c3, c2, dy, dx]
    u = jnp.einsum("chw,ckyx->khywx", fw3, w3)            # (C2, 4, 4, 4, 4)
    # flatten (ho,dy,wo,dx) row-major == h2*16 + w2 with h2=ho*4+dy, w2=wo*4+dx
    return u.reshape(w3.shape[1], _M2)


def fused_tail(x2t_1, x2t_2, params):
    """x2t_1: (64, n*256) bf16, x2t_2: (256, n*256) bf16  ->  (n, 1) f32."""
    n = x2t_1.shape[1] // _M2
    bf16, f32 = jnp.bfloat16, jnp.float32
    w21, b21 = params["n1c2"]
    w31, b31 = params["n1c3"]
    w22, b22 = params["n2c2"]
    w32, b32 = params["n2c3"]
    wfc, bfc = params["fc"]

    # fusion_net input is cat((x1, y1)) with x1 = net2 features, y1 = net1.
    fwx = wfc[0, :256].reshape(16, 16)       # fc weights for net2 features
    fwy = wfc[0, 256:].reshape(16, 16)       # fc weights for net1 features
    u1 = _fold_conv3_fc(w31, fwy).astype(f32)            # (8, 256)
    u2 = _fold_conv3_fc(w32, fwx).astype(f32)            # (32, 256)
    c0 = (jnp.sum(fwy * b31[:, None]) + jnp.sum(fwx * b32[:, None])
          + bfc[0]).reshape(1, 1).astype(f32)

    operands = (
        x2t_1, x2t_2,
        w21.reshape(8, 64).astype(bf16), b21.reshape(8, 1).astype(f32),
        w22.reshape(32, 256).astype(bf16), b22.reshape(32, 1).astype(f32),
        u1, u2, c0,
    )

    def const_spec(shape):
        return pl.BlockSpec(shape, lambda i, _s=shape: tuple(0 for _ in _s))

    out = pl.pallas_call(
        _tail_kernel,
        out_shape=jax.ShapeDtypeStruct((n, 1, 1), jnp.float32),
        grid_spec=pltpu.PrefetchScalarGridSpec(
            num_scalar_prefetch=0,
            grid=(n,),
            in_specs=[
                pl.BlockSpec((64, _M2), lambda i: (0, i)),
                pl.BlockSpec((256, _M2), lambda i: (0, i)),
                const_spec((8, 64)), const_spec((8, 1)),
                const_spec((32, 256)), const_spec((32, 1)),
                const_spec((8, _M2)), const_spec((32, _M2)),
                const_spec((1, 1)),
            ],
            out_specs=pl.BlockSpec((None, 1, 1), lambda i: (i, 0, 0)),
        ),
        compiler_params=pltpu.CompilerParams(
            dimension_semantics=("parallel",)
        ),
    )(*operands)
    return out.reshape(n, 1)


# ----------------------------------------------------------------------------
# Layout glue (XLA): one canonical transposed-patch layout between layers
# ----------------------------------------------------------------------------
def _patches_t(x, k):
    """NCHW (n, c, h, w) -> transposed patch matrix (c*k*k, n*(h//k)*(w//k))."""
    n, c, h, w = x.shape
    ho, wo = h // k, w // k
    return (x.reshape(n, c, ho, k, wo, k)
             .transpose(1, 3, 5, 0, 2, 4)
             .reshape(c * k * k, n * ho * wo))


def _regroup_t(a, n, hw, k):
    """Channel-major activation (C, n*hw*hw) -> next layer's transposed patch
    matrix (C*k*k, n*(hw//k)**2)."""
    c = a.shape[0]
    ho = hw // k
    return (a.reshape(c, n, ho, k, ho, k)
             .transpose(0, 3, 5, 1, 2, 4)
             .reshape(c * k * k, n * ho * ho))


# ----------------------------------------------------------------------------
# Parameter construction (deterministic, PyTorch-like shapes)
# ----------------------------------------------------------------------------
def _conv_params(key, co, ci, k):
    kw, kb = jax.random.split(key)
    fan_in = ci * k * k
    bound = 1.0 / jnp.sqrt(fan_in)
    w = jax.random.uniform(kw, (co, ci, k, k), jnp.float32, -bound, bound)
    b = jax.random.uniform(kb, (co,), jnp.float32, -bound, bound)
    return w, b


def _linear_params(key, out_f, in_f):
    kw, kb = jax.random.split(key)
    bound = 1.0 / jnp.sqrt(in_f)
    w = jax.random.uniform(kw, (out_f, in_f), jnp.float32, -bound, bound)
    b = jax.random.uniform(kb, (out_f,), jnp.float32, -bound, bound)
    return w, b


def init_params(key):
    ks = jax.random.split(key, 7)
    return {
        # net1: Conv2d(3,4,4,4), Conv2d(4,8,4,4), Conv2d(8,16,4,4)
        "n1c1": _conv_params(ks[0], 4, 3, 4),
        "n1c2": _conv_params(ks[1], 8, 4, 4),
        "n1c3": _conv_params(ks[2], 16, 8, 4),
        # net2: Conv2d(128,64,2,2), Conv2d(64,32,2,2), Conv2d(32,16,4,4)
        "n2c1": _conv_params(ks[3], 64, 128, 2),
        "n2c2": _conv_params(ks[4], 32, 64, 2),
        "n2c3": _conv_params(ks[5], 16, 32, 4),
        # fusion: Linear(512, 1)
        "fc": _linear_params(ks[6], 1, 512),
    }


# ----------------------------------------------------------------------------
# Forward pass (mirrors StatisticNetwork_X2c1.forward)
# ----------------------------------------------------------------------------
@jax.jit
def statistic_network_x2c1(params, image, mfcc):
    n = image.shape[0]
    bf16 = jnp.bfloat16

    # net1 conv1: Conv2d(3, 4, 4, 4) on (n, 3, 256, 256)
    w1, b1 = params["n1c1"]
    a1 = conv1_matmul(_patches_t(image, 4).astype(bf16),
                      w1.reshape(4, 48).astype(bf16), b1)       # (4, n*4096) bf16
    x2t_1 = _regroup_t(a1, n, 64, 4)                            # (64, n*256) bf16

    # net2 conv1: Conv2d(128, 64, 2, 2) on (n, 128, 64, 64)
    w4, b4 = params["n2c1"]
    a2 = conv1_matmul(_patches_t(mfcc, 2).astype(bf16),
                      w4.reshape(64, 512).astype(bf16), b4)     # (64, n*1024) bf16
    x2t_2 = _regroup_t(a2, n, 32, 2)                            # (256, n*256) bf16

    # fused tail: conv2 of both branches + folded conv3/flatten/concat/Linear
    return fused_tail(x2t_1, x2t_2, params)


# ----------------------------------------------------------------------------
# Pure-JAX reference (lax.conv).  conv1/conv2 operands mirror the kernel's
# bf16 MXU inputs (f32 accumulation); conv1 activations round to bf16.
# ----------------------------------------------------------------------------
def _ref_conv(x, w, b, stride, cast_bf16=False):
    f32 = jnp.float32
    if cast_bf16:
        x = x.astype(jnp.bfloat16).astype(f32)
        w = w.astype(jnp.bfloat16).astype(f32)
    y = lax.conv_general_dilated(
        x, w, window_strides=(stride, stride), padding="VALID",
        dimension_numbers=("NCHW", "OIHW", "NCHW"),
        precision=lax.Precision.HIGHEST,
    )
    return y + b.reshape(1, -1, 1, 1)


def reference_forward(params, image, mfcc):
    bf16, f32 = jnp.bfloat16, jnp.float32
    y = _ref_conv(image, *params["n1c1"], 4, cast_bf16=True)
    y = y.astype(bf16).astype(f32)                       # kernel stores bf16
    y = _ref_conv(y, *params["n1c2"], 4, cast_bf16=True)
    y = _ref_conv(y, *params["n1c3"], 4)
    y1 = y.reshape(-1, 256)
    x = _ref_conv(mfcc, *params["n2c1"], 2, cast_bf16=True)
    x = x.astype(bf16).astype(f32)
    x = _ref_conv(x, *params["n2c2"], 2, cast_bf16=True)
    x = _ref_conv(x, *params["n2c3"], 4)
    x1 = x.reshape(-1, 256)
    cat = jnp.concatenate((x1, y1), axis=1)
    w_fc, b_fc = params["fc"]
    return jnp.dot(cat, w_fc.T, precision=lax.Precision.HIGHEST) + b_fc


# ----------------------------------------------------------------------------
if __name__ == "__main__":
    key = jax.random.PRNGKey(0)
    k_img, k_mfcc, k_par = jax.random.split(key, 3)

    # Shapes implied by the module: net1 needs 256x256 RGB images
    # (-> 16*4*4 = 256 features); net2 needs 64x64 maps with 128 channels.
    batch = 2
    image = jax.random.normal(k_img, (batch, 3, 256, 256), jnp.float32)
    mfcc = jax.random.normal(k_mfcc, (batch, 128, 64, 64), jnp.float32)

    params = init_params(k_par)

    out = statistic_network_x2c1(params, image, mfcc)
    out = jax.block_until_ready(out)
    assert out.shape == (batch, 1), out.shape

    ref = reference_forward(params, image, mfcc)
    # Tolerance covers bf16-matched conv1/conv2 operands + f32 reassociation
    # from the conv3/FC algebraic fold.
    assert jnp.allclose(out, ref, rtol=1e-3, atol=1e-3), (
        "mismatch vs reference", out, ref)

    print("KERNEL_OK")
</pallas_src>

<mosaic_0001>
module attributes {stable_mosaic.version = 11 : i64} {
  func.func @_convmm_kernel(%arg0: i32, %arg1: memref<48x4096xbf16, #tpu.memory_space<vmem>>, %arg2: memref<4x48xbf16, #tpu.memory_space<vmem>>, %arg3: memref<4x1xf32, #tpu.memory_space<vmem>>, %arg4: memref<4x4096xbf16, #tpu.memory_space<vmem>>) attributes {dimension_semantics = [#tpu.dimension_semantics<parallel>], iteration_bounds = array<i64: 2>, scalar_prefetch = 0 : i64, scratch_operands = 0 : i64, tpu.core_type = #tpu.core_type<tc>, window_params = [{transform_indices = @transform_0, window_bounds = array<i64: 48, 4096>}, {pipeline_mode = #tpu.pipeline_mode<synchronous>, transform_indices = @transform_1, window_bounds = array<i64: 4, 48>}, {pipeline_mode = #tpu.pipeline_mode<synchronous>, transform_indices = @transform_2, window_bounds = array<i64: 4, 1>}, {transform_indices = @transform_3, window_bounds = array<i64: 4, 4096>}]} {
    %c0 = arith.constant 0 : index
    %c0_0 = arith.constant 0 : index
    %0 = vector.load %arg2[%c0, %c0_0] : memref<4x48xbf16, #tpu.memory_space<vmem>>, vector<4x48xbf16>
    %c0_1 = arith.constant 0 : index
    %c0_2 = arith.constant 0 : index
    %1 = vector.load %arg1[%c0_1, %c0_2] : memref<48x4096xbf16, #tpu.memory_space<vmem>>, vector<48x4096xbf16>
    %cst = arith.constant dense<0.000000e+00> : vector<4x4096xf32>
    %2 = tpu.matmul %0, %1, %cst {dimension_numbers = #tpu.dot_dimension_numbers<[1], [0], [0], [1], [0, 0, 1, 1], [], []>} : vector<4x48xbf16>, vector<48x4096xbf16>, vector<4x4096xf32> -> vector<4x4096xf32>
    %c0_3 = arith.constant 0 : index
    %c0_4 = arith.constant 0 : index
    %3 = vector.load %arg3[%c0_3, %c0_4] : memref<4x1xf32, #tpu.memory_space<vmem>>, vector<4x1xf32>
    %4 = vector.broadcast %3 : vector<4x1xf32> to vector<4x4096xf32>
    %5 = arith.addf %2, %4 : vector<4x4096xf32>
    %6 = arith.truncf %5 : vector<4x4096xf32> to vector<4x4096xbf16>
    %c0_5 = arith.constant 0 : index
    %c0_6 = arith.constant 0 : index
    %7 = vector.load %arg4[%c0_5, %c0_6] : memref<4x4096xbf16, #tpu.memory_space<vmem>>, vector<4x4096xbf16>
    tpu.vector_store %arg4[%c0_5, %c0_6], %6 {strides = array<i32>} : memref<4x4096xbf16, #tpu.memory_space<vmem>>, vector<4x4096xbf16>,
    return
  }
  func.func @transform_0(%arg0: i32) -> (i32, i32) {
    %c0_i32 = arith.constant 0 : i32
    %c0_i32_0 = arith.constant 0 : i32
    return %c0_i32, %arg0 : i32, i32
  }
  func.func @transform_1(%arg0: i32) -> (i32, i32) {
    %c0_i32 = arith.constant 0 : i32
    %c0_i32_0 = arith.constant 0 : i32
    %c0_i32_1 = arith.constant 0 : i32
    return %c0_i32, %c0_i32_0 : i32, i32
  }
  func.func @transform_2(%arg0: i32) -> (i32, i32) {
    %c0_i32 = arith.constant 0 : i32
    %c0_i32_0 = arith.constant 0 : i32
    %c0_i32_1 = arith.constant 0 : i32
    return %c0_i32, %c0_i32_0 : i32, i32
  }
  func.func @transform_3(%arg0: i32) -> (i32, i32) {
    %c0_i32 = arith.constant 0 : i32
    %c0_i32_0 = arith.constant 0 : i32
    return %c0_i32, %arg0 : i32, i32
  }
}

module attributes {stable_mosaic.version = 11 : i64} {
  func.func @_convmm_kernel(%arg0: i32, %arg1: memref<512x2048xbf16, #tpu.memory_space<vmem>>, %arg2: memref<64x512xbf16, #tpu.memory_space<vmem>>, %arg3: memref<64x1xf32, #tpu.memory_space<vmem>>, %arg4: memref<64x2048xbf16, #tpu.memory_space<vmem>>) attributes {dimension_semantics = [#tpu.dimension_semantics<parallel>], iteration_bounds = array<i64: 1>, scalar_prefetch = 0 : i64, scratch_operands = 0 : i64, tpu.core_type = #tpu.core_type<tc>, window_params = [{transform_indices = @transform_0, window_bounds = array<i64: 512, 2048>}, {pipeline_mode = #tpu.pipeline_mode<synchronous>, transform_indices = @transform_1, window_bounds = array<i64: 64, 512>}, {pipeline_mode = #tpu.pipeline_mode<synchronous>, transform_indices = @transform_2, window_bounds = array<i64: 64, 1>}, {transform_indices = @transform_3, window_bounds = array<i64: 64, 2048>}]} {
    %c0 = arith.constant 0 : index
    %c0_0 = arith.constant 0 : index
    %0 = vector.load %arg2[%c0, %c0_0] : memref<64x512xbf16, #tpu.memory_space<vmem>>, vector<64x512xbf16>
    %c0_1 = arith.constant 0 : index
    %c0_2 = arith.constant 0 : index
    %1 = vector.load %arg1[%c0_1, %c0_2] : memref<512x2048xbf16, #tpu.memory_space<vmem>>, vector<512x2048xbf16>
    %cst = arith.constant dense<0.000000e+00> : vector<64x2048xf32>
    %2 = tpu.matmul %0, %1, %cst {dimension_numbers = #tpu.dot_dimension_numbers<[1], [0], [0], [1], [0, 0, 1, 1], [], []>} : vector<64x512xbf16>, vector<512x2048xbf16>, vector<64x2048xf32> -> vector<64x2048xf32>
    %c0_3 = arith.constant 0 : index
    %c0_4 = arith.constant 0 : index
    %3 = vector.load %arg3[%c0_3, %c0_4] : memref<64x1xf32, #tpu.memory_space<vmem>>, vector<64x1xf32>
    %4 = vector.broadcast %3 : vector<64x1xf32> to vector<64x2048xf32>
    %5 = arith.addf %2, %4 : vector<64x2048xf32>
    %6 = arith.truncf %5 : vector<64x2048xf32> to vector<64x2048xbf16>
    %c0_5 = arith.constant 0 : index
    %c0_6 = arith.constant 0 : index
    %7 = vector.load %arg4[%c0_5, %c0_6] : memref<64x2048xbf16, #tpu.memory_space<vmem>>, vector<64x2048xbf16>
    tpu.vector_store %arg4[%c0_5, %c0_6], %6 {strides = array<i32>} : memref<64x2048xbf16, #tpu.memory_space<vmem>>, vector<64x2048xbf16>,
    return
  }
  func.func @transform_0(%arg0: i32) -> (i32, i32) {
    %c0_i32 = arith.constant 0 : i32
    %c0_i32_0 = arith.constant 0 : i32
    return %c0_i32, %arg0 : i32, i32
  }
  func.func @transform_1(%arg0: i32) -> (i32, i32) {
    %c0_i32 = arith.constant 0 : i32
    %c0_i32_0 = arith.constant 0 : i32
    %c0_i32_1 = arith.constant 0 : i32
    return %c0_i32, %c0_i32_0 : i32, i32
  }
  func.func @transform_2(%arg0: i32) -> (i32, i32) {
    %c0_i32 = arith.constant 0 : i32
    %c0_i32_0 = arith.constant 0 : i32
    %c0_i32_1 = arith.constant 0 : i32
    return %c0_i32, %c0_i32_0 : i32, i32
  }
  func.func @transform_3(%arg0: i32) -> (i32, i32) {
    %c0_i32 = arith.constant 0 : i32
    %c0_i32_0 = arith.constant 0 : i32
    return %c0_i32, %arg0 : i32, i32
  }
}

module attributes {stable_mosaic.version = 11 : i64} {
  func.func @_tail_kernel(%arg0: i32, %arg1: memref<64x256xbf16, #tpu.memory_space<vmem>>, %arg2: memref<256x256xbf16, #tpu.memory_space<vmem>>, %arg3: memref<8x64xbf16, #tpu.memory_space<vmem>>, %arg4: memref<8x1xf32, #tpu.memory_space<vmem>>, %arg5: memref<32x256xbf16, #tpu.memory_space<vmem>>, %arg6: memref<32x1xf32, #tpu.memory_space<vmem>>, %arg7: memref<8x256xf32, #tpu.memory_space<vmem>>, %arg8: memref<32x256xf32, #tpu.memory_space<vmem>>, %arg9: memref<1x1xf32, #tpu.memory_space<vmem>>, %arg10: memref<1x1x1xf32, #tpu.memory_space<vmem>>) attributes {dimension_semantics = [#tpu.dimension_semantics<parallel>], iteration_bounds = array<i64: 2>, scalar_prefetch = 0 : i64, scratch_operands = 0 : i64, tpu.core_type = #tpu.core_type<tc>, window_params = [{transform_indices = @transform_0, window_bounds = array<i64: 64, 256>}, {transform_indices = @transform_1, window_bounds = array<i64: 256, 256>}, {pipeline_mode = #tpu.pipeline_mode<synchronous>, transform_indices = @transform_2, window_bounds = array<i64: 8, 64>}, {pipeline_mode = #tpu.pipeline_mode<synchronous>, transform_indices = @transform_3, window_bounds = array<i64: 8, 1>}, {pipeline_mode = #tpu.pipeline_mode<synchronous>, transform_indices = @transform_4, window_bounds = array<i64: 32, 256>}, {pipeline_mode = #tpu.pipeline_mode<synchronous>, transform_indices = @transform_5, window_bounds = array<i64: 32, 1>}, {pipeline_mode = #tpu.pipeline_mode<synchronous>, transform_indices = @transform_6, window_bounds = array<i64: 8, 256>}, {pipeline_mode = #tpu.pipeline_mode<synchronous>, transform_indices = @transform_7, window_bounds = array<i64: 32, 256>}, {pipeline_mode = #tpu.pipeline_mode<synchronous>, transform_indices = @transform_8, window_bounds = array<i64: 1, 1>}, {transform_indices = @transform_9, window_bounds = array<i64: 1, 1, 1>}]} {
    %c0 = arith.constant 0 : index
    %c0_0 = arith.constant 0 : index
    %0 = vector.load %arg3[%c0, %c0_0] : memref<8x64xbf16, #tpu.memory_space<vmem>>, vector<8x64xbf16>
    %c0_1 = arith.constant 0 : index
    %c0_2 = arith.constant 0 : index
    %1 = vector.load %arg1[%c0_1, %c0_2] : memref<64x256xbf16, #tpu.memory_space<vmem>>, vector<64x256xbf16>
    %cst = arith.constant dense<0.000000e+00> : vector<8x256xf32>
    %2 = tpu.matmul %0, %1, %cst {dimension_numbers = #tpu.dot_dimension_numbers<[1], [0], [0], [1], [0, 0, 1, 1], [], []>} : vector<8x64xbf16>, vector<64x256xbf16>, vector<8x256xf32> -> vector<8x256xf32>
    %c0_3 = arith.constant 0 : index
    %c0_4 = arith.constant 0 : index
    %3 = vector.load %arg4[%c0_3, %c0_4] : memref<8x1xf32, #tpu.memory_space<vmem>>, vector<8x1xf32>
    %4 = vector.broadcast %3 : vector<8x1xf32> to vector<8x256xf32>
    %5 = arith.addf %2, %4 : vector<8x256xf32>
    %c0_5 = arith.constant 0 : index
    %c0_6 = arith.constant 0 : index
    %6 = vector.load %arg5[%c0_5, %c0_6] : memref<32x256xbf16, #tpu.memory_space<vmem>>, vector<32x256xbf16>
    %c0_7 = arith.constant 0 : index
    %c0_8 = arith.constant 0 : index
    %7 = vector.load %arg2[%c0_7, %c0_8] : memref<256x256xbf16, #tpu.memory_space<vmem>>, vector<256x256xbf16>
    %cst_9 = arith.constant dense<0.000000e+00> : vector<32x256xf32>
    %8 = tpu.matmul %6, %7, %cst_9 {dimension_numbers = #tpu.dot_dimension_numbers<[1], [0], [0], [1], [0, 0, 1, 1], [], []>} : vector<32x256xbf16>, vector<256x256xbf16>, vector<32x256xf32> -> vector<32x256xf32>
    %c0_10 = arith.constant 0 : index
    %c0_11 = arith.constant 0 : index
    %9 = vector.load %arg6[%c0_10, %c0_11] : memref<32x1xf32, #tpu.memory_space<vmem>>, vector<32x1xf32>
    %10 = vector.broadcast %9 : vector<32x1xf32> to vector<32x256xf32>
    %11 = arith.addf %8, %10 : vector<32x256xf32>
    %c0_12 = arith.constant 0 : index
    %c0_13 = arith.constant 0 : index
    %12 = vector.load %arg7[%c0_12, %c0_13] : memref<8x256xf32, #tpu.memory_space<vmem>>, vector<8x256xf32>
    %13 = arith.mulf %12, %5 : vector<8x256xf32>
    %cst_14 = arith.constant dense<0.000000e+00> : vector<8xf32>
    %14 = vector.multi_reduction <add>, %13, %cst_14 [1] : vector<8x256xf32> to vector<8xf32>
    %15 = vector.shape_cast %14 : vector<8xf32> to vector<8x1xf32>
    %c0_15 = arith.constant 0 : index
    %c0_16 = arith.constant 0 : index
    %16 = vector.load %arg8[%c0_15, %c0_16] : memref<32x256xf32, #tpu.memory_space<vmem>>, vector<32x256xf32>
    %17 = arith.mulf %16, %11 : vector<32x256xf32>
    %cst_17 = arith.constant dense<0.000000e+00> : vector<32xf32>
    %18 = vector.multi_reduction <add>, %17, %cst_17 [1] : vector<32x256xf32> to vector<32xf32>
    %19 = vector.shape_cast %18 : vector<32xf32> to vector<32x1xf32>
    %cst_18 = arith.constant dense<0.000000e+00> : vector<1xf32>
    %20 = vector.multi_reduction <add>, %15, %cst_18 [0] : vector<8x1xf32> to vector<1xf32>
    %21 = vector.shape_cast %20 : vector<1xf32> to vector<1x1xf32>
    %cst_19 = arith.constant dense<0.000000e+00> : vector<1xf32>
    %22 = vector.multi_reduction <add>, %19, %cst_19 [0] : vector<32x1xf32> to vector<1xf32>
    %23 = vector.shape_cast %22 : vector<1xf32> to vector<1x1xf32>
    %24 = arith.addf %21, %23 : vector<1x1xf32>
    %c0_20 = arith.constant 0 : index
    %c0_21 = arith.constant 0 : index
    %25 = vector.load %arg9[%c0_20, %c0_21] : memref<1x1xf32, #tpu.memory_space<vmem>>, vector<1x1xf32>
    %26 = arith.addf %24, %25 : vector<1x1xf32>
    %c0_22 = arith.constant 0 : index
    %c0_23 = arith.constant 0 : index
    %c0_24 = arith.constant 0 : index
    %27 = vector.load %arg10[%c0_22, %c0_23, %c0_24] : memref<1x1x1xf32, #tpu.memory_space<vmem>>, vector<1x1x1xf32>
    %28 = vector.shape_cast %27 : vector<1x1x1xf32> to vector<1x1xf32>
    %29 = vector.shape_cast %26 : vector<1x1xf32> to vector<1x1x1xf32>
    tpu.vector_store %arg10[%c0_22, %c0_23, %c0_24], %29 {strides = array<i32>} : memref<1x1x1xf32, #tpu.memory_space<vmem>>, vector<1x1x1xf32>,
    return
  }
  func.func @transform_0(%arg0: i32) -> (i32, i32) {
    %c0_i32 = arith.constant 0 : i32
    %c0_i32_0 = arith.constant 0 : i32
    return %c0_i32, %arg0 : i32, i32
  }
  func.func @transform_1(%arg0: i32) -> (i32, i32) {
    %c0_i32 = arith.constant 0 : i32
    %c0_i32_0 = arith.constant 0 : i32
    return %c0_i32, %arg0 : i32, i32
  }
  func.func @transform_2(%arg0: i32) -> (i32, i32) {
    %c0_i32 = arith.constant 0 : i32
    %c0_i32_0 = arith.constant 0 : i32
    %c0_i32_1 = arith.constant 0 : i32
    return %c0_i32, %c0_i32_0 : i32, i32
  }
  func.func @transform_3(%arg0: i32) -> (i32, i32) {
    %c0_i32 = arith.constant 0 : i32
    %c0_i32_0 = arith.constant 0 : i32
    %c0_i32_1 = arith.constant 0 : i32
    return %c0_i32, %c0_i32_0 : i32, i32
  }
  func.func @transform_4(%arg0: i32) -> (i32, i32) {
    %c0_i32 = arith.constant 0 : i32
    %c0_i32_0 = arith.constant 0 : i32
    %c0_i32_1 = arith.constant 0 : i32
    return %c0_i32, %c0_i32_0 : i32, i32
  }
  func.func @transform_5(%arg0: i32) -> (i32, i32) {
    %c0_i32 = arith.constant 0 : i32
    %c0_i32_0 = arith.constant 0 : i32
    %c0_i32_1 = arith.constant 0 : i32
    return %c0_i32, %c0_i32_0 : i32, i32
  }
  func.func @transform_6(%arg0: i32) -> (i32, i32) {
    %c0_i32 = arith.constant 0 : i32
    %c0_i32_0 = arith.constant 0 : i32
    %c0_i32_1 = arith.constant 0 : i32
    return %c0_i32, %c0_i32_0 : i32, i32
  }
  func.func @transform_7(%arg0: i32) -> (i32, i32) {
    %c0_i32 = arith.constant 0 : i32
    %c0_i32_0 = arith.constant 0 : i32
    %c0_i32_1 = arith.constant 0 : i32
    return %c0_i32, %c0_i32_0 : i32, i32
  }
  func.func @transform_8(%arg0: i32) -> (i32, i32) {
    %c0_i32 = arith.constant 0 : i32
    %c0_i32_0 = arith.constant 0 : i32
    %c0_i32_1 = arith.constant 0 : i32
    return %c0_i32, %c0_i32_0 : i32, i32
  }
  func.func @transform_9(%arg0: i32) -> (i32, i32, i32) {
    %c0_i32 = arith.constant 0 : i32
    %c0_i32_0 = arith.constant 0 : i32
    %c0_i32_1 = arith.constant 0 : i32
    return %arg0, %c0_i32, %c0_i32_0 : i32, i32, i32
  }
}

</mosaic_0001>

<llo_original>
// kernel: statistic_network_x2c1.3
$region0: #{statistic_network_x2c1.3}
  #allocation0 [shape = 'u32[]', space=smem, size = 0x4, offset = 0x4, fixed_abs, tag = 'smem constant byte address 0x4 - core index']
  #allocation1 [shape = 'u32[144,128]{1,0:T(1,128)}', space=vmem, size = 0x12000, scoped, tag = 'internal scratch']
  %s0 = inlined_call_operand.vmem [shape: bf16[48,8192], index: 0, kind: input, shape index: {}]
  %s1 = inlined_call_operand.vmem [shape: bf16[4,48], index: 1, kind: input, shape index: {}]
  %s2 = inlined_call_operand.vmem [shape: f32[4,1], index: 2, kind: input, shape index: {}]
  %s3 = inlined_call_operand.vmem [shape: bf16[4,8192], index: 3, kind: output, shape index: {}]
  %s4 = sld [smem:[#allocation0]]
  $region68: #{statistic_network_x2c1.3} parent=0
    _
  %s6 = ssub.s32 1, %s4
  %s7 = scalar_select 0, %s6, %s4
  $region1: #{statistic_network_x2c1.3} parent=0
    #allocation2 [shape = 'u8[786432]{0}', space=vmem, size = 0xc0000, scoped, tag = 'input window, operand 0']
    loop: start=0, step=1, limit=4
    $region2: #{statistic_network_x2c1.3} parent=1 // loop_pre_header
      _
    $region3: #{statistic_network_x2c1.3} parent=1 // loop_header
      %s9 = sphi 0, %s13
      %p10 = scmp.ge.s32.totalorder %s9, 4
      %s19 = sphi 0, %s21
      %s22 = sphi 0, %s19
      %s23 = sphi 0, %s22
      %s39 = sphi 0, %s23
      %s43 = sphi 0, %s43
      %s45 = sphi 0, %s43
      %s46 = sphi 0, %s45
      %s60 = sphi 0, %s46
      %s64 = sphi 0, %s64
      %s66 = sphi 0, %s64
      %s67 = sphi 0, %s66
      %s81 = sphi 0, %s67
      %s87 = sphi 0, %s89
      %s90 = sphi 0, %s87
      %s91 = sphi 0, %s90
      %s107 = sphi 0, %s91
    $region4: #{statistic_network_x2c1.3} parent=1 // loop_header_branch
      %12 = sbr.rel (%p10) target = $region8
    $region5: #{statistic_network_x2c1.3} parent=1 // loop_body
      %s14 = ssub.s32 %s9, 1
      %s15 = ssub.s32 %s9, 2
      %s16 = sadd.s32 %s9, 1
      %s17 = ssub.s32 %s9, %s16
      %p18 = scmp.eq.s32.totalorder %s17, 0
      %s20 = sadd.s32 %s19, 1
      %s21 = scalar_select %p18, %s19, %s20
      %p24 = pneg %p18
      %p25 = scmp.eq.s32.totalorder %s9, 1
      %p26 = por %p24, %p25
      %p27 = scmp.ne.s32.totalorder %s19, %s22
      %p28 = scmp.eq.s32.totalorder %s9, 0
      %p29 = por %p27, %p28
      %p30 = scmp.ne.s32.totalorder %s19, %s22
      %p31 = scmp.eq.s32.totalorder %s14, 1
      %p32 = por %p30, %p31
      %p33 = scmp.ne.s32.totalorder %s22, %s23
      %p34 = scmp.eq.s32.totalorder %s14, 0
      %p35 = por %p33, %p34
      %p36 = scmp.ne.s32.totalorder %s22, %s23
      %p37 = scmp.eq.s32.totalorder %s15, 1
      %p38 = por %p36, %p37
      %p40 = scmp.ne.s32.totalorder %s23, %s39
      %p41 = scmp.eq.s32.totalorder %s15, 0
      %p42 = por %p40, %p41
      %s44 = sadd.s32 %s43, 1
      %p47 = scmp.eq.s32.totalorder %s9, 1
      %p48 = scmp.ne.s32.totalorder %s43, %s45
      %p49 = scmp.eq.s32.totalorder %s9, 0
      %p50 = por %p48, %p49
      %p51 = scmp.ne.s32.totalorder %s43, %s45
      %p52 = scmp.eq.s32.totalorder %s14, 1
      %p53 = por %p51, %p52
      %p54 = scmp.ne.s32.totalorder %s45, %s46
      %p55 = scmp.eq.s32.totalorder %s14, 0
      %p56 = por %p54, %p55
      %p57 = scmp.ne.s32.totalorder %s45, %s46
      %p58 = scmp.eq.s32.totalorder %s15, 1
      %p59 = por %p57, %p58
      %p61 = scmp.ne.s32.totalorder %s46, %s60
      %p62 = scmp.eq.s32.totalorder %s15, 0
      %p63 = por %p61, %p62
      %s65 = sadd.s32 %s64, 1
      %p68 = scmp.eq.s32.totalorder %s9, 1
      %p69 = scmp.ne.s32.totalorder %s64, %s66
      %p70 = scmp.eq.s32.totalorder %s9, 0
      %p71 = por %p69, %p70
      %p72 = scmp.ne.s32.totalorder %s64, %s66
      %p73 = scmp.eq.s32.totalorder %s14, 1
      %p74 = por %p72, %p73
      %p75 = scmp.ne.s32.totalorder %s66, %s67
      %p76 = scmp.eq.s32.totalorder %s14, 0
      %p77 = por %p75, %p76
      %p78 = scmp.ne.s32.totalorder %s66, %s67
      %p79 = scmp.eq.s32.totalorder %s15, 1
      %p80 = por %p78, %p79
      %p82 = scmp.ne.s32.totalorder %s67, %s81
      %p83 = scmp.eq.s32.totalorder %s15, 0
      %p84 = por %p82, %p83
      %s85 = ssub.s32 %s9, %s16
      %p86 = scmp.eq.s32.totalorder %s85, 0
      %s88 = sadd.s32 %s87, 1
      %s89 = scalar_select %p86, %s87, %s88
      %p92 = pneg %p86
      %p93 = scmp.eq.s32.totalorder %s9, 1
      %p94 = por %p92, %p93
      %p95 = scmp.ne.s32.totalorder %s87, %s90
      %p96 = scmp.eq.s32.totalorder %s9, 0
      %p97 = por %p95, %p96
      %p98 = scmp.ne.s32.totalorder %s87, %s90
      %p99 = scmp.eq.s32.totalorder %s14, 1
      %p100 = por %p98, %p99
      %p101 = scmp.ne.s32.totalorder %s90, %s91
      %p102 = scmp.eq.s32.totalorder %s14, 0
      %p103 = por %p101, %p102
      %p104 = scmp.ne.s32.totalorder %s90, %s91
      %p105 = scmp.eq.s32.totalorder %s15, 1
      %p106 = por %p104, %p105
      %p108 = scmp.ne.s32.totalorder %s91, %s107
      %p109 = scmp.eq.s32.totalorder %s15, 0
      %p110 = por %p108, %p109
      %p111 = scmp.le.s32.totalorder 1, %s9
      %p112 = scmp.lt.s32.totalorder %s9, 3
      %p113 = pnand %p111, %p112
      %p114 = pneg %p113
      // Predicated region
      $region9: #{statistic_network_x2c1.3} parent=5 // pred_check
        _
      $region10: #{statistic_network_x2c1.3} parent=5 // pred_check_branch
        %116 = sbr.rel (%p113) target = $region12
      $region11: #{statistic_network_x2c1.3} parent=5 // pred_region
        %s117 = ssub.s32 %s9, 1
        // Predicated region
        $region13: #{statistic_network_x2c1.3} parent=11 // pred_check
          %p118 = pneg %p56
        $region14: #{statistic_network_x2c1.3} parent=11 // pred_check_branch
          %120 = sbr.rel (%p118) target = $region16
        $region15: #{statistic_network_x2c1.3} parent=11 // pred_region
          _
        $region16: #{statistic_network_x2c1.3} parent=11 // pred_fallthru
          _
        // Predicated region
        $region17: #{statistic_network_x2c1.3} parent=11 // pred_check
          %p121 = pneg %p77
        $region18: #{statistic_network_x2c1.3} parent=11 // pred_check_branch
          %123 = sbr.rel (%p121) target = $region20
        $region19: #{statistic_network_x2c1.3} parent=11 // pred_region
          _
        $region20: #{statistic_network_x2c1.3} parent=11 // pred_fallthru
          _
      $region12: #{statistic_network_x2c1.3} parent=5 // pred_fallthru
        _
      %p124 = scmp.lt.s32.totalorder %s9, 2
      // Predicated region
      $region21: #{statistic_network_x2c1.3} parent=5 // pred_check
        %p125 = pneg %p124
      $region22: #{statistic_network_x2c1.3} parent=5 // pred_check_branch
        %127 = sbr.rel (%p125) target = $region24
      $region23: #{statistic_network_x2c1.3} parent=5 // pred_region
        // Predicated region
        $region25: #{statistic_network_x2c1.3} parent=23 // pred_check
          %p128 = pneg %p29
        $region26: #{statistic_network_x2c1.3} parent=23 // pred_check_branch
          %130 = sbr.rel (%p128) target = $region28
        $region27: #{statistic_network_x2c1.3} parent=23 // pred_region
          %s131 = sand.u32 %s19, 1
          %s132 = sand.u32 %s19, 1
          %s133 = smul.addr %s132, 768
          %s134 = scalar_lea.vmem [#allocation2], %s133
          %s135 = smul.u32 32, %s9
          %s136 = smul.addr %s135, 4
          %s137 = scalar_lea.vmem %s0, %s136
          // Predicated region
          $region29: #{statistic_network_x2c1.3} parent=27 // pred_check
            _
          $region30: #{statistic_network_x2c1.3} parent=27 // pred_check_branch
            %139 = sbr.rel (0) target = $region32
          $region31: #{statistic_network_x2c1.3} parent=27 // pred_region
            // Predicated region
            $region33: #{statistic_network_x2c1.3} parent=31 // pred_check
              _
            $region34: #{statistic_network_x2c1.3} parent=31 // pred_check_branch
              %141 = sbr.rel (0) target = $region36
            $region35: #{statistic_network_x2c1.3} parent=31 // pred_region
              loop: start=0, step=1, limit=1
              $region37: #{statistic_network_x2c1.3} parent=35 // loop_pre_header
                _
              $region38: #{statistic_network_x2c1.3} parent=35 // loop_header
                %s143 = sphi 0, %s147
                %p144 = scmp.ge.s32.totalorder %s143, 1
                %s148 = sphi %s137, %s137
                %s149 = sphi %s134, %s134
              $region39: #{statistic_network_x2c1.3} parent=35 // loop_header_branch
                %146 = sbr.rel (%p144) target = $region43
              $region40: #{statistic_network_x2c1.3} parent=35 // loop_body
                %v150 = vld [vmem:[%s148] sm:$0xff]
                %151 = vst [vmem:[%s149] sm:$0xff] %v150
                %v152 = vld [vmem:[%s148 + $0x8] sm:$0xff]
                %153 = vst [vmem:[%s149 + $0x8] sm:$0xff] %v152
                %v154 = vld [vmem:[%s148 + $0x10] sm:$0xff]
                %155 = vst [vmem:[%s149 + $0x10] sm:$0xff] %v154
                %v156 = vld [vmem:[%s148 + $0x18] sm:$0xff]
                %157 = vst [vmem:[%s149 + $0x18] sm:$0xff] %v156
                %v158 = vld [vmem:[%s148 + $0x20] sm:$0xff]
                %159 = vst [vmem:[%s149 + $0x20] sm:$0xff] %v158
                %v160 = vld [vmem:[%s148 + $0x28] sm:$0xff]
                %161 = vst [vmem:[%s149 + $0x28] sm:$0xff] %v160
                %v162 = vld [vmem:[%s148 + $0x30] sm:$0xff]
                %163 = vst [vmem:[%s149 + $0x30] sm:$0xff] %v162
                %v164 = vld [vmem:[%s148 + $0x38] sm:$0xff]
                %165 = vst [vmem:[%s149 + $0x38] sm:$0xff] %v164
                %v166 = vld [vmem:[%s148 + $0x40] sm:$0xff]
                %167 = vst [vmem:[%s149 + $0x40] sm:$0xff] %v166
                %v168 = vld [vmem:[%s148 + $0x48] sm:$0xff]
                %169 = vst [vmem:[%s149 + $0x48] sm:$0xff] %v168
                %v170 = vld [vmem:[%s148 + $0x50] sm:$0xff]
                %171 = vst [vmem:[%s149 + $0x50] sm:$0xff] %v170
                %v172 = vld [vmem:[%s148 + $0x58] sm:$0xff]
                %173 = vst [vmem:[%s149 + $0x58] sm:$0xff] %v172
                %v174 = vld [vmem:[%s148 + $0x60] sm:$0xff]
                %175 = vst [vmem:[%s149 + $0x60] sm:$0xff] %v174
                %v176 = vld [vmem:[%s148 + $0x68] sm:$0xff]
                %177 = vst [vmem:[%s149 + $0x68] sm:$0xff] %v176
                %v178 = vld [vmem:[%s148 + $0x70] sm:$0xff]
                %179 = vst [vmem:[%s149 + $0x70] sm:$0xff] %v178
                %v180 = vld [vmem:[%s148 + $0x78] sm:$0xff]
                %181 = vst [vmem:[%s149 + $0x78] sm:$0xff] %v180
                %v182 = vld [vmem:[%s148 + $0x100] sm:$0xff]
                %183 = vst [vmem:[%s149 + $0x80] sm:$0xff] %v182
                %v184 = vld [vmem:[%s148 + $0x108] sm:$0xff]
                %185 = vst [vmem:[%s149 + $0x88] sm:$0xff] %v184
                %v186 = vld [vmem:[%s148 + $0x110] sm:$0xff]
                %187 = vst [vmem:[%s149 + $0x90] sm:$0xff] %v186
                %v188 = vld [vmem:[%s148 + $0x118] sm:$0xff]
                %189 = vst [vmem:[%s149 + $0x98] sm:$0xff] %v188
                %v190 = vld [vmem:[%s148 + $0x120] sm:$0xff]
                %191 = vst [vmem:[%s149 + $0xa0] sm:$0xff] %v190
                %v192 = vld [vmem:[%s148 + $0x128] sm:$0xff]
                %193 = vst [vmem:[%s149 + $0xa8] sm:$0xff] %v192
                %v194 = vld [vmem:[%s148 + $0x130] sm:$0xff]
                %195 = vst [vmem:[%s149 + $0xb0] sm:$0xff] %v194
                %v196 = vld [vmem:[%s148 + $0x138] sm:$0xff]
                %197 = vst [vmem:[%s149 + $0xb8] sm:$0xff] %v196
                %v198 = vld [vmem:[%s148 + $0x140] sm:$0xff]
                %199 = vst [vmem:[%s149 + $0xc0] sm:$0xff] %v198
                %v200 = vld [vmem:[%s148 + $0x148] sm:$0xff]
                %201 = vst [vmem:[%s149 + $0xc8] sm:$0xff] %v200
                %v202 = vld [vmem:[%s148 + $0x150] sm:$0xff]
                %203 = vst [vmem:[%s149 + $0xd0] sm:$0xff] %v202
                %v204 = vld [vmem:[%s148 + $0x158] sm:$0xff]
                %205 = vst [vmem:[%s149 + $0xd8] sm:$0xff] %v204
                %v206 = vld [vmem:[%s148 + $0x160] sm:$0xff]
                %207 = vst [vmem:[%s149 + $0xe0] sm:$0xff] %v206
                %v208 = vld [vmem:[%s148 + $0x168] sm:$0xff]
                %209 = vst [vmem:[%s149 + $0xe8] sm:$0xff] %v208
                %v210 = vld [vmem:[%s148 + $0x170] sm:$0xff]
                %211 = vst [vmem:[%s149 + $0xf0] sm:$0xff] %v210
                %v212 = vld [vmem:[%s148 + $0x178] sm:$0xff]
                %213 = vst [vmem:[%s149 + $0xf8] sm:$0xff] %v212
                %v214 = vld [vmem:[%s148 + $0x200] sm:$0xff]
                %215 = vst [vmem:[%s149 + $0x100] sm:$0xff] %v214
                %v216 = vld [vmem:[%s148 + $0x208] sm:$0xff]
                %217 = vst [vmem:[%s149 + $0x108] sm:$0xff] %v216
                %v218 = vld [vmem:[%s148 + $0x210] sm:$0xff]
                %219 = vst [vmem:[%s149 + $0x110] sm:$0xff] %v218
                %v220 = vld [vmem:[%s148 + $0x218] sm:$0xff]
                %221 = vst [vmem:[%s149 + $0x118] sm:$0xff] %v220
                %v222 = vld [vmem:[%s148 + $0x220] sm:$0xff]
                %223 = vst [vmem:[%s149 + $0x120] sm:$0xff] %v222
                %v224 = vld [vmem:[%s148 + $0x228] sm:$0xff]
                %225 = vst [vmem:[%s149 + $0x128] sm:$0xff] %v224
                %v226 = vld [vmem:[%s148 + $0x230] sm:$0xff]
                %227 = vst [vmem:[%s149 + $0x130] sm:$0xff] %v226
                %v228 = vld [vmem:[%s148 + $0x238] sm:$0xff]
                %229 = vst [vmem:[%s149 + $0x138] sm:$0xff] %v228
                %v230 = vld [vmem:[%s148 + $0x240] sm:$0xff]
                %231 = vst [vmem:[%s149 + $0x140] sm:$0xff] %v230
                %v232 = vld [vmem:[%s148 + $0x248] sm:$0xff]
                %233 = vst [vmem:[%s149 + $0x148] sm:$0xff] %v232
                %v234 = vld [vmem:[%s148 + $0x250] sm:$0xff]
                %235 = vst [vmem:[%s149 + $0x150] sm:$0xff] %v234
                %v236 = vld [vmem:[%s148 + $0x258] sm:$0xff]
                %237 = vst [vmem:[%s149 + $0x158] sm:$0xff] %v236
                %v238 = vld [vmem:[%s148 + $0x260] sm:$0xff]
                %239 = vst [vmem:[%s149 + $0x160] sm:$0xff] %v238
                %v240 = vld [vmem:[%s148 + $0x268] sm:$0xff]
                %241 = vst [vmem:[%s149 + $0x168] sm:$0xff] %v240
                %v242 = vld [vmem:[%s148 + $0x270] sm:$0xff]
                %243 = vst [vmem:[%s149 + $0x170] sm:$0xff] %v242
                %v244 = vld [vmem:[%s148 + $0x278] sm:$0xff]
                %245 = vst [vmem:[%s149 + $0x178] sm:$0xff] %v244
                %v246 = vld [vmem:[%s148 + $0x300] sm:$0xff]
                %247 = vst [vmem:[%s149 + $0x180] sm:$0xff] %v246
                %v248 = vld [vmem:[%s148 + $0x308] sm:$0xff]
                %249 = vst [vmem:[%s149 + $0x188] sm:$0xff] %v248
                %v250 = vld [vmem:[%s148 + $0x310] sm:$0xff]
                %251 = vst [vmem:[%s149 + $0x190] sm:$0xff] %v250
                %v252 = vld [vmem:[%s148 + $0x318] sm:$0xff]
                %253 = vst [vmem:[%s149 + $0x198] sm:$0xff] %v252
                %v254 = vld [vmem:[%s148 + $0x320] sm:$0xff]
                %255 = vst [vmem:[%s149 + $0x1a0] sm:$0xff] %v254
                %v256 = vld [vmem:[%s148 + $0x328] sm:$0xff]
                %257 = vst [vmem:[%s149 + $0x1a8] sm:$0xff] %v256
                %v258 = vld [vmem:[%s148 + $0x330] sm:$0xff]
                %259 = vst [vmem:[%s149 + $0x1b0] sm:$0xff] %v258
                %v260 = vld [vmem:[%s148 + $0x338] sm:$0xff]
                %261 = vst [vmem:[%s149 + $0x1b8] sm:$0xff] %v260
                %v262 = vld [vmem:[%s148 + $0x340] sm:$0xff]
                %263 = vst [vmem:[%s149 + $0x1c0] sm:$0xff] %v262
                %v264 = vld [vmem:[%s148 + $0x348] sm:$0xff]
                %265 = vst [vmem:[%s149 + $0x1c8] sm:$0xff] %v264
                %v266 = vld [vmem:[%s148 + $0x350] sm:$0xff]
                %267 = vst [vmem:[%s149 + $0x1d0] sm:$0xff] %v266
                %v268 = vld [vmem:[%s148 + $0x358] sm:$0xff]
                %269 = vst [vmem:[%s149 + $0x1d8] sm:$0xff] %v268
                %v270 = vld [vmem:[%s148 + $0x360] sm:$0xff]
                %271 = vst [vmem:[%s149 + $0x1e0] sm:$0xff] %v270
                %v272 = vld [vmem:[%s148 + $0x368] sm:$0xff]
                %273 = vst [vmem:[%s149 + $0x1e8] sm:$0xff] %v272
                %v274 = vld [vmem:[%s148 + $0x370] sm:$0xff]
                %275 = vst [vmem:[%s149 + $0x1f0] sm:$0xff] %v274
                %v276 = vld [vmem:[%s148 + $0x378] sm:$0xff]
                %277 = vst [vmem:[%s149 + $0x1f8] sm:$0xff] %v276
                %v278 = vld [vmem:[%s148 + $0x400] sm:$0xff]
                %279 = vst [vmem:[%s149 + $0x200] sm:$0xff] %v278
                %v280 = vld [vmem:[%s148 + $0x408] sm:$0xff]
                %281 = vst [vmem:[%s149 + $0x208] sm:$0xff] %v280
                %v282 = vld [vmem:[%s148 + $0x410] sm:$0xff]
                %283 = vst [vmem:[%s149 + $0x210] sm:$0xff] %v282
                %v284 = vld [vmem:[%s148 + $0x418] sm:$0xff]
                %285 = vst [vmem:[%s149 + $0x218] sm:$0xff] %v284
                %v286 = vld [vmem:[%s148 + $0x420] sm:$0xff]
                %287 = vst [vmem:[%s149 + $0x220] sm:$0xff] %v286
                %v288 = vld [vmem:[%s148 + $0x428] sm:$0xff]
                %289 = vst [vmem:[%s149 + $0x228] sm:$0xff] %v288
                %v290 = vld [vmem:[%s148 + $0x430] sm:$0xff]
                %291 = vst [vmem:[%s149 + $0x230] sm:$0xff] %v290
                %v292 = vld [vmem:[%s148 + $0x438] sm:$0xff]
                %293 = vst [vmem:[%s149 + $0x238] sm:$0xff] %v292
                %v294 = vld [vmem:[%s148 + $0x440] sm:$0xff]
                %295 = vst [vmem:[%s149 + $0x240] sm:$0xff] %v294
                %v296 = vld [vmem:[%s148 + $0x448] sm:$0xff]
                %297 = vst [vmem:[%s149 + $0x248] sm:$0xff] %v296
                %v298 = vld [vmem:[%s148 + $0x450] sm:$0xff]
                %299 = vst [vmem:[%s149 + $0x250] sm:$0xff] %v298
                %v300 = vld [vmem:[%s148 + $0x458] sm:$0xff]
                %301 = vst [vmem:[%s149 + $0x258] sm:$0xff] %v300
                %v302 = vld [vmem:[%s148 + $0x460] sm:$0xff]
                %303 = vst [vmem:[%s149 + $0x260] sm:$0xff] %v302
                %v304 = vld [vmem:[%s148 + $0x468] sm:$0xff]
                %305 = vst [vmem:[%s149 + $0x268] sm:$0xff] %v304
                %v306 = vld [vmem:[%s148 + $0x470] sm:$0xff]
                %307 = vst [vmem:[%s149 + $0x270] sm:$0xff] %v306
                %v308 = vld [vmem:[%s148 + $0x478] sm:$0xff]
                %309 = vst [vmem:[%s149 + $0x278] sm:$0xff] %v308
                %v310 = vld [vmem:[%s148 + $0x500] sm:$0xff]
                %311 = vst [vmem:[%s149 + $0x280] sm:$0xff] %v310
                %v312 = vld [vmem:[%s148 + $0x508] sm:$0xff]
                %313 = vst [vmem:[%s149 + $0x288] sm:$0xff] %v312
                %v314 = vld [vmem:[%s148 + $0x510] sm:$0xff]
                %315 = vst [vmem:[%s149 + $0x290] sm:$0xff] %v314
                %v316 = vld [vmem:[%s148 + $0x518] sm:$0xff]
                %317 = vst [vmem:[%s149 + $0x298] sm:$0xff] %v316
                %v318 = vld [vmem:[%s148 + $0x520] sm:$0xff]
                %319 = vst [vmem:[%s149 + $0x2a0] sm:$0xff] %v318
                %v320 = vld [vmem:[%s148 + $0x528] sm:$0xff]
                %321 = vst [vmem:[%s149 + $0x2a8] sm:$0xff] %v320
                %v322 = vld [vmem:[%s148 + $0x530] sm:$0xff]
                %323 = vst [vmem:[%s149 + $0x2b0] sm:$0xff] %v322
                %v324 = vld [vmem:[%s148 + $0x538] sm:$0xff]
                %325 = vst [vmem:[%s149 + $0x2b8] sm:$0xff] %v324
                %v326 = vld [vmem:[%s148 + $0x540] sm:$0xff]
                %327 = vst [vmem:[%s149 + $0x2c0] sm:$0xff] %v326
                %v328 = vld [vmem:[%s148 + $0x548] sm:$0xff]
                %329 = vst [vmem:[%s149 + $0x2c8] sm:$0xff] %v328
                %v330 = vld [vmem:[%s148 + $0x550] sm:$0xff]
                %331 = vst [vmem:[%s149 + $0x2d0] sm:$0xff] %v330
                %v332 = vld [vmem:[%s148 + $0x558] sm:$0xff]
                %333 = vst [vmem:[%s149 + $0x2d8] sm:$0xff] %v332
                %v334 = vld [vmem:[%s148 + $0x560] sm:$0xff]
                %335 = vst [vmem:[%s149 + $0x2e0] sm:$0xff] %v334
                %v336 = vld [vmem:[%s148 + $0x568] sm:$0xff]
                %337 = vst [vmem:[%s149 + $0x2e8] sm:$0xff] %v336
                %v338 = vld [vmem:[%s148 + $0x570] sm:$0xff]
                %339 = vst [vmem:[%s149 + $0x2f0] sm:$0xff] %v338
                %v340 = vld [vmem:[%s148 + $0x578] sm:$0xff]
                %341 = vst [vmem:[%s149 + $0x2f8] sm:$0xff] %v340
              $region41: #{statistic_network_x2c1.3} parent=35 // loop_footer
                %s147 = sadd.s32 1, %s143
              $region42: #{statistic_network_x2c1.3} parent=35 // loop_footer_branch
                %142 = sbr.rel target = $region38
              $region43: #{statistic_network_x2c1.3} parent=35 // loop_exit
                _
            $region36: #{statistic_network_x2c1.3} parent=31 // pred_fallthru
              _
            // Predicated region
            $region44: #{statistic_network_x2c1.3} parent=31 // pred_check
              _
            $region45: #{statistic_network_x2c1.3} parent=31 // pred_check_branch
              %343 = sbr.rel target = $region47
            $region46: #{statistic_network_x2c1.3} parent=31 // pred_region
              _
            $region47: #{statistic_network_x2c1.3} parent=31 // pred_fallthru
              _
          $region32: #{statistic_network_x2c1.3} parent=27 // pred_fallthru
            _
          %344 = vnop
        $region28: #{statistic_network_x2c1.3} parent=23 // pred_fallthru
          _
      $region24: #{statistic_network_x2c1.3} parent=5 // pred_fallthru
        _
      %p345 = scmp.le.s32.totalorder 1, %s9
      %p346 = scmp.lt.s32.totalorder %s9, 3
      %p347 = pnand %p345, %p346
      %p348 = pneg %p347
      // Predicated region
      $region48: #{statistic_network_x2c1.3} parent=5 // pred_check
        _
      $region49: #{statistic_network_x2c1.3} parent=5 // pred_check_branch
        %350 = sbr.rel (%p347) target = $region51
      $region50: #{statistic_network_x2c1.3} parent=5 // pred_region
        %s351 = ssub.s32 %s9, 1
        %s352 = sand.u32 %s22, 1
        %s353 = sand.u32 %s22, 1
        %s354 = smul.addr %s353, 768
        %s355 = scalar_lea.vmem [#allocation2], %s354
        // Predicated region
        $region52: #{statistic_network_x2c1.3} parent=50 // pred_check
          %p356 = pneg %p35
        $region53: #{statistic_network_x2c1.3} parent=50 // pred_check_branch
          %358 = sbr.rel (%p356) target = $region55
        $region54: #{statistic_network_x2c1.3} parent=50 // pred_region
          _
        $region55: #{statistic_network_x2c1.3} parent=50 // pred_fallthru
          _
        %s359 = sand.u32 %s22, 1
        %s360 = sand.u32 %s22, 1
        %s361 = smul.addr %s360, 768
        %s362 = scalar_lea.vmem [#allocation2], %s361
        %p363 = pneg %p35
        %p364 = pneg %p32
        %p365 = pneg %p56
        %p366 = pneg %p53
        %p367 = pneg %p77
        %p368 = pneg %p74
        %p369 = pneg %p103
        %p370 = pneg %p100
        %s371 = smul.u32 32, %s14
        %p372 = scmp.lt.s32.totalorder %s371, 63
        %s373 = scalar_select %p372, %s371, 63
        %s374 = smul.addr %s373, 2
        %s375 = scalar_lea.vmem %s3, %s374
        %s376 = smul.u32 32, %s14
        %s377 = smul.u32 32, %s14
        %p378 = scmp.lt.s32.totalorder %s377, 63
        %s379 = scalar_select %p378, %s377, 63
        %s380 = smul.addr %s379, 2
        %s381 = scalar_lea.vmem %s3, %s380
        %s382 = smul.u32 32, %s14
        %v384 = vld [vmem:[%s1] sm:$0x3]
        %v385 = vld [vmem:[%s355] sm:$0xff]
        %v386 = vld [vmem:[%s355 + $0x8] sm:$0xff]
        %v387 = vld [vmem:[%s355 + $0x10] sm:$0xff]
        %v388 = vld [vmem:[%s355 + $0x18] sm:$0xff]
        %v389 = vld [vmem:[%s355 + $0x20] sm:$0xff]
        %v390 = vld [vmem:[%s355 + $0x28] sm:$0xff]
        %v391 = vld [vmem:[%s355 + $0x30] sm:$0xff]
        %v392 = vld [vmem:[%s355 + $0x38] sm:$0xff]
        %v393 = vld [vmem:[%s355 + $0x40] sm:$0xff]
        %v394 = vld [vmem:[%s355 + $0x48] sm:$0xff]
        %v395 = vld [vmem:[%s355 + $0x50] sm:$0xff]
        %v396 = vld [vmem:[%s355 + $0x58] sm:$0xff]
        %v397 = vld [vmem:[%s355 + $0x60] sm:$0xff]
        %v398 = vld [vmem:[%s355 + $0x68] sm:$0xff]
        %v399 = vld [vmem:[%s355 + $0x70] sm:$0xff]
        %v400 = vld [vmem:[%s355 + $0x78] sm:$0xff]
        %v401 = vld [vmem:[%s355 + $0x80] sm:$0xff]
        %v402 = vld [vmem:[%s355 + $0x88] sm:$0xff]
        %v403 = vld [vmem:[%s355 + $0x90] sm:$0xff]
        %v404 = vld [vmem:[%s355 + $0x98] sm:$0xff]
        %v405 = vld [vmem:[%s355 + $0xa0] sm:$0xff]
        %v406 = vld [vmem:[%s355 + $0xa8] sm:$0xff]
        %v407 = vld [vmem:[%s355 + $0xb0] sm:$0xff]
        %v408 = vld [vmem:[%s355 + $0xb8] sm:$0xff]
        %v409 = vld [vmem:[%s355 + $0xc0] sm:$0xff]
        %v410 = vld [vmem:[%s355 + $0xc8] sm:$0xff]
        %v411 = vld [vmem:[%s355 + $0xd0] sm:$0xff]
        %v412 = vld [vmem:[%s355 + $0xd8] sm:$0xff]
        %v413 = vld [vmem:[%s355 + $0xe0] sm:$0xff]
        %v414 = vld [vmem:[%s355 + $0xe8] sm:$0xff]
        %v415 = vld [vmem:[%s355 + $0xf0] sm:$0xff]
        %v416 = vld [vmem:[%s355 + $0xf8] sm:$0xff]
        %v417 = vld [vmem:[%s355 + $0x100] sm:$0xff]
        %v418 = vld [vmem:[%s355 + $0x108] sm:$0xff]
        %v419 = vld [vmem:[%s355 + $0x110] sm:$0xff]
        %v420 = vld [vmem:[%s355 + $0x118] sm:$0xff]
        %v421 = vld [vmem:[%s355 + $0x120] sm:$0xff]
        %v422 = vld [vmem:[%s355 + $0x128] sm:$0xff]
        %v423 = vld [vmem:[%s355 + $0x130] sm:$0xff]
        %v424 = vld [vmem:[%s355 + $0x138] sm:$0xff]
        %v425 = vld [vmem:[%s355 + $0x140] sm:$0xff]
        %v426 = vld [vmem:[%s355 + $0x148] sm:$0xff]
        %v427 = vld [vmem:[%s355 + $0x150] sm:$0xff]
        %v428 = vld [vmem:[%s355 + $0x158] sm:$0xff]
        %v429 = vld [vmem:[%s355 + $0x160] sm:$0xff]
        %v430 = vld [vmem:[%s355 + $0x168] sm:$0xff]
        %v431 = vld [vmem:[%s355 + $0x170] sm:$0xff]
        %v432 = vld [vmem:[%s355 + $0x178] sm:$0xff]
        %v433 = vld [vmem:[%s355 + $0x180] sm:$0xff]
        %v434 = vld [vmem:[%s355 + $0x188] sm:$0xff]
        %v435 = vld [vmem:[%s355 + $0x190] sm:$0xff]
        %v436 = vld [vmem:[%s355 + $0x198] sm:$0xff]
        %v437 = vld [vmem:[%s355 + $0x1a0] sm:$0xff]
        %v438 = vld [vmem:[%s355 + $0x1a8] sm:$0xff]
        %v439 = vld [vmem:[%s355 + $0x1b0] sm:$0xff]
        %v440 = vld [vmem:[%s355 + $0x1b8] sm:$0xff]
        %v441 = vld [vmem:[%s355 + $0x1c0] sm:$0xff]
        %v442 = vld [vmem:[%s355 + $0x1c8] sm:$0xff]
        %v443 = vld [vmem:[%s355 + $0x1d0] sm:$0xff]
        %v444 = vld [vmem:[%s355 + $0x1d8] sm:$0xff]
        %v445 = vld [vmem:[%s355 + $0x1e0] sm:$0xff]
        %v446 = vld [vmem:[%s355 + $0x1e8] sm:$0xff]
        %v447 = vld [vmem:[%s355 + $0x1f0] sm:$0xff]
        %v448 = vld [vmem:[%s355 + $0x1f8] sm:$0xff]
        %v449 = vld [vmem:[%s355 + $0x200] sm:$0xff]
        %v450 = vld [vmem:[%s355 + $0x208] sm:$0xff]
        %v451 = vld [vmem:[%s355 + $0x210] sm:$0xff]
        %v452 = vld [vmem:[%s355 + $0x218] sm:$0xff]
        %v453 = vld [vmem:[%s355 + $0x220] sm:$0xff]
        %v454 = vld [vmem:[%s355 + $0x228] sm:$0xff]
        %v455 = vld [vmem:[%s355 + $0x230] sm:$0xff]
        %v456 = vld [vmem:[%s355 + $0x238] sm:$0xff]
        %v457 = vld [vmem:[%s355 + $0x240] sm:$0xff]
        %v458 = vld [vmem:[%s355 + $0x248] sm:$0xff]
        %v459 = vld [vmem:[%s355 + $0x250] sm:$0xff]
        %v460 = vld [vmem:[%s355 + $0x258] sm:$0xff]
        %v461 = vld [vmem:[%s355 + $0x260] sm:$0xff]
        %v462 = vld [vmem:[%s355 + $0x268] sm:$0xff]
        %v463 = vld [vmem:[%s355 + $0x270] sm:$0xff]
        %v464 = vld [vmem:[%s355 + $0x278] sm:$0xff]
        %v465 = vld [vmem:[%s355 + $0x280] sm:$0xff]
        %v466 = vld [vmem:[%s355 + $0x288] sm:$0xff]
        %v467 = vld [vmem:[%s355 + $0x290] sm:$0xff]
        %v468 = vld [vmem:[%s355 + $0x298] sm:$0xff]
        %v469 = vld [vmem:[%s355 + $0x2a0] sm:$0xff]
        %v470 = vld [vmem:[%s355 + $0x2a8] sm:$0xff]
        %v471 = vld [vmem:[%s355 + $0x2b0] sm:$0xff]
        %v472 = vld [vmem:[%s355 + $0x2b8] sm:$0xff]
        %v473 = vld [vmem:[%s355 + $0x2c0] sm:$0xff]
        %v474 = vld [vmem:[%s355 + $0x2c8] sm:$0xff]
        %v475 = vld [vmem:[%s355 + $0x2d0] sm:$0xff]
        %v476 = vld [vmem:[%s355 + $0x2d8] sm:$0xff]
        %v477 = vld [vmem:[%s355 + $0x2e0] sm:$0xff]
        %v478 = vld [vmem:[%s355 + $0x2e8] sm:$0xff]
        %v479 = vld [vmem:[%s355 + $0x2f0] sm:$0xff]
        %v480 = vld [vmem:[%s355 + $0x2f8] sm:$0xff]
        %v481 = vld [vmem:[%s2] sm:$0xf]
        %483 = vset.pattern.permute.xlu0 0
        %484 = vperm.xlu0 %483, %v481
        %v485 = vpop.permute.xlu0 %484
        %v583 = vunpack.c.l.b16 %v385
        %v584 = vunpack.c.h.b16 %v385
        %v585 = vunpack.c.l.b16 %v386
        %v586 = vunpack.c.h.b16 %v386
        %v587 = vunpack.c.l.b16 %v387
        %v588 = vunpack.c.h.b16 %v387
        %v589 = vunpack.c.l.b16 %v388
        %v590 = vunpack.c.h.b16 %v388
        %v591 = vunpack.c.l.b16 %v389
        %v592 = vunpack.c.h.b16 %v389
        %v593 = vunpack.c.l.b16 %v390
        %v594 = vunpack.c.h.b16 %v390
        %v595 = vunpack.c.l.b16 %v391
        %v596 = vunpack.c.h.b16 %v391
        %v597 = vunpack.c.l.b16 %v392
        %v598 = vunpack.c.h.b16 %v392
        %v599 = vunpack.c.l.b16 %v393
        %v600 = vunpack.c.h.b16 %v393
        %v601 = vunpack.c.l.b16 %v394
        %v602 = vunpack.c.h.b16 %v394
        %v603 = vunpack.c.l.b16 %v395
        %v604 = vunpack.c.h.b16 %v395
        %v605 = vunpack.c.l.b16 %v396
        %v606 = vunpack.c.h.b16 %v396
        %v607 = vunpack.c.l.b16 %v397
        %v608 = vunpack.c.h.b16 %v397
        %v609 = vunpack.c.l.b16 %v398
        %v610 = vunpack.c.h.b16 %v398
        %v611 = vunpack.c.l.b16 %v399
        %v612 = vunpack.c.h.b16 %v399
        %v613 = vunpack.c.l.b16 %v400
        %v614 = vunpack.c.h.b16 %v400
        %v615 = vunpack.c.l.b16 %v401
        %v616 = vunpack.c.h.b16 %v401
        %v617 = vunpack.c.l.b16 %v402
        %v618 = vunpack.c.h.b16 %v402
        %v619 = vunpack.c.l.b16 %v403
        %v620 = vunpack.c.h.b16 %v403
        %v621 = vunpack.c.l.b16 %v404
        %v622 = vunpack.c.h.b16 %v404
        %v623 = vunpack.c.l.b16 %v405
        %v624 = vunpack.c.h.b16 %v405
        %v625 = vunpack.c.l.b16 %v406
        %v626 = vunpack.c.h.b16 %v406
        %v627 = vunpack.c.l.b16 %v407
        %v628 = vunpack.c.h.b16 %v407
        %v629 = vunpack.c.l.b16 %v408
        %v630 = vunpack.c.h.b16 %v408
        %v631 = vunpack.c.l.b16 %v409
        %v632 = vunpack.c.h.b16 %v409
        %v633 = vunpack.c.l.b16 %v410
        %v634 = vunpack.c.h.b16 %v410
        %v635 = vunpack.c.l.b16 %v411
        %v636 = vunpack.c.h.b16 %v411
        %v637 = vunpack.c.l.b16 %v412
        %v638 = vunpack.c.h.b16 %v412
        %v639 = vunpack.c.l.b16 %v413
        %v640 = vunpack.c.h.b16 %v413
        %v641 = vunpack.c.l.b16 %v414
        %v642 = vunpack.c.h.b16 %v414
        %v643 = vunpack.c.l.b16 %v415
        %v644 = vunpack.c.h.b16 %v415
        %v645 = vunpack.c.l.b16 %v416
        %v646 = vunpack.c.h.b16 %v416
        %v647 = vunpack.c.l.b16 %v417
        %v648 = vunpack.c.h.b16 %v417
        %v649 = vunpack.c.l.b16 %v418
        %v650 = vunpack.c.h.b16 %v418
        %v651 = vunpack.c.l.b16 %v419
        %v652 = vunpack.c.h.b16 %v419
        %v653 = vunpack.c.l.b16 %v420
        %v654 = vunpack.c.h.b16 %v420
        %v655 = vunpack.c.l.b16 %v421
        %v656 = vunpack.c.h.b16 %v421
        %v657 = vunpack.c.l.b16 %v422
        %v658 = vunpack.c.h.b16 %v422
        %v659 = vunpack.c.l.b16 %v423
        %v660 = vunpack.c.h.b16 %v423
        %v661 = vunpack.c.l.b16 %v424
        %v662 = vunpack.c.h.b16 %v424
        %v663 = vunpack.c.l.b16 %v425
        %v664 = vunpack.c.h.b16 %v425
        %v665 = vunpack.c.l.b16 %v426
        %v666 = vunpack.c.h.b16 %v426
        %v667 = vunpack.c.l.b16 %v427
        %v668 = vunpack.c.h.b16 %v427
        %v669 = vunpack.c.l.b16 %v428
        %v670 = vunpack.c.h.b16 %v428
        %v671 = vunpack.c.l.b16 %v429
        %v672 = vunpack.c.h.b16 %v429
        %v673 = vunpack.c.l.b16 %v430
        %v674 = vunpack.c.h.b16 %v430
        %v675 = vunpack.c.l.b16 %v431
        %v676 = vunpack.c.h.b16 %v431
        %v677 = vunpack.c.l.b16 %v432
        %v678 = vunpack.c.h.b16 %v432
        %v679 = vunpack.c.l.b16 %v433
        %v680 = vunpack.c.h.b16 %v433
        %v681 = vunpack.c.l.b16 %v434
        %v682 = vunpack.c.h.b16 %v434
        %v683 = vunpack.c.l.b16 %v435
        %v684 = vunpack.c.h.b16 %v435
        %v685 = vunpack.c.l.b16 %v436
        %v686 = vunpack.c.h.b16 %v436
        %v687 = vunpack.c.l.b16 %v437
        %v688 = vunpack.c.h.b16 %v437
        %v689 = vunpack.c.l.b16 %v438
        %v690 = vunpack.c.h.b16 %v438
        %v691 = vunpack.c.l.b16 %v439
        %v692 = vunpack.c.h.b16 %v439
        %v693 = vunpack.c.l.b16 %v440
        %v694 = vunpack.c.h.b16 %v440
        %v695 = vunpack.c.l.b16 %v441
        %v696 = vunpack.c.h.b16 %v441
        %v697 = vunpack.c.l.b16 %v442
        %v698 = vunpack.c.h.b16 %v442
        %v699 = vunpack.c.l.b16 %v443
        %v700 = vunpack.c.h.b16 %v443
        %v701 = vunpack.c.l.b16 %v444
        %v702 = vunpack.c.h.b16 %v444
        %v703 = vunpack.c.l.b16 %v445
        %v704 = vunpack.c.h.b16 %v445
        %v705 = vunpack.c.l.b16 %v446
        %v706 = vunpack.c.h.b16 %v446
        %v707 = vunpack.c.l.b16 %v447
        %v708 = vunpack.c.h.b16 %v447
        %v709 = vunpack.c.l.b16 %v448
        %v710 = vunpack.c.h.b16 %v448
        %v711 = vunpack.c.l.b16 %v449
        %v712 = vunpack.c.h.b16 %v449
        %v713 = vunpack.c.l.b16 %v450
        %v714 = vunpack.c.h.b16 %v450
        %v715 = vunpack.c.l.b16 %v451
        %v716 = vunpack.c.h.b16 %v451
        %v717 = vunpack.c.l.b16 %v452
        %v718 = vunpack.c.h.b16 %v452
        %v719 = vunpack.c.l.b16 %v453
        %v720 = vunpack.c.h.b16 %v453
        %v721 = vunpack.c.l.b16 %v454
        %v722 = vunpack.c.h.b16 %v454
        %v723 = vunpack.c.l.b16 %v455
        %v724 = vunpack.c.h.b16 %v455
        %v725 = vunpack.c.l.b16 %v456
        %v726 = vunpack.c.h.b16 %v456
        %v727 = vunpack.c.l.b16 %v457
        %v728 = vunpack.c.h.b16 %v457
        %v729 = vunpack.c.l.b16 %v458
        %v730 = vunpack.c.h.b16 %v458
        %v731 = vunpack.c.l.b16 %v459
        %v732 = vunpack.c.h.b16 %v459
        %v733 = vunpack.c.l.b16 %v460
        %v734 = vunpack.c.h.b16 %v460
        %v735 = vunpack.c.l.b16 %v461
        %v736 = vunpack.c.h.b16 %v461
        %v737 = vunpack.c.l.b16 %v462
        %v738 = vunpack.c.h.b16 %v462
        %v739 = vunpack.c.l.b16 %v463
        %v740 = vunpack.c.h.b16 %v463
        %v741 = vunpack.c.l.b16 %v464
        %v742 = vunpack.c.h.b16 %v464
        %v743 = vunpack.c.l.b16 %v465
        %v744 = vunpack.c.h.b16 %v465
        %v745 = vunpack.c.l.b16 %v466
        %v746 = vunpack.c.h.b16 %v466
        %v747 = vunpack.c.l.b16 %v467
        %v748 = vunpack.c.h.b16 %v467
        %v749 = vunpack.c.l.b16 %v468
        %v750 = vunpack.c.h.b16 %v468
        %v751 = vunpack.c.l.b16 %v469
        %v752 = vunpack.c.h.b16 %v469
        %v753 = vunpack.c.l.b16 %v470
        %v754 = vunpack.c.h.b16 %v470
        %v755 = vunpack.c.l.b16 %v471
        %v756 = vunpack.c.h.b16 %v471
        %v757 = vunpack.c.l.b16 %v472
        %v758 = vunpack.c.h.b16 %v472
        %v759 = vunpack.c.l.b16 %v473
        %v760 = vunpack.c.h.b16 %v473
        %v761 = vunpack.c.l.b16 %v474
        %v762 = vunpack.c.h.b16 %v474
        %v763 = vunpack.c.l.b16 %v475
        %v764 = vunpack.c.h.b16 %v475
        %v765 = vunpack.c.l.b16 %v476
        %v766 = vunpack.c.h.b16 %v476
        %v767 = vunpack.c.l.b16 %v477
        %v768 = vunpack.c.h.b16 %v477
        %v769 = vunpack.c.l.b16 %v478
        %v770 = vunpack.c.h.b16 %v478
        %v771 = vunpack.c.l.b16 %v479
        %v772 = vunpack.c.h.b16 %v479
        %v773 = vunpack.c.l.b16 %v480
        %v774 = vunpack.c.h.b16 %v480
        %v775 = vpack.c.b16 %v615, %v583
        %v776 = vpack.c.b16 %v616, %v584
        %v777 = vpack.c.b16 %v617, %v585
        %v778 = vpack.c.b16 %v618, %v586
        %v779 = vpack.c.b16 %v619, %v587
        %v780 = vpack.c.b16 %v620, %v588
        %v781 = vpack.c.b16 %v621, %v589
        %v782 = vpack.c.b16 %v622, %v590
        %v783 = vpack.c.b16 %v623, %v591
        %v784 = vpack.c.b16 %v624, %v592
        %v785 = vpack.c.b16 %v625, %v593
        %v786 = vpack.c.b16 %v626, %v594
        %v787 = vpack.c.b16 %v627, %v595
        %v788 = vpack.c.b16 %v628, %v596
        %v789 = vpack.c.b16 %v629, %v597
        %v790 = vpack.c.b16 %v630, %v598
        %v791 = vpack.c.b16 %v631, %v599
        %v792 = vpack.c.b16 %v632, %v600
        %v793 = vpack.c.b16 %v633, %v601
        %v794 = vpack.c.b16 %v634, %v602
        %v795 = vpack.c.b16 %v635, %v603
        %v796 = vpack.c.b16 %v636, %v604
        %v797 = vpack.c.b16 %v637, %v605
        %v798 = vpack.c.b16 %v638, %v606
        %v799 = vpack.c.b16 %v639, %v607
        %v800 = vpack.c.b16 %v640, %v608
        %v801 = vpack.c.b16 %v641, %v609
        %v802 = vpack.c.b16 %v642, %v610
        %v803 = vpack.c.b16 %v643, %v611
        %v804 = vpack.c.b16 %v644, %v612
        %v805 = vpack.c.b16 %v645, %v613
        %v806 = vpack.c.b16 %v646, %v614
        %v807 = vpack.c.b16 %v679, %v647
        %v808 = vpack.c.b16 %v680, %v648
        %v809 = vpack.c.b16 %v681, %v649
        %v810 = vpack.c.b16 %v682, %v650
        %v811 = vpack.c.b16 %v683, %v651
        %v812 = vpack.c.b16 %v684, %v652
        %v813 = vpack.c.b16 %v685, %v653
        %v814 = vpack.c.b16 %v686, %v654
        %v815 = vpack.c.b16 %v687, %v655
        %v816 = vpack.c.b16 %v688, %v656
        %v817 = vpack.c.b16 %v689, %v657
        %v818 = vpack.c.b16 %v690, %v658
        %v819 = vpack.c.b16 %v691, %v659
        %v820 = vpack.c.b16 %v692, %v660
        %v821 = vpack.c.b16 %v693, %v661
        %v822 = vpack.c.b16 %v694, %v662
        %v823 = vpack.c.b16 %v695, %v663
        %v824 = vpack.c.b16 %v696, %v664
        %v825 = vpack.c.b16 %v697, %v665
        %v826 = vpack.c.b16 %v698, %v666
        %v827 = vpack.c.b16 %v699, %v667
        %v828 = vpack.c.b16 %v700, %v668
        %v829 = vpack.c.b16 %v701, %v669
        %v830 = vpack.c.b16 %v702, %v670
        %v831 = vpack.c.b16 %v703, %v671
        %v832 = vpack.c.b16 %v704, %v672
        %v833 = vpack.c.b16 %v705, %v673
        %v834 = vpack.c.b16 %v706, %v674
        %v835 = vpack.c.b16 %v707, %v675
        %v836 = vpack.c.b16 %v708, %v676
        %v837 = vpack.c.b16 %v709, %v677
        %v838 = vpack.c.b16 %v710, %v678
        %v839 = vpack.c.b16 %v743, %v711
        %v840 = vpack.c.b16 %v744, %v712
        %v841 = vpack.c.b16 %v745, %v713
        %v842 = vpack.c.b16 %v746, %v714
        %v843 = vpack.c.b16 %v747, %v715
        %v844 = vpack.c.b16 %v748, %v716
        %v845 = vpack.c.b16 %v749, %v717
        %v846 = vpack.c.b16 %v750, %v718
        %v847 = vpack.c.b16 %v751, %v719
        %v848 = vpack.c.b16 %v752, %v720
        %v849 = vpack.c.b16 %v753, %v721
        %v850 = vpack.c.b16 %v754, %v722
        %v851 = vpack.c.b16 %v755, %v723
        %v852 = vpack.c.b16 %v756, %v724
        %v853 = vpack.c.b16 %v757, %v725
        %v854 = vpack.c.b16 %v758, %v726
        %v855 = vpack.c.b16 %v759, %v727
        %v856 = vpack.c.b16 %v760, %v728
        %v857 = vpack.c.b16 %v761, %v729
        %v858 = vpack.c.b16 %v762, %v730
        %v859 = vpack.c.b16 %v763, %v731
        %v860 = vpack.c.b16 %v764, %v732
        %v861 = vpack.c.b16 %v765, %v733
        %v862 = vpack.c.b16 %v766, %v734
        %v863 = vpack.c.b16 %v767, %v735
        %v864 = vpack.c.b16 %v768, %v736
        %v865 = vpack.c.b16 %v769, %v737
        %v866 = vpack.c.b16 %v770, %v738
        %v867 = vpack.c.b16 %v771, %v739
        %v868 = vpack.c.b16 %v772, %v740
        %v869 = vpack.c.b16 %v773, %v741
        %v870 = vpack.c.b16 %v774, %v742
        %vm967 = vcmask 392192
        %v969 = vsel %vm967, %v384, 0
        %971 = vmatprep.subr.bf16.mxu0 %v776
        %972 = vmatpush1.bf16.msra.mxu0 %v775
        %973 = vmatprep.subr.bf16.mxu0 %v808
        %974 = vmatpush1.bf16.msra.mxu0 %v807
        %975 = vmatprep.subr.bf16.mxu0 %v840
        %976 = vmatpush1.bf16.msra.mxu0 %v839
        %977 = vmatprep.subr.bf16.mxu0 0
        %978 = vmatpush1.bf16.msra.mxu0 0
        %979 = vmatprep.subr.bf16.mxu0 0
        %980 = vmatpush1.bf16.msra.mxu0 0
        %981 = vmatprep.subr.bf16.mxu0 0
        %982 = vmatpush1.bf16.msra.mxu0 0
        %983 = vmatprep.subr.bf16.mxu0 0
        %984 = vmatpush1.bf16.msra.mxu0 0
        %985 = vmatprep.subr.bf16.mxu0 0
        %986 = vmatpush1.bf16.msra.mxu0 0
        %987 = vmatprep.subr.bf16.mxu0 0
        %988 = vmatpush1.bf16.msra.mxu0 0
        %989 = vmatprep.subr.bf16.mxu0 0
        %990 = vmatpush1.bf16.msra.mxu0 0
        %991 = vmatprep.subr.bf16.mxu0 0
        %992 = vmatpush1.bf16.msra.mxu0 0
        %993 = vmatprep.subr.bf16.mxu0 0
        %994 = vmatpush1.bf16.msra.mxu0 0
        %995 = vmatprep.subr.bf16.mxu0 0
        %996 = vmatpush1.bf16.msra.mxu0 0
        %997 = vmatprep.subr.bf16.mxu0 0
        %998 = vmatpush1.bf16.msra.mxu0 0
        %999 = vmatprep.subr.bf16.mxu0 0
        %1000 = vmatpush1.bf16.msra.mxu0 0
        %1001 = vmatprep.subr.bf16.mxu0 0
        %1002 = vmatpush1.bf16.msra.mxu0 0
        %1003 = vmatprep.mubr.bf16.mxu0 0
        %1004 = vmatmul.mubr.bf16.gmra.mrb[0].mxu0 %v969
        %v1005 = vpop.f32.mrb[0].mxu0
        %v1006 = vadd.f32 %v485, %v1005
        %v1007 = vpop.f32.mrb[0].mxu0
        %v1008 = vadd.f32 %v485, %v1007
        %v1009 = vpop.f32.mrb[0].mxu0
        %v1010 = vpop.f32.mrb[0].mxu0
        %1011 = vdwg.mxu0
        %1012 = vmatprep.subr.bf16.mxu0 %v778
        %1013 = vmatpush1.bf16.msra.mxu0 %v777
        %1014 = vmatprep.subr.bf16.mxu0 %v810
        %1015 = vmatpush1.bf16.msra.mxu0 %v809
        %1016 = vmatprep.subr.bf16.mxu0 %v842
        %1017 = vmatpush1.bf16.msra.mxu0 %v841
        %1018 = vmatprep.subr.bf16.mxu0 0
        %1019 = vmatpush1.bf16.msra.mxu0 0
        %1020 = vmatprep.subr.bf16.mxu0 0
        %1021 = vmatpush1.bf16.msra.mxu0 0
        %1022 = vmatprep.subr.bf16.mxu0 0
        %1023 = vmatpush1.bf16.msra.mxu0 0
        %1024 = vmatprep.subr.bf16.mxu0 0
        %1025 = vmatpush1.bf16.msra.mxu0 0
        %1026 = vmatprep.subr.bf16.mxu0 0
        %1027 = vmatpush1.bf16.msra.mxu0 0
        %1028 = vmatprep.subr.bf16.mxu0 0
        %1029 = vmatpush1.bf16.msra.mxu0 0
        %1030 = vmatprep.subr.bf16.mxu0 0
        %1031 = vmatpush1.bf16.msra.mxu0 0
        %1032 = vmatprep.subr.bf16.mxu0 0
        %1033 = vmatpush1.bf16.msra.mxu0 0
        %1034 = vmatprep.subr.bf16.mxu0 0
        %1035 = vmatpush1.bf16.msra.mxu0 0
        %1036 = vmatprep.subr.bf16.mxu0 0
        %1037 = vmatpush1.bf16.msra.mxu0 0
        %1038 = vmatprep.subr.bf16.mxu0 0
        %1039 = vmatpush1.bf16.msra.mxu0 0
        %1040 = vmatprep.subr.bf16.mxu0 0
        %1041 = vmatpush1.bf16.msra.mxu0 0
        %1042 = vmatprep.subr.bf16.mxu0 0
        %1043 = vmatpush1.bf16.msra.mxu0 0
        %1044 = vmatprep.mubr.bf16.mxu0 0
        %1045 = vmatmul.mubr.bf16.gmra.mrb[0].mxu0 %v969
        %v1046 = vpop.f32.mrb[0].mxu0
        %v1047 = vadd.f32 %v485, %v1046
        %v1048 = vpop.f32.mrb[0].mxu0
        %v1049 = vadd.f32 %v485, %v1048
        %v1050 = vpop.f32.mrb[0].mxu0
        %v1051 = vpop.f32.mrb[0].mxu0
        %1052 = vdwg.mxu0
        %1053 = vmatprep.subr.bf16.mxu0 %v780
        %1054 = vmatpush1.bf16.msra.mxu0 %v779
        %1055 = vmatprep.subr.bf16.mxu0 %v812
        %1056 = vmatpush1.bf16.msra.mxu0 %v811
        %1057 = vmatprep.subr.bf16.mxu0 %v844
        %1058 = vmatpush1.bf16.msra.mxu0 %v843
        %1059 = vmatprep.subr.bf16.mxu0 0
        %1060 = vmatpush1.bf16.msra.mxu0 0
        %1061 = vmatprep.subr.bf16.mxu0 0
        %1062 = vmatpush1.bf16.msra.mxu0 0
        %1063 = vmatprep.subr.bf16.mxu0 0
        %1064 = vmatpush1.bf16.msra.mxu0 0
        %1065 = vmatprep.subr.bf16.mxu0 0
        %1066 = vmatpush1.bf16.msra.mxu0 0
        %1067 = vmatprep.subr.bf16.mxu0 0
        %1068 = vmatpush1.bf16.msra.mxu0 0
        %1069 = vmatprep.subr.bf16.mxu0 0
        %1070 = vmatpush1.bf16.msra.mxu0 0
        %1071 = vmatprep.subr.bf16.mxu0 0
        %1072 = vmatpush1.bf16.msra.mxu0 0
        %1073 = vmatprep.subr.bf16.mxu0 0
        %1074 = vmatpush1.bf16.msra.mxu0 0
        %1075 = vmatprep.subr.bf16.mxu0 0
        %1076 = vmatpush1.bf16.msra.mxu0 0
        %1077 = vmatprep.subr.bf16.mxu0 0
        %1078 = vmatpush1.bf16.msra.mxu0 0
        %1079 = vmatprep.subr.bf16.mxu0 0
        %1080 = vmatpush1.bf16.msra.mxu0 0
        %1081 = vmatprep.subr.bf16.mxu0 0
        %1082 = vmatpush1.bf16.msra.mxu0 0
        %1083 = vmatprep.subr.bf16.mxu0 0
        %1084 = vmatpush1.bf16.msra.mxu0 0
        %1085 = vmatprep.mubr.bf16.mxu0 0
        %1086 = vmatmul.mubr.bf16.gmra.mrb[0].mxu0 %v969
        %v1087 = vpop.f32.mrb[0].mxu0
        %v1088 = vadd.f32 %v485, %v1087
        %v1089 = vpop.f32.mrb[0].mxu0
        %v1090 = vadd.f32 %v485, %v1089
        %v1091 = vpop.f32.mrb[0].mxu0
        %v1092 = vpop.f32.mrb[0].mxu0
        %1093 = vdwg.mxu0
        %1094 = vmatprep.subr.bf16.mxu0 %v782
        %1095 = vmatpush1.bf16.msra.mxu0 %v781
        %1096 = vmatprep.subr.bf16.mxu0 %v814
        %1097 = vmatpush1.bf16.msra.mxu0 %v813
        %1098 = vmatprep.subr.bf16.mxu0 %v846
        %1099 = vmatpush1.bf16.msra.mxu0 %v845
        %1100 = vmatprep.subr.bf16.mxu0 0
        %1101 = vmatpush1.bf16.msra.mxu0 0
        %1102 = vmatprep.subr.bf16.mxu0 0
        %1103 = vmatpush1.bf16.msra.mxu0 0
        %1104 = vmatprep.subr.bf16.mxu0 0
        %1105 = vmatpush1.bf16.msra.mxu0 0
        %1106 = vmatprep.subr.bf16.mxu0 0
        %1107 = vmatpush1.bf16.msra.mxu0 0
        %1108 = vmatprep.subr.bf16.mxu0 0
        %1109 = vmatpush1.bf16.msra.mxu0 0
        %1110 = vmatprep.subr.bf16.mxu0 0
        %1111 = vmatpush1.bf16.msra.mxu0 0
        %1112 = vmatprep.subr.bf16.mxu0 0
        %1113 = vmatpush1.bf16.msra.mxu0 0
        %1114 = vmatprep.subr.bf16.mxu0 0
        %1115 = vmatpush1.bf16.msra.mxu0 0
        %1116 = vmatprep.subr.bf16.mxu0 0
        %1117 = vmatpush1.bf16.msra.mxu0 0
        %1118 = vmatprep.subr.bf16.mxu0 0
        %1119 = vmatpush1.bf16.msra.mxu0 0
        %1120 = vmatprep.subr.bf16.mxu0 0
        %1121 = vmatpush1.bf16.msra.mxu0 0
        %1122 = vmatprep.subr.bf16.mxu0 0
        %1123 = vmatpush1.bf16.msra.mxu0 0
        %1124 = vmatprep.subr.bf16.mxu0 0
        %1125 = vmatpush1.bf16.msra.mxu0 0
        %1126 = vmatprep.mubr.bf16.mxu0 0
        %1127 = vmatmul.mubr.bf16.gmra.mrb[0].mxu0 %v969
        %v1128 = vpop.f32.mrb[0].mxu0
        %v1129 = vadd.f32 %v485, %v1128
        %v1130 = vpop.f32.mrb[0].mxu0
        %v1131 = vadd.f32 %v485, %v1130
        %v1132 = vpop.f32.mrb[0].mxu0
        %v1133 = vpop.f32.mrb[0].mxu0
        %1134 = vdwg.mxu0
        %1135 = vmatprep.subr.bf16.mxu0 %v784
        %1136 = vmatpush1.bf16.msra.mxu0 %v783
        %1137 = vmatprep.subr.bf16.mxu0 %v816
        %1138 = vmatpush1.bf16.msra.mxu0 %v815
        %1139 = vmatprep.subr.bf16.mxu0 %v848
        %1140 = vmatpush1.bf16.msra.mxu0 %v847
        %1141 = vmatprep.subr.bf16.mxu0 0
        %1142 = vmatpush1.bf16.msra.mxu0 0
        %1143 = vmatprep.subr.bf16.mxu0 0
        %1144 = vmatpush1.bf16.msra.mxu0 0
        %1145 = vmatprep.subr.bf16.mxu0 0
        %1146 = vmatpush1.bf16.msra.mxu0 0
        %1147 = vmatprep.subr.bf16.mxu0 0
        %1148 = vmatpush1.bf16.msra.mxu0 0
        %1149 = vmatprep.subr.bf16.mxu0 0
        %1150 = vmatpush1.bf16.msra.mxu0 0
        %1151 = vmatprep.subr.bf16.mxu0 0
        %1152 = vmatpush1.bf16.msra.mxu0 0
        %1153 = vmatprep.subr.bf16.mxu0 0
        %1154 = vmatpush1.bf16.msra.mxu0 0
        %1155 = vmatprep.subr.bf16.mxu0 0
        %1156 = vmatpush1.bf16.msra.mxu0 0
        %1157 = vmatprep.subr.bf16.mxu0 0
        %1158 = vmatpush1.bf16.msra.mxu0 0
        %1159 = vmatprep.subr.bf16.mxu0 0
        %1160 = vmatpush1.bf16.msra.mxu0 0
        %1161 = vmatprep.subr.bf16.mxu0 0
        %1162 = vmatpush1.bf16.msra.mxu0 0
        %1163 = vmatprep.subr.bf16.mxu0 0
        %1164 = vmatpush1.bf16.msra.mxu0 0
        %1165 = vmatprep.subr.bf16.mxu0 0
        %1166 = vmatpush1.bf16.msra.mxu0 0
        %1167 = vmatprep.mubr.bf16.mxu0 0
        %1168 = vmatmul.mubr.bf16.gmra.mrb[0].mxu0 %v969
        %v1169 = vpop.f32.mrb[0].mxu0
        %v1170 = vadd.f32 %v485, %v1169
        %v1171 = vpop.f32.mrb[0].mxu0
        %v1172 = vadd.f32 %v485, %v1171
        %v1173 = vpop.f32.mrb[0].mxu0
        %v1174 = vpop.f32.mrb[0].mxu0
        %1175 = vdwg.mxu0
        %1176 = vmatprep.subr.bf16.mxu0 %v786
        %1177 = vmatpush1.bf16.msra.mxu0 %v785
        %1178 = vmatprep.subr.bf16.mxu0 %v818
        %1179 = vmatpush1.bf16.msra.mxu0 %v817
        %1180 = vmatprep.subr.bf16.mxu0 %v850
        %1181 = vmatpush1.bf16.msra.mxu0 %v849
        %1182 = vmatprep.subr.bf16.mxu0 0
        %1183 = vmatpush1.bf16.msra.mxu0 0
        %1184 = vmatprep.subr.bf16.mxu0 0
        %1185 = vmatpush1.bf16.msra.mxu0 0
        %1186 = vmatprep.subr.bf16.mxu0 0
        %1187 = vmatpush1.bf16.msra.mxu0 0
        %1188 = vmatprep.subr.bf16.mxu0 0
        %1189 = vmatpush1.bf16.msra.mxu0 0
        %1190 = vmatprep.subr.bf16.mxu0 0
        %1191 = vmatpush1.bf16.msra.mxu0 0
        %1192 = vmatprep.subr.bf16.mxu0 0
        %1193 = vmatpush1.bf16.msra.mxu0 0
        %1194 = vmatprep.subr.bf16.mxu0 0
        %1195 = vmatpush1.bf16.msra.mxu0 0
        %1196 = vmatprep.subr.bf16.mxu0 0
        %1197 = vmatpush1.bf16.msra.mxu0 0
        %1198 = vmatprep.subr.bf16.mxu0 0
        %1199 = vmatpush1.bf16.msra.mxu0 0
        %1200 = vmatprep.subr.bf16.mxu0 0
        %1201 = vmatpush1.bf16.msra.mxu0 0
        %1202 = vmatprep.subr.bf16.mxu0 0
        %1203 = vmatpush1.bf16.msra.mxu0 0
        %1204 = vmatprep.subr.bf16.mxu0 0
        %1205 = vmatpush1.bf16.msra.mxu0 0
        %1206 = vmatprep.subr.bf16.mxu0 0
        %1207 = vmatpush1.bf16.msra.mxu0 0
        %1208 = vmatprep.mubr.bf16.mxu0 0
        %1209 = vmatmul.mubr.bf16.gmra.mrb[0].mxu0 %v969
        %v1210 = vpop.f32.mrb[0].mxu0
        %v1211 = vadd.f32 %v485, %v1210
        %v1212 = vpop.f32.mrb[0].mxu0
        %v1213 = vadd.f32 %v485, %v1212
        %v1214 = vpop.f32.mrb[0].mxu0
        %v1215 = vpop.f32.mrb[0].mxu0
        %1216 = vdwg.mxu0
        %1217 = vmatprep.subr.bf16.mxu0 %v788
        %1218 = vmatpush1.bf16.msra.mxu0 %v787
        %1219 = vmatprep.subr.bf16.mxu0 %v820
        %1220 = vmatpush1.bf16.msra.mxu0 %v819
        %1221 = vmatprep.subr.bf16.mxu0 %v852
        %1222 = vmatpush1.bf16.msra.mxu0 %v851
        %1223 = vmatprep.subr.bf16.mxu0 0
        %1224 = vmatpush1.bf16.msra.mxu0 0
        %1225 = vmatprep.subr.bf16.mxu0 0
        %1226 = vmatpush1.bf16.msra.mxu0 0
        %1227 = vmatprep.subr.bf16.mxu0 0
        %1228 = vmatpush1.bf16.msra.mxu0 0
        %1229 = vmatprep.subr.bf16.mxu0 0
        %1230 = vmatpush1.bf16.msra.mxu0 0
        %1231 = vmatprep.subr.bf16.mxu0 0
        %1232 = vmatpush1.bf16.msra.mxu0 0
        %1233 = vmatprep.subr.bf16.mxu0 0
        %1234 = vmatpush1.bf16.msra.mxu0 0
        %1235 = vmatprep.subr.bf16.mxu0 0
        %1236 = vmatpush1.bf16.msra.mxu0 0
        %1237 = vmatprep.subr.bf16.mxu0 0
        %1238 = vmatpush1.bf16.msra.mxu0 0
        %1239 = vmatprep.subr.bf16.mxu0 0
        %1240 = vmatpush1.bf16.msra.mxu0 0
        %1241 = vmatprep.subr.bf16.mxu0 0
        %1242 = vmatpush1.bf16.msra.mxu0 0
        %1243 = vmatprep.subr.bf16.mxu0 0
        %1244 = vmatpush1.bf16.msra.mxu0 0
        %1245 = vmatprep.subr.bf16.mxu0 0
        %1246 = vmatpush1.bf16.msra.mxu0 0
        %1247 = vmatprep.subr.bf16.mxu0 0
        %1248 = vmatpush1.bf16.msra.mxu0 0
        %1249 = vmatprep.mubr.bf16.mxu0 0
        %1250 = vmatmul.mubr.bf16.gmra.mrb[0].mxu0 %v969
        %v1251 = vpop.f32.mrb[0].mxu0
        %v1252 = vadd.f32 %v485, %v1251
        %v1253 = vpop.f32.mrb[0].mxu0
        %v1254 = vadd.f32 %v485, %v1253
        %v1255 = vpop.f32.mrb[0].mxu0
        %v1256 = vpop.f32.mrb[0].mxu0
        %1257 = vdwg.mxu0
        %1258 = vmatprep.subr.bf16.mxu0 %v790
        %1259 = vmatpush1.bf16.msra.mxu0 %v789
        %1260 = vmatprep.subr.bf16.mxu0 %v822
        %1261 = vmatpush1.bf16.msra.mxu0 %v821
        %1262 = vmatprep.subr.bf16.mxu0 %v854
        %1263 = vmatpush1.bf16.msra.mxu0 %v853
        %1264 = vmatprep.subr.bf16.mxu0 0
        %1265 = vmatpush1.bf16.msra.mxu0 0
        %1266 = vmatprep.subr.bf16.mxu0 0
        %1267 = vmatpush1.bf16.msra.mxu0 0
        %1268 = vmatprep.subr.bf16.mxu0 0
        %1269 = vmatpush1.bf16.msra.mxu0 0
        %1270 = vmatprep.subr.bf16.mxu0 0
        %1271 = vmatpush1.bf16.msra.mxu0 0
        %1272 = vmatprep.subr.bf16.mxu0 0
        %1273 = vmatpush1.bf16.msra.mxu0 0
        %1274 = vmatprep.subr.bf16.mxu0 0
        %1275 = vmatpush1.bf16.msra.mxu0 0
        %1276 = vmatprep.subr.bf16.mxu0 0
        %1277 = vmatpush1.bf16.msra.mxu0 0
        %1278 = vmatprep.subr.bf16.mxu0 0
        %1279 = vmatpush1.bf16.msra.mxu0 0
        %1280 = vmatprep.subr.bf16.mxu0 0
        %1281 = vmatpush1.bf16.msra.mxu0 0
        %1282 = vmatprep.subr.bf16.mxu0 0
        %1283 = vmatpush1.bf16.msra.mxu0 0
        %1284 = vmatprep.subr.bf16.mxu0 0
        %1285 = vmatpush1.bf16.msra.mxu0 0
        %1286 = vmatprep.subr.bf16.mxu0 0
        %1287 = vmatpush1.bf16.msra.mxu0 0
        %1288 = vmatprep.subr.bf16.mxu0 0
        %1289 = vmatpush1.bf16.msra.mxu0 0
        %1290 = vmatprep.mubr.bf16.mxu0 0
        %1291 = vmatmul.mubr.bf16.gmra.mrb[0].mxu0 %v969
        %v1292 = vpop.f32.mrb[0].mxu0
        %v1293 = vadd.f32 %v485, %v1292
        %v1294 = vpop.f32.mrb[0].mxu0
        %v1295 = vadd.f32 %v485, %v1294
        %v1296 = vpop.f32.mrb[0].mxu0
        %v1297 = vpop.f32.mrb[0].mxu0
        %1298 = vdwg.mxu0
        %1299 = vmatprep.subr.bf16.mxu0 %v792
        %1300 = vmatpush1.bf16.msra.mxu0 %v791
        %1301 = vmatprep.subr.bf16.mxu0 %v824
        %1302 = vmatpush1.bf16.msra.mxu0 %v823
        %1303 = vmatprep.subr.bf16.mxu0 %v856
        %1304 = vmatpush1.bf16.msra.mxu0 %v855
        %1305 = vmatprep.subr.bf16.mxu0 0
        %1306 = vmatpush1.bf16.msra.mxu0 0
        %1307 = vmatprep.subr.bf16.mxu0 0
        %1308 = vmatpush1.bf16.msra.mxu0 0
        %1309 = vmatprep.subr.bf16.mxu0 0
        %1310 = vmatpush1.bf16.msra.mxu0 0
        %1311 = vmatprep.subr.bf16.mxu0 0
        %1312 = vmatpush1.bf16.msra.mxu0 0
        %1313 = vmatprep.subr.bf16.mxu0 0
        %1314 = vmatpush1.bf16.msra.mxu0 0
        %1315 = vmatprep.subr.bf16.mxu0 0
        %1316 = vmatpush1.bf16.msra.mxu0 0
        %1317 = vmatprep.subr.bf16.mxu0 0
        %1318 = vmatpush1.bf16.msra.mxu0 0
        %1319 = vmatprep.subr.bf16.mxu0 0
        %1320 = vmatpush1.bf16.msra.mxu0 0
        %1321 = vmatprep.subr.bf16.mxu0 0
        %1322 = vmatpush1.bf16.msra.mxu0 0
        %1323 = vmatprep.subr.bf16.mxu0 0
        %1324 = vmatpush1.bf16.msra.mxu0 0
        %1325 = vmatprep.subr.bf16.mxu0 0
        %1326 = vmatpush1.bf16.msra.mxu0 0
        %1327 = vmatprep.subr.bf16.mxu0 0
        %1328 = vmatpush1.bf16.msra.mxu0 0
        %1329 = vmatprep.subr.bf16.mxu0 0
        %1330 = vmatpush1.bf16.msra.mxu0 0
        %1331 = vmatprep.mubr.bf16.mxu0 0
        %1332 = vmatmul.mubr.bf16.gmra.mrb[0].mxu0 %v969
        %v1333 = vpop.f32.mrb[0].mxu0
        %v1334 = vadd.f32 %v485, %v1333
        %v1335 = vpop.f32.mrb[0].mxu0
        %v1336 = vadd.f32 %v485, %v1335
        %v1337 = vpop.f32.mrb[0].mxu0
        %v1338 = vpop.f32.mrb[0].mxu0
        %1339 = vdwg.mxu0
        %1340 = vmatprep.subr.bf16.mxu0 %v794
        %1341 = vmatpush1.bf16.msra.mxu0 %v793
        %1342 = vmatprep.subr.bf16.mxu0 %v826
        %1343 = vmatpush1.bf16.msra.mxu0 %v825
        %1344 = vmatprep.subr.bf16.mxu0 %v858
        %1345 = vmatpush1.bf16.msra.mxu0 %v857
        %1346 = vmatprep.subr.bf16.mxu0 0
        %1347 = vmatpush1.bf16.msra.mxu0 0
        %1348 = vmatprep.subr.bf16.mxu0 0
        %1349 = vmatpush1.bf16.msra.mxu0 0
        %1350 = vmatprep.subr.bf16.mxu0 0
        %1351 = vmatpush1.bf16.msra.mxu0 0
        %1352 = vmatprep.subr.bf16.mxu0 0
        %1353 = vmatpush1.bf16.msra.mxu0 0
        %1354 = vmatprep.subr.bf16.mxu0 0
        %1355 = vmatpush1.bf16.msra.mxu0 0
        %1356 = vmatprep.subr.bf16.mxu0 0
        %1357 = vmatpush1.bf16.msra.mxu0 0
        %1358 = vmatprep.subr.bf16.mxu0 0
        %1359 = vmatpush1.bf16.msra.mxu0 0
        %1360 = vmatprep.subr.bf16.mxu0 0
        %1361 = vmatpush1.bf16.msra.mxu0 0
        %1362 = vmatprep.subr.bf16.mxu0 0
        %1363 = vmatpush1.bf16.msra.mxu0 0
        %1364 = vmatprep.subr.bf16.mxu0 0
        %1365 = vmatpush1.bf16.msra.mxu0 0
        %1366 = vmatprep.subr.bf16.mxu0 0
        %1367 = vmatpush1.bf16.msra.mxu0 0
        %1368 = vmatprep.subr.bf16.mxu0 0
        %1369 = vmatpush1.bf16.msra.mxu0 0
        %1370 = vmatprep.subr.bf16.mxu0 0
        %1371 = vmatpush1.bf16.msra.mxu0 0
        %1372 = vmatprep.mubr.bf16.mxu0 0
        %1373 = vmatmul.mubr.bf16.gmra.mrb[0].mxu0 %v969
        %v1374 = vpop.f32.mrb[0].mxu0
        %v1375 = vadd.f32 %v485, %v1374
        %v1376 = vpop.f32.mrb[0].mxu0
        %v1377 = vadd.f32 %v485, %v1376
        %v1378 = vpop.f32.mrb[0].mxu0
        %v1379 = vpop.f32.mrb[0].mxu0
        %1380 = vdwg.mxu0
        %1381 = vmatprep.subr.bf16.mxu0 %v796
        %1382 = vmatpush1.bf16.msra.mxu0 %v795
        %1383 = vmatprep.subr.bf16.mxu0 %v828
        %1384 = vmatpush1.bf16.msra.mxu0 %v827
        %1385 = vmatprep.subr.bf16.mxu0 %v860
        %1386 = vmatpush1.bf16.msra.mxu0 %v859
        %1387 = vmatprep.subr.bf16.mxu0 0
        %1388 = vmatpush1.bf16.msra.mxu0 0
        %1389 = vmatprep.subr.bf16.mxu0 0
        %1390 = vmatpush1.bf16.msra.mxu0 0
        %1391 = vmatprep.subr.bf16.mxu0 0
        %1392 = vmatpush1.bf16.msra.mxu0 0
        %1393 = vmatprep.subr.bf16.mxu0 0
        %1394 = vmatpush1.bf16.msra.mxu0 0
        %1395 = vmatprep.subr.bf16.mxu0 0
        %1396 = vmatpush1.bf16.msra.mxu0 0
        %1397 = vmatprep.subr.bf16.mxu0 0
        %1398 = vmatpush1.bf16.msra.mxu0 0
        %1399 = vmatprep.subr.bf16.mxu0 0
        %1400 = vmatpush1.bf16.msra.mxu0 0
        %1401 = vmatprep.subr.bf16.mxu0 0
        %1402 = vmatpush1.bf16.msra.mxu0 0
        %1403 = vmatprep.subr.bf16.mxu0 0
        %1404 = vmatpush1.bf16.msra.mxu0 0
        %1405 = vmatprep.subr.bf16.mxu0 0
        %1406 = vmatpush1.bf16.msra.mxu0 0
        %1407 = vmatprep.subr.bf16.mxu0 0
        %1408 = vmatpush1.bf16.msra.mxu0 0
        %1409 = vmatprep.subr.bf16.mxu0 0
        %1410 = vmatpush1.bf16.msra.mxu0 0
        %1411 = vmatprep.subr.bf16.mxu0 0
        %1412 = vmatpush1.bf16.msra.mxu0 0
        %1413 = vmatprep.mubr.bf16.mxu0 0
        %1414 = vmatmul.mubr.bf16.gmra.mrb[0].mxu0 %v969
        %v1415 = vpop.f32.mrb[0].mxu0
        %v1416 = vadd.f32 %v485, %v1415
        %v1417 = vpop.f32.mrb[0].mxu0
        %v1418 = vadd.f32 %v485, %v1417
        %v1419 = vpop.f32.mrb[0].mxu0
        %v1420 = vpop.f32.mrb[0].mxu0
        %1421 = vdwg.mxu0
        %1422 = vmatprep.subr.bf16.mxu0 %v798
        %1423 = vmatpush1.bf16.msra.mxu0 %v797
        %1424 = vmatprep.subr.bf16.mxu0 %v830
        %1425 = vmatpush1.bf16.msra.mxu0 %v829
        %1426 = vmatprep.subr.bf16.mxu0 %v862
        %1427 = vmatpush1.bf16.msra.mxu0 %v861
        %1428 = vmatprep.subr.bf16.mxu0 0
        %1429 = vmatpush1.bf16.msra.mxu0 0
        %1430 = vmatprep.subr.bf16.mxu0 0
        %1431 = vmatpush1.bf16.msra.mxu0 0
        %1432 = vmatprep.subr.bf16.mxu0 0
        %1433 = vmatpush1.bf16.msra.mxu0 0
        %1434 = vmatprep.subr.bf16.mxu0 0
        %1435 = vmatpush1.bf16.msra.mxu0 0
        %1436 = vmatprep.subr.bf16.mxu0 0
        %1437 = vmatpush1.bf16.msra.mxu0 0
        %1438 = vmatprep.subr.bf16.mxu0 0
        %1439 = vmatpush1.bf16.msra.mxu0 0
        %1440 = vmatprep.subr.bf16.mxu0 0
        %1441 = vmatpush1.bf16.msra.mxu0 0
        %1442 = vmatprep.subr.bf16.mxu0 0
        %1443 = vmatpush1.bf16.msra.mxu0 0
        %1444 = vmatprep.subr.bf16.mxu0 0
        %1445 = vmatpush1.bf16.msra.mxu0 0
        %1446 = vmatprep.subr.bf16.mxu0 0
        %1447 = vmatpush1.bf16.msra.mxu0 0
        %1448 = vmatprep.subr.bf16.mxu0 0
        %1449 = vmatpush1.bf16.msra.mxu0 0
        %1450 = vmatprep.subr.bf16.mxu0 0
        %1451 = vmatpush1.bf16.msra.mxu0 0
        %1452 = vmatprep.subr.bf16.mxu0 0
        %1453 = vmatpush1.bf16.msra.mxu0 0
        %1454 = vmatprep.mubr.bf16.mxu0 0
        %1455 = vmatmul.mubr.bf16.gmra.mrb[0].mxu0 %v969
        %v1456 = vpop.f32.mrb[0].mxu0
        %v1457 = vadd.f32 %v485, %v1456
        %v1458 = vpop.f32.mrb[0].mxu0
        %v1459 = vadd.f32 %v485, %v1458
        %v1460 = vpop.f32.mrb[0].mxu0
        %v1461 = vpop.f32.mrb[0].mxu0
        %1462 = vdwg.mxu0
        %1463 = vmatprep.subr.bf16.mxu0 %v800
        %1464 = vmatpush1.bf16.msra.mxu0 %v799
        %1465 = vmatprep.subr.bf16.mxu0 %v832
        %1466 = vmatpush1.bf16.msra.mxu0 %v831
        %1467 = vmatprep.subr.bf16.mxu0 %v864
        %1468 = vmatpush1.bf16.msra.mxu0 %v863
        %1469 = vmatprep.subr.bf16.mxu0 0
        %1470 = vmatpush1.bf16.msra.mxu0 0
        %1471 = vmatprep.subr.bf16.mxu0 0
        %1472 = vmatpush1.bf16.msra.mxu0 0
        %1473 = vmatprep.subr.bf16.mxu0 0
        %1474 = vmatpush1.bf16.msra.mxu0 0
        %1475 = vmatprep.subr.bf16.mxu0 0
        %1476 = vmatpush1.bf16.msra.mxu0 0
        %1477 = vmatprep.subr.bf16.mxu0 0
        %1478 = vmatpush1.bf16.msra.mxu0 0
        %1479 = vmatprep.subr.bf16.mxu0 0
        %1480 = vmatpush1.bf16.msra.mxu0 0
        %1481 = vmatprep.subr.bf16.mxu0 0
        %1482 = vmatpush1.bf16.msra.mxu0 0
        %1483 = vmatprep.subr.bf16.mxu0 0
        %1484 = vmatpush1.bf16.msra.mxu0 0
        %1485 = vmatprep.subr.bf16.mxu0 0
        %1486 = vmatpush1.bf16.msra.mxu0 0
        %1487 = vmatprep.subr.bf16.mxu0 0
        %1488 = vmatpush1.bf16.msra.mxu0 0
        %1489 = vmatprep.subr.bf16.mxu0 0
        %1490 = vmatpush1.bf16.msra.mxu0 0
        %1491 = vmatprep.subr.bf16.mxu0 0
        %1492 = vmatpush1.bf16.msra.mxu0 0
        %1493 = vmatprep.subr.bf16.mxu0 0
        %1494 = vmatpush1.bf16.msra.mxu0 0
        %1495 = vmatprep.mubr.bf16.mxu0 0
        %1496 = vmatmul.mubr.bf16.gmra.mrb[0].mxu0 %v969
        %v1497 = vpop.f32.mrb[0].mxu0
        %v1498 = vadd.f32 %v485, %v1497
        %v1499 = vpop.f32.mrb[0].mxu0
        %v1500 = vadd.f32 %v485, %v1499
        %v1501 = vpop.f32.mrb[0].mxu0
        %v1502 = vpop.f32.mrb[0].mxu0
        %1503 = vdwg.mxu0
        %1504 = vmatprep.subr.bf16.mxu0 %v802
        %1505 = vmatpush1.bf16.msra.mxu0 %v801
        %1506 = vmatprep.subr.bf16.mxu0 %v834
        %1507 = vmatpush1.bf16.msra.mxu0 %v833
        %1508 = vmatprep.subr.bf16.mxu0 %v866
        %1509 = vmatpush1.bf16.msra.mxu0 %v865
        %1510 = vmatprep.subr.bf16.mxu0 0
        %1511 = vmatpush1.bf16.msra.mxu0 0
        %1512 = vmatprep.subr.bf16.mxu0 0
        %1513 = vmatpush1.bf16.msra.mxu0 0
        %1514 = vmatprep.subr.bf16.mxu0 0
        %1515 = vmatpush1.bf16.msra.mxu0 0
        %1516 = vmatprep.subr.bf16.mxu0 0
        %1517 = vmatpush1.bf16.msra.mxu0 0
        %1518 = vmatprep.subr.bf16.mxu0 0
        %1519 = vmatpush1.bf16.msra.mxu0 0
        %1520 = vmatprep.subr.bf16.mxu0 0
        %1521 = vmatpush1.bf16.msra.mxu0 0
        %1522 = vmatprep.subr.bf16.mxu0 0
        %1523 = vmatpush1.bf16.msra.mxu0 0
        %1524 = vmatprep.subr.bf16.mxu0 0
        %1525 = vmatpush1.bf16.msra.mxu0 0
        %1526 = vmatprep.subr.bf16.mxu0 0
        %1527 = vmatpush1.bf16.msra.mxu0 0
        %1528 = vmatprep.subr.bf16.mxu0 0
        %1529 = vmatpush1.bf16.msra.mxu0 0
        %1530 = vmatprep.subr.bf16.mxu0 0
        %1531 = vmatpush1.bf16.msra.mxu0 0
        %1532 = vmatprep.subr.bf16.mxu0 0
        %1533 = vmatpush1.bf16.msra.mxu0 0
        %1534 = vmatprep.subr.bf16.mxu0 0
        %1535 = vmatpush1.bf16.msra.mxu0 0
        %1536 = vmatprep.mubr.bf16.mxu0 0
        %1537 = vmatmul.mubr.bf16.gmra.mrb[0].mxu0 %v969
        %v1538 = vpop.f32.mrb[0].mxu0
        %v1539 = vadd.f32 %v485, %v1538
        %v1540 = vpop.f32.mrb[0].mxu0
        %v1541 = vadd.f32 %v485, %v1540
        %v1542 = vpop.f32.mrb[0].mxu0
        %v1543 = vpop.f32.mrb[0].mxu0
        %1544 = vdwg.mxu0
        %1545 = vmatprep.subr.bf16.mxu0 %v804
        %1546 = vmatpush1.bf16.msra.mxu0 %v803
        %1547 = vmatprep.subr.bf16.mxu0 %v836
        %1548 = vmatpush1.bf16.msra.mxu0 %v835
        %1549 = vmatprep.subr.bf16.mxu0 %v868
        %1550 = vmatpush1.bf16.msra.mxu0 %v867
        %1551 = vmatprep.subr.bf16.mxu0 0
        %1552 = vmatpush1.bf16.msra.mxu0 0
        %1553 = vmatprep.subr.bf16.mxu0 0
        %1554 = vmatpush1.bf16.msra.mxu0 0
        %1555 = vmatprep.subr.bf16.mxu0 0
        %1556 = vmatpush1.bf16.msra.mxu0 0
        %1557 = vmatprep.subr.bf16.mxu0 0
        %1558 = vmatpush1.bf16.msra.mxu0 0
        %1559 = vmatprep.subr.bf16.mxu0 0
        %1560 = vmatpush1.bf16.msra.mxu0 0
        %1561 = vmatprep.subr.bf16.mxu0 0
        %1562 = vmatpush1.bf16.msra.mxu0 0
        %1563 = vmatprep.subr.bf16.mxu0 0
        %1564 = vmatpush1.bf16.msra.mxu0 0
        %1565 = vmatprep.subr.bf16.mxu0 0
        %1566 = vmatpush1.bf16.msra.mxu0 0
        %1567 = vmatprep.subr.bf16.mxu0 0
        %1568 = vmatpush1.bf16.msra.mxu0 0
        %1569 = vmatprep.subr.bf16.mxu0 0
        %1570 = vmatpush1.bf16.msra.mxu0 0
        %1571 = vmatprep.subr.bf16.mxu0 0
        %1572 = vmatpush1.bf16.msra.mxu0 0
        %1573 = vmatprep.subr.bf16.mxu0 0
        %1574 = vmatpush1.bf16.msra.mxu0 0
        %1575 = vmatprep.subr.bf16.mxu0 0
        %1576 = vmatpush1.bf16.msra.mxu0 0
        %1577 = vmatprep.mubr.bf16.mxu0 0
        %1578 = vmatmul.mubr.bf16.gmra.mrb[0].mxu0 %v969
        %v1579 = vpop.f32.mrb[0].mxu0
        %v1580 = vadd.f32 %v485, %v1579
        %v1581 = vpop.f32.mrb[0].mxu0
        %v1582 = vadd.f32 %v485, %v1581
        %v1583 = vpop.f32.mrb[0].mxu0
        %v1584 = vpop.f32.mrb[0].mxu0
        %1585 = vdwg.mxu0
        %1586 = vmatprep.subr.bf16.mxu0 %v806
        %1587 = vmatpush1.bf16.msra.mxu0 %v805
        %1588 = vmatprep.subr.bf16.mxu0 %v838
        %1589 = vmatpush1.bf16.msra.mxu0 %v837
        %1590 = vmatprep.subr.bf16.mxu0 %v870
        %1591 = vmatpush1.bf16.msra.mxu0 %v869
        %1592 = vmatprep.subr.bf16.mxu0 0
        %1593 = vmatpush1.bf16.msra.mxu0 0
        %1594 = vmatprep.subr.bf16.mxu0 0
        %1595 = vmatpush1.bf16.msra.mxu0 0
        %1596 = vmatprep.subr.bf16.mxu0 0
        %1597 = vmatpush1.bf16.msra.mxu0 0
        %1598 = vmatprep.subr.bf16.mxu0 0
        %1599 = vmatpush1.bf16.msra.mxu0 0
        %1600 = vmatprep.subr.bf16.mxu0 0
        %1601 = vmatpush1.bf16.msra.mxu0 0
        %1602 = vmatprep.subr.bf16.mxu0 0
        %1603 = vmatpush1.bf16.msra.mxu0 0
        %1604 = vmatprep.subr.bf16.mxu0 0
        %1605 = vmatpush1.bf16.msra.mxu0 0
        %1606 = vmatprep.subr.bf16.mxu0 0
        %1607 = vmatpush1.bf16.msra.mxu0 0
        %1608 = vmatprep.subr.bf16.mxu0 0
        %1609 = vmatpush1.bf16.msra.mxu0 0
        %1610 = vmatprep.subr.bf16.mxu0 0
        %1611 = vmatpush1.bf16.msra.mxu0 0
        %1612 = vmatprep.subr.bf16.mxu0 0
        %1613 = vmatpush1.bf16.msra.mxu0 0
        %1614 = vmatprep.subr.bf16.mxu0 0
        %1615 = vmatpush1.bf16.msra.mxu0 0
        %1616 = vmatprep.subr.bf16.mxu0 0
        %1617 = vmatpush1.bf16.msra.mxu0 0
        %1618 = vmatprep.mubr.bf16.mxu0 0
        %1619 = vmatmul.mubr.bf16.gmra.mrb[0].mxu0 %v969
        %v1620 = vpop.f32.mrb[0].mxu0
        %v1621 = vadd.f32 %v485, %v1620
        %v1622 = vpop.f32.mrb[0].mxu0
        %v1623 = vadd.f32 %v485, %v1622
        %v1624 = vpop.f32.mrb[0].mxu0
        %v1625 = vpop.f32.mrb[0].mxu0
        %1626 = vdwg.mxu0
        %v1627 = vpack.c.bf16 %v1006, %v1006
        %v1628 = vpack.c.bf16 %v1008, %v1008
        %v1629 = vpack.c.bf16 %v1047, %v1047
        %v1630 = vpack.c.bf16 %v1049, %v1049
        %v1631 = vpack.c.bf16 %v1088, %v1088
        %v1632 = vpack.c.bf16 %v1090, %v1090
        %v1633 = vpack.c.bf16 %v1129, %v1129
        %v1634 = vpack.c.bf16 %v1131, %v1131
        %v1635 = vpack.c.bf16 %v1170, %v1170
        %v1636 = vpack.c.bf16 %v1172, %v1172
        %v1637 = vpack.c.bf16 %v1211, %v1211
        %v1638 = vpack.c.bf16 %v1213, %v1213
        %v1639 = vpack.c.bf16 %v1252, %v1252
        %v1640 = vpack.c.bf16 %v1254, %v1254
        %v1641 = vpack.c.bf16 %v1293, %v1293
        %v1642 = vpack.c.bf16 %v1295, %v1295
        %v1643 = vpack.c.bf16 %v1334, %v1334
        %v1644 = vpack.c.bf16 %v1336, %v1336
        %v1645 = vpack.c.bf16 %v1375, %v1375
        %v1646 = vpack.c.bf16 %v1377, %v1377
        %v1647 = vpack.c.bf16 %v1416, %v1416
        %v1648 = vpack.c.bf16 %v1418, %v1418
        %v1649 = vpack.c.bf16 %v1457, %v1457
        %v1650 = vpack.c.bf16 %v1459, %v1459
        %v1651 = vpack.c.bf16 %v1498, %v1498
        %v1652 = vpack.c.bf16 %v1500, %v1500
        %v1653 = vpack.c.bf16 %v1539, %v1539
        %v1654 = vpack.c.bf16 %v1541, %v1541
        %v1655 = vpack.c.bf16 %v1580, %v1580
        %v1656 = vpack.c.bf16 %v1582, %v1582
        %v1657 = vpack.c.bf16 %v1621, %v1621
        %v1658 = vpack.c.bf16 %v1623, %v1623
        %v1691 = vcombine.low %v1627, %v1628
        %v1692 = vcombine.low %v1629, %v1630
        %v1694 = vunpack.c.l.s4 1983009808
        %v1695 = vunpack.c.0.s8 %v1694
        %v1696 = vlaneseq
        %v1697 = vshrl.u32 %v1696, 7
        %v1698 = vsub.s32 %v1695, %v1697
        %v1699 = vrot.slane %v1691, %v1698
        %v1701 = vunpack.c.l.s4 1983009808
        %v1702 = vunpack.c.0.s8 %v1701
        %v1703 = vlaneseq
        %v1704 = vshrl.u32 %v1703, 7
        %v1705 = vsub.s32 %v1702, %v1704
        %v1706 = vrot.slane %v1692, %v1705
        %v1707 = vcombine.low %v1699, %v1706
        %v1708 = vcombine.low %v1631, %v1632
        %v1709 = vcombine.low %v1633, %v1634
        %v1711 = vunpack.c.l.s4 1983009808
        %v1712 = vunpack.c.0.s8 %v1711
        %v1713 = vlaneseq
        %v1714 = vshrl.u32 %v1713, 7
        %v1715 = vsub.s32 %v1712, %v1714
        %v1716 = vrot.slane %v1708, %v1715
        %v1718 = vunpack.c.l.s4 1983009808
        %v1719 = vunpack.c.0.s8 %v1718
        %v1720 = vlaneseq
        %v1721 = vshrl.u32 %v1720, 7
        %v1722 = vsub.s32 %v1719, %v1721
        %v1723 = vrot.slane %v1709, %v1722
        %v1724 = vcombine.low %v1716, %v1723
        %v1725 = vcombine.low %v1635, %v1636
        %v1726 = vcombine.low %v1637, %v1638
        %v1728 = vunpack.c.l.s4 1983009808
        %v1729 = vunpack.c.0.s8 %v1728
        %v1730 = vlaneseq
        %v1731 = vshrl.u32 %v1730, 7
        %v1732 = vsub.s32 %v1729, %v1731
        %v1733 = vrot.slane %v1725, %v1732
        %v1735 = vunpack.c.l.s4 1983009808
        %v1736 = vunpack.c.0.s8 %v1735
        %v1737 = vlaneseq
        %v1738 = vshrl.u32 %v1737, 7
        %v1739 = vsub.s32 %v1736, %v1738
        %v1740 = vrot.slane %v1726, %v1739
        %v1741 = vcombine.low %v1733, %v1740
        %v1742 = vcombine.low %v1639, %v1640
        %v1743 = vcombine.low %v1641, %v1642
        %v1745 = vunpack.c.l.s4 1983009808
        %v1746 = vunpack.c.0.s8 %v1745
        %v1747 = vlaneseq
        %v1748 = vshrl.u32 %v1747, 7
        %v1749 = vsub.s32 %v1746, %v1748
        %v1750 = vrot.slane %v1742, %v1749
        %v1752 = vunpack.c.l.s4 1983009808
        %v1753 = vunpack.c.0.s8 %v1752
        %v1754 = vlaneseq
        %v1755 = vshrl.u32 %v1754, 7
        %v1756 = vsub.s32 %v1753, %v1755
        %v1757 = vrot.slane %v1743, %v1756
        %v1758 = vcombine.low %v1750, %v1757
        %v1759 = vcombine.low %v1643, %v1644
        %v1760 = vcombine.low %v1645, %v1646
        %v1762 = vunpack.c.l.s4 1983009808
        %v1763 = vunpack.c.0.s8 %v1762
        %v1764 = vlaneseq
        %v1765 = vshrl.u32 %v1764, 7
        %v1766 = vsub.s32 %v1763, %v1765
        %v1767 = vrot.slane %v1759, %v1766
        %v1769 = vunpack.c.l.s4 1983009808
        %v1770 = vunpack.c.0.s8 %v1769
        %v1771 = vlaneseq
        %v1772 = vshrl.u32 %v1771, 7
        %v1773 = vsub.s32 %v1770, %v1772
        %v1774 = vrot.slane %v1760, %v1773
        %v1775 = vcombine.low %v1767, %v1774
        %v1776 = vcombine.low %v1647, %v1648
        %v1777 = vcombine.low %v1649, %v1650
        %v1779 = vunpack.c.l.s4 1983009808
        %v1780 = vunpack.c.0.s8 %v1779
        %v1781 = vlaneseq
        %v1782 = vshrl.u32 %v1781, 7
        %v1783 = vsub.s32 %v1780, %v1782
        %v1784 = vrot.slane %v1776, %v1783
        %v1786 = vunpack.c.l.s4 1983009808
        %v1787 = vunpack.c.0.s8 %v1786
        %v1788 = vlaneseq
        %v1789 = vshrl.u32 %v1788, 7
        %v1790 = vsub.s32 %v1787, %v1789
        %v1791 = vrot.slane %v1777, %v1790
        %v1792 = vcombine.low %v1784, %v1791
        %v1793 = vcombine.low %v1651, %v1652
        %v1794 = vcombine.low %v1653, %v1654
        %v1796 = vunpack.c.l.s4 1983009808
        %v1797 = vunpack.c.0.s8 %v1796
        %v1798 = vlaneseq
        %v1799 = vshrl.u32 %v1798, 7
        %v1800 = vsub.s32 %v1797, %v1799
        %v1801 = vrot.slane %v1793, %v1800
        %v1803 = vunpack.c.l.s4 1983009808
        %v1804 = vunpack.c.0.s8 %v1803
        %v1805 = vlaneseq
        %v1806 = vshrl.u32 %v1805, 7
        %v1807 = vsub.s32 %v1804, %v1806
        %v1808 = vrot.slane %v1794, %v1807
        %v1809 = vcombine.low %v1801, %v1808
        %v1810 = vcombine.low %v1655, %v1656
        %v1811 = vcombine.low %v1657, %v1658
        %v1813 = vunpack.c.l.s4 1983009808
        %v1814 = vunpack.c.0.s8 %v1813
        %v1815 = vlaneseq
        %v1816 = vshrl.u32 %v1815, 7
        %v1817 = vsub.s32 %v1814, %v1816
        %v1818 = vrot.slane %v1810, %v1817
        %v1820 = vunpack.c.l.s4 1983009808
        %v1821 = vunpack.c.0.s8 %v1820
        %v1822 = vlaneseq
        %v1823 = vshrl.u32 %v1822, 7
        %v1824 = vsub.s32 %v1821, %v1823
        %v1825 = vrot.slane %v1811, %v1824
        %v1826 = vcombine.low %v1818, %v1825
        %1835 = vst [vmem:[%s381] sm:$0xff] %v1707
        %1836 = vst [vmem:[%s381 + $0x8] sm:$0xff] %v1724
        %1837 = vst [vmem:[%s381 + $0x10] sm:$0xff] %v1741
        %1838 = vst [vmem:[%s381 + $0x18] sm:$0xff] %v1758
        %1839 = vst [vmem:[%s381 + $0x20] sm:$0xff] %v1775
        %1840 = vst [vmem:[%s381 + $0x28] sm:$0xff] %v1792
        %1841 = vst [vmem:[%s381 + $0x30] sm:$0xff] %v1809
        %1842 = vst [vmem:[%s381 + $0x38] sm:$0xff] %v1826
        %s1843 = smul.u32 32, %s14
        %p1844 = scmp.lt.s32.totalorder %s1843, 63
        %s1845 = scalar_select %p1844, %s1843, 63
        %s1846 = smul.addr %s1845, 2
        %s1847 = scalar_lea.vmem %s3, %s1846
        // Predicated region
        $region56: #{statistic_network_x2c1.3} parent=50 // pred_check
          %p1848 = pneg %p100
        $region57: #{statistic_network_x2c1.3} parent=50 // pred_check_branch
          %1850 = sbr.rel (%p1848) target = $region59
        $region58: #{statistic_network_x2c1.3} parent=50 // pred_region
          %s1851 = smul.u32 32, %s14
        $region59: #{statistic_network_x2c1.3} parent=50 // pred_fallthru
          _
      $region51: #{statistic_network_x2c1.3} parent=5 // pred_fallthru
        _
      %p1852 = scmp.le.s32.totalorder 2, %s9
      // Predicated region
      $region60: #{statistic_network_x2c1.3} parent=5 // pred_check
        %p1853 = pneg %p1852
      $region61: #{statistic_network_x2c1.3} parent=5 // pred_check_branch
        %1855 = sbr.rel (%p1853) target = $region63
      $region62: #{statistic_network_x2c1.3} parent=5 // pred_region
        %s1856 = ssub.s32 %s9, 2
        // Predicated region
        $region64: #{statistic_network_x2c1.3} parent=62 // pred_check
          %p1857 = pneg %p106
        $region65: #{statistic_network_x2c1.3} parent=62 // pred_check_branch
          %1859 = sbr.rel (%p1857) target = $region67
        $region66: #{statistic_network_x2c1.3} parent=62 // pred_region
          %s1860 = smul.u32 32, %s15
          %p1861 = scmp.lt.s32.totalorder %s1860, 63
          %s1862 = scalar_select %p1861, %s1860, 63
          %s1863 = smul.addr %s1862, 2
          %s1864 = scalar_lea.vmem %s3, %s1863
        $region67: #{statistic_network_x2c1.3} parent=62 // pred_fallthru
          _
      $region63: #{statistic_network_x2c1.3} parent=5 // pred_fallthru
        _
    $region6: #{statistic_network_x2c1.3} parent=1 // loop_footer
      %s13 = sadd.s32 1, %s9
    $region7: #{statistic_network_x2c1.3} parent=1 // loop_footer_branch
      %8 = sbr.rel target = $region3
    $region8: #{statistic_network_x2c1.3} parent=1 // loop_exit
      _

// kernel: statistic_network_x2c1.4
$region0: #{statistic_network_x2c1.4}
  #allocation0 [shape = 'u32[]', space=smem, size = 0x4, offset = 0x4, fixed_abs, tag = 'smem constant byte address 0x4 - core index']
  #allocation1 [shape = 'u32[144,128]{1,0:T(1,128)}', space=vmem, size = 0x12000, scoped, tag = 'internal scratch']
  %s0 = inlined_call_operand.vmem [shape: bf16[512,2048], index: 0, kind: input, shape index: {}]
  %s1 = inlined_call_operand.vmem [shape: bf16[64,512], index: 1, kind: input, shape index: {}]
  %s2 = inlined_call_operand.vmem [shape: f32[64,1], index: 2, kind: input, shape index: {}]
  %s3 = inlined_call_operand.vmem [shape: bf16[64,2048], index: 3, kind: output, shape index: {}]
  %s4 = sld [smem:[#allocation0]]
  $region22: #{statistic_network_x2c1.4} parent=0
    _
  %s6 = ssub.s32 1, %s4
  %s7 = scalar_select 0, %s6, %s4
  // Predicated region
  $region2: #{statistic_network_x2c1.4} parent=0 // pred_check
    _
  $region3: #{statistic_network_x2c1.4} parent=0 // pred_check_branch
    %9 = sbr.rel (0) target = $region5
  $region4: #{statistic_network_x2c1.4} parent=0 // pred_region
    _
  $region5: #{statistic_network_x2c1.4} parent=0 // pred_fallthru
    _
  // Predicated region
  $region6: #{statistic_network_x2c1.4} parent=0 // pred_check
    _
  $region7: #{statistic_network_x2c1.4} parent=0 // pred_check_branch
    %11 = sbr.rel (0) target = $region9
  $region8: #{statistic_network_x2c1.4} parent=0 // pred_region
    _
  $region9: #{statistic_network_x2c1.4} parent=0 // pred_fallthru
    _
  // Predicated region
  $region10: #{statistic_network_x2c1.4} parent=0 // pred_check
    _
  $region11: #{statistic_network_x2c1.4} parent=0 // pred_check_branch
    %13 = sbr.rel (0) target = $region13
  $region12: #{statistic_network_x2c1.4} parent=0 // pred_region
    _
  $region13: #{statistic_network_x2c1.4} parent=0 // pred_fallthru
    _
  %v14 = vld [vmem:[%s1] sm:$0xff]
  %v15 = vld [vmem:[%s1 + $0x8] sm:$0xff]
  %v16 = vld [vmem:[%s1 + $0x10] sm:$0xff]
  %v17 = vld [vmem:[%s1 + $0x18] sm:$0xff]
  %v18 = vld [vmem:[%s1 + $0x20] sm:$0xff]
  %v19 = vld [vmem:[%s1 + $0x28] sm:$0xff]
  %v20 = vld [vmem:[%s1 + $0x30] sm:$0xff]
  %v21 = vld [vmem:[%s1 + $0x38] sm:$0xff]
  %v22 = vld [vmem:[%s1 + $0x40] sm:$0xff]
  %v23 = vld [vmem:[%s1 + $0x48] sm:$0xff]
  %v24 = vld [vmem:[%s1 + $0x50] sm:$0xff]
  %v25 = vld [vmem:[%s1 + $0x58] sm:$0xff]
  %v26 = vld [vmem:[%s1 + $0x60] sm:$0xff]
  %v27 = vld [vmem:[%s1 + $0x68] sm:$0xff]
  %v28 = vld [vmem:[%s1 + $0x70] sm:$0xff]
  %v29 = vld [vmem:[%s1 + $0x78] sm:$0xff]
  %v30 = vld [vmem:[%s0] sm:$0xff]
  %v31 = vld [vmem:[%s0 + $0x8] sm:$0xff]
  %v32 = vld [vmem:[%s0 + $0x10] sm:$0xff]
  %v33 = vld [vmem:[%s0 + $0x18] sm:$0xff]
  %v34 = vld [vmem:[%s0 + $0x20] sm:$0xff]
  %v35 = vld [vmem:[%s0 + $0x28] sm:$0xff]
  %v36 = vld [vmem:[%s0 + $0x30] sm:$0xff]
  %v37 = vld [vmem:[%s0 + $0x38] sm:$0xff]
  %v38 = vld [vmem:[%s0 + $0x40] sm:$0xff]
  %v39 = vld [vmem:[%s0 + $0x48] sm:$0xff]
  %v40 = vld [vmem:[%s0 + $0x50] sm:$0xff]
  %v41 = vld [vmem:[%s0 + $0x58] sm:$0xff]
  %v42 = vld [vmem:[%s0 + $0x60] sm:$0xff]
  %v43 = vld [vmem:[%s0 + $0x68] sm:$0xff]
  %v44 = vld [vmem:[%s0 + $0x70] sm:$0xff]
  %v45 = vld [vmem:[%s0 + $0x78] sm:$0xff]
  %v46 = vld [vmem:[%s0 + $0x80] sm:$0xff]
  %v47 = vld [vmem:[%s0 + $0x88] sm:$0xff]
  %v48 = vld [vmem:[%s0 + $0x90] sm:$0xff]
  %v49 = vld [vmem:[%s0 + $0x98] sm:$0xff]
  %v50 = vld [vmem:[%s0 + $0xa0] sm:$0xff]
  %v51 = vld [vmem:[%s0 + $0xa8] sm:$0xff]
  %v52 = vld [vmem:[%s0 + $0xb0] sm:$0xff]
  %v53 = vld [vmem:[%s0 + $0xb8] sm:$0xff]
  %v54 = vld [vmem:[%s0 + $0xc0] sm:$0xff]
  %v55 = vld [vmem:[%s0 + $0xc8] sm:$0xff]
  %v56 = vld [vmem:[%s0 + $0xd0] sm:$0xff]
  %v57 = vld [vmem:[%s0 + $0xd8] sm:$0xff]
  %v58 = vld [vmem:[%s0 + $0xe0] sm:$0xff]
  %v59 = vld [vmem:[%s0 + $0xe8] sm:$0xff]
  %v60 = vld [vmem:[%s0 + $0xf0] sm:$0xff]
  %v61 = vld [vmem:[%s0 + $0xf8] sm:$0xff]
  %v62 = vld [vmem:[%s0 + $0x100] sm:$0xff]
  %v63 = vld [vmem:[%s0 + $0x108] sm:$0xff]
  %v64 = vld [vmem:[%s0 + $0x110] sm:$0xff]
  %v65 = vld [vmem:[%s0 + $0x118] sm:$0xff]
  %v66 = vld [vmem:[%s0 + $0x120] sm:$0xff]
  %v67 = vld [vmem:[%s0 + $0x128] sm:$0xff]
  %v68 = vld [vmem:[%s0 + $0x130] sm:$0xff]
  %v69 = vld [vmem:[%s0 + $0x138] sm:$0xff]
  %v70 = vld [vmem:[%s0 + $0x140] sm:$0xff]
  %v71 = vld [vmem:[%s0 + $0x148] sm:$0xff]
  %v72 = vld [vmem:[%s0 + $0x150] sm:$0xff]
  %v73 = vld [vmem:[%s0 + $0x158] sm:$0xff]
  %v74 = vld [vmem:[%s0 + $0x160] sm:$0xff]
  %v75 = vld [vmem:[%s0 + $0x168] sm:$0xff]
  %v76 = vld [vmem:[%s0 + $0x170] sm:$0xff]
  %v77 = vld [vmem:[%s0 + $0x178] sm:$0xff]
  %v78 = vld [vmem:[%s0 + $0x180] sm:$0xff]
  %v79 = vld [vmem:[%s0 + $0x188] sm:$0xff]
  %v80 = vld [vmem:[%s0 + $0x190] sm:$0xff]
  %v81 = vld [vmem:[%s0 + $0x198] sm:$0xff]
  %v82 = vld [vmem:[%s0 + $0x1a0] sm:$0xff]
  %v83 = vld [vmem:[%s0 + $0x1a8] sm:$0xff]
  %v84 = vld [vmem:[%s0 + $0x1b0] sm:$0xff]
  %v85 = vld [vmem:[%s0 + $0x1b8] sm:$0xff]
  %v86 = vld [vmem:[%s0 + $0x1c0] sm:$0xff]
  %v87 = vld [vmem:[%s0 + $0x1c8] sm:$0xff]
  %v88 = vld [vmem:[%s0 + $0x1d0] sm:$0xff]
  %v89 = vld [vmem:[%s0 + $0x1d8] sm:$0xff]
  %v90 = vld [vmem:[%s0 + $0x1e0] sm:$0xff]
  %v91 = vld [vmem:[%s0 + $0x1e8] sm:$0xff]
  %v92 = vld [vmem:[%s0 + $0x1f0] sm:$0xff]
  %v93 = vld [vmem:[%s0 + $0x1f8] sm:$0xff]
  %v94 = vld [vmem:[%s0 + $0x200] sm:$0xff]
  %v95 = vld [vmem:[%s0 + $0x208] sm:$0xff]
  %v96 = vld [vmem:[%s0 + $0x210] sm:$0xff]
  %v97 = vld [vmem:[%s0 + $0x218] sm:$0xff]
  %v98 = vld [vmem:[%s0 + $0x220] sm:$0xff]
  %v99 = vld [vmem:[%s0 + $0x228] sm:$0xff]
  %v100 = vld [vmem:[%s0 + $0x230] sm:$0xff]
  %v101 = vld [vmem:[%s0 + $0x238] sm:$0xff]
  %v102 = vld [vmem:[%s0 + $0x240] sm:$0xff]
  %v103 = vld [vmem:[%s0 + $0x248] sm:$0xff]
  %v104 = vld [vmem:[%s0 + $0x250] sm:$0xff]
  %v105 = vld [vmem:[%s0 + $0x258] sm:$0xff]
  %v106 = vld [vmem:[%s0 + $0x260] sm:$0xff]
  %v107 = vld [vmem:[%s0 + $0x268] sm:$0xff]
  %v108 = vld [vmem:[%s0 + $0x270] sm:$0xff]
  %v109 = vld [vmem:[%s0 + $0x278] sm:$0xff]
  %v110 = vld [vmem:[%s0 + $0x280] sm:$0xff]
  %v111 = vld [vmem:[%s0 + $0x288] sm:$0xff]
  %v112 = vld [vmem:[%s0 + $0x290] sm:$0xff]
  %v113 = vld [vmem:[%s0 + $0x298] sm:$0xff]
  %v114 = vld [vmem:[%s0 + $0x2a0] sm:$0xff]
  %v115 = vld [vmem:[%s0 + $0x2a8] sm:$0xff]
  %v116 = vld [vmem:[%s0 + $0x2b0] sm:$0xff]
  %v117 = vld [vmem:[%s0 + $0x2b8] sm:$0xff]
  %v118 = vld [vmem:[%s0 + $0x2c0] sm:$0xff]
  %v119 = vld [vmem:[%s0 + $0x2c8] sm:$0xff]
  %v120 = vld [vmem:[%s0 + $0x2d0] sm:$0xff]
  %v121 = vld [vmem:[%s0 + $0x2d8] sm:$0xff]
  %v122 = vld [vmem:[%s0 + $0x2e0] sm:$0xff]
  %v123 = vld [vmem:[%s0 + $0x2e8] sm:$0xff]
  %v124 = vld [vmem:[%s0 + $0x2f0] sm:$0xff]
  %v125 = vld [vmem:[%s0 + $0x2f8] sm:$0xff]
  %v126 = vld [vmem:[%s0 + $0x300] sm:$0xff]
  %v127 = vld [vmem:[%s0 + $0x308] sm:$0xff]
  %v128 = vld [vmem:[%s0 + $0x310] sm:$0xff]
  %v129 = vld [vmem:[%s0 + $0x318] sm:$0xff]
  %v130 = vld [vmem:[%s0 + $0x320] sm:$0xff]
  %v131 = vld [vmem:[%s0 + $0x328] sm:$0xff]
  %v132 = vld [vmem:[%s0 + $0x330] sm:$0xff]
  %v133 = vld [vmem:[%s0 + $0x338] sm:$0xff]
  %v134 = vld [vmem:[%s0 + $0x340] sm:$0xff]
  %v135 = vld [vmem:[%s0 + $0x348] sm:$0xff]
  %v136 = vld [vmem:[%s0 + $0x350] sm:$0xff]
  %v137 = vld [vmem:[%s0 + $0x358] sm:$0xff]
  %v138 = vld [vmem:[%s0 + $0x360] sm:$0xff]
  %v139 = vld [vmem:[%s0 + $0x368] sm:$0xff]
  %v140 = vld [vmem:[%s0 + $0x370] sm:$0xff]
  %v141 = vld [vmem:[%s0 + $0x378] sm:$0xff]
  %v142 = vld [vmem:[%s0 + $0x380] sm:$0xff]
  %v143 = vld [vmem:[%s0 + $0x388] sm:$0xff]
  %v144 = vld [vmem:[%s0 + $0x390] sm:$0xff]
  %v145 = vld [vmem:[%s0 + $0x398] sm:$0xff]
  %v146 = vld [vmem:[%s0 + $0x3a0] sm:$0xff]
  %v147 = vld [vmem:[%s0 + $0x3a8] sm:$0xff]
  %v148 = vld [vmem:[%s0 + $0x3b0] sm:$0xff]
  %v149 = vld [vmem:[%s0 + $0x3b8] sm:$0xff]
  %v150 = vld [vmem:[%s0 + $0x3c0] sm:$0xff]
  %v151 = vld [vmem:[%s0 + $0x3c8] sm:$0xff]
  %v152 = vld [vmem:[%s0 + $0x3d0] sm:$0xff]
  %v153 = vld [vmem:[%s0 + $0x3d8] sm:$0xff]
  %v154 = vld [vmem:[%s0 + $0x3e0] sm:$0xff]
  %v155 = vld [vmem:[%s0 + $0x3e8] sm:$0xff]
  %v156 = vld [vmem:[%s0 + $0x3f0] sm:$0xff]
  %v157 = vld [vmem:[%s0 + $0x3f8] sm:$0xff]
  %v158 = vld [vmem:[%s0 + $0x400] sm:$0xff]
  %v159 = vld [vmem:[%s0 + $0x408] sm:$0xff]
  %v160 = vld [vmem:[%s0 + $0x410] sm:$0xff]
  %v161 = vld [vmem:[%s0 + $0x418] sm:$0xff]
  %v162 = vld [vmem:[%s0 + $0x420] sm:$0xff]
  %v163 = vld [vmem:[%s0 + $0x428] sm:$0xff]
  %v164 = vld [vmem:[%s0 + $0x430] sm:$0xff]
  %v165 = vld [vmem:[%s0 + $0x438] sm:$0xff]
  %v166 = vld [vmem:[%s0 + $0x440] sm:$0xff]
  %v167 = vld [vmem:[%s0 + $0x448] sm:$0xff]
  %v168 = vld [vmem:[%s0 + $0x450] sm:$0xff]
  %v169 = vld [vmem:[%s0 + $0x458] sm:$0xff]
  %v170 = vld [vmem:[%s0 + $0x460] sm:$0xff]
  %v171 = vld [vmem:[%s0 + $0x468] sm:$0xff]
  %v172 = vld [vmem:[%s0 + $0x470] sm:$0xff]
  %v173 = vld [vmem:[%s0 + $0x478] sm:$0xff]
  %v174 = vld [vmem:[%s0 + $0x480] sm:$0xff]
  %v175 = vld [vmem:[%s0 + $0x488] sm:$0xff]
  %v176 = vld [vmem:[%s0 + $0x490] sm:$0xff]
  %v177 = vld [vmem:[%s0 + $0x498] sm:$0xff]
  %v178 = vld [vmem:[%s0 + $0x4a0] sm:$0xff]
  %v179 = vld [vmem:[%s0 + $0x4a8] sm:$0xff]
  %v180 = vld [vmem:[%s0 + $0x4b0] sm:$0xff]
  %v181 = vld [vmem:[%s0 + $0x4b8] sm:$0xff]
  %v182 = vld [vmem:[%s0 + $0x4c0] sm:$0xff]
  %v183 = vld [vmem:[%s0 + $0x4c8] sm:$0xff]
  %v184 = vld [vmem:[%s0 + $0x4d0] sm:$0xff]
  %v185 = vld [vmem:[%s0 + $0x4d8] sm:$0xff]
  %v186 = vld [vmem:[%s0 + $0x4e0] sm:$0xff]
  %v187 = vld [vmem:[%s0 + $0x4e8] sm:$0xff]
  %v188 = vld [vmem:[%s0 + $0x4f0] sm:$0xff]
  %v189 = vld [vmem:[%s0 + $0x4f8] sm:$0xff]
  %v190 = vld [vmem:[%s0 + $0x500] sm:$0xff]
  %v191 = vld [vmem:[%s0 + $0x508] sm:$0xff]
  %v192 = vld [vmem:[%s0 + $0x510] sm:$0xff]
  %v193 = vld [vmem:[%s0 + $0x518] sm:$0xff]
  %v194 = vld [vmem:[%s0 + $0x520] sm:$0xff]
  %v195 = vld [vmem:[%s0 + $0x528] sm:$0xff]
  %v196 = vld [vmem:[%s0 + $0x530] sm:$0xff]
  %v197 = vld [vmem:[%s0 + $0x538] sm:$0xff]
  %v198 = vld [vmem:[%s0 + $0x540] sm:$0xff]
  %v199 = vld [vmem:[%s0 + $0x548] sm:$0xff]
  %v200 = vld [vmem:[%s0 + $0x550] sm:$0xff]
  %v201 = vld [vmem:[%s0 + $0x558] sm:$0xff]
  %v202 = vld [vmem:[%s0 + $0x560] sm:$0xff]
  %v203 = vld [vmem:[%s0 + $0x568] sm:$0xff]
  %v204 = vld [vmem:[%s0 + $0x570] sm:$0xff]
  %v205 = vld [vmem:[%s0 + $0x578] sm:$0xff]
  %v206 = vld [vmem:[%s0 + $0x580] sm:$0xff]
  %v207 = vld [vmem:[%s0 + $0x588] sm:$0xff]
  %v208 = vld [vmem:[%s0 + $0x590] sm:$0xff]
  %v209 = vld [vmem:[%s0 + $0x598] sm:$0xff]
  %v210 = vld [vmem:[%s0 + $0x5a0] sm:$0xff]
  %v211 = vld [vmem:[%s0 + $0x5a8] sm:$0xff]
  %v212 = vld [vmem:[%s0 + $0x5b0] sm:$0xff]
  %v213 = vld [vmem:[%s0 + $0x5b8] sm:$0xff]
  %v214 = vld [vmem:[%s0 + $0x5c0] sm:$0xff]
  %v215 = vld [vmem:[%s0 + $0x5c8] sm:$0xff]
  %v216 = vld [vmem:[%s0 + $0x5d0] sm:$0xff]
  %v217 = vld [vmem:[%s0 + $0x5d8] sm:$0xff]
  %v218 = vld [vmem:[%s0 + $0x5e0] sm:$0xff]
  %v219 = vld [vmem:[%s0 + $0x5e8] sm:$0xff]
  %v220 = vld [vmem:[%s0 + $0x5f0] sm:$0xff]
  %v221 = vld [vmem:[%s0 + $0x5f8] sm:$0xff]
  %v222 = vld [vmem:[%s0 + $0x600] sm:$0xff]
  %v223 = vld [vmem:[%s0 + $0x608] sm:$0xff]
  %v224 = vld [vmem:[%s0 + $0x610] sm:$0xff]
  %v225 = vld [vmem:[%s0 + $0x618] sm:$0xff]
  %v226 = vld [vmem:[%s0 + $0x620] sm:$0xff]
  %v227 = vld [vmem:[%s0 + $0x628] sm:$0xff]
  %v228 = vld [vmem:[%s0 + $0x630] sm:$0xff]
  %v229 = vld [vmem:[%s0 + $0x638] sm:$0xff]
  %v230 = vld [vmem:[%s0 + $0x640] sm:$0xff]
  %v231 = vld [vmem:[%s0 + $0x648] sm:$0xff]
  %v232 = vld [vmem:[%s0 + $0x650] sm:$0xff]
  %v233 = vld [vmem:[%s0 + $0x658] sm:$0xff]
  %v234 = vld [vmem:[%s0 + $0x660] sm:$0xff]
  %v235 = vld [vmem:[%s0 + $0x668] sm:$0xff]
  %v236 = vld [vmem:[%s0 + $0x670] sm:$0xff]
  %v237 = vld [vmem:[%s0 + $0x678] sm:$0xff]
  %v238 = vld [vmem:[%s0 + $0x680] sm:$0xff]
  %v239 = vld [vmem:[%s0 + $0x688] sm:$0xff]
  %v240 = vld [vmem:[%s0 + $0x690] sm:$0xff]
  %v241 = vld [vmem:[%s0 + $0x698] sm:$0xff]
  %v242 = vld [vmem:[%s0 + $0x6a0] sm:$0xff]
  %v243 = vld [vmem:[%s0 + $0x6a8] sm:$0xff]
  %v244 = vld [vmem:[%s0 + $0x6b0] sm:$0xff]
  %v245 = vld [vmem:[%s0 + $0x6b8] sm:$0xff]
  %v246 = vld [vmem:[%s0 + $0x6c0] sm:$0xff]
  %v247 = vld [vmem:[%s0 + $0x6c8] sm:$0xff]
  %v248 = vld [vmem:[%s0 + $0x6d0] sm:$0xff]
  %v249 = vld [vmem:[%s0 + $0x6d8] sm:$0xff]
  %v250 = vld [vmem:[%s0 + $0x6e0] sm:$0xff]
  %v251 = vld [vmem:[%s0 + $0x6e8] sm:$0xff]
  %v252 = vld [vmem:[%s0 + $0x6f0] sm:$0xff]
  %v253 = vld [vmem:[%s0 + $0x6f8] sm:$0xff]
  %v254 = vld [vmem:[%s0 + $0x700] sm:$0xff]
  %v255 = vld [vmem:[%s0 + $0x708] sm:$0xff]
  %v256 = vld [vmem:[%s0 + $0x710] sm:$0xff]
  %v257 = vld [vmem:[%s0 + $0x718] sm:$0xff]
  %v258 = vld [vmem:[%s0 + $0x720] sm:$0xff]
  %v259 = vld [vmem:[%s0 + $0x728] sm:$0xff]
  %v260 = vld [vmem:[%s0 + $0x730] sm:$0xff]
  %v261 = vld [vmem:[%s0 + $0x738] sm:$0xff]
  %v262 = vld [vmem:[%s0 + $0x740] sm:$0xff]
  %v263 = vld [vmem:[%s0 + $0x748] sm:$0xff]
  %v264 = vld [vmem:[%s0 + $0x750] sm:$0xff]
  %v265 = vld [vmem:[%s0 + $0x758] sm:$0xff]
  %v266 = vld [vmem:[%s0 + $0x760] sm:$0xff]
  %v267 = vld [vmem:[%s0 + $0x768] sm:$0xff]
  %v268 = vld [vmem:[%s0 + $0x770] sm:$0xff]
  %v269 = vld [vmem:[%s0 + $0x778] sm:$0xff]
  %v270 = vld [vmem:[%s0 + $0x780] sm:$0xff]
  %v271 = vld [vmem:[%s0 + $0x788] sm:$0xff]
  %v272 = vld [vmem:[%s0 + $0x790] sm:$0xff]
  %v273 = vld [vmem:[%s0 + $0x798] sm:$0xff]
  %v274 = vld [vmem:[%s0 + $0x7a0] sm:$0xff]
  %v275 = vld [vmem:[%s0 + $0x7a8] sm:$0xff]
  %v276 = vld [vmem:[%s0 + $0x7b0] sm:$0xff]
  %v277 = vld [vmem:[%s0 + $0x7b8] sm:$0xff]
  %v278 = vld [vmem:[%s0 + $0x7c0] sm:$0xff]
  %v279 = vld [vmem:[%s0 + $0x7c8] sm:$0xff]
  %v280 = vld [vmem:[%s0 + $0x7d0] sm:$0xff]
  %v281 = vld [vmem:[%s0 + $0x7d8] sm:$0xff]
  %v282 = vld [vmem:[%s0 + $0x7e0] sm:$0xff]
  %v283 = vld [vmem:[%s0 + $0x7e8] sm:$0xff]
  %v284 = vld [vmem:[%s0 + $0x7f0] sm:$0xff]
  %v285 = vld [vmem:[%s0 + $0x7f8] sm:$0xff]
  %v286 = vld [vmem:[%s0 + $0x800] sm:$0xff]
  %v287 = vld [vmem:[%s0 + $0x808] sm:$0xff]
  %v288 = vld [vmem:[%s0 + $0x810] sm:$0xff]
  %v289 = vld [vmem:[%s0 + $0x818] sm:$0xff]
  %v290 = vld [vmem:[%s0 + $0x820] sm:$0xff]
  %v291 = vld [vmem:[%s0 + $0x828] sm:$0xff]
  %v292 = vld [vmem:[%s0 + $0x830] sm:$0xff]
  %v293 = vld [vmem:[%s0 + $0x838] sm:$0xff]
  %v294 = vld [vmem:[%s0 + $0x840] sm:$0xff]
  %v295 = vld [vmem:[%s0 + $0x848] sm:$0xff]
  %v296 = vld [vmem:[%s0 + $0x850] sm:$0xff]
  %v297 = vld [vmem:[%s0 + $0x858] sm:$0xff]
  %v298 = vld [vmem:[%s0 + $0x860] sm:$0xff]
  %v299 = vld [vmem:[%s0 + $0x868] sm:$0xff]
  %v300 = vld [vmem:[%s0 + $0x870] sm:$0xff]
  %v301 = vld [vmem:[%s0 + $0x878] sm:$0xff]
  %v302 = vld [vmem:[%s0 + $0x880] sm:$0xff]
  %v303 = vld [vmem:[%s0 + $0x888] sm:$0xff]
  %v304 = vld [vmem:[%s0 + $0x890] sm:$0xff]
  %v305 = vld [vmem:[%s0 + $0x898] sm:$0xff]
  %v306 = vld [vmem:[%s0 + $0x8a0] sm:$0xff]
  %v307 = vld [vmem:[%s0 + $0x8a8] sm:$0xff]
  %v308 = vld [vmem:[%s0 + $0x8b0] sm:$0xff]
  %v309 = vld [vmem:[%s0 + $0x8b8] sm:$0xff]
  %v310 = vld [vmem:[%s0 + $0x8c0] sm:$0xff]
  %v311 = vld [vmem:[%s0 + $0x8c8] sm:$0xff]
  %v312 = vld [vmem:[%s0 + $0x8d0] sm:$0xff]
  %v313 = vld [vmem:[%s0 + $0x8d8] sm:$0xff]
  %v314 = vld [vmem:[%s0 + $0x8e0] sm:$0xff]
  %v315 = vld [vmem:[%s0 + $0x8e8] sm:$0xff]
  %v316 = vld [vmem:[%s0 + $0x8f0] sm:$0xff]
  %v317 = vld [vmem:[%s0 + $0x8f8] sm:$0xff]
  %v318 = vld [vmem:[%s0 + $0x900] sm:$0xff]
  %v319 = vld [vmem:[%s0 + $0x908] sm:$0xff]
  %v320 = vld [vmem:[%s0 + $0x910] sm:$0xff]
  %v321 = vld [vmem:[%s0 + $0x918] sm:$0xff]
  %v322 = vld [vmem:[%s0 + $0x920] sm:$0xff]
  %v323 = vld [vmem:[%s0 + $0x928] sm:$0xff]
  %v324 = vld [vmem:[%s0 + $0x930] sm:$0xff]
  %v325 = vld [vmem:[%s0 + $0x938] sm:$0xff]
  %v326 = vld [vmem:[%s0 + $0x940] sm:$0xff]
  %v327 = vld [vmem:[%s0 + $0x948] sm:$0xff]
  %v328 = vld [vmem:[%s0 + $0x950] sm:$0xff]
  %v329 = vld [vmem:[%s0 + $0x958] sm:$0xff]
  %v330 = vld [vmem:[%s0 + $0x960] sm:$0xff]
  %v331 = vld [vmem:[%s0 + $0x968] sm:$0xff]
  %v332 = vld [vmem:[%s0 + $0x970] sm:$0xff]
  %v333 = vld [vmem:[%s0 + $0x978] sm:$0xff]
  %v334 = vld [vmem:[%s0 + $0x980] sm:$0xff]
  %v335 = vld [vmem:[%s0 + $0x988] sm:$0xff]
  %v336 = vld [vmem:[%s0 + $0x990] sm:$0xff]
  %v337 = vld [vmem:[%s0 + $0x998] sm:$0xff]
  %v338 = vld [vmem:[%s0 + $0x9a0] sm:$0xff]
  %v339 = vld [vmem:[%s0 + $0x9a8] sm:$0xff]
  %v340 = vld [vmem:[%s0 + $0x9b0] sm:$0xff]
  %v341 = vld [vmem:[%s0 + $0x9b8] sm:$0xff]
  %v342 = vld [vmem:[%s0 + $0x9c0] sm:$0xff]
  %v343 = vld [vmem:[%s0 + $0x9c8] sm:$0xff]
  %v344 = vld [vmem:[%s0 + $0x9d0] sm:$0xff]
  %v345 = vld [vmem:[%s0 + $0x9d8] sm:$0xff]
  %v346 = vld [vmem:[%s0 + $0x9e0] sm:$0xff]
  %v347 = vld [vmem:[%s0 + $0x9e8] sm:$0xff]
  %v348 = vld [vmem:[%s0 + $0x9f0] sm:$0xff]
  %v349 = vld [vmem:[%s0 + $0x9f8] sm:$0xff]
  %v350 = vld [vmem:[%s0 + $0xa00] sm:$0xff]
  %v351 = vld [vmem:[%s0 + $0xa08] sm:$0xff]
  %v352 = vld [vmem:[%s0 + $0xa10] sm:$0xff]
  %v353 = vld [vmem:[%s0 + $0xa18] sm:$0xff]
  %v354 = vld [vmem:[%s0 + $0xa20] sm:$0xff]
  %v355 = vld [vmem:[%s0 + $0xa28] sm:$0xff]
  %v356 = vld [vmem:[%s0 + $0xa30] sm:$0xff]
  %v357 = vld [vmem:[%s0 + $0xa38] sm:$0xff]
  %v358 = vld [vmem:[%s0 + $0xa40] sm:$0xff]
  %v359 = vld [vmem:[%s0 + $0xa48] sm:$0xff]
  %v360 = vld [vmem:[%s0 + $0xa50] sm:$0xff]
  %v361 = vld [vmem:[%s0 + $0xa58] sm:$0xff]
  %v362 = vld [vmem:[%s0 + $0xa60] sm:$0xff]
  %v363 = vld [vmem:[%s0 + $0xa68] sm:$0xff]
  %v364 = vld [vmem:[%s0 + $0xa70] sm:$0xff]
  %v365 = vld [vmem:[%s0 + $0xa78] sm:$0xff]
  %v366 = vld [vmem:[%s0 + $0xa80] sm:$0xff]
  %v367 = vld [vmem:[%s0 + $0xa88] sm:$0xff]
  %v368 = vld [vmem:[%s0 + $0xa90] sm:$0xff]
  %v369 = vld [vmem:[%s0 + $0xa98] sm:$0xff]
  %v370 = vld [vmem:[%s0 + $0xaa0] sm:$0xff]
  %v371 = vld [vmem:[%s0 + $0xaa8] sm:$0xff]
  %v372 = vld [vmem:[%s0 + $0xab0] sm:$0xff]
  %v373 = vld [vmem:[%s0 + $0xab8] sm:$0xff]
  %v374 = vld [vmem:[%s0 + $0xac0] sm:$0xff]
  %v375 = vld [vmem:[%s0 + $0xac8] sm:$0xff]
  %v376 = vld [vmem:[%s0 + $0xad0] sm:$0xff]
  %v377 = vld [vmem:[%s0 + $0xad8] sm:$0xff]
  %v378 = vld [vmem:[%s0 + $0xae0] sm:$0xff]
  %v379 = vld [vmem:[%s0 + $0xae8] sm:$0xff]
  %v380 = vld [vmem:[%s0 + $0xaf0] sm:$0xff]
  %v381 = vld [vmem:[%s0 + $0xaf8] sm:$0xff]
  %v382 = vld [vmem:[%s0 + $0xb00] sm:$0xff]
  %v383 = vld [vmem:[%s0 + $0xb08] sm:$0xff]
  %v384 = vld [vmem:[%s0 + $0xb10] sm:$0xff]
  %v385 = vld [vmem:[%s0 + $0xb18] sm:$0xff]
  %v386 = vld [vmem:[%s0 + $0xb20] sm:$0xff]
  %v387 = vld [vmem:[%s0 + $0xb28] sm:$0xff]
  %v388 = vld [vmem:[%s0 + $0xb30] sm:$0xff]
  %v389 = vld [vmem:[%s0 + $0xb38] sm:$0xff]
  %v390 = vld [vmem:[%s0 + $0xb40] sm:$0xff]
  %v391 = vld [vmem:[%s0 + $0xb48] sm:$0xff]
  %v392 = vld [vmem:[%s0 + $0xb50] sm:$0xff]
  %v393 = vld [vmem:[%s0 + $0xb58] sm:$0xff]
  %v394 = vld [vmem:[%s0 + $0xb60] sm:$0xff]
  %v395 = vld [vmem:[%s0 + $0xb68] sm:$0xff]
  %v396 = vld [vmem:[%s0 + $0xb70] sm:$0xff]
  %v397 = vld [vmem:[%s0 + $0xb78] sm:$0xff]
  %v398 = vld [vmem:[%s0 + $0xb80] sm:$0xff]
  %v399 = vld [vmem:[%s0 + $0xb88] sm:$0xff]
  %v400 = vld [vmem:[%s0 + $0xb90] sm:$0xff]
  %v401 = vld [vmem:[%s0 + $0xb98] sm:$0xff]
  %v402 = vld [vmem:[%s0 + $0xba0] sm:$0xff]
  %v403 = vld [vmem:[%s0 + $0xba8] sm:$0xff]
  %v404 = vld [vmem:[%s0 + $0xbb0] sm:$0xff]
  %v405 = vld [vmem:[%s0 + $0xbb8] sm:$0xff]
  %v406 = vld [vmem:[%s0 + $0xbc0] sm:$0xff]
  %v407 = vld [vmem:[%s0 + $0xbc8] sm:$0xff]
  %v408 = vld [vmem:[%s0 + $0xbd0] sm:$0xff]
  %v409 = vld [vmem:[%s0 + $0xbd8] sm:$0xff]
  %v410 = vld [vmem:[%s0 + $0xbe0] sm:$0xff]
  %v411 = vld [vmem:[%s0 + $0xbe8] sm:$0xff]
  %v412 = vld [vmem:[%s0 + $0xbf0] sm:$0xff]
  %v413 = vld [vmem:[%s0 + $0xbf8] sm:$0xff]
  %v414 = vld [vmem:[%s0 + $0xc00] sm:$0xff]
  %v415 = vld [vmem:[%s0 + $0xc08] sm:$0xff]
  %v416 = vld [vmem:[%s0 + $0xc10] sm:$0xff]
  %v417 = vld [vmem:[%s0 + $0xc18] sm:$0xff]
  %v418 = vld [vmem:[%s0 + $0xc20] sm:$0xff]
  %v419 = vld [vmem:[%s0 + $0xc28] sm:$0xff]
  %v420 = vld [vmem:[%s0 + $0xc30] sm:$0xff]
  %v421 = vld [vmem:[%s0 + $0xc38] sm:$0xff]
  %v422 = vld [vmem:[%s0 + $0xc40] sm:$0xff]
  %v423 = vld [vmem:[%s0 + $0xc48] sm:$0xff]
  %v424 = vld [vmem:[%s0 + $0xc50] sm:$0xff]
  %v425 = vld [vmem:[%s0 + $0xc58] sm:$0xff]
  %v426 = vld [vmem:[%s0 + $0xc60] sm:$0xff]
  %v427 = vld [vmem:[%s0 + $0xc68] sm:$0xff]
  %v428 = vld [vmem:[%s0 + $0xc70] sm:$0xff]
  %v429 = vld [vmem:[%s0 + $0xc78] sm:$0xff]
  %v430 = vld [vmem:[%s0 + $0xc80] sm:$0xff]
  %v431 = vld [vmem:[%s0 + $0xc88] sm:$0xff]
  %v432 = vld [vmem:[%s0 + $0xc90] sm:$0xff]
  %v433 = vld [vmem:[%s0 + $0xc98] sm:$0xff]
  %v434 = vld [vmem:[%s0 + $0xca0] sm:$0xff]
  %v435 = vld [vmem:[%s0 + $0xca8] sm:$0xff]
  %v436 = vld [vmem:[%s0 + $0xcb0] sm:$0xff]
  %v437 = vld [vmem:[%s0 + $0xcb8] sm:$0xff]
  %v438 = vld [vmem:[%s0 + $0xcc0] sm:$0xff]
  %v439 = vld [vmem:[%s0 + $0xcc8] sm:$0xff]
  %v440 = vld [vmem:[%s0 + $0xcd0] sm:$0xff]
  %v441 = vld [vmem:[%s0 + $0xcd8] sm:$0xff]
  %v442 = vld [vmem:[%s0 + $0xce0] sm:$0xff]
  %v443 = vld [vmem:[%s0 + $0xce8] sm:$0xff]
  %v444 = vld [vmem:[%s0 + $0xcf0] sm:$0xff]
  %v445 = vld [vmem:[%s0 + $0xcf8] sm:$0xff]
  %v446 = vld [vmem:[%s0 + $0xd00] sm:$0xff]
  %v447 = vld [vmem:[%s0 + $0xd08] sm:$0xff]
  %v448 = vld [vmem:[%s0 + $0xd10] sm:$0xff]
  %v449 = vld [vmem:[%s0 + $0xd18] sm:$0xff]
  %v450 = vld [vmem:[%s0 + $0xd20] sm:$0xff]
  %v451 = vld [vmem:[%s0 + $0xd28] sm:$0xff]
  %v452 = vld [vmem:[%s0 + $0xd30] sm:$0xff]
  %v453 = vld [vmem:[%s0 + $0xd38] sm:$0xff]
  %v454 = vld [vmem:[%s0 + $0xd40] sm:$0xff]
  %v455 = vld [vmem:[%s0 + $0xd48] sm:$0xff]
  %v456 = vld [vmem:[%s0 + $0xd50] sm:$0xff]
  %v457 = vld [vmem:[%s0 + $0xd58] sm:$0xff]
  %v458 = vld [vmem:[%s0 + $0xd60] sm:$0xff]
  %v459 = vld [vmem:[%s0 + $0xd68] sm:$0xff]
  %v460 = vld [vmem:[%s0 + $0xd70] sm:$0xff]
  %v461 = vld [vmem:[%s0 + $0xd78] sm:$0xff]
  %v462 = vld [vmem:[%s0 + $0xd80] sm:$0xff]
  %v463 = vld [vmem:[%s0 + $0xd88] sm:$0xff]
  %v464 = vld [vmem:[%s0 + $0xd90] sm:$0xff]
  %v465 = vld [vmem:[%s0 + $0xd98] sm:$0xff]
  %v466 = vld [vmem:[%s0 + $0xda0] sm:$0xff]
  %v467 = vld [vmem:[%s0 + $0xda8] sm:$0xff]
  %v468 = vld [vmem:[%s0 + $0xdb0] sm:$0xff]
  %v469 = vld [vmem:[%s0 + $0xdb8] sm:$0xff]
  %v470 = vld [vmem:[%s0 + $0xdc0] sm:$0xff]
  %v471 = vld [vmem:[%s0 + $0xdc8] sm:$0xff]
  %v472 = vld [vmem:[%s0 + $0xdd0] sm:$0xff]
  %v473 = vld [vmem:[%s0 + $0xdd8] sm:$0xff]
  %v474 = vld [vmem:[%s0 + $0xde0] sm:$0xff]
  %v475 = vld [vmem:[%s0 + $0xde8] sm:$0xff]
  %v476 = vld [vmem:[%s0 + $0xdf0] sm:$0xff]
  %v477 = vld [vmem:[%s0 + $0xdf8] sm:$0xff]
  %v478 = vld [vmem:[%s0 + $0xe00] sm:$0xff]
  %v479 = vld [vmem:[%s0 + $0xe08] sm:$0xff]
  %v480 = vld [vmem:[%s0 + $0xe10] sm:$0xff]
  %v481 = vld [vmem:[%s0 + $0xe18] sm:$0xff]
  %v482 = vld [vmem:[%s0 + $0xe20] sm:$0xff]
  %v483 = vld [vmem:[%s0 + $0xe28] sm:$0xff]
  %v484 = vld [vmem:[%s0 + $0xe30] sm:$0xff]
  %v485 = vld [vmem:[%s0 + $0xe38] sm:$0xff]
  %v486 = vld [vmem:[%s0 + $0xe40] sm:$0xff]
  %v487 = vld [vmem:[%s0 + $0xe48] sm:$0xff]
  %v488 = vld [vmem:[%s0 + $0xe50] sm:$0xff]
  %v489 = vld [vmem:[%s0 + $0xe58] sm:$0xff]
  %v490 = vld [vmem:[%s0 + $0xe60] sm:$0xff]
  %v491 = vld [vmem:[%s0 + $0xe68] sm:$0xff]
  %v492 = vld [vmem:[%s0 + $0xe70] sm:$0xff]
  %v493 = vld [vmem:[%s0 + $0xe78] sm:$0xff]
  %v494 = vld [vmem:[%s0 + $0xe80] sm:$0xff]
  %v495 = vld [vmem:[%s0 + $0xe88] sm:$0xff]
  %v496 = vld [vmem:[%s0 + $0xe90] sm:$0xff]
  %v497 = vld [vmem:[%s0 + $0xe98] sm:$0xff]
  %v498 = vld [vmem:[%s0 + $0xea0] sm:$0xff]
  %v499 = vld [vmem:[%s0 + $0xea8] sm:$0xff]
  %v500 = vld [vmem:[%s0 + $0xeb0] sm:$0xff]
  %v501 = vld [vmem:[%s0 + $0xeb8] sm:$0xff]
  %v502 = vld [vmem:[%s0 + $0xec0] sm:$0xff]
  %v503 = vld [vmem:[%s0 + $0xec8] sm:$0xff]
  %v504 = vld [vmem:[%s0 + $0xed0] sm:$0xff]
  %v505 = vld [vmem:[%s0 + $0xed8] sm:$0xff]
  %v506 = vld [vmem:[%s0 + $0xee0] sm:$0xff]
  %v507 = vld [vmem:[%s0 + $0xee8] sm:$0xff]
  %v508 = vld [vmem:[%s0 + $0xef0] sm:$0xff]
  %v509 = vld [vmem:[%s0 + $0xef8] sm:$0xff]
  %v510 = vld [vmem:[%s0 + $0xf00] sm:$0xff]
  %v511 = vld [vmem:[%s0 + $0xf08] sm:$0xff]
  %v512 = vld [vmem:[%s0 + $0xf10] sm:$0xff]
  %v513 = vld [vmem:[%s0 + $0xf18] sm:$0xff]
  %v514 = vld [vmem:[%s0 + $0xf20] sm:$0xff]
  %v515 = vld [vmem:[%s0 + $0xf28] sm:$0xff]
  %v516 = vld [vmem:[%s0 + $0xf30] sm:$0xff]
  %v517 = vld [vmem:[%s0 + $0xf38] sm:$0xff]
  %v518 = vld [vmem:[%s0 + $0xf40] sm:$0xff]
  %v519 = vld [vmem:[%s0 + $0xf48] sm:$0xff]
  %v520 = vld [vmem:[%s0 + $0xf50] sm:$0xff]
  %v521 = vld [vmem:[%s0 + $0xf58] sm:$0xff]
  %v522 = vld [vmem:[%s0 + $0xf60] sm:$0xff]
  %v523 = vld [vmem:[%s0 + $0xf68] sm:$0xff]
  %v524 = vld [vmem:[%s0 + $0xf70] sm:$0xff]
  %v525 = vld [vmem:[%s0 + $0xf78] sm:$0xff]
  %v526 = vld [vmem:[%s0 + $0xf80] sm:$0xff]
  %v527 = vld [vmem:[%s0 + $0xf88] sm:$0xff]
  %v528 = vld [vmem:[%s0 + $0xf90] sm:$0xff]
  %v529 = vld [vmem:[%s0 + $0xf98] sm:$0xff]
  %v530 = vld [vmem:[%s0 + $0xfa0] sm:$0xff]
  %v531 = vld [vmem:[%s0 + $0xfa8] sm:$0xff]
  %v532 = vld [vmem:[%s0 + $0xfb0] sm:$0xff]
  %v533 = vld [vmem:[%s0 + $0xfb8] sm:$0xff]
  %v534 = vld [vmem:[%s0 + $0xfc0] sm:$0xff]
  %v535 = vld [vmem:[%s0 + $0xfc8] sm:$0xff]
  %v536 = vld [vmem:[%s0 + $0xfd0] sm:$0xff]
  %v537 = vld [vmem:[%s0 + $0xfd8] sm:$0xff]
  %v538 = vld [vmem:[%s0 + $0xfe0] sm:$0xff]
  %v539 = vld [vmem:[%s0 + $0xfe8] sm:$0xff]
  %v540 = vld [vmem:[%s0 + $0xff0] sm:$0xff]
  %v541 = vld [vmem:[%s0 + $0xff8] sm:$0xff]
  %v542 = vld [vmem:[%s2] sm:$0xff]
  %v543 = vld [vmem:[%s2 + $0x8] sm:$0xff]
  %v544 = vld [vmem:[%s2 + $0x10] sm:$0xff]
  %v545 = vld [vmem:[%s2 + $0x18] sm:$0xff]
  %v546 = vld [vmem:[%s2 + $0x20] sm:$0xff]
  %v547 = vld [vmem:[%s2 + $0x28] sm:$0xff]
  %v548 = vld [vmem:[%s2 + $0x30] sm:$0xff]
  %v549 = vld [vmem:[%s2 + $0x38] sm:$0xff]
  %551 = vset.pattern.permute.xlu0 0
  %552 = vperm.xlu0 %551, %v542
  %v553 = vpop.permute.xlu0 %552
  %556 = vset.pattern.permute.xlu0 0
  %557 = vperm.xlu0 %556, %v543
  %v558 = vpop.permute.xlu0 %557
  %561 = vset.pattern.permute.xlu0 0
  %562 = vperm.xlu0 %561, %v544
  %v563 = vpop.permute.xlu0 %562
  %566 = vset.pattern.permute.xlu0 0
  %567 = vperm.xlu0 %566, %v545
  %v568 = vpop.permute.xlu0 %567
  %571 = vset.pattern.permute.xlu0 0
  %572 = vperm.xlu0 %571, %v546
  %v573 = vpop.permute.xlu0 %572
  %576 = vset.pattern.permute.xlu0 0
  %577 = vperm.xlu0 %576, %v547
  %v578 = vpop.permute.xlu0 %577
  %581 = vset.pattern.permute.xlu0 0
  %582 = vperm.xlu0 %581, %v548
  %v583 = vpop.permute.xlu0 %582
  %586 = vset.pattern.permute.xlu0 0
  %587 = vperm.xlu0 %586, %v549
  %v588 = vpop.permute.xlu0 %587
  %v606 = vunpack.c.l.b16 %v14
  %v607 = vunpack.c.h.b16 %v14
  %v608 = vunpack.c.l.b16 %v15
  %v609 = vunpack.c.h.b16 %v15
  %v610 = vunpack.c.l.b16 %v16
  %v611 = vunpack.c.h.b16 %v16
  %v612 = vunpack.c.l.b16 %v17
  %v613 = vunpack.c.h.b16 %v17
  %v614 = vunpack.c.l.b16 %v18
  %v615 = vunpack.c.h.b16 %v18
  %v616 = vunpack.c.l.b16 %v19
  %v617 = vunpack.c.h.b16 %v19
  %v618 = vunpack.c.l.b16 %v20
  %v619 = vunpack.c.h.b16 %v20
  %v620 = vunpack.c.l.b16 %v21
  %v621 = vunpack.c.h.b16 %v21
  %v622 = vunpack.c.l.b16 %v22
  %v623 = vunpack.c.h.b16 %v22
  %v624 = vunpack.c.l.b16 %v23
  %v625 = vunpack.c.h.b16 %v23
  %v626 = vunpack.c.l.b16 %v24
  %v627 = vunpack.c.h.b16 %v24
  %v628 = vunpack.c.l.b16 %v25
  %v629 = vunpack.c.h.b16 %v25
  %v630 = vunpack.c.l.b16 %v26
  %v631 = vunpack.c.h.b16 %v26
  %v632 = vunpack.c.l.b16 %v27
  %v633 = vunpack.c.h.b16 %v27
  %v634 = vunpack.c.l.b16 %v28
  %v635 = vunpack.c.h.b16 %v28
  %v636 = vunpack.c.l.b16 %v29
  %v637 = vunpack.c.h.b16 %v29
  %v638 = vpack.c.b16 %v610, %v606
  %v639 = vpack.c.b16 %v611, %v607
  %v640 = vpack.c.b16 %v612, %v608
  %v641 = vpack.c.b16 %v613, %v609
  %v642 = vpack.c.b16 %v618, %v614
  %v643 = vpack.c.b16 %v619, %v615
  %v644 = vpack.c.b16 %v620, %v616
  %v645 = vpack.c.b16 %v621, %v617
  %v646 = vpack.c.b16 %v626, %v622
  %v647 = vpack.c.b16 %v627, %v623
  %v648 = vpack.c.b16 %v628, %v624
  %v649 = vpack.c.b16 %v629, %v625
  %v650 = vpack.c.b16 %v634, %v630
  %v651 = vpack.c.b16 %v635, %v631
  %v652 = vpack.c.b16 %v636, %v632
  %v653 = vpack.c.b16 %v637, %v633
  %v1182 = vunpack.c.l.b16 %v30
  %v1183 = vunpack.c.h.b16 %v30
  %v1184 = vunpack.c.l.b16 %v31
  %v1185 = vunpack.c.h.b16 %v31
  %v1186 = vunpack.c.l.b16 %v32
  %v1187 = vunpack.c.h.b16 %v32
  %v1188 = vunpack.c.l.b16 %v33
  %v1189 = vunpack.c.h.b16 %v33
  %v1190 = vunpack.c.l.b16 %v34
  %v1191 = vunpack.c.h.b16 %v34
  %v1192 = vunpack.c.l.b16 %v35
  %v1193 = vunpack.c.h.b16 %v35
  %v1194 = vunpack.c.l.b16 %v36
  %v1195 = vunpack.c.h.b16 %v36
  %v1196 = vunpack.c.l.b16 %v37
  %v1197 = vunpack.c.h.b16 %v37
  %v1198 = vunpack.c.l.b16 %v38
  %v1199 = vunpack.c.h.b16 %v38
  %v1200 = vunpack.c.l.b16 %v39
  %v1201 = vunpack.c.h.b16 %v39
  %v1202 = vunpack.c.l.b16 %v40
  %v1203 = vunpack.c.h.b16 %v40
  %v1204 = vunpack.c.l.b16 %v41
  %v1205 = vunpack.c.h.b16 %v41
  %v1206 = vunpack.c.l.b16 %v42
  %v1207 = vunpack.c.h.b16 %v42
  %v1208 = vunpack.c.l.b16 %v43
  %v1209 = vunpack.c.h.b16 %v43
  %v1210 = vunpack.c.l.b16 %v44
  %v1211 = vunpack.c.h.b16 %v44
  %v1212 = vunpack.c.l.b16 %v45
  %v1213 = vunpack.c.h.b16 %v45
  %v1214 = vunpack.c.l.b16 %v46
  %v1215 = vunpack.c.h.b16 %v46
  %v1216 = vunpack.c.l.b16 %v47
  %v1217 = vunpack.c.h.b16 %v47
  %v1218 = vunpack.c.l.b16 %v48
  %v1219 = vunpack.c.h.b16 %v48
  %v1220 = vunpack.c.l.b16 %v49
  %v1221 = vunpack.c.h.b16 %v49
  %v1222 = vunpack.c.l.b16 %v50
  %v1223 = vunpack.c.h.b16 %v50
  %v1224 = vunpack.c.l.b16 %v51
  %v1225 = vunpack.c.h.b16 %v51
  %v1226 = vunpack.c.l.b16 %v52
  %v1227 = vunpack.c.h.b16 %v52
  %v1228 = vunpack.c.l.b16 %v53
  %v1229 = vunpack.c.h.b16 %v53
  %v1230 = vunpack.c.l.b16 %v54
  %v1231 = vunpack.c.h.b16 %v54
  %v1232 = vunpack.c.l.b16 %v55
  %v1233 = vunpack.c.h.b16 %v55
  %v1234 = vunpack.c.l.b16 %v56
  %v1235 = vunpack.c.h.b16 %v56
  %v1236 = vunpack.c.l.b16 %v57
  %v1237 = vunpack.c.h.b16 %v57
  %v1238 = vunpack.c.l.b16 %v58
  %v1239 = vunpack.c.h.b16 %v58
  %v1240 = vunpack.c.l.b16 %v59
  %v1241 = vunpack.c.h.b16 %v59
  %v1242 = vunpack.c.l.b16 %v60
  %v1243 = vunpack.c.h.b16 %v60
  %v1244 = vunpack.c.l.b16 %v61
  %v1245 = vunpack.c.h.b16 %v61
  %v1246 = vunpack.c.l.b16 %v62
  %v1247 = vunpack.c.h.b16 %v62
  %v1248 = vunpack.c.l.b16 %v63
  %v1249 = vunpack.c.h.b16 %v63
  %v1250 = vunpack.c.l.b16 %v64
  %v1251 = vunpack.c.h.b16 %v64
  %v1252 = vunpack.c.l.b16 %v65
  %v1253 = vunpack.c.h.b16 %v65
  %v1254 = vunpack.c.l.b16 %v66
  %v1255 = vunpack.c.h.b16 %v66
  %v1256 = vunpack.c.l.b16 %v67
  %v1257 = vunpack.c.h.b16 %v67
  %v1258 = vunpack.c.l.b16 %v68
  %v1259 = vunpack.c.h.b16 %v68
  %v1260 = vunpack.c.l.b16 %v69
  %v1261 = vunpack.c.h.b16 %v69
  %v1262 = vunpack.c.l.b16 %v70
  %v1263 = vunpack.c.h.b16 %v70
  %v1264 = vunpack.c.l.b16 %v71
  %v1265 = vunpack.c.h.b16 %v71
  %v1266 = vunpack.c.l.b16 %v72
  %v1267 = vunpack.c.h.b16 %v72
  %v1268 = vunpack.c.l.b16 %v73
  %v1269 = vunpack.c.h.b16 %v73
  %v1270 = vunpack.c.l.b16 %v74
  %v1271 = vunpack.c.h.b16 %v74
  %v1272 = vunpack.c.l.b16 %v75
  %v1273 = vunpack.c.h.b16 %v75
  %v1274 = vunpack.c.l.b16 %v76
  %v1275 = vunpack.c.h.b16 %v76
  %v1276 = vunpack.c.l.b16 %v77
  %v1277 = vunpack.c.h.b16 %v77
  %v1278 = vunpack.c.l.b16 %v78
  %v1279 = vunpack.c.h.b16 %v78
  %v1280 = vunpack.c.l.b16 %v79
  %v1281 = vunpack.c.h.b16 %v79
  %v1282 = vunpack.c.l.b16 %v80
  %v1283 = vunpack.c.h.b16 %v80
  %v1284 = vunpack.c.l.b16 %v81
  %v1285 = vunpack.c.h.b16 %v81
  %v1286 = vunpack.c.l.b16 %v82
  %v1287 = vunpack.c.h.b16 %v82
  %v1288 = vunpack.c.l.b16 %v83
  %v1289 = vunpack.c.h.b16 %v83
  %v1290 = vunpack.c.l.b16 %v84
  %v1291 = vunpack.c.h.b16 %v84
  %v1292 = vunpack.c.l.b16 %v85
  %v1293 = vunpack.c.h.b16 %v85
  %v1294 = vunpack.c.l.b16 %v86
  %v1295 = vunpack.c.h.b16 %v86
  %v1296 = vunpack.c.l.b16 %v87
  %v1297 = vunpack.c.h.b16 %v87
  %v1298 = vunpack.c.l.b16 %v88
  %v1299 = vunpack.c.h.b16 %v88
  %v1300 = vunpack.c.l.b16 %v89
  %v1301 = vunpack.c.h.b16 %v89
  %v1302 = vunpack.c.l.b16 %v90
  %v1303 = vunpack.c.h.b16 %v90
  %v1304 = vunpack.c.l.b16 %v91
  %v1305 = vunpack.c.h.b16 %v91
  %v1306 = vunpack.c.l.b16 %v92
  %v1307 = vunpack.c.h.b16 %v92
  %v1308 = vunpack.c.l.b16 %v93
  %v1309 = vunpack.c.h.b16 %v93
  %v1310 = vunpack.c.l.b16 %v94
  %v1311 = vunpack.c.h.b16 %v94
  %v1312 = vunpack.c.l.b16 %v95
  %v1313 = vunpack.c.h.b16 %v95
  %v1314 = vunpack.c.l.b16 %v96
  %v1315 = vunpack.c.h.b16 %v96
  %v1316 = vunpack.c.l.b16 %v97
  %v1317 = vunpack.c.h.b16 %v97
  %v1318 = vunpack.c.l.b16 %v98
  %v1319 = vunpack.c.h.b16 %v98
  %v1320 = vunpack.c.l.b16 %v99
  %v1321 = vunpack.c.h.b16 %v99
  %v1322 = vunpack.c.l.b16 %v100
  %v1323 = vunpack.c.h.b16 %v100
  %v1324 = vunpack.c.l.b16 %v101
  %v1325 = vunpack.c.h.b16 %v101
  %v1326 = vunpack.c.l.b16 %v102
  %v1327 = vunpack.c.h.b16 %v102
  %v1328 = vunpack.c.l.b16 %v103
  %v1329 = vunpack.c.h.b16 %v103
  %v1330 = vunpack.c.l.b16 %v104
  %v1331 = vunpack.c.h.b16 %v104
  %v1332 = vunpack.c.l.b16 %v105
  %v1333 = vunpack.c.h.b16 %v105
  %v1334 = vunpack.c.l.b16 %v106
  %v1335 = vunpack.c.h.b16 %v106
  %v1336 = vunpack.c.l.b16 %v107
  %v1337 = vunpack.c.h.b16 %v107
  %v1338 = vunpack.c.l.b16 %v108
  %v1339 = vunpack.c.h.b16 %v108
  %v1340 = vunpack.c.l.b16 %v109
  %v1341 = vunpack.c.h.b16 %v109
  %v1342 = vunpack.c.l.b16 %v110
  %v1343 = vunpack.c.h.b16 %v110
  %v1344 = vunpack.c.l.b16 %v111
  %v1345 = vunpack.c.h.b16 %v111
  %v1346 = vunpack.c.l.b16 %v112
  %v1347 = vunpack.c.h.b16 %v112
  %v1348 = vunpack.c.l.b16 %v113
  %v1349 = vunpack.c.h.b16 %v113
  %v1350 = vunpack.c.l.b16 %v114
  %v1351 = vunpack.c.h.b16 %v114
  %v1352 = vunpack.c.l.b16 %v115
  %v1353 = vunpack.c.h.b16 %v115
  %v1354 = vunpack.c.l.b16 %v116
  %v1355 = vunpack.c.h.b16 %v116
  %v1356 = vunpack.c.l.b16 %v117
  %v1357 = vunpack.c.h.b16 %v117
  %v1358 = vunpack.c.l.b16 %v118
  %v1359 = vunpack.c.h.b16 %v118
  %v1360 = vunpack.c.l.b16 %v119
  %v1361 = vunpack.c.h.b16 %v119
  %v1362 = vunpack.c.l.b16 %v120
  %v1363 = vunpack.c.h.b16 %v120
  %v1364 = vunpack.c.l.b16 %v121
  %v1365 = vunpack.c.h.b16 %v121
  %v1366 = vunpack.c.l.b16 %v122
  %v1367 = vunpack.c.h.b16 %v122
  %v1368 = vunpack.c.l.b16 %v123
  %v1369 = vunpack.c.h.b16 %v123
  %v1370 = vunpack.c.l.b16 %v124
  %v1371 = vunpack.c.h.b16 %v124
  %v1372 = vunpack.c.l.b16 %v125
  %v1373 = vunpack.c.h.b16 %v125
  %v1374 = vunpack.c.l.b16 %v126
  %v1375 = vunpack.c.h.b16 %v126
  %v1376 = vunpack.c.l.b16 %v127
  %v1377 = vunpack.c.h.b16 %v127
  %v1378 = vunpack.c.l.b16 %v128
  %v1379 = vunpack.c.h.b16 %v128
  %v1380 = vunpack.c.l.b16 %v129
  %v1381 = vunpack.c.h.b16 %v129
  %v1382 = vunpack.c.l.b16 %v130
  %v1383 = vunpack.c.h.b16 %v130
  %v1384 = vunpack.c.l.b16 %v131
  %v1385 = vunpack.c.h.b16 %v131
  %v1386 = vunpack.c.l.b16 %v132
  %v1387 = vunpack.c.h.b16 %v132
  %v1388 = vunpack.c.l.b16 %v133
  %v1389 = vunpack.c.h.b16 %v133
  %v1390 = vunpack.c.l.b16 %v134
  %v1391 = vunpack.c.h.b16 %v134
  %v1392 = vunpack.c.l.b16 %v135
  %v1393 = vunpack.c.h.b16 %v135
  %v1394 = vunpack.c.l.b16 %v136
  %v1395 = vunpack.c.h.b16 %v136
  %v1396 = vunpack.c.l.b16 %v137
  %v1397 = vunpack.c.h.b16 %v137
  %v1398 = vunpack.c.l.b16 %v138
  %v1399 = vunpack.c.h.b16 %v138
  %v1400 = vunpack.c.l.b16 %v139
  %v1401 = vunpack.c.h.b16 %v139
  %v1402 = vunpack.c.l.b16 %v140
  %v1403 = vunpack.c.h.b16 %v140
  %v1404 = vunpack.c.l.b16 %v141
  %v1405 = vunpack.c.h.b16 %v141
  %v1406 = vunpack.c.l.b16 %v142
  %v1407 = vunpack.c.h.b16 %v142
  %v1408 = vunpack.c.l.b16 %v143
  %v1409 = vunpack.c.h.b16 %v143
  %v1410 = vunpack.c.l.b16 %v144
  %v1411 = vunpack.c.h.b16 %v144
  %v1412 = vunpack.c.l.b16 %v145
  %v1413 = vunpack.c.h.b16 %v145
  %v1414 = vunpack.c.l.b16 %v146
  %v1415 = vunpack.c.h.b16 %v146
  %v1416 = vunpack.c.l.b16 %v147
  %v1417 = vunpack.c.h.b16 %v147
  %v1418 = vunpack.c.l.b16 %v148
  %v1419 = vunpack.c.h.b16 %v148
  %v1420 = vunpack.c.l.b16 %v149
  %v1421 = vunpack.c.h.b16 %v149
  %v1422 = vunpack.c.l.b16 %v150
  %v1423 = vunpack.c.h.b16 %v150
  %v1424 = vunpack.c.l.b16 %v151
  %v1425 = vunpack.c.h.b16 %v151
  %v1426 = vunpack.c.l.b16 %v152
  %v1427 = vunpack.c.h.b16 %v152
  %v1428 = vunpack.c.l.b16 %v153
  %v1429 = vunpack.c.h.b16 %v153
  %v1430 = vunpack.c.l.b16 %v154
  %v1431 = vunpack.c.h.b16 %v154
  %v1432 = vunpack.c.l.b16 %v155
  %v1433 = vunpack.c.h.b16 %v155
  %v1434 = vunpack.c.l.b16 %v156
  %v1435 = vunpack.c.h.b16 %v156
  %v1436 = vunpack.c.l.b16 %v157
  %v1437 = vunpack.c.h.b16 %v157
  %v1438 = vunpack.c.l.b16 %v158
  %v1439 = vunpack.c.h.b16 %v158
  %v1440 = vunpack.c.l.b16 %v159
  %v1441 = vunpack.c.h.b16 %v159
  %v1442 = vunpack.c.l.b16 %v160
  %v1443 = vunpack.c.h.b16 %v160
  %v1444 = vunpack.c.l.b16 %v161
  %v1445 = vunpack.c.h.b16 %v161
  %v1446 = vunpack.c.l.b16 %v162
  %v1447 = vunpack.c.h.b16 %v162
  %v1448 = vunpack.c.l.b16 %v163
  %v1449 = vunpack.c.h.b16 %v163
  %v1450 = vunpack.c.l.b16 %v164
  %v1451 = vunpack.c.h.b16 %v164
  %v1452 = vunpack.c.l.b16 %v165
  %v1453 = vunpack.c.h.b16 %v165
  %v1454 = vunpack.c.l.b16 %v166
  %v1455 = vunpack.c.h.b16 %v166
  %v1456 = vunpack.c.l.b16 %v167
  %v1457 = vunpack.c.h.b16 %v167
  %v1458 = vunpack.c.l.b16 %v168
  %v1459 = vunpack.c.h.b16 %v168
  %v1460 = vunpack.c.l.b16 %v169
  %v1461 = vunpack.c.h.b16 %v169
  %v1462 = vunpack.c.l.b16 %v170
  %v1463 = vunpack.c.h.b16 %v170
  %v1464 = vunpack.c.l.b16 %v171
  %v1465 = vunpack.c.h.b16 %v171
  %v1466 = vunpack.c.l.b16 %v172
  %v1467 = vunpack.c.h.b16 %v172
  %v1468 = vunpack.c.l.b16 %v173
  %v1469 = vunpack.c.h.b16 %v173
  %v1470 = vunpack.c.l.b16 %v174
  %v1471 = vunpack.c.h.b16 %v174
  %v1472 = vunpack.c.l.b16 %v175
  %v1473 = vunpack.c.h.b16 %v175
  %v1474 = vunpack.c.l.b16 %v176
  %v1475 = vunpack.c.h.b16 %v176
  %v1476 = vunpack.c.l.b16 %v177
  %v1477 = vunpack.c.h.b16 %v177
  %v1478 = vunpack.c.l.b16 %v178
  %v1479 = vunpack.c.h.b16 %v178
  %v1480 = vunpack.c.l.b16 %v179
  %v1481 = vunpack.c.h.b16 %v179
  %v1482 = vunpack.c.l.b16 %v180
  %v1483 = vunpack.c.h.b16 %v180
  %v1484 = vunpack.c.l.b16 %v181
  %v1485 = vunpack.c.h.b16 %v181
  %v1486 = vunpack.c.l.b16 %v182
  %v1487 = vunpack.c.h.b16 %v182
  %v1488 = vunpack.c.l.b16 %v183
  %v1489 = vunpack.c.h.b16 %v183
  %v1490 = vunpack.c.l.b16 %v184
  %v1491 = vunpack.c.h.b16 %v184
  %v1492 = vunpack.c.l.b16 %v185
  %v1493 = vunpack.c.h.b16 %v185
  %v1494 = vunpack.c.l.b16 %v186
  %v1495 = vunpack.c.h.b16 %v186
  %v1496 = vunpack.c.l.b16 %v187
  %v1497 = vunpack.c.h.b16 %v187
  %v1498 = vunpack.c.l.b16 %v188
  %v1499 = vunpack.c.h.b16 %v188
  %v1500 = vunpack.c.l.b16 %v189
  %v1501 = vunpack.c.h.b16 %v189
  %v1502 = vunpack.c.l.b16 %v190
  %v1503 = vunpack.c.h.b16 %v190
  %v1504 = vunpack.c.l.b16 %v191
  %v1505 = vunpack.c.h.b16 %v191
  %v1506 = vunpack.c.l.b16 %v192
  %v1507 = vunpack.c.h.b16 %v192
  %v1508 = vunpack.c.l.b16 %v193
  %v1509 = vunpack.c.h.b16 %v193
  %v1510 = vunpack.c.l.b16 %v194
  %v1511 = vunpack.c.h.b16 %v194
  %v1512 = vunpack.c.l.b16 %v195
  %v1513 = vunpack.c.h.b16 %v195
  %v1514 = vunpack.c.l.b16 %v196
  %v1515 = vunpack.c.h.b16 %v196
  %v1516 = vunpack.c.l.b16 %v197
  %v1517 = vunpack.c.h.b16 %v197
  %v1518 = vunpack.c.l.b16 %v198
  %v1519 = vunpack.c.h.b16 %v198
  %v1520 = vunpack.c.l.b16 %v199
  %v1521 = vunpack.c.h.b16 %v199
  %v1522 = vunpack.c.l.b16 %v200
  %v1523 = vunpack.c.h.b16 %v200
  %v1524 = vunpack.c.l.b16 %v201
  %v1525 = vunpack.c.h.b16 %v201
  %v1526 = vunpack.c.l.b16 %v202
  %v1527 = vunpack.c.h.b16 %v202
  %v1528 = vunpack.c.l.b16 %v203
  %v1529 = vunpack.c.h.b16 %v203
  %v1530 = vunpack.c.l.b16 %v204
  %v1531 = vunpack.c.h.b16 %v204
  %v1532 = vunpack.c.l.b16 %v205
  %v1533 = vunpack.c.h.b16 %v205
  %v1534 = vunpack.c.l.b16 %v206
  %v1535 = vunpack.c.h.b16 %v206
  %v1536 = vunpack.c.l.b16 %v207
  %v1537 = vunpack.c.h.b16 %v207
  %v1538 = vunpack.c.l.b16 %v208
  %v1539 = vunpack.c.h.b16 %v208
  %v1540 = vunpack.c.l.b16 %v209
  %v1541 = vunpack.c.h.b16 %v209
  %v1542 = vunpack.c.l.b16 %v210
  %v1543 = vunpack.c.h.b16 %v210
  %v1544 = vunpack.c.l.b16 %v211
  %v1545 = vunpack.c.h.b16 %v211
  %v1546 = vunpack.c.l.b16 %v212
  %v1547 = vunpack.c.h.b16 %v212
  %v1548 = vunpack.c.l.b16 %v213
  %v1549 = vunpack.c.h.b16 %v213
  %v1550 = vunpack.c.l.b16 %v214
  %v1551 = vunpack.c.h.b16 %v214
  %v1552 = vunpack.c.l.b16 %v215
  %v1553 = vunpack.c.h.b16 %v215
  %v1554 = vunpack.c.l.b16 %v216
  %v1555 = vunpack.c.h.b16 %v216
  %v1556 = vunpack.c.l.b16 %v217
  %v1557 = vunpack.c.h.b16 %v217
  %v1558 = vunpack.c.l.b16 %v218
  %v1559 = vunpack.c.h.b16 %v218
  %v1560 = vunpack.c.l.b16 %v219
  %v1561 = vunpack.c.h.b16 %v219
  %v1562 = vunpack.c.l.b16 %v220
  %v1563 = vunpack.c.h.b16 %v220
  %v1564 = vunpack.c.l.b16 %v221
  %v1565 = vunpack.c.h.b16 %v221
  %v1566 = vunpack.c.l.b16 %v222
  %v1567 = vunpack.c.h.b16 %v222
  %v1568 = vunpack.c.l.b16 %v223
  %v1569 = vunpack.c.h.b16 %v223
  %v1570 = vunpack.c.l.b16 %v224
  %v1571 = vunpack.c.h.b16 %v224
  %v1572 = vunpack.c.l.b16 %v225
  %v1573 = vunpack.c.h.b16 %v225
  %v1574 = vunpack.c.l.b16 %v226
  %v1575 = vunpack.c.h.b16 %v226
  %v1576 = vunpack.c.l.b16 %v227
  %v1577 = vunpack.c.h.b16 %v227
  %v1578 = vunpack.c.l.b16 %v228
  %v1579 = vunpack.c.h.b16 %v228
  %v1580 = vunpack.c.l.b16 %v229
  %v1581 = vunpack.c.h.b16 %v229
  %v1582 = vunpack.c.l.b16 %v230
  %v1583 = vunpack.c.h.b16 %v230
  %v1584 = vunpack.c.l.b16 %v231
  %v1585 = vunpack.c.h.b16 %v231
  %v1586 = vunpack.c.l.b16 %v232
  %v1587 = vunpack.c.h.b16 %v232
  %v1588 = vunpack.c.l.b16 %v233
  %v1589 = vunpack.c.h.b16 %v233
  %v1590 = vunpack.c.l.b16 %v234
  %v1591 = vunpack.c.h.b16 %v234
  %v1592 = vunpack.c.l.b16 %v235
  %v1593 = vunpack.c.h.b16 %v235
  %v1594 = vunpack.c.l.b16 %v236
  %v1595 = vunpack.c.h.b16 %v236
  %v1596 = vunpack.c.l.b16 %v237
  %v1597 = vunpack.c.h.b16 %v237
  %v1598 = vunpack.c.l.b16 %v238
  %v1599 = vunpack.c.h.b16 %v238
  %v1600 = vunpack.c.l.b16 %v239
  %v1601 = vunpack.c.h.b16 %v239
  %v1602 = vunpack.c.l.b16 %v240
  %v1603 = vunpack.c.h.b16 %v240
  %v1604 = vunpack.c.l.b16 %v241
  %v1605 = vunpack.c.h.b16 %v241
  %v1606 = vunpack.c.l.b16 %v242
  %v1607 = vunpack.c.h.b16 %v242
  %v1608 = vunpack.c.l.b16 %v243
  %v1609 = vunpack.c.h.b16 %v243
  %v1610 = vunpack.c.l.b16 %v244
  %v1611 = vunpack.c.h.b16 %v244
  %v1612 = vunpack.c.l.b16 %v245
  %v1613 = vunpack.c.h.b16 %v245
  %v1614 = vunpack.c.l.b16 %v246
  %v1615 = vunpack.c.h.b16 %v246
  %v1616 = vunpack.c.l.b16 %v247
  %v1617 = vunpack.c.h.b16 %v247
  %v1618 = vunpack.c.l.b16 %v248
  %v1619 = vunpack.c.h.b16 %v248
  %v1620 = vunpack.c.l.b16 %v249
  %v1621 = vunpack.c.h.b16 %v249
  %v1622 = vunpack.c.l.b16 %v250
  %v1623 = vunpack.c.h.b16 %v250
  %v1624 = vunpack.c.l.b16 %v251
  %v1625 = vunpack.c.h.b16 %v251
  %v1626 = vunpack.c.l.b16 %v252
  %v1627 = vunpack.c.h.b16 %v252
  %v1628 = vunpack.c.l.b16 %v253
  %v1629 = vunpack.c.h.b16 %v253
  %v1630 = vunpack.c.l.b16 %v254
  %v1631 = vunpack.c.h.b16 %v254
  %v1632 = vunpack.c.l.b16 %v255
  %v1633 = vunpack.c.h.b16 %v255
  %v1634 = vunpack.c.l.b16 %v256
  %v1635 = vunpack.c.h.b16 %v256
  %v1636 = vunpack.c.l.b16 %v257
  %v1637 = vunpack.c.h.b16 %v257
  %v1638 = vunpack.c.l.b16 %v258
  %v1639 = vunpack.c.h.b16 %v258
  %v1640 = vunpack.c.l.b16 %v259
  %v1641 = vunpack.c.h.b16 %v259
  %v1642 = vunpack.c.l.b16 %v260
  %v1643 = vunpack.c.h.b16 %v260
  %v1644 = vunpack.c.l.b16 %v261
  %v1645 = vunpack.c.h.b16 %v261
  %v1646 = vunpack.c.l.b16 %v262
  %v1647 = vunpack.c.h.b16 %v262
  %v1648 = vunpack.c.l.b16 %v263
  %v1649 = vunpack.c.h.b16 %v263
  %v1650 = vunpack.c.l.b16 %v264
  %v1651 = vunpack.c.h.b16 %v264
  %v1652 = vunpack.c.l.b16 %v265
  %v1653 = vunpack.c.h.b16 %v265
  %v1654 = vunpack.c.l.b16 %v266
  %v1655 = vunpack.c.h.b16 %v266
  %v1656 = vunpack.c.l.b16 %v267
  %v1657 = vunpack.c.h.b16 %v267
  %v1658 = vunpack.c.l.b16 %v268
  %v1659 = vunpack.c.h.b16 %v268
  %v1660 = vunpack.c.l.b16 %v269
  %v1661 = vunpack.c.h.b16 %v269
  %v1662 = vunpack.c.l.b16 %v270
  %v1663 = vunpack.c.h.b16 %v270
  %v1664 = vunpack.c.l.b16 %v271
  %v1665 = vunpack.c.h.b16 %v271
  %v1666 = vunpack.c.l.b16 %v272
  %v1667 = vunpack.c.h.b16 %v272
  %v1668 = vunpack.c.l.b16 %v273
  %v1669 = vunpack.c.h.b16 %v273
  %v1670 = vunpack.c.l.b16 %v274
  %v1671 = vunpack.c.h.b16 %v274
  %v1672 = vunpack.c.l.b16 %v275
  %v1673 = vunpack.c.h.b16 %v275
  %v1674 = vunpack.c.l.b16 %v276
  %v1675 = vunpack.c.h.b16 %v276
  %v1676 = vunpack.c.l.b16 %v277
  %v1677 = vunpack.c.h.b16 %v277
  %v1678 = vunpack.c.l.b16 %v278
  %v1679 = vunpack.c.h.b16 %v278
  %v1680 = vunpack.c.l.b16 %v279
  %v1681 = vunpack.c.h.b16 %v279
  %v1682 = vunpack.c.l.b16 %v280
  %v1683 = vunpack.c.h.b16 %v280
  %v1684 = vunpack.c.l.b16 %v281
  %v1685 = vunpack.c.h.b16 %v281
  %v1686 = vunpack.c.l.b16 %v282
  %v1687 = vunpack.c.h.b16 %v282
  %v1688 = vunpack.c.l.b16 %v283
  %v1689 = vunpack.c.h.b16 %v283
  %v1690 = vunpack.c.l.b16 %v284
  %v1691 = vunpack.c.h.b16 %v284
  %v1692 = vunpack.c.l.b16 %v285
  %v1693 = vunpack.c.h.b16 %v285
  %v1694 = vunpack.c.l.b16 %v286
  %v1695 = vunpack.c.h.b16 %v286
  %v1696 = vunpack.c.l.b16 %v287
  %v1697 = vunpack.c.h.b16 %v287
  %v1698 = vunpack.c.l.b16 %v288
  %v1699 = vunpack.c.h.b16 %v288
  %v1700 = vunpack.c.l.b16 %v289
  %v1701 = vunpack.c.h.b16 %v289
  %v1702 = vunpack.c.l.b16 %v290
  %v1703 = vunpack.c.h.b16 %v290
  %v1704 = vunpack.c.l.b16 %v291
  %v1705 = vunpack.c.h.b16 %v291
  %v1706 = vunpack.c.l.b16 %v292
  %v1707 = vunpack.c.h.b16 %v292
  %v1708 = vunpack.c.l.b16 %v293
  %v1709 = vunpack.c.h.b16 %v293
  %v1710 = vunpack.c.l.b16 %v294
  %v1711 = vunpack.c.h.b16 %v294
  %v1712 = vunpack.c.l.b16 %v295
  %v1713 = vunpack.c.h.b16 %v295
  %v1714 = vunpack.c.l.b16 %v296
  %v1715 = vunpack.c.h.b16 %v296
  %v1716 = vunpack.c.l.b16 %v297
  %v1717 = vunpack.c.h.b16 %v297
  %v1718 = vunpack.c.l.b16 %v298
  %v1719 = vunpack.c.h.b16 %v298
  %v1720 = vunpack.c.l.b16 %v299
  %v1721 = vunpack.c.h.b16 %v299
  %v1722 = vunpack.c.l.b16 %v300
  %v1723 = vunpack.c.h.b16 %v300
  %v1724 = vunpack.c.l.b16 %v301
  %v1725 = vunpack.c.h.b16 %v301
  %v1726 = vunpack.c.l.b16 %v302
  %v1727 = vunpack.c.h.b16 %v302
  %v1728 = vunpack.c.l.b16 %v303
  %v1729 = vunpack.c.h.b16 %v303
  %v1730 = vunpack.c.l.b16 %v304
  %v1731 = vunpack.c.h.b16 %v304
  %v1732 = vunpack.c.l.b16 %v305
  %v1733 = vunpack.c.h.b16 %v305
  %v1734 = vunpack.c.l.b16 %v306
  %v1735 = vunpack.c.h.b16 %v306
  %v1736 = vunpack.c.l.b16 %v307
  %v1737 = vunpack.c.h.b16 %v307
  %v1738 = vunpack.c.l.b16 %v308
  %v1739 = vunpack.c.h.b16 %v308
  %v1740 = vunpack.c.l.b16 %v309
  %v1741 = vunpack.c.h.b16 %v309
  %v1742 = vunpack.c.l.b16 %v310
  %v1743 = vunpack.c.h.b16 %v310
  %v1744 = vunpack.c.l.b16 %v311
  %v1745 = vunpack.c.h.b16 %v311
  %v1746 = vunpack.c.l.b16 %v312
  %v1747 = vunpack.c.h.b16 %v312
  %v1748 = vunpack.c.l.b16 %v313
  %v1749 = vunpack.c.h.b16 %v313
  %v1750 = vunpack.c.l.b16 %v314
  %v1751 = vunpack.c.h.b16 %v314
  %v1752 = vunpack.c.l.b16 %v315
  %v1753 = vunpack.c.h.b16 %v315
  %v1754 = vunpack.c.l.b16 %v316
  %v1755 = vunpack.c.h.b16 %v316
  %v1756 = vunpack.c.l.b16 %v317
  %v1757 = vunpack.c.h.b16 %v317
  %v1758 = vunpack.c.l.b16 %v318
  %v1759 = vunpack.c.h.b16 %v318
  %v1760 = vunpack.c.l.b16 %v319
  %v1761 = vunpack.c.h.b16 %v319
  %v1762 = vunpack.c.l.b16 %v320
  %v1763 = vunpack.c.h.b16 %v320
  %v1764 = vunpack.c.l.b16 %v321
  %v1765 = vunpack.c.h.b16 %v321
  %v1766 = vunpack.c.l.b16 %v322
  %v1767 = vunpack.c.h.b16 %v322
  %v1768 = vunpack.c.l.b16 %v323
  %v1769 = vunpack.c.h.b16 %v323
  %v1770 = vunpack.c.l.b16 %v324
  %v1771 = vunpack.c.h.b16 %v324
  %v1772 = vunpack.c.l.b16 %v325
  %v1773 = vunpack.c.h.b16 %v325
  %v1774 = vunpack.c.l.b16 %v326
  %v1775 = vunpack.c.h.b16 %v326
  %v1776 = vunpack.c.l.b16 %v327
  %v1777 = vunpack.c.h.b16 %v327
  %v1778 = vunpack.c.l.b16 %v328
  %v1779 = vunpack.c.h.b16 %v328
  %v1780 = vunpack.c.l.b16 %v329
  %v1781 = vunpack.c.h.b16 %v329
  %v1782 = vunpack.c.l.b16 %v330
  %v1783 = vunpack.c.h.b16 %v330
  %v1784 = vunpack.c.l.b16 %v331
  %v1785 = vunpack.c.h.b16 %v331
  %v1786 = vunpack.c.l.b16 %v332
  %v1787 = vunpack.c.h.b16 %v332
  %v1788 = vunpack.c.l.b16 %v333
  %v1789 = vunpack.c.h.b16 %v333
  %v1790 = vunpack.c.l.b16 %v334
  %v1791 = vunpack.c.h.b16 %v334
  %v1792 = vunpack.c.l.b16 %v335
  %v1793 = vunpack.c.h.b16 %v335
  %v1794 = vunpack.c.l.b16 %v336
  %v1795 = vunpack.c.h.b16 %v336
  %v1796 = vunpack.c.l.b16 %v337
  %v1797 = vunpack.c.h.b16 %v337
  %v1798 = vunpack.c.l.b16 %v338
  %v1799 = vunpack.c.h.b16 %v338
  %v1800 = vunpack.c.l.b16 %v339
  %v1801 = vunpack.c.h.b16 %v339
  %v1802 = vunpack.c.l.b16 %v340
  %v1803 = vunpack.c.h.b16 %v340
  %v1804 = vunpack.c.l.b16 %v341
  %v1805 = vunpack.c.h.b16 %v341
  %v1806 = vunpack.c.l.b16 %v342
  %v1807 = vunpack.c.h.b16 %v342
  %v1808 = vunpack.c.l.b16 %v343
  %v1809 = vunpack.c.h.b16 %v343
  %v1810 = vunpack.c.l.b16 %v344
  %v1811 = vunpack.c.h.b16 %v344
  %v1812 = vunpack.c.l.b16 %v345
  %v1813 = vunpack.c.h.b16 %v345
  %v1814 = vunpack.c.l.b16 %v346
  %v1815 = vunpack.c.h.b16 %v346
  %v1816 = vunpack.c.l.b16 %v347
  %v1817 = vunpack.c.h.b16 %v347
  %v1818 = vunpack.c.l.b16 %v348
  %v1819 = vunpack.c.h.b16 %v348
  %v1820 = vunpack.c.l.b16 %v349
  %v1821 = vunpack.c.h.b16 %v349
  %v1822 = vunpack.c.l.b16 %v350
  %v1823 = vunpack.c.h.b16 %v350
  %v1824 = vunpack.c.l.b16 %v351
  %v1825 = vunpack.c.h.b16 %v351
  %v1826 = vunpack.c.l.b16 %v352
  %v1827 = vunpack.c.h.b16 %v352
  %v1828 = vunpack.c.l.b16 %v353
  %v1829 = vunpack.c.h.b16 %v353
  %v1830 = vunpack.c.l.b16 %v354
  %v1831 = vunpack.c.h.b16 %v354
  %v1832 = vunpack.c.l.b16 %v355
  %v1833 = vunpack.c.h.b16 %v355
  %v1834 = vunpack.c.l.b16 %v356
  %v1835 = vunpack.c.h.b16 %v356
  %v1836 = vunpack.c.l.b16 %v357
  %v1837 = vunpack.c.h.b16 %v357
  %v1838 = vunpack.c.l.b16 %v358
  %v1839 = vunpack.c.h.b16 %v358
  %v1840 = vunpack.c.l.b16 %v359
  %v1841 = vunpack.c.h.b16 %v359
  %v1842 = vunpack.c.l.b16 %v360
  %v1843 = vunpack.c.h.b16 %v360
  %v1844 = vunpack.c.l.b16 %v361
  %v1845 = vunpack.c.h.b16 %v361
  %v1846 = vunpack.c.l.b16 %v362
  %v1847 = vunpack.c.h.b16 %v362
  %v1848 = vunpack.c.l.b16 %v363
  %v1849 = vunpack.c.h.b16 %v363
  %v1850 = vunpack.c.l.b16 %v364
  %v1851 = vunpack.c.h.b16 %v364
  %v1852 = vunpack.c.l.b16 %v365
  %v1853 = vunpack.c.h.b16 %v365
  %v1854 = vunpack.c.l.b16 %v366
  %v1855 = vunpack.c.h.b16 %v366
  %v1856 = vunpack.c.l.b16 %v367
  %v1857 = vunpack.c.h.b16 %v367
  %v1858 = vunpack.c.l.b16 %v368
  %v1859 = vunpack.c.h.b16 %v368
  %v1860 = vunpack.c.l.b16 %v369
  %v1861 = vunpack.c.h.b16 %v369
  %v1862 = vunpack.c.l.b16 %v370
  %v1863 = vunpack.c.h.b16 %v370
  %v1864 = vunpack.c.l.b16 %v371
  %v1865 = vunpack.c.h.b16 %v371
  %v1866 = vunpack.c.l.b16 %v372
  %v1867 = vunpack.c.h.b16 %v372
  %v1868 = vunpack.c.l.b16 %v373
  %v1869 = vunpack.c.h.b16 %v373
  %v1870 = vunpack.c.l.b16 %v374
  %v1871 = vunpack.c.h.b16 %v374
  %v1872 = vunpack.c.l.b16 %v375
  %v1873 = vunpack.c.h.b16 %v375
  %v1874 = vunpack.c.l.b16 %v376
  %v1875 = vunpack.c.h.b16 %v376
  %v1876 = vunpack.c.l.b16 %v377
  %v1877 = vunpack.c.h.b16 %v377
  %v1878 = vunpack.c.l.b16 %v378
  %v1879 = vunpack.c.h.b16 %v378
  %v1880 = vunpack.c.l.b16 %v379
  %v1881 = vunpack.c.h.b16 %v379
  %v1882 = vunpack.c.l.b16 %v380
  %v1883 = vunpack.c.h.b16 %v380
  %v1884 = vunpack.c.l.b16 %v381
  %v1885 = vunpack.c.h.b16 %v381
  %v1886 = vunpack.c.l.b16 %v382
  %v1887 = vunpack.c.h.b16 %v382
  %v1888 = vunpack.c.l.b16 %v383
  %v1889 = vunpack.c.h.b16 %v383
  %v1890 = vunpack.c.l.b16 %v384
  %v1891 = vunpack.c.h.b16 %v384
  %v1892 = vunpack.c.l.b16 %v385
  %v1893 = vunpack.c.h.b16 %v385
  %v1894 = vunpack.c.l.b16 %v386
  %v1895 = vunpack.c.h.b16 %v386
  %v1896 = vunpack.c.l.b16 %v387
  %v1897 = vunpack.c.h.b16 %v387
  %v1898 = vunpack.c.l.b16 %v388
  %v1899 = vunpack.c.h.b16 %v388
  %v1900 = vunpack.c.l.b16 %v389
  %v1901 = vunpack.c.h.b16 %v389
  %v1902 = vunpack.c.l.b16 %v390
  %v1903 = vunpack.c.h.b16 %v390
  %v1904 = vunpack.c.l.b16 %v391
  %v1905 = vunpack.c.h.b16 %v391
  %v1906 = vunpack.c.l.b16 %v392
  %v1907 = vunpack.c.h.b16 %v392
  %v1908 = vunpack.c.l.b16 %v393
  %v1909 = vunpack.c.h.b16 %v393
  %v1910 = vunpack.c.l.b16 %v394
  %v1911 = vunpack.c.h.b16 %v394
  %v1912 = vunpack.c.l.b16 %v395
  %v1913 = vunpack.c.h.b16 %v395
  %v1914 = vunpack.c.l.b16 %v396
  %v1915 = vunpack.c.h.b16 %v396
  %v1916 = vunpack.c.l.b16 %v397
  %v1917 = vunpack.c.h.b16 %v397
  %v1918 = vunpack.c.l.b16 %v398
  %v1919 = vunpack.c.h.b16 %v398
  %v1920 = vunpack.c.l.b16 %v399
  %v1921 = vunpack.c.h.b16 %v399
  %v1922 = vunpack.c.l.b16 %v400
  %v1923 = vunpack.c.h.b16 %v400
  %v1924 = vunpack.c.l.b16 %v401
  %v1925 = vunpack.c.h.b16 %v401
  %v1926 = vunpack.c.l.b16 %v402
  %v1927 = vunpack.c.h.b16 %v402
  %v1928 = vunpack.c.l.b16 %v403
  %v1929 = vunpack.c.h.b16 %v403
  %v1930 = vunpack.c.l.b16 %v404
  %v1931 = vunpack.c.h.b16 %v404
  %v1932 = vunpack.c.l.b16 %v405
  %v1933 = vunpack.c.h.b16 %v405
  %v1934 = vunpack.c.l.b16 %v406
  %v1935 = vunpack.c.h.b16 %v406
  %v1936 = vunpack.c.l.b16 %v407
  %v1937 = vunpack.c.h.b16 %v407
  %v1938 = vunpack.c.l.b16 %v408
  %v1939 = vunpack.c.h.b16 %v408
  %v1940 = vunpack.c.l.b16 %v409
  %v1941 = vunpack.c.h.b16 %v409
  %v1942 = vunpack.c.l.b16 %v410
  %v1943 = vunpack.c.h.b16 %v410
  %v1944 = vunpack.c.l.b16 %v411
  %v1945 = vunpack.c.h.b16 %v411
  %v1946 = vunpack.c.l.b16 %v412
  %v1947 = vunpack.c.h.b16 %v412
  %v1948 = vunpack.c.l.b16 %v413
  %v1949 = vunpack.c.h.b16 %v413
  %v1950 = vunpack.c.l.b16 %v414
  %v1951 = vunpack.c.h.b16 %v414
  %v1952 = vunpack.c.l.b16 %v415
  %v1953 = vunpack.c.h.b16 %v415
  %v1954 = vunpack.c.l.b16 %v416
  %v1955 = vunpack.c.h.b16 %v416
  %v1956 = vunpack.c.l.b16 %v417
  %v1957 = vunpack.c.h.b16 %v417
  %v1958 = vunpack.c.l.b16 %v418
  %v1959 = vunpack.c.h.b16 %v418
  %v1960 = vunpack.c.l.b16 %v419
  %v1961 = vunpack.c.h.b16 %v419
  %v1962 = vunpack.c.l.b16 %v420
  %v1963 = vunpack.c.h.b16 %v420
  %v1964 = vunpack.c.l.b16 %v421
  %v1965 = vunpack.c.h.b16 %v421
  %v1966 = vunpack.c.l.b16 %v422
  %v1967 = vunpack.c.h.b16 %v422
  %v1968 = vunpack.c.l.b16 %v423
  %v1969 = vunpack.c.h.b16 %v423
  %v1970 = vunpack.c.l.b16 %v424
  %v1971 = vunpack.c.h.b16 %v424
  %v1972 = vunpack.c.l.b16 %v425
  %v1973 = vunpack.c.h.b16 %v425
  %v1974 = vunpack.c.l.b16 %v426
  %v1975 = vunpack.c.h.b16 %v426
  %v1976 = vunpack.c.l.b16 %v427
  %v1977 = vunpack.c.h.b16 %v427
  %v1978 = vunpack.c.l.b16 %v428
  %v1979 = vunpack.c.h.b16 %v428
  %v1980 = vunpack.c.l.b16 %v429
  %v1981 = vunpack.c.h.b16 %v429
  %v1982 = vunpack.c.l.b16 %v430
  %v1983 = vunpack.c.h.b16 %v430
  %v1984 = vunpack.c.l.b16 %v431
  %v1985 = vunpack.c.h.b16 %v431
  %v1986 = vunpack.c.l.b16 %v432
  %v1987 = vunpack.c.h.b16 %v432
  %v1988 = vunpack.c.l.b16 %v433
  %v1989 = vunpack.c.h.b16 %v433
  %v1990 = vunpack.c.l.b16 %v434
  %v1991 = vunpack.c.h.b16 %v434
  %v1992 = vunpack.c.l.b16 %v435
  %v1993 = vunpack.c.h.b16 %v435
  %v1994 = vunpack.c.l.b16 %v436
  %v1995 = vunpack.c.h.b16 %v436
  %v1996 = vunpack.c.l.b16 %v437
  %v1997 = vunpack.c.h.b16 %v437
  %v1998 = vunpack.c.l.b16 %v438
  %v1999 = vunpack.c.h.b16 %v438
  %v2000 = vunpack.c.l.b16 %v439
  %v2001 = vunpack.c.h.b16 %v439
  %v2002 = vunpack.c.l.b16 %v440
  %v2003 = vunpack.c.h.b16 %v440
  %v2004 = vunpack.c.l.b16 %v441
  %v2005 = vunpack.c.h.b16 %v441
  %v2006 = vunpack.c.l.b16 %v442
  %v2007 = vunpack.c.h.b16 %v442
  %v2008 = vunpack.c.l.b16 %v443
  %v2009 = vunpack.c.h.b16 %v443
  %v2010 = vunpack.c.l.b16 %v444
  %v2011 = vunpack.c.h.b16 %v444
  %v2012 = vunpack.c.l.b16 %v445
  %v2013 = vunpack.c.h.b16 %v445
  %v2014 = vunpack.c.l.b16 %v446
  %v2015 = vunpack.c.h.b16 %v446
  %v2016 = vunpack.c.l.b16 %v447
  %v2017 = vunpack.c.h.b16 %v447
  %v2018 = vunpack.c.l.b16 %v448
  %v2019 = vunpack.c.h.b16 %v448
  %v2020 = vunpack.c.l.b16 %v449
  %v2021 = vunpack.c.h.b16 %v449
  %v2022 = vunpack.c.l.b16 %v450
  %v2023 = vunpack.c.h.b16 %v450
  %v2024 = vunpack.c.l.b16 %v451
  %v2025 = vunpack.c.h.b16 %v451
  %v2026 = vunpack.c.l.b16 %v452
  %v2027 = vunpack.c.h.b16 %v452
  %v2028 = vunpack.c.l.b16 %v453
  %v2029 = vunpack.c.h.b16 %v453
  %v2030 = vunpack.c.l.b16 %v454
  %v2031 = vunpack.c.h.b16 %v454
  %v2032 = vunpack.c.l.b16 %v455
  %v2033 = vunpack.c.h.b16 %v455
  %v2034 = vunpack.c.l.b16 %v456
  %v2035 = vunpack.c.h.b16 %v456
  %v2036 = vunpack.c.l.b16 %v457
  %v2037 = vunpack.c.h.b16 %v457
  %v2038 = vunpack.c.l.b16 %v458
  %v2039 = vunpack.c.h.b16 %v458
  %v2040 = vunpack.c.l.b16 %v459
  %v2041 = vunpack.c.h.b16 %v459
  %v2042 = vunpack.c.l.b16 %v460
  %v2043 = vunpack.c.h.b16 %v460
  %v2044 = vunpack.c.l.b16 %v461
  %v2045 = vunpack.c.h.b16 %v461
  %v2046 = vunpack.c.l.b16 %v462
  %v2047 = vunpack.c.h.b16 %v462
  %v2048 = vunpack.c.l.b16 %v463
  %v2049 = vunpack.c.h.b16 %v463
  %v2050 = vunpack.c.l.b16 %v464
  %v2051 = vunpack.c.h.b16 %v464
  %v2052 = vunpack.c.l.b16 %v465
  %v2053 = vunpack.c.h.b16 %v465
  %v2054 = vunpack.c.l.b16 %v466
  %v2055 = vunpack.c.h.b16 %v466
  %v2056 = vunpack.c.l.b16 %v467
  %v2057 = vunpack.c.h.b16 %v467
  %v2058 = vunpack.c.l.b16 %v468
  %v2059 = vunpack.c.h.b16 %v468
  %v2060 = vunpack.c.l.b16 %v469
  %v2061 = vunpack.c.h.b16 %v469
  %v2062 = vunpack.c.l.b16 %v470
  %v2063 = vunpack.c.h.b16 %v470
  %v2064 = vunpack.c.l.b16 %v471
  %v2065 = vunpack.c.h.b16 %v471
  %v2066 = vunpack.c.l.b16 %v472
  %v2067 = vunpack.c.h.b16 %v472
  %v2068 = vunpack.c.l.b16 %v473
  %v2069 = vunpack.c.h.b16 %v473
  %v2070 = vunpack.c.l.b16 %v474
  %v2071 = vunpack.c.h.b16 %v474
  %v2072 = vunpack.c.l.b16 %v475
  %v2073 = vunpack.c.h.b16 %v475
  %v2074 = vunpack.c.l.b16 %v476
  %v2075 = vunpack.c.h.b16 %v476
  %v2076 = vunpack.c.l.b16 %v477
  %v2077 = vunpack.c.h.b16 %v477
  %v2078 = vunpack.c.l.b16 %v478
  %v2079 = vunpack.c.h.b16 %v478
  %v2080 = vunpack.c.l.b16 %v479
  %v2081 = vunpack.c.h.b16 %v479
  %v2082 = vunpack.c.l.b16 %v480
  %v2083 = vunpack.c.h.b16 %v480
  %v2084 = vunpack.c.l.b16 %v481
  %v2085 = vunpack.c.h.b16 %v481
  %v2086 = vunpack.c.l.b16 %v482
  %v2087 = vunpack.c.h.b16 %v482
  %v2088 = vunpack.c.l.b16 %v483
  %v2089 = vunpack.c.h.b16 %v483
  %v2090 = vunpack.c.l.b16 %v484
  %v2091 = vunpack.c.h.b16 %v484
  %v2092 = vunpack.c.l.b16 %v485
  %v2093 = vunpack.c.h.b16 %v485
  %v2094 = vunpack.c.l.b16 %v486
  %v2095 = vunpack.c.h.b16 %v486
  %v2096 = vunpack.c.l.b16 %v487
  %v2097 = vunpack.c.h.b16 %v487
  %v2098 = vunpack.c.l.b16 %v488
  %v2099 = vunpack.c.h.b16 %v488
  %v2100 = vunpack.c.l.b16 %v489
  %v2101 = vunpack.c.h.b16 %v489
  %v2102 = vunpack.c.l.b16 %v490
  %v2103 = vunpack.c.h.b16 %v490
  %v2104 = vunpack.c.l.b16 %v491
  %v2105 = vunpack.c.h.b16 %v491
  %v2106 = vunpack.c.l.b16 %v492
  %v2107 = vunpack.c.h.b16 %v492
  %v2108 = vunpack.c.l.b16 %v493
  %v2109 = vunpack.c.h.b16 %v493
  %v2110 = vunpack.c.l.b16 %v494
  %v2111 = vunpack.c.h.b16 %v494
  %v2112 = vunpack.c.l.b16 %v495
  %v2113 = vunpack.c.h.b16 %v495
  %v2114 = vunpack.c.l.b16 %v496
  %v2115 = vunpack.c.h.b16 %v496
  %v2116 = vunpack.c.l.b16 %v497
  %v2117 = vunpack.c.h.b16 %v497
  %v2118 = vunpack.c.l.b16 %v498
  %v2119 = vunpack.c.h.b16 %v498
  %v2120 = vunpack.c.l.b16 %v499
  %v2121 = vunpack.c.h.b16 %v499
  %v2122 = vunpack.c.l.b16 %v500
  %v2123 = vunpack.c.h.b16 %v500
  %v2124 = vunpack.c.l.b16 %v501
  %v2125 = vunpack.c.h.b16 %v501
  %v2126 = vunpack.c.l.b16 %v502
  %v2127 = vunpack.c.h.b16 %v502
  %v2128 = vunpack.c.l.b16 %v503
  %v2129 = vunpack.c.h.b16 %v503
  %v2130 = vunpack.c.l.b16 %v504
  %v2131 = vunpack.c.h.b16 %v504
  %v2132 = vunpack.c.l.b16 %v505
  %v2133 = vunpack.c.h.b16 %v505
  %v2134 = vunpack.c.l.b16 %v506
  %v2135 = vunpack.c.h.b16 %v506
  %v2136 = vunpack.c.l.b16 %v507
  %v2137 = vunpack.c.h.b16 %v507
  %v2138 = vunpack.c.l.b16 %v508
  %v2139 = vunpack.c.h.b16 %v508
  %v2140 = vunpack.c.l.b16 %v509
  %v2141 = vunpack.c.h.b16 %v509
  %v2142 = vunpack.c.l.b16 %v510
  %v2143 = vunpack.c.h.b16 %v510
  %v2144 = vunpack.c.l.b16 %v511
  %v2145 = vunpack.c.h.b16 %v511
  %v2146 = vunpack.c.l.b16 %v512
  %v2147 = vunpack.c.h.b16 %v512
  %v2148 = vunpack.c.l.b16 %v513
  %v2149 = vunpack.c.h.b16 %v513
  %v2150 = vunpack.c.l.b16 %v514
  %v2151 = vunpack.c.h.b16 %v514
  %v2152 = vunpack.c.l.b16 %v515
  %v2153 = vunpack.c.h.b16 %v515
  %v2154 = vunpack.c.l.b16 %v516
  %v2155 = vunpack.c.h.b16 %v516
  %v2156 = vunpack.c.l.b16 %v517
  %v2157 = vunpack.c.h.b16 %v517
  %v2158 = vunpack.c.l.b16 %v518
  %v2159 = vunpack.c.h.b16 %v518
  %v2160 = vunpack.c.l.b16 %v519
  %v2161 = vunpack.c.h.b16 %v519
  %v2162 = vunpack.c.l.b16 %v520
  %v2163 = vunpack.c.h.b16 %v520
  %v2164 = vunpack.c.l.b16 %v521
  %v2165 = vunpack.c.h.b16 %v521
  %v2166 = vunpack.c.l.b16 %v522
  %v2167 = vunpack.c.h.b16 %v522
  %v2168 = vunpack.c.l.b16 %v523
  %v2169 = vunpack.c.h.b16 %v523
  %v2170 = vunpack.c.l.b16 %v524
  %v2171 = vunpack.c.h.b16 %v524
  %v2172 = vunpack.c.l.b16 %v525
  %v2173 = vunpack.c.h.b16 %v525
  %v2174 = vunpack.c.l.b16 %v526
  %v2175 = vunpack.c.h.b16 %v526
  %v2176 = vunpack.c.l.b16 %v527
  %v2177 = vunpack.c.h.b16 %v527
  %v2178 = vunpack.c.l.b16 %v528
  %v2179 = vunpack.c.h.b16 %v528
  %v2180 = vunpack.c.l.b16 %v529
  %v2181 = vunpack.c.h.b16 %v529
  %v2182 = vunpack.c.l.b16 %v530
  %v2183 = vunpack.c.h.b16 %v530
  %v2184 = vunpack.c.l.b16 %v531
  %v2185 = vunpack.c.h.b16 %v531
  %v2186 = vunpack.c.l.b16 %v532
  %v2187 = vunpack.c.h.b16 %v532
  %v2188 = vunpack.c.l.b16 %v533
  %v2189 = vunpack.c.h.b16 %v533
  %v2190 = vunpack.c.l.b16 %v534
  %v2191 = vunpack.c.h.b16 %v534
  %v2192 = vunpack.c.l.b16 %v535
  %v2193 = vunpack.c.h.b16 %v535
  %v2194 = vunpack.c.l.b16 %v536
  %v2195 = vunpack.c.h.b16 %v536
  %v2196 = vunpack.c.l.b16 %v537
  %v2197 = vunpack.c.h.b16 %v537
  %v2198 = vunpack.c.l.b16 %v538
  %v2199 = vunpack.c.h.b16 %v538
  %v2200 = vunpack.c.l.b16 %v539
  %v2201 = vunpack.c.h.b16 %v539
  %v2202 = vunpack.c.l.b16 %v540
  %v2203 = vunpack.c.h.b16 %v540
  %v2204 = vunpack.c.l.b16 %v541
  %v2205 = vunpack.c.h.b16 %v541
  %v2206 = vpack.c.b16 %v1198, %v1182
  %v2207 = vpack.c.b16 %v1199, %v1183
  %v2208 = vpack.c.b16 %v1200, %v1184
  %v2209 = vpack.c.b16 %v1201, %v1185
  %v2210 = vpack.c.b16 %v1202, %v1186
  %v2211 = vpack.c.b16 %v1203, %v1187
  %v2212 = vpack.c.b16 %v1204, %v1188
  %v2213 = vpack.c.b16 %v1205, %v1189
  %v2214 = vpack.c.b16 %v1206, %v1190
  %v2215 = vpack.c.b16 %v1207, %v1191
  %v2216 = vpack.c.b16 %v1208, %v1192
  %v2217 = vpack.c.b16 %v1209, %v1193
  %v2218 = vpack.c.b16 %v1210, %v1194
  %v2219 = vpack.c.b16 %v1211, %v1195
  %v2220 = vpack.c.b16 %v1212, %v1196
  %v2221 = vpack.c.b16 %v1213, %v1197
  %v2222 = vpack.c.b16 %v1230, %v1214
  %v2223 = vpack.c.b16 %v1231, %v1215
  %v2224 = vpack.c.b16 %v1232, %v1216
  %v2225 = vpack.c.b16 %v1233, %v1217
  %v2226 = vpack.c.b16 %v1234, %v1218
  %v2227 = vpack.c.b16 %v1235, %v1219
  %v2228 = vpack.c.b16 %v1236, %v1220
  %v2229 = vpack.c.b16 %v1237, %v1221
  %v2230 = vpack.c.b16 %v1238, %v1222
  %v2231 = vpack.c.b16 %v1239, %v1223
  %v2232 = vpack.c.b16 %v1240, %v1224
  %v2233 = vpack.c.b16 %v1241, %v1225
  %v2234 = vpack.c.b16 %v1242, %v1226
  %v2235 = vpack.c.b16 %v1243, %v1227
  %v2236 = vpack.c.b16 %v1244, %v1228
  %v2237 = vpack.c.b16 %v1245, %v1229
  %v2238 = vpack.c.b16 %v1262, %v1246
  %v2239 = vpack.c.b16 %v1263, %v1247
  %v2240 = vpack.c.b16 %v1264, %v1248
  %v2241 = vpack.c.b16 %v1265, %v1249
  %v2242 = vpack.c.b16 %v1266, %v1250
  %v2243 = vpack.c.b16 %v1267, %v1251
  %v2244 = vpack.c.b16 %v1268, %v1252
  %v2245 = vpack.c.b16 %v1269, %v1253
  %v2246 = vpack.c.b16 %v1270, %v1254
  %v2247 = vpack.c.b16 %v1271, %v1255
  %v2248 = vpack.c.b16 %v1272, %v1256
  %v2249 = vpack.c.b16 %v1273, %v1257
  %v2250 = vpack.c.b16 %v1274, %v1258
  %v2251 = vpack.c.b16 %v1275, %v1259
  %v2252 = vpack.c.b16 %v1276, %v1260
  %v2253 = vpack.c.b16 %v1277, %v1261
  %v2254 = vpack.c.b16 %v1294, %v1278
  %v2255 = vpack.c.b16 %v1295, %v1279
  %v2256 = vpack.c.b16 %v1296, %v1280
  %v2257 = vpack.c.b16 %v1297, %v1281
  %v2258 = vpack.c.b16 %v1298, %v1282
  %v2259 = vpack.c.b16 %v1299, %v1283
  %v2260 = vpack.c.b16 %v1300, %v1284
  %v2261 = vpack.c.b16 %v1301, %v1285
  %v2262 = vpack.c.b16 %v1302, %v1286
  %v2263 = vpack.c.b16 %v1303, %v1287
  %v2264 = vpack.c.b16 %v1304, %v1288
  %v2265 = vpack.c.b16 %v1305, %v1289
  %v2266 = vpack.c.b16 %v1306, %v1290
  %v2267 = vpack.c.b16 %v1307, %v1291
  %v2268 = vpack.c.b16 %v1308, %v1292
  %v2269 = vpack.c.b16 %v1309, %v1293
  %v2270 = vpack.c.b16 %v1326, %v1310
  %v2271 = vpack.c.b16 %v1327, %v1311
  %v2272 = vpack.c.b16 %v1328, %v1312
  %v2273 = vpack.c.b16 %v1329, %v1313
  %v2274 = vpack.c.b16 %v1330, %v1314
  %v2275 = vpack.c.b16 %v1331, %v1315
  %v2276 = vpack.c.b16 %v1332, %v1316
  %v2277 = vpack.c.b16 %v1333, %v1317
  %v2278 = vpack.c.b16 %v1334, %v1318
  %v2279 = vpack.c.b16 %v1335, %v1319
  %v2280 = vpack.c.b16 %v1336, %v1320
  %v2281 = vpack.c.b16 %v1337, %v1321
  %v2282 = vpack.c.b16 %v1338, %v1322
  %v2283 = vpack.c.b16 %v1339, %v1323
  %v2284 = vpack.c.b16 %v1340, %v1324
  %v2285 = vpack.c.b16 %v1341, %v1325
  %v2286 = vpack.c.b16 %v1358, %v1342
  %v2287 = vpack.c.b16 %v1359, %v1343
  %v2288 = vpack.c.b16 %v1360, %v1344
  %v2289 = vpack.c.b16 %v1361, %v1345
  %v2290 = vpack.c.b16 %v1362, %v1346
  %v2291 = vpack.c.b16 %v1363, %v1347
  %v2292 = vpack.c.b16 %v1364, %v1348
  %v2293 = vpack.c.b16 %v1365, %v1349
  %v2294 = vpack.c.b16 %v1366, %v1350
  %v2295 = vpack.c.b16 %v1367, %v1351
  %v2296 = vpack.c.b16 %v1368, %v1352
  %v2297 = vpack.c.b16 %v1369, %v1353
  %v2298 = vpack.c.b16 %v1370, %v1354
  %v2299 = vpack.c.b16 %v1371, %v1355
  %v2300 = vpack.c.b16 %v1372, %v1356
  %v2301 = vpack.c.b16 %v1373, %v1357
  %v2302 = vpack.c.b16 %v1390, %v1374
  %v2303 = vpack.c.b16 %v1391, %v1375
  %v2304 = vpack.c.b16 %v1392, %v1376
  %v2305 = vpack.c.b16 %v1393, %v1377
  %v2306 = vpack.c.b16 %v1394, %v1378
  %v2307 = vpack.c.b16 %v1395, %v1379
  %v2308 = vpack.c.b16 %v1396, %v1380
  %v2309 = vpack.c.b16 %v1397, %v1381
  %v2310 = vpack.c.b16 %v1398, %v1382
  %v2311 = vpack.c.b16 %v1399, %v1383
  %v2312 = vpack.c.b16 %v1400, %v1384
  %v2313 = vpack.c.b16 %v1401, %v1385
  %v2314 = vpack.c.b16 %v1402, %v1386
  %v2315 = vpack.c.b16 %v1403, %v1387
  %v2316 = vpack.c.b16 %v1404, %v1388
  %v2317 = vpack.c.b16 %v1405, %v1389
  %v2318 = vpack.c.b16 %v1422, %v1406
  %v2319 = vpack.c.b16 %v1423, %v1407
  %v2320 = vpack.c.b16 %v1424, %v1408
  %v2321 = vpack.c.b16 %v1425, %v1409
  %v2322 = vpack.c.b16 %v1426, %v1410
  %v2323 = vpack.c.b16 %v1427, %v1411
  %v2324 = vpack.c.b16 %v1428, %v1412
  %v2325 = vpack.c.b16 %v1429, %v1413
  %v2326 = vpack.c.b16 %v1430, %v1414
  %v2327 = vpack.c.b16 %v1431, %v1415
  %v2328 = vpack.c.b16 %v1432, %v1416
  %v2329 = vpack.c.b16 %v1433, %v1417
  %v2330 = vpack.c.b16 %v1434, %v1418
  %v2331 = vpack.c.b16 %v1435, %v1419
  %v2332 = vpack.c.b16 %v1436, %v1420
  %v2333 = vpack.c.b16 %v1437, %v1421
  %v2334 = vpack.c.b16 %v1454, %v1438
  %v2335 = vpack.c.b16 %v1455, %v1439
  %v2336 = vpack.c.b16 %v1456, %v1440
  %v2337 = vpack.c.b16 %v1457, %v1441
  %v2338 = vpack.c.b16 %v1458, %v1442
  %v2339 = vpack.c.b16 %v1459, %v1443
  %v2340 = vpack.c.b16 %v1460, %v1444
  %v2341 = vpack.c.b16 %v1461, %v1445
  %v2342 = vpack.c.b16 %v1462, %v1446
  %v2343 = vpack.c.b16 %v1463, %v1447
  %v2344 = vpack.c.b16 %v1464, %v1448
  %v2345 = vpack.c.b16 %v1465, %v1449
  %v2346 = vpack.c.b16 %v1466, %v1450
  %v2347 = vpack.c.b16 %v1467, %v1451
  %v2348 = vpack.c.b16 %v1468, %v1452
  %v2349 = vpack.c.b16 %v1469, %v1453
  %v2350 = vpack.c.b16 %v1486, %v1470
  %v2351 = vpack.c.b16 %v1487, %v1471
  %v2352 = vpack.c.b16 %v1488, %v1472
  %v2353 = vpack.c.b16 %v1489, %v1473
  %v2354 = vpack.c.b16 %v1490, %v1474
  %v2355 = vpack.c.b16 %v1491, %v1475
  %v2356 = vpack.c.b16 %v1492, %v1476
  %v2357 = vpack.c.b16 %v1493, %v1477
  %v2358 = vpack.c.b16 %v1494, %v1478
  %v2359 = vpack.c.b16 %v1495, %v1479
  %v2360 = vpack.c.b16 %v1496, %v1480
  %v2361 = vpack.c.b16 %v1497, %v1481
  %v2362 = vpack.c.b16 %v1498, %v1482
  %v2363 = vpack.c.b16 %v1499, %v1483
  %v2364 = vpack.c.b16 %v1500, %v1484
  %v2365 = vpack.c.b16 %v1501, %v1485
  %v2366 = vpack.c.b16 %v1518, %v1502
  %v2367 = vpack.c.b16 %v1519, %v1503
  %v2368 = vpack.c.b16 %v1520, %v1504
  %v2369 = vpack.c.b16 %v1521, %v1505
  %v2370 = vpack.c.b16 %v1522, %v1506
  %v2371 = vpack.c.b16 %v1523, %v1507
  %v2372 = vpack.c.b16 %v1524, %v1508
  %v2373 = vpack.c.b16 %v1525, %v1509
  %v2374 = vpack.c.b16 %v1526, %v1510
  %v2375 = vpack.c.b16 %v1527, %v1511
  %v2376 = vpack.c.b16 %v1528, %v1512
  %v2377 = vpack.c.b16 %v1529, %v1513
  %v2378 = vpack.c.b16 %v1530, %v1514
  %v2379 = vpack.c.b16 %v1531, %v1515
  %v2380 = vpack.c.b16 %v1532, %v1516
  %v2381 = vpack.c.b16 %v1533, %v1517
  %v2382 = vpack.c.b16 %v1550, %v1534
  %v2383 = vpack.c.b16 %v1551, %v1535
  %v2384 = vpack.c.b16 %v1552, %v1536
  %v2385 = vpack.c.b16 %v1553, %v1537
  %v2386 = vpack.c.b16 %v1554, %v1538
  %v2387 = vpack.c.b16 %v1555, %v1539
  %v2388 = vpack.c.b16 %v1556, %v1540
  %v2389 = vpack.c.b16 %v1557, %v1541
  %v2390 = vpack.c.b16 %v1558, %v1542
  %v2391 = vpack.c.b16 %v1559, %v1543
  %v2392 = vpack.c.b16 %v1560, %v1544
  %v2393 = vpack.c.b16 %v1561, %v1545
  %v2394 = vpack.c.b16 %v1562, %v1546
  %v2395 = vpack.c.b16 %v1563, %v1547
  %v2396 = vpack.c.b16 %v1564, %v1548
  %v2397 = vpack.c.b16 %v1565, %v1549
  %v2398 = vpack.c.b16 %v1582, %v1566
  %v2399 = vpack.c.b16 %v1583, %v1567
  %v2400 = vpack.c.b16 %v1584, %v1568
  %v2401 = vpack.c.b16 %v1585, %v1569
  %v2402 = vpack.c.b16 %v1586, %v1570
  %v2403 = vpack.c.b16 %v1587, %v1571
  %v2404 = vpack.c.b16 %v1588, %v1572
  %v2405 = vpack.c.b16 %v1589, %v1573
  %v2406 = vpack.c.b16 %v1590, %v1574
  %v2407 = vpack.c.b16 %v1591, %v1575
  %v2408 = vpack.c.b16 %v1592, %v1576
  %v2409 = vpack.c.b16 %v1593, %v1577
  %v2410 = vpack.c.b16 %v1594, %v1578
  %v2411 = vpack.c.b16 %v1595, %v1579
  %v2412 = vpack.c.b16 %v1596, %v1580
  %v2413 = vpack.c.b16 %v1597, %v1581
  %v2414 = vpack.c.b16 %v1614, %v1598
  %v2415 = vpack.c.b16 %v1615, %v1599
  %v2416 = vpack.c.b16 %v1616, %v1600
  %v2417 = vpack.c.b16 %v1617, %v1601
  %v2418 = vpack.c.b16 %v1618, %v1602
  %v2419 = vpack.c.b16 %v1619, %v1603
  %v2420 = vpack.c.b16 %v1620, %v1604
  %v2421 = vpack.c.b16 %v1621, %v1605
  %v2422 = vpack.c.b16 %v1622, %v1606
  %v2423 = vpack.c.b16 %v1623, %v1607
  %v2424 = vpack.c.b16 %v1624, %v1608
  %v2425 = vpack.c.b16 %v1625, %v1609
  %v2426 = vpack.c.b16 %v1626, %v1610
  %v2427 = vpack.c.b16 %v1627, %v1611
  %v2428 = vpack.c.b16 %v1628, %v1612
  %v2429 = vpack.c.b16 %v1629, %v1613
  %v2430 = vpack.c.b16 %v1646, %v1630
  %v2431 = vpack.c.b16 %v1647, %v1631
  %v2432 = vpack.c.b16 %v1648, %v1632
  %v2433 = vpack.c.b16 %v1649, %v1633
  %v2434 = vpack.c.b16 %v1650, %v1634
  %v2435 = vpack.c.b16 %v1651, %v1635
  %v2436 = vpack.c.b16 %v1652, %v1636
  %v2437 = vpack.c.b16 %v1653, %v1637
  %v2438 = vpack.c.b16 %v1654, %v1638
  %v2439 = vpack.c.b16 %v1655, %v1639
  %v2440 = vpack.c.b16 %v1656, %v1640
  %v2441 = vpack.c.b16 %v1657, %v1641
  %v2442 = vpack.c.b16 %v1658, %v1642
  %v2443 = vpack.c.b16 %v1659, %v1643
  %v2444 = vpack.c.b16 %v1660, %v1644
  %v2445 = vpack.c.b16 %v1661, %v1645
  %v2446 = vpack.c.b16 %v1678, %v1662
  %v2447 = vpack.c.b16 %v1679, %v1663
  %v2448 = vpack.c.b16 %v1680, %v1664
  %v2449 = vpack.c.b16 %v1681, %v1665
  %v2450 = vpack.c.b16 %v1682, %v1666
  %v2451 = vpack.c.b16 %v1683, %v1667
  %v2452 = vpack.c.b16 %v1684, %v1668
  %v2453 = vpack.c.b16 %v1685, %v1669
  %v2454 = vpack.c.b16 %v1686, %v1670
  %v2455 = vpack.c.b16 %v1687, %v1671
  %v2456 = vpack.c.b16 %v1688, %v1672
  %v2457 = vpack.c.b16 %v1689, %v1673
  %v2458 = vpack.c.b16 %v1690, %v1674
  %v2459 = vpack.c.b16 %v1691, %v1675
  %v2460 = vpack.c.b16 %v1692, %v1676
  %v2461 = vpack.c.b16 %v1693, %v1677
  %v2462 = vpack.c.b16 %v1710, %v1694
  %v2463 = vpack.c.b16 %v1711, %v1695
  %v2464 = vpack.c.b16 %v1712, %v1696
  %v2465 = vpack.c.b16 %v1713, %v1697
  %v2466 = vpack.c.b16 %v1714, %v1698
  %v2467 = vpack.c.b16 %v1715, %v1699
  %v2468 = vpack.c.b16 %v1716, %v1700
  %v2469 = vpack.c.b16 %v1717, %v1701
  %v2470 = vpack.c.b16 %v1718, %v1702
  %v2471 = vpack.c.b16 %v1719, %v1703
  %v2472 = vpack.c.b16 %v1720, %v1704
  %v2473 = vpack.c.b16 %v1721, %v1705
  %v2474 = vpack.c.b16 %v1722, %v1706
  %v2475 = vpack.c.b16 %v1723, %v1707
  %v2476 = vpack.c.b16 %v1724, %v1708
  %v2477 = vpack.c.b16 %v1725, %v1709
  %v2478 = vpack.c.b16 %v1742, %v1726
  %v2479 = vpack.c.b16 %v1743, %v1727
  %v2480 = vpack.c.b16 %v1744, %v1728
  %v2481 = vpack.c.b16 %v1745, %v1729
  %v2482 = vpack.c.b16 %v1746, %v1730
  %v2483 = vpack.c.b16 %v1747, %v1731
  %v2484 = vpack.c.b16 %v1748, %v1732
  %v2485 = vpack.c.b16 %v1749, %v1733
  %v2486 = vpack.c.b16 %v1750, %v1734
  %v2487 = vpack.c.b16 %v1751, %v1735
  %v2488 = vpack.c.b16 %v1752, %v1736
  %v2489 = vpack.c.b16 %v1753, %v1737
  %v2490 = vpack.c.b16 %v1754, %v1738
  %v2491 = vpack.c.b16 %v1755, %v1739
  %v2492 = vpack.c.b16 %v1756, %v1740
  %v2493 = vpack.c.b16 %v1757, %v1741
  %v2494 = vpack.c.b16 %v1774, %v1758
  %v2495 = vpack.c.b16 %v1775, %v1759
  %v2496 = vpack.c.b16 %v1776, %v1760
  %v2497 = vpack.c.b16 %v1777, %v1761
  %v2498 = vpack.c.b16 %v1778, %v1762
  %v2499 = vpack.c.b16 %v1779, %v1763
  %v2500 = vpack.c.b16 %v1780, %v1764
  %v2501 = vpack.c.b16 %v1781, %v1765
  %v2502 = vpack.c.b16 %v1782, %v1766
  %v2503 = vpack.c.b16 %v1783, %v1767
  %v2504 = vpack.c.b16 %v1784, %v1768
  %v2505 = vpack.c.b16 %v1785, %v1769
  %v2506 = vpack.c.b16 %v1786, %v1770
  %v2507 = vpack.c.b16 %v1787, %v1771
  %v2508 = vpack.c.b16 %v1788, %v1772
  %v2509 = vpack.c.b16 %v1789, %v1773
  %v2510 = vpack.c.b16 %v1806, %v1790
  %v2511 = vpack.c.b16 %v1807, %v1791
  %v2512 = vpack.c.b16 %v1808, %v1792
  %v2513 = vpack.c.b16 %v1809, %v1793
  %v2514 = vpack.c.b16 %v1810, %v1794
  %v2515 = vpack.c.b16 %v1811, %v1795
  %v2516 = vpack.c.b16 %v1812, %v1796
  %v2517 = vpack.c.b16 %v1813, %v1797
  %v2518 = vpack.c.b16 %v1814, %v1798
  %v2519 = vpack.c.b16 %v1815, %v1799
  %v2520 = vpack.c.b16 %v1816, %v1800
  %v2521 = vpack.c.b16 %v1817, %v1801
  %v2522 = vpack.c.b16 %v1818, %v1802
  %v2523 = vpack.c.b16 %v1819, %v1803
  %v2524 = vpack.c.b16 %v1820, %v1804
  %v2525 = vpack.c.b16 %v1821, %v1805
  %v2526 = vpack.c.b16 %v1838, %v1822
  %v2527 = vpack.c.b16 %v1839, %v1823
  %v2528 = vpack.c.b16 %v1840, %v1824
  %v2529 = vpack.c.b16 %v1841, %v1825
  %v2530 = vpack.c.b16 %v1842, %v1826
  %v2531 = vpack.c.b16 %v1843, %v1827
  %v2532 = vpack.c.b16 %v1844, %v1828
  %v2533 = vpack.c.b16 %v1845, %v1829
  %v2534 = vpack.c.b16 %v1846, %v1830
  %v2535 = vpack.c.b16 %v1847, %v1831
  %v2536 = vpack.c.b16 %v1848, %v1832
  %v2537 = vpack.c.b16 %v1849, %v1833
  %v2538 = vpack.c.b16 %v1850, %v1834
  %v2539 = vpack.c.b16 %v1851, %v1835
  %v2540 = vpack.c.b16 %v1852, %v1836
  %v2541 = vpack.c.b16 %v1853, %v1837
  %v2542 = vpack.c.b16 %v1870, %v1854
  %v2543 = vpack.c.b16 %v1871, %v1855
  %v2544 = vpack.c.b16 %v1872, %v1856
  %v2545 = vpack.c.b16 %v1873, %v1857
  %v2546 = vpack.c.b16 %v1874, %v1858
  %v2547 = vpack.c.b16 %v1875, %v1859
  %v2548 = vpack.c.b16 %v1876, %v1860
  %v2549 = vpack.c.b16 %v1877, %v1861
  %v2550 = vpack.c.b16 %v1878, %v1862
  %v2551 = vpack.c.b16 %v1879, %v1863
  %v2552 = vpack.c.b16 %v1880, %v1864
  %v2553 = vpack.c.b16 %v1881, %v1865
  %v2554 = vpack.c.b16 %v1882, %v1866
  %v2555 = vpack.c.b16 %v1883, %v1867
  %v2556 = vpack.c.b16 %v1884, %v1868
  %v2557 = vpack.c.b16 %v1885, %v1869
  %v2558 = vpack.c.b16 %v1902, %v1886
  %v2559 = vpack.c.b16 %v1903, %v1887
  %v2560 = vpack.c.b16 %v1904, %v1888
  %v2561 = vpack.c.b16 %v1905, %v1889
  %v2562 = vpack.c.b16 %v1906, %v1890
  %v2563 = vpack.c.b16 %v1907, %v1891
  %v2564 = vpack.c.b16 %v1908, %v1892
  %v2565 = vpack.c.b16 %v1909, %v1893
  %v2566 = vpack.c.b16 %v1910, %v1894
  %v2567 = vpack.c.b16 %v1911, %v1895
  %v2568 = vpack.c.b16 %v1912, %v1896
  %v2569 = vpack.c.b16 %v1913, %v1897
  %v2570 = vpack.c.b16 %v1914, %v1898
  %v2571 = vpack.c.b16 %v1915, %v1899
  %v2572 = vpack.c.b16 %v1916, %v1900
  %v2573 = vpack.c.b16 %v1917, %v1901
  %v2574 = vpack.c.b16 %v1934, %v1918
  %v2575 = vpack.c.b16 %v1935, %v1919
  %v2576 = vpack.c.b16 %v1936, %v1920
  %v2577 = vpack.c.b16 %v1937, %v1921
  %v2578 = vpack.c.b16 %v1938, %v1922
  %v2579 = vpack.c.b16 %v1939, %v1923
  %v2580 = vpack.c.b16 %v1940, %v1924
  %v2581 = vpack.c.b16 %v1941, %v1925
  %v2582 = vpack.c.b16 %v1942, %v1926
  %v2583 = vpack.c.b16 %v1943, %v1927
  %v2584 = vpack.c.b16 %v1944, %v1928
  %v2585 = vpack.c.b16 %v1945, %v1929
  %v2586 = vpack.c.b16 %v1946, %v1930
  %v2587 = vpack.c.b16 %v1947, %v1931
  %v2588 = vpack.c.b16 %v1948, %v1932
  %v2589 = vpack.c.b16 %v1949, %v1933
  %v2590 = vpack.c.b16 %v1966, %v1950
  %v2591 = vpack.c.b16 %v1967, %v1951
  %v2592 = vpack.c.b16 %v1968, %v1952
  %v2593 = vpack.c.b16 %v1969, %v1953
  %v2594 = vpack.c.b16 %v1970, %v1954
  %v2595 = vpack.c.b16 %v1971, %v1955
  %v2596 = vpack.c.b16 %v1972, %v1956
  %v2597 = vpack.c.b16 %v1973, %v1957
  %v2598 = vpack.c.b16 %v1974, %v1958
  %v2599 = vpack.c.b16 %v1975, %v1959
  %v2600 = vpack.c.b16 %v1976, %v1960
  %v2601 = vpack.c.b16 %v1977, %v1961
  %v2602 = vpack.c.b16 %v1978, %v1962
  %v2603 = vpack.c.b16 %v1979, %v1963
  %v2604 = vpack.c.b16 %v1980, %v1964
  %v2605 = vpack.c.b16 %v1981, %v1965
  %v2606 = vpack.c.b16 %v1998, %v1982
  %v2607 = vpack.c.b16 %v1999, %v1983
  %v2608 = vpack.c.b16 %v2000, %v1984
  %v2609 = vpack.c.b16 %v2001, %v1985
  %v2610 = vpack.c.b16 %v2002, %v1986
  %v2611 = vpack.c.b16 %v2003, %v1987
  %v2612 = vpack.c.b16 %v2004, %v1988
  %v2613 = vpack.c.b16 %v2005, %v1989
  %v2614 = vpack.c.b16 %v2006, %v1990
  %v2615 = vpack.c.b16 %v2007, %v1991
  %v2616 = vpack.c.b16 %v2008, %v1992
  %v2617 = vpack.c.b16 %v2009, %v1993
  %v2618 = vpack.c.b16 %v2010, %v1994
  %v2619 = vpack.c.b16 %v2011, %v1995
  %v2620 = vpack.c.b16 %v2012, %v1996
  %v2621 = vpack.c.b16 %v2013, %v1997
  %v2622 = vpack.c.b16 %v2030, %v2014
  %v2623 = vpack.c.b16 %v2031, %v2015
  %v2624 = vpack.c.b16 %v2032, %v2016
  %v2625 = vpack.c.b16 %v2033, %v2017
  %v2626 = vpack.c.b16 %v2034, %v2018
  %v2627 = vpack.c.b16 %v2035, %v2019
  %v2628 = vpack.c.b16 %v2036, %v2020
  %v2629 = vpack.c.b16 %v2037, %v2021
  %v2630 = vpack.c.b16 %v2038, %v2022
  %v2631 = vpack.c.b16 %v2039, %v2023
  %v2632 = vpack.c.b16 %v2040, %v2024
  %v2633 = vpack.c.b16 %v2041, %v2025
  %v2634 = vpack.c.b16 %v2042, %v2026
  %v2635 = vpack.c.b16 %v2043, %v2027
  %v2636 = vpack.c.b16 %v2044, %v2028
  %v2637 = vpack.c.b16 %v2045, %v2029
  %v2638 = vpack.c.b16 %v2062, %v2046
  %v2639 = vpack.c.b16 %v2063, %v2047
  %v2640 = vpack.c.b16 %v2064, %v2048
  %v2641 = vpack.c.b16 %v2065, %v2049
  %v2642 = vpack.c.b16 %v2066, %v2050
  %v2643 = vpack.c.b16 %v2067, %v2051
  %v2644 = vpack.c.b16 %v2068, %v2052
  %v2645 = vpack.c.b16 %v2069, %v2053
  %v2646 = vpack.c.b16 %v2070, %v2054
  %v2647 = vpack.c.b16 %v2071, %v2055
  %v2648 = vpack.c.b16 %v2072, %v2056
  %v2649 = vpack.c.b16 %v2073, %v2057
  %v2650 = vpack.c.b16 %v2074, %v2058
  %v2651 = vpack.c.b16 %v2075, %v2059
  %v2652 = vpack.c.b16 %v2076, %v2060
  %v2653 = vpack.c.b16 %v2077, %v2061
  %v2654 = vpack.c.b16 %v2094, %v2078
  %v2655 = vpack.c.b16 %v2095, %v2079
  %v2656 = vpack.c.b16 %v2096, %v2080
  %v2657 = vpack.c.b16 %v2097, %v2081
  %v2658 = vpack.c.b16 %v2098, %v2082
  %v2659 = vpack.c.b16 %v2099, %v2083
  %v2660 = vpack.c.b16 %v2100, %v2084
  %v2661 = vpack.c.b16 %v2101, %v2085
  %v2662 = vpack.c.b16 %v2102, %v2086
  %v2663 = vpack.c.b16 %v2103, %v2087
  %v2664 = vpack.c.b16 %v2104, %v2088
  %v2665 = vpack.c.b16 %v2105, %v2089
  %v2666 = vpack.c.b16 %v2106, %v2090
  %v2667 = vpack.c.b16 %v2107, %v2091
  %v2668 = vpack.c.b16 %v2108, %v2092
  %v2669 = vpack.c.b16 %v2109, %v2093
  %v2670 = vpack.c.b16 %v2126, %v2110
  %v2671 = vpack.c.b16 %v2127, %v2111
  %v2672 = vpack.c.b16 %v2128, %v2112
  %v2673 = vpack.c.b16 %v2129, %v2113
  %v2674 = vpack.c.b16 %v2130, %v2114
  %v2675 = vpack.c.b16 %v2131, %v2115
  %v2676 = vpack.c.b16 %v2132, %v2116
  %v2677 = vpack.c.b16 %v2133, %v2117
  %v2678 = vpack.c.b16 %v2134, %v2118
  %v2679 = vpack.c.b16 %v2135, %v2119
  %v2680 = vpack.c.b16 %v2136, %v2120
  %v2681 = vpack.c.b16 %v2137, %v2121
  %v2682 = vpack.c.b16 %v2138, %v2122
  %v2683 = vpack.c.b16 %v2139, %v2123
  %v2684 = vpack.c.b16 %v2140, %v2124
  %v2685 = vpack.c.b16 %v2141, %v2125
  %v2686 = vpack.c.b16 %v2158, %v2142
  %v2687 = vpack.c.b16 %v2159, %v2143
  %v2688 = vpack.c.b16 %v2160, %v2144
  %v2689 = vpack.c.b16 %v2161, %v2145
  %v2690 = vpack.c.b16 %v2162, %v2146
  %v2691 = vpack.c.b16 %v2163, %v2147
  %v2692 = vpack.c.b16 %v2164, %v2148
  %v2693 = vpack.c.b16 %v2165, %v2149
  %v2694 = vpack.c.b16 %v2166, %v2150
  %v2695 = vpack.c.b16 %v2167, %v2151
  %v2696 = vpack.c.b16 %v2168, %v2152
  %v2697 = vpack.c.b16 %v2169, %v2153
  %v2698 = vpack.c.b16 %v2170, %v2154
  %v2699 = vpack.c.b16 %v2171, %v2155
  %v2700 = vpack.c.b16 %v2172, %v2156
  %v2701 = vpack.c.b16 %v2173, %v2157
  %v2702 = vpack.c.b16 %v2190, %v2174
  %v2703 = vpack.c.b16 %v2191, %v2175
  %v2704 = vpack.c.b16 %v2192, %v2176
  %v2705 = vpack.c.b16 %v2193, %v2177
  %v2706 = vpack.c.b16 %v2194, %v2178
  %v2707 = vpack.c.b16 %v2195, %v2179
  %v2708 = vpack.c.b16 %v2196, %v2180
  %v2709 = vpack.c.b16 %v2197, %v2181
  %v2710 = vpack.c.b16 %v2198, %v2182
  %v2711 = vpack.c.b16 %v2199, %v2183
  %v2712 = vpack.c.b16 %v2200, %v2184
  %v2713 = vpack.c.b16 %v2201, %v2185
  %v2714 = vpack.c.b16 %v2202, %v2186
  %v2715 = vpack.c.b16 %v2203, %v2187
  %v2716 = vpack.c.b16 %v2204, %v2188
  %v2717 = vpack.c.b16 %v2205, %v2189
  %3230 = vmatprep.subr.bf16.mxu0 %v2207
  %3231 = vmatpush1.bf16.msra.mxu0 %v2206
  %3232 = vmatprep.subr.bf16.mxu0 %v2223
  %3233 = vmatpush1.bf16.msra.mxu0 %v2222
  %3234 = vmatprep.subr.bf16.mxu0 %v2239
  %3235 = vmatpush1.bf16.msra.mxu0 %v2238
  %3236 = vmatprep.subr.bf16.mxu0 %v2255
  %3237 = vmatpush1.bf16.msra.mxu0 %v2254
  %3238 = vmatprep.subr.bf16.mxu0 %v2271
  %3239 = vmatpush1.bf16.msra.mxu0 %v2270
  %3240 = vmatprep.subr.bf16.mxu0 %v2287
  %3241 = vmatpush1.bf16.msra.mxu0 %v2286
  %3242 = vmatprep.subr.bf16.mxu0 %v2303
  %3243 = vmatpush1.bf16.msra.mxu0 %v2302
  %3244 = vmatprep.subr.bf16.mxu0 %v2319
  %3245 = vmatpush1.bf16.msra.mxu0 %v2318
  %3246 = vmatprep.subr.bf16.mxu0 %v2335
  %3247 = vmatpush1.bf16.msra.mxu0 %v2334
  %3248 = vmatprep.subr.bf16.mxu0 %v2351
  %3249 = vmatpush1.bf16.msra.mxu0 %v2350
  %3250 = vmatprep.subr.bf16.mxu0 %v2367
  %3251 = vmatpush1.bf16.msra.mxu0 %v2366
  %3252 = vmatprep.subr.bf16.mxu0 %v2383
  %3253 = vmatpush1.bf16.msra.mxu0 %v2382
  %3254 = vmatprep.subr.bf16.mxu0 %v2399
  %3255 = vmatpush1.bf16.msra.mxu0 %v2398
  %3256 = vmatprep.subr.bf16.mxu0 %v2415
  %3257 = vmatpush1.bf16.msra.mxu0 %v2414
  %3258 = vmatprep.subr.bf16.mxu0 %v2431
  %3259 = vmatpush1.bf16.msra.mxu0 %v2430
  %3260 = vmatprep.subr.bf16.mxu0 %v2447
  %3261 = vmatpush1.bf16.msra.mxu0 %v2446
  %3262 = vmatprep.mubr.bf16.mxu0 %v639
  %3263 = vmatmul.mubr.bf16.gmra.mrb[0].mxu0 %v638
  %v3264 = vpop.f32.mrb[0].mxu0
  %v3265 = vadd.f32 %v553, %v3264
  %v3266 = vpop.f32.mrb[0].mxu0
  %v3267 = vadd.f32 %v553, %v3266
  %v3268 = vpop.f32.mrb[0].mxu0
  %v3269 = vadd.f32 %v558, %v3268
  %v3270 = vpop.f32.mrb[0].mxu0
  %v3271 = vadd.f32 %v558, %v3270
  %3272 = vmatprep.mubr.bf16.mxu0 %v643
  %3273 = vmatmul.mubr.bf16.gmra.mrb[0].mxu0 %v642
  %v3274 = vpop.f32.mrb[0].mxu0
  %v3275 = vadd.f32 %v563, %v3274
  %v3276 = vpop.f32.mrb[0].mxu0
  %v3277 = vadd.f32 %v563, %v3276
  %v3278 = vpop.f32.mrb[0].mxu0
  %v3279 = vadd.f32 %v568, %v3278
  %v3280 = vpop.f32.mrb[0].mxu0
  %v3281 = vadd.f32 %v568, %v3280
  %3282 = vmatprep.mubr.bf16.mxu0 %v647
  %3283 = vmatmul.mubr.bf16.gmra.mrb[0].mxu0 %v646
  %v3284 = vpop.f32.mrb[0].mxu0
  %v3285 = vadd.f32 %v573, %v3284
  %v3286 = vpop.f32.mrb[0].mxu0
  %v3287 = vadd.f32 %v573, %v3286
  %v3288 = vpop.f32.mrb[0].mxu0
  %v3289 = vadd.f32 %v578, %v3288
  %v3290 = vpop.f32.mrb[0].mxu0
  %v3291 = vadd.f32 %v578, %v3290
  %3292 = vmatprep.mubr.bf16.mxu0 %v651
  %3293 = vmatmul.mubr.bf16.gmra.mrb[0].mxu0 %v650
  %v3294 = vpop.f32.mrb[0].mxu0
  %v3295 = vadd.f32 %v583, %v3294
  %v3296 = vpop.f32.mrb[0].mxu0
  %v3297 = vadd.f32 %v583, %v3296
  %v3298 = vpop.f32.mrb[0].mxu0
  %v3299 = vadd.f32 %v588, %v3298
  %v3300 = vpop.f32.mrb[0].mxu0
  %v3301 = vadd.f32 %v588, %v3300
  %3302 = vdwg.mxu0
  %3303 = vmatprep.subr.bf16.mxu0 %v2463
  %3304 = vmatpush1.bf16.msra.mxu0 %v2462
  %3305 = vmatprep.subr.bf16.mxu0 %v2479
  %3306 = vmatpush1.bf16.msra.mxu0 %v2478
  %3307 = vmatprep.subr.bf16.mxu0 %v2495
  %3308 = vmatpush1.bf16.msra.mxu0 %v2494
  %3309 = vmatprep.subr.bf16.mxu0 %v2511
  %3310 = vmatpush1.bf16.msra.mxu0 %v2510
  %3311 = vmatprep.subr.bf16.mxu0 %v2527
  %3312 = vmatpush1.bf16.msra.mxu0 %v2526
  %3313 = vmatprep.subr.bf16.mxu0 %v2543
  %3314 = vmatpush1.bf16.msra.mxu0 %v2542
  %3315 = vmatprep.subr.bf16.mxu0 %v2559
  %3316 = vmatpush1.bf16.msra.mxu0 %v2558
  %3317 = vmatprep.subr.bf16.mxu0 %v2575
  %3318 = vmatpush1.bf16.msra.mxu0 %v2574
  %3319 = vmatprep.subr.bf16.mxu0 %v2591
  %3320 = vmatpush1.bf16.msra.mxu0 %v2590
  %3321 = vmatprep.subr.bf16.mxu0 %v2607
  %3322 = vmatpush1.bf16.msra.mxu0 %v2606
  %3323 = vmatprep.subr.bf16.mxu0 %v2623
  %3324 = vmatpush1.bf16.msra.mxu0 %v2622
  %3325 = vmatprep.subr.bf16.mxu0 %v2639
  %3326 = vmatpush1.bf16.msra.mxu0 %v2638
  %3327 = vmatprep.subr.bf16.mxu0 %v2655
  %3328 = vmatpush1.bf16.msra.mxu0 %v2654
  %3329 = vmatprep.subr.bf16.mxu0 %v2671
  %3330 = vmatpush1.bf16.msra.mxu0 %v2670
  %3331 = vmatprep.subr.bf16.mxu0 %v2687
  %3332 = vmatpush1.bf16.msra.mxu0 %v2686
  %3333 = vmatprep.subr.bf16.mxu0 %v2703
  %3334 = vmatpush1.bf16.msra.mxu0 %v2702
  %3335 = vmatprep.mubr.bf16.mxu0 %v641
  %3336 = vmatmul.mubr.bf16.gmra.mrb[0].mxu0 %v640
  %v3337 = vpop.f32.mrb[0].mxu0
  %v3338 = vadd.f32 %v3265, %v3337
  %v3339 = vpop.f32.mrb[0].mxu0
  %v3340 = vadd.f32 %v3267, %v3339
  %v3341 = vpop.f32.mrb[0].mxu0
  %v3342 = vadd.f32 %v3269, %v3341
  %v3343 = vpop.f32.mrb[0].mxu0
  %v3344 = vadd.f32 %v3271, %v3343
  %3345 = vmatprep.mubr.bf16.mxu0 %v645
  %3346 = vmatmul.mubr.bf16.gmra.mrb[0].mxu0 %v644
  %v3347 = vpop.f32.mrb[0].mxu0
  %v3348 = vadd.f32 %v3275, %v3347
  %v3349 = vpop.f32.mrb[0].mxu0
  %v3350 = vadd.f32 %v3277, %v3349
  %v3351 = vpop.f32.mrb[0].mxu0
  %v3352 = vadd.f32 %v3279, %v3351
  %v3353 = vpop.f32.mrb[0].mxu0
  %v3354 = vadd.f32 %v3281, %v3353
  %3355 = vmatprep.mubr.bf16.mxu0 %v649
  %3356 = vmatmul.mubr.bf16.gmra.mrb[0].mxu0 %v648
  %v3357 = vpop.f32.mrb[0].mxu0
  %v3358 = vadd.f32 %v3285, %v3357
  %v3359 = vpop.f32.mrb[0].mxu0
  %v3360 = vadd.f32 %v3287, %v3359
  %v3361 = vpop.f32.mrb[0].mxu0
  %v3362 = vadd.f32 %v3289, %v3361
  %v3363 = vpop.f32.mrb[0].mxu0
  %v3364 = vadd.f32 %v3291, %v3363
  %3365 = vmatprep.mubr.bf16.mxu0 %v653
  %3366 = vmatmul.mubr.bf16.gmra.mrb[0].mxu0 %v652
  %v3367 = vpop.f32.mrb[0].mxu0
  %v3368 = vadd.f32 %v3295, %v3367
  %v3369 = vpop.f32.mrb[0].mxu0
  %v3370 = vadd.f32 %v3297, %v3369
  %v3371 = vpop.f32.mrb[0].mxu0
  %v3372 = vadd.f32 %v3299, %v3371
  %v3373 = vpop.f32.mrb[0].mxu0
  %v3374 = vadd.f32 %v3301, %v3373
  %3375 = vdwg.mxu0
  %3376 = vmatprep.subr.bf16.mxu0 %v2209
  %3377 = vmatpush1.bf16.msra.mxu0 %v2208
  %3378 = vmatprep.subr.bf16.mxu0 %v2225
  %3379 = vmatpush1.bf16.msra.mxu0 %v2224
  %3380 = vmatprep.subr.bf16.mxu0 %v2241
  %3381 = vmatpush1.bf16.msra.mxu0 %v2240
  %3382 = vmatprep.subr.bf16.mxu0 %v2257
  %3383 = vmatpush1.bf16.msra.mxu0 %v2256
  %3384 = vmatprep.subr.bf16.mxu0 %v2273
  %3385 = vmatpush1.bf16.msra.mxu0 %v2272
  %3386 = vmatprep.subr.bf16.mxu0 %v2289
  %3387 = vmatpush1.bf16.msra.mxu0 %v2288
  %3388 = vmatprep.subr.bf16.mxu0 %v2305
  %3389 = vmatpush1.bf16.msra.mxu0 %v2304
  %3390 = vmatprep.subr.bf16.mxu0 %v2321
  %3391 = vmatpush1.bf16.msra.mxu0 %v2320
  %3392 = vmatprep.subr.bf16.mxu0 %v2337
  %3393 = vmatpush1.bf16.msra.mxu0 %v2336
  %3394 = vmatprep.subr.bf16.mxu0 %v2353
  %3395 = vmatpush1.bf16.msra.mxu0 %v2352
  %3396 = vmatprep.subr.bf16.mxu0 %v2369
  %3397 = vmatpush1.bf16.msra.mxu0 %v2368
  %3398 = vmatprep.subr.bf16.mxu0 %v2385
  %3399 = vmatpush1.bf16.msra.mxu0 %v2384
  %3400 = vmatprep.subr.bf16.mxu0 %v2401
  %3401 = vmatpush1.bf16.msra.mxu0 %v2400
  %3402 = vmatprep.subr.bf16.mxu0 %v2417
  %3403 = vmatpush1.bf16.msra.mxu0 %v2416
  %3404 = vmatprep.subr.bf16.mxu0 %v2433
  %3405 = vmatpush1.bf16.msra.mxu0 %v2432
  %3406 = vmatprep.subr.bf16.mxu0 %v2449
  %3407 = vmatpush1.bf16.msra.mxu0 %v2448
  %3408 = vmatprep.mubr.bf16.mxu0 %v639
  %3409 = vmatmul.mubr.bf16.gmra.mrb[0].mxu0 %v638
  %v3410 = vpop.f32.mrb[0].mxu0
  %v3411 = vadd.f32 %v553, %v3410
  %v3412 = vpop.f32.mrb[0].mxu0
  %v3413 = vadd.f32 %v553, %v3412
  %v3414 = vpop.f32.mrb[0].mxu0
  %v3415 = vadd.f32 %v558, %v3414
  %v3416 = vpop.f32.mrb[0].mxu0
  %v3417 = vadd.f32 %v558, %v3416
  %3418 = vmatprep.mubr.bf16.mxu0 %v643
  %3419 = vmatmul.mubr.bf16.gmra.mrb[0].mxu0 %v642
  %v3420 = vpop.f32.mrb[0].mxu0
  %v3421 = vadd.f32 %v563, %v3420
  %v3422 = vpop.f32.mrb[0].mxu0
  %v3423 = vadd.f32 %v563, %v3422
  %v3424 = vpop.f32.mrb[0].mxu0
  %v3425 = vadd.f32 %v568, %v3424
  %v3426 = vpop.f32.mrb[0].mxu0
  %v3427 = vadd.f32 %v568, %v3426
  %3428 = vmatprep.mubr.bf16.mxu0 %v647
  %3429 = vmatmul.mubr.bf16.gmra.mrb[0].mxu0 %v646
  %v3430 = vpop.f32.mrb[0].mxu0
  %v3431 = vadd.f32 %v573, %v3430
  %v3432 = vpop.f32.mrb[0].mxu0
  %v3433 = vadd.f32 %v573, %v3432
  %v3434 = vpop.f32.mrb[0].mxu0
  %v3435 = vadd.f32 %v578, %v3434
  %v3436 = vpop.f32.mrb[0].mxu0
  %v3437 = vadd.f32 %v578, %v3436
  %3438 = vmatprep.mubr.bf16.mxu0 %v651
  %3439 = vmatmul.mubr.bf16.gmra.mrb[0].mxu0 %v650
  %v3440 = vpop.f32.mrb[0].mxu0
  %v3441 = vadd.f32 %v583, %v3440
  %v3442 = vpop.f32.mrb[0].mxu0
  %v3443 = vadd.f32 %v583, %v3442
  %v3444 = vpop.f32.mrb[0].mxu0
  %v3445 = vadd.f32 %v588, %v3444
  %v3446 = vpop.f32.mrb[0].mxu0
  %v3447 = vadd.f32 %v588, %v3446
  %3448 = vdwg.mxu0
  %3449 = vmatprep.subr.bf16.mxu0 %v2465
  %3450 = vmatpush1.bf16.msra.mxu0 %v2464
  %3451 = vmatprep.subr.bf16.mxu0 %v2481
  %3452 = vmatpush1.bf16.msra.mxu0 %v2480
  %3453 = vmatprep.subr.bf16.mxu0 %v2497
  %3454 = vmatpush1.bf16.msra.mxu0 %v2496
  %3455 = vmatprep.subr.bf16.mxu0 %v2513
  %3456 = vmatpush1.bf16.msra.mxu0 %v2512
  %3457 = vmatprep.subr.bf16.mxu0 %v2529
  %3458 = vmatpush1.bf16.msra.mxu0 %v2528
  %3459 = vmatprep.subr.bf16.mxu0 %v2545
  %3460 = vmatpush1.bf16.msra.mxu0 %v2544
  %3461 = vmatprep.subr.bf16.mxu0 %v2561
  %3462 = vmatpush1.bf16.msra.mxu0 %v2560
  %3463 = vmatprep.subr.bf16.mxu0 %v2577
  %3464 = vmatpush1.bf16.msra.mxu0 %v2576
  %3465 = vmatprep.subr.bf16.mxu0 %v2593
  %3466 = vmatpush1.bf16.msra.mxu0 %v2592
  %3467 = vmatprep.subr.bf16.mxu0 %v2609
  %3468 = vmatpush1.bf16.msra.mxu0 %v2608
  %3469 = vmatprep.subr.bf16.mxu0 %v2625
  %3470 = vmatpush1.bf16.msra.mxu0 %v2624
  %3471 = vmatprep.subr.bf16.mxu0 %v2641
  %3472 = vmatpush1.bf16.msra.mxu0 %v2640
  %3473 = vmatprep.subr.bf16.mxu0 %v2657
  %3474 = vmatpush1.bf16.msra.mxu0 %v2656
  %3475 = vmatprep.subr.bf16.mxu0 %v2673
  %3476 = vmatpush1.bf16.msra.mxu0 %v2672
  %3477 = vmatprep.subr.bf16.mxu0 %v2689
  %3478 = vmatpush1.bf16.msra.mxu0 %v2688
  %3479 = vmatprep.subr.bf16.mxu0 %v2705
  %3480 = vmatpush1.bf16.msra.mxu0 %v2704
  %3481 = vmatprep.mubr.bf16.mxu0 %v641
  %3482 = vmatmul.mubr.bf16.gmra.mrb[0].mxu0 %v640
  %v3483 = vpop.f32.mrb[0].mxu0
  %v3484 = vadd.f32 %v3411, %v3483
  %v3485 = vpop.f32.mrb[0].mxu0
  %v3486 = vadd.f32 %v3413, %v3485
  %v3487 = vpop.f32.mrb[0].mxu0
  %v3488 = vadd.f32 %v3415, %v3487
  %v3489 = vpop.f32.mrb[0].mxu0
  %v3490 = vadd.f32 %v3417, %v3489
  %3491 = vmatprep.mubr.bf16.mxu0 %v645
  %3492 = vmatmul.mubr.bf16.gmra.mrb[0].mxu0 %v644
  %v3493 = vpop.f32.mrb[0].mxu0
  %v3494 = vadd.f32 %v3421, %v3493
  %v3495 = vpop.f32.mrb[0].mxu0
  %v3496 = vadd.f32 %v3423, %v3495
  %v3497 = vpop.f32.mrb[0].mxu0
  %v3498 = vadd.f32 %v3425, %v3497
  %v3499 = vpop.f32.mrb[0].mxu0
  %v3500 = vadd.f32 %v3427, %v3499
  %3501 = vmatprep.mubr.bf16.mxu0 %v649
  %3502 = vmatmul.mubr.bf16.gmra.mrb[0].mxu0 %v648
  %v3503 = vpop.f32.mrb[0].mxu0
  %v3504 = vadd.f32 %v3431, %v3503
  %v3505 = vpop.f32.mrb[0].mxu0
  %v3506 = vadd.f32 %v3433, %v3505
  %v3507 = vpop.f32.mrb[0].mxu0
  %v3508 = vadd.f32 %v3435, %v3507
  %v3509 = vpop.f32.mrb[0].mxu0
  %v3510 = vadd.f32 %v3437, %v3509
  %3511 = vmatprep.mubr.bf16.mxu0 %v653
  %3512 = vmatmul.mubr.bf16.gmra.mrb[0].mxu0 %v652
  %v3513 = vpop.f32.mrb[0].mxu0
  %v3514 = vadd.f32 %v3441, %v3513
  %v3515 = vpop.f32.mrb[0].mxu0
  %v3516 = vadd.f32 %v3443, %v3515
  %v3517 = vpop.f32.mrb[0].mxu0
  %v3518 = vadd.f32 %v3445, %v3517
  %v3519 = vpop.f32.mrb[0].mxu0
  %v3520 = vadd.f32 %v3447, %v3519
  %3521 = vdwg.mxu0
  %3522 = vmatprep.subr.bf16.mxu0 %v2211
  %3523 = vmatpush1.bf16.msra.mxu0 %v2210
  %3524 = vmatprep.subr.bf16.mxu0 %v2227
  %3525 = vmatpush1.bf16.msra.mxu0 %v2226
  %3526 = vmatprep.subr.bf16.mxu0 %v2243
  %3527 = vmatpush1.bf16.msra.mxu0 %v2242
  %3528 = vmatprep.subr.bf16.mxu0 %v2259
  %3529 = vmatpush1.bf16.msra.mxu0 %v2258
  %3530 = vmatprep.subr.bf16.mxu0 %v2275
  %3531 = vmatpush1.bf16.msra.mxu0 %v2274
  %3532 = vmatprep.subr.bf16.mxu0 %v2291
  %3533 = vmatpush1.bf16.msra.mxu0 %v2290
  %3534 = vmatprep.subr.bf16.mxu0 %v2307
  %3535 = vmatpush1.bf16.msra.mxu0 %v2306
  %3536 = vmatprep.subr.bf16.mxu0 %v2323
  %3537 = vmatpush1.bf16.msra.mxu0 %v2322
  %3538 = vmatprep.subr.bf16.mxu0 %v2339
  %3539 = vmatpush1.bf16.msra.mxu0 %v2338
  %3540 = vmatprep.subr.bf16.mxu0 %v2355
  %3541 = vmatpush1.bf16.msra.mxu0 %v2354
  %3542 = vmatprep.subr.bf16.mxu0 %v2371
  %3543 = vmatpush1.bf16.msra.mxu0 %v2370
  %3544 = vmatprep.subr.bf16.mxu0 %v2387
  %3545 = vmatpush1.bf16.msra.mxu0 %v2386
  %3546 = vmatprep.subr.bf16.mxu0 %v2403
  %3547 = vmatpush1.bf16.msra.mxu0 %v2402
  %3548 = vmatprep.subr.bf16.mxu0 %v2419
  %3549 = vmatpush1.bf16.msra.mxu0 %v2418
  %3550 = vmatprep.subr.bf16.mxu0 %v2435
  %3551 = vmatpush1.bf16.msra.mxu0 %v2434
  %3552 = vmatprep.subr.bf16.mxu0 %v2451
  %3553 = vmatpush1.bf16.msra.mxu0 %v2450
  %3554 = vmatprep.mubr.bf16.mxu0 %v639
  %3555 = vmatmul.mubr.bf16.gmra.mrb[0].mxu0 %v638
  %v3556 = vpop.f32.mrb[0].mxu0
  %v3557 = vadd.f32 %v553, %v3556
  %v3558 = vpop.f32.mrb[0].mxu0
  %v3559 = vadd.f32 %v553, %v3558
  %v3560 = vpop.f32.mrb[0].mxu0
  %v3561 = vadd.f32 %v558, %v3560
  %v3562 = vpop.f32.mrb[0].mxu0
  %v3563 = vadd.f32 %v558, %v3562
  %3564 = vmatprep.mubr.bf16.mxu0 %v643
  %3565 = vmatmul.mubr.bf16.gmra.mrb[0].mxu0 %v642
  %v3566 = vpop.f32.mrb[0].mxu0
  %v3567 = vadd.f32 %v563, %v3566
  %v3568 = vpop.f32.mrb[0].mxu0
  %v3569 = vadd.f32 %v563, %v3568
  %v3570 = vpop.f32.mrb[0].mxu0
  %v3571 = vadd.f32 %v568, %v3570
  %v3572 = vpop.f32.mrb[0].mxu0
  %v3573 = vadd.f32 %v568, %v3572
  %3574 = vmatprep.mubr.bf16.mxu0 %v647
  %3575 = vmatmul.mubr.bf16.gmra.mrb[0].mxu0 %v646
  %v3576 = vpop.f32.mrb[0].mxu0
  %v3577 = vadd.f32 %v573, %v3576
  %v3578 = vpop.f32.mrb[0].mxu0
  %v3579 = vadd.f32 %v573, %v3578
  %v3580 = vpop.f32.mrb[0].mxu0
  %v3581 = vadd.f32 %v578, %v3580
  %v3582 = vpop.f32.mrb[0].mxu0
  %v3583 = vadd.f32 %v578, %v3582
  %3584 = vmatprep.mubr.bf16.mxu0 %v651
  %3585 = vmatmul.mubr.bf16.gmra.mrb[0].mxu0 %v650
  %v3586 = vpop.f32.mrb[0].mxu0
  %v3587 = vadd.f32 %v583, %v3586
  %v3588 = vpop.f32.mrb[0].mxu0
  %v3589 = vadd.f32 %v583, %v3588
  %v3590 = vpop.f32.mrb[0].mxu0
  %v3591 = vadd.f32 %v588, %v3590
  %v3592 = vpop.f32.mrb[0].mxu0
  %v3593 = vadd.f32 %v588, %v3592
  %3594 = vdwg.mxu0
  %3595 = vmatprep.subr.bf16.mxu0 %v2467
  %3596 = vmatpush1.bf16.msra.mxu0 %v2466
  %3597 = vmatprep.subr.bf16.mxu0 %v2483
  %3598 = vmatpush1.bf16.msra.mxu0 %v2482
  %3599 = vmatprep.subr.bf16.mxu0 %v2499
  %3600 = vmatpush1.bf16.msra.mxu0 %v2498
  %3601 = vmatprep.subr.bf16.mxu0 %v2515
  %3602 = vmatpush1.bf16.msra.mxu0 %v2514
  %3603 = vmatprep.subr.bf16.mxu0 %v2531
  %3604 = vmatpush1.bf16.msra.mxu0 %v2530
  %3605 = vmatprep.subr.bf16.mxu0 %v2547
  %3606 = vmatpush1.bf16.msra.mxu0 %v2546
  %3607 = vmatprep.subr.bf16.mxu0 %v2563
  %3608 = vmatpush1.bf16.msra.mxu0 %v2562
  %3609 = vmatprep.subr.bf16.mxu0 %v2579
  %3610 = vmatpush1.bf16.msra.mxu0 %v2578
  %3611 = vmatprep.subr.bf16.mxu0 %v2595
  %3612 = vmatpush1.bf16.msra.mxu0 %v2594
  %3613 = vmatprep.subr.bf16.mxu0 %v2611
  %3614 = vmatpush1.bf16.msra.mxu0 %v2610
  %3615 = vmatprep.subr.bf16.mxu0 %v2627
  %3616 = vmatpush1.bf16.msra.mxu0 %v2626
  %3617 = vmatprep.subr.bf16.mxu0 %v2643
  %3618 = vmatpush1.bf16.msra.mxu0 %v2642
  %3619 = vmatprep.subr.bf16.mxu0 %v2659
  %3620 = vmatpush1.bf16.msra.mxu0 %v2658
  %3621 = vmatprep.subr.bf16.mxu0 %v2675
  %3622 = vmatpush1.bf16.msra.mxu0 %v2674
  %3623 = vmatprep.subr.bf16.mxu0 %v2691
  %3624 = vmatpush1.bf16.msra.mxu0 %v2690
  %3625 = vmatprep.subr.bf16.mxu0 %v2707
  %3626 = vmatpush1.bf16.msra.mxu0 %v2706
  %3627 = vmatprep.mubr.bf16.mxu0 %v641
  %3628 = vmatmul.mubr.bf16.gmra.mrb[0].mxu0 %v640
  %v3629 = vpop.f32.mrb[0].mxu0
  %v3630 = vadd.f32 %v3557, %v3629
  %v3631 = vpop.f32.mrb[0].mxu0
  %v3632 = vadd.f32 %v3559, %v3631
  %v3633 = vpop.f32.mrb[0].mxu0
  %v3634 = vadd.f32 %v3561, %v3633
  %v3635 = vpop.f32.mrb[0].mxu0
  %v3636 = vadd.f32 %v3563, %v3635
  %3637 = vmatprep.mubr.bf16.mxu0 %v645
  %3638 = vmatmul.mubr.bf16.gmra.mrb[0].mxu0 %v644
  %v3639 = vpop.f32.mrb[0].mxu0
  %v3640 = vadd.f32 %v3567, %v3639
  %v3641 = vpop.f32.mrb[0].mxu0
  %v3642 = vadd.f32 %v3569, %v3641
  %v3643 = vpop.f32.mrb[0].mxu0
  %v3644 = vadd.f32 %v3571, %v3643
  %v3645 = vpop.f32.mrb[0].mxu0
  %v3646 = vadd.f32 %v3573, %v3645
  %3647 = vmatprep.mubr.bf16.mxu0 %v649
  %3648 = vmatmul.mubr.bf16.gmra.mrb[0].mxu0 %v648
  %v3649 = vpop.f32.mrb[0].mxu0
  %v3650 = vadd.f32 %v3577, %v3649
  %v3651 = vpop.f32.mrb[0].mxu0
  %v3652 = vadd.f32 %v3579, %v3651
  %v3653 = vpop.f32.mrb[0].mxu0
  %v3654 = vadd.f32 %v3581, %v3653
  %v3655 = vpop.f32.mrb[0].mxu0
  %v3656 = vadd.f32 %v3583, %v3655
  %3657 = vmatprep.mubr.bf16.mxu0 %v653
  %3658 = vmatmul.mubr.bf16.gmra.mrb[0].mxu0 %v652
  %v3659 = vpop.f32.mrb[0].mxu0
  %v3660 = vadd.f32 %v3587, %v3659
  %v3661 = vpop.f32.mrb[0].mxu0
  %v3662 = vadd.f32 %v3589, %v3661
  %v3663 = vpop.f32.mrb[0].mxu0
  %v3664 = vadd.f32 %v3591, %v3663
  %v3665 = vpop.f32.mrb[0].mxu0
  %v3666 = vadd.f32 %v3593, %v3665
  %3667 = vdwg.mxu0
  %3668 = vmatprep.subr.bf16.mxu0 %v2213
  %3669 = vmatpush1.bf16.msra.mxu0 %v2212
  %3670 = vmatprep.subr.bf16.mxu0 %v2229
  %3671 = vmatpush1.bf16.msra.mxu0 %v2228
  %3672 = vmatprep.subr.bf16.mxu0 %v2245
  %3673 = vmatpush1.bf16.msra.mxu0 %v2244
  %3674 = vmatprep.subr.bf16.mxu0 %v2261
  %3675 = vmatpush1.bf16.msra.mxu0 %v2260
  %3676 = vmatprep.subr.bf16.mxu0 %v2277
  %3677 = vmatpush1.bf16.msra.mxu0 %v2276
  %3678 = vmatprep.subr.bf16.mxu0 %v2293
  %3679 = vmatpush1.bf16.msra.mxu0 %v2292
  %3680 = vmatprep.subr.bf16.mxu0 %v2309
  %3681 = vmatpush1.bf16.msra.mxu0 %v2308
  %3682 = vmatprep.subr.bf16.mxu0 %v2325
  %3683 = vmatpush1.bf16.msra.mxu0 %v2324
  %3684 = vmatprep.subr.bf16.mxu0 %v2341
  %3685 = vmatpush1.bf16.msra.mxu0 %v2340
  %3686 = vmatprep.subr.bf16.mxu0 %v2357
  %3687 = vmatpush1.bf16.msra.mxu0 %v2356
  %3688 = vmatprep.subr.bf16.mxu0 %v2373
  %3689 = vmatpush1.bf16.msra.mxu0 %v2372
  %3690 = vmatprep.subr.bf16.mxu0 %v2389
  %3691 = vmatpush1.bf16.msra.mxu0 %v2388
  %3692 = vmatprep.subr.bf16.mxu0 %v2405
  %3693 = vmatpush1.bf16.msra.mxu0 %v2404
  %3694 = vmatprep.subr.bf16.mxu0 %v2421
  %3695 = vmatpush1.bf16.msra.mxu0 %v2420
  %3696 = vmatprep.subr.bf16.mxu0 %v2437
  %3697 = vmatpush1.bf16.msra.mxu0 %v2436
  %3698 = vmatprep.subr.bf16.mxu0 %v2453
  %3699 = vmatpush1.bf16.msra.mxu0 %v2452
  %3700 = vmatprep.mubr.bf16.mxu0 %v639
  %3701 = vmatmul.mubr.bf16.gmra.mrb[0].mxu0 %v638
  %v3702 = vpop.f32.mrb[0].mxu0
  %v3703 = vadd.f32 %v553, %v3702
  %v3704 = vpop.f32.mrb[0].mxu0
  %v3705 = vadd.f32 %v553, %v3704
  %v3706 = vpop.f32.mrb[0].mxu0
  %v3707 = vadd.f32 %v558, %v3706
  %v3708 = vpop.f32.mrb[0].mxu0
  %v3709 = vadd.f32 %v558, %v3708
  %3710 = vmatprep.mubr.bf16.mxu0 %v643
  %3711 = vmatmul.mubr.bf16.gmra.mrb[0].mxu0 %v642
  %v3712 = vpop.f32.mrb[0].mxu0
  %v3713 = vadd.f32 %v563, %v3712
  %v3714 = vpop.f32.mrb[0].mxu0
  %v3715 = vadd.f32 %v563, %v3714
  %v3716 = vpop.f32.mrb[0].mxu0
  %v3717 = vadd.f32 %v568, %v3716
  %v3718 = vpop.f32.mrb[0].mxu0
  %v3719 = vadd.f32 %v568, %v3718
  %3720 = vmatprep.mubr.bf16.mxu0 %v647
  %3721 = vmatmul.mubr.bf16.gmra.mrb[0].mxu0 %v646
  %v3722 = vpop.f32.mrb[0].mxu0
  %v3723 = vadd.f32 %v573, %v3722
  %v3724 = vpop.f32.mrb[0].mxu0
  %v3725 = vadd.f32 %v573, %v3724
  %v3726 = vpop.f32.mrb[0].mxu0
  %v3727 = vadd.f32 %v578, %v3726
  %v3728 = vpop.f32.mrb[0].mxu0
  %v3729 = vadd.f32 %v578, %v3728
  %3730 = vmatprep.mubr.bf16.mxu0 %v651
  %3731 = vmatmul.mubr.bf16.gmra.mrb[0].mxu0 %v650
  %v3732 = vpop.f32.mrb[0].mxu0
  %v3733 = vadd.f32 %v583, %v3732
  %v3734 = vpop.f32.mrb[0].mxu0
  %v3735 = vadd.f32 %v583, %v3734
  %v3736 = vpop.f32.mrb[0].mxu0
  %v3737 = vadd.f32 %v588, %v3736
  %v3738 = vpop.f32.mrb[0].mxu0
  %v3739 = vadd.f32 %v588, %v3738
  %3740 = vdwg.mxu0
  %3741 = vmatprep.subr.bf16.mxu0 %v2469
  %3742 = vmatpush1.bf16.msra.mxu0 %v2468
  %3743 = vmatprep.subr.bf16.mxu0 %v2485
  %3744 = vmatpush1.bf16.msra.mxu0 %v2484
  %3745 = vmatprep.subr.bf16.mxu0 %v2501
  %3746 = vmatpush1.bf16.msra.mxu0 %v2500
  %3747 = vmatprep.subr.bf16.mxu0 %v2517
  %3748 = vmatpush1.bf16.msra.mxu0 %v2516
  %3749 = vmatprep.subr.bf16.mxu0 %v2533
  %3750 = vmatpush1.bf16.msra.mxu0 %v2532
  %3751 = vmatprep.subr.bf16.mxu0 %v2549
  %3752 = vmatpush1.bf16.msra.mxu0 %v2548
  %3753 = vmatprep.subr.bf16.mxu0 %v2565
  %3754 = vmatpush1.bf16.msra.mxu0 %v2564
  %3755 = vmatprep.subr.bf16.mxu0 %v2581
  %3756 = vmatpush1.bf16.msra.mxu0 %v2580
  %3757 = vmatprep.subr.bf16.mxu0 %v2597
  %3758 = vmatpush1.bf16.msra.mxu0 %v2596
  %3759 = vmatprep.subr.bf16.mxu0 %v2613
  %3760 = vmatpush1.bf16.msra.mxu0 %v2612
  %3761 = vmatprep.subr.bf16.mxu0 %v2629
  %3762 = vmatpush1.bf16.msra.mxu0 %v2628
  %3763 = vmatprep.subr.bf16.mxu0 %v2645
  %3764 = vmatpush1.bf16.msra.mxu0 %v2644
  %3765 = vmatprep.subr.bf16.mxu0 %v2661
  %3766 = vmatpush1.bf16.msra.mxu0 %v2660
  %3767 = vmatprep.subr.bf16.mxu0 %v2677
  %3768 = vmatpush1.bf16.msra.mxu0 %v2676
  %3769 = vmatprep.subr.bf16.mxu0 %v2693
  %3770 = vmatpush1.bf16.msra.mxu0 %v2692
  %3771 = vmatprep.subr.bf16.mxu0 %v2709
  %3772 = vmatpush1.bf16.msra.mxu0 %v2708
  %3773 = vmatprep.mubr.bf16.mxu0 %v641
  %3774 = vmatmul.mubr.bf16.gmra.mrb[0].mxu0 %v640
  %v3775 = vpop.f32.mrb[0].mxu0
  %v3776 = vadd.f32 %v3703, %v3775
  %v3777 = vpop.f32.mrb[0].mxu0
  %v3778 = vadd.f32 %v3705, %v3777
  %v3779 = vpop.f32.mrb[0].mxu0
  %v3780 = vadd.f32 %v3707, %v3779
  %v3781 = vpop.f32.mrb[0].mxu0
  %v3782 = vadd.f32 %v3709, %v3781
  %3783 = vmatprep.mubr.bf16.mxu0 %v645
  %3784 = vmatmul.mubr.bf16.gmra.mrb[0].mxu0 %v644
  %v3785 = vpop.f32.mrb[0].mxu0
  %v3786 = vadd.f32 %v3713, %v3785
  %v3787 = vpop.f32.mrb[0].mxu0
  %v3788 = vadd.f32 %v3715, %v3787
  %v3789 = vpop.f32.mrb[0].mxu0
  %v3790 = vadd.f32 %v3717, %v3789
  %v3791 = vpop.f32.mrb[0].mxu0
  %v3792 = vadd.f32 %v3719, %v3791
  %3793 = vmatprep.mubr.bf16.mxu0 %v649
  %3794 = vmatmul.mubr.bf16.gmra.mrb[0].mxu0 %v648
  %v3795 = vpop.f32.mrb[0].mxu0
  %v3796 = vadd.f32 %v3723, %v3795
  %v3797 = vpop.f32.mrb[0].mxu0
  %v3798 = vadd.f32 %v3725, %v3797
  %v3799 = vpop.f32.mrb[0].mxu0
  %v3800 = vadd.f32 %v3727, %v3799
  %v3801 = vpop.f32.mrb[0].mxu0
  %v3802 = vadd.f32 %v3729, %v3801
  %3803 = vmatprep.mubr.bf16.mxu0 %v653
  %3804 = vmatmul.mubr.bf16.gmra.mrb[0].mxu0 %v652
  %v3805 = vpop.f32.mrb[0].mxu0
  %v3806 = vadd.f32 %v3733, %v3805
  %v3807 = vpop.f32.mrb[0].mxu0
  %v3808 = vadd.f32 %v3735, %v3807
  %v3809 = vpop.f32.mrb[0].mxu0
  %v3810 = vadd.f32 %v3737, %v3809
  %v3811 = vpop.f32.mrb[0].mxu0
  %v3812 = vadd.f32 %v3739, %v3811
  %3813 = vdwg.mxu0
  %3814 = vmatprep.subr.bf16.mxu0 %v2215
  %3815 = vmatpush1.bf16.msra.mxu0 %v2214
  %3816 = vmatprep.subr.bf16.mxu0 %v2231
  %3817 = vmatpush1.bf16.msra.mxu0 %v2230
  %3818 = vmatprep.subr.bf16.mxu0 %v2247
  %3819 = vmatpush1.bf16.msra.mxu0 %v2246
  %3820 = vmatprep.subr.bf16.mxu0 %v2263
  %3821 = vmatpush1.bf16.msra.mxu0 %v2262
  %3822 = vmatprep.subr.bf16.mxu0 %v2279
  %3823 = vmatpush1.bf16.msra.mxu0 %v2278
  %3824 = vmatprep.subr.bf16.mxu0 %v2295
  %3825 = vmatpush1.bf16.msra.mxu0 %v2294
  %3826 = vmatprep.subr.bf16.mxu0 %v2311
  %3827 = vmatpush1.bf16.msra.mxu0 %v2310
  %3828 = vmatprep.subr.bf16.mxu0 %v2327
  %3829 = vmatpush1.bf16.msra.mxu0 %v2326
  %3830 = vmatprep.subr.bf16.mxu0 %v2343
  %3831 = vmatpush1.bf16.msra.mxu0 %v2342
  %3832 = vmatprep.subr.bf16.mxu0 %v2359
  %3833 = vmatpush1.bf16.msra.mxu0 %v2358
  %3834 = vmatprep.subr.bf16.mxu0 %v2375
  %3835 = vmatpush1.bf16.msra.mxu0 %v2374
  %3836 = vmatprep.subr.bf16.mxu0 %v2391
  %3837 = vmatpush1.bf16.msra.mxu0 %v2390
  %3838 = vmatprep.subr.bf16.mxu0 %v2407
  %3839 = vmatpush1.bf16.msra.mxu0 %v2406
  %3840 = vmatprep.subr.bf16.mxu0 %v2423
  %3841 = vmatpush1.bf16.msra.mxu0 %v2422
  %3842 = vmatprep.subr.bf16.mxu0 %v2439
  %3843 = vmatpush1.bf16.msra.mxu0 %v2438
  %3844 = vmatprep.subr.bf16.mxu0 %v2455
  %3845 = vmatpush1.bf16.msra.mxu0 %v2454
  %3846 = vmatprep.mubr.bf16.mxu0 %v639
  %3847 = vmatmul.mubr.bf16.gmra.mrb[0].mxu0 %v638
  %v3848 = vpop.f32.mrb[0].mxu0
  %v3849 = vadd.f32 %v553, %v3848
  %v3850 = vpop.f32.mrb[0].mxu0
  %v3851 = vadd.f32 %v553, %v3850
  %v3852 = vpop.f32.mrb[0].mxu0
  %v3853 = vadd.f32 %v558, %v3852
  %v3854 = vpop.f32.mrb[0].mxu0
  %v3855 = vadd.f32 %v558, %v3854
  %3856 = vmatprep.mubr.bf16.mxu0 %v643
  %3857 = vmatmul.mubr.bf16.gmra.mrb[0].mxu0 %v642
  %v3858 = vpop.f32.mrb[0].mxu0
  %v3859 = vadd.f32 %v563, %v3858
  %v3860 = vpop.f32.mrb[0].mxu0
  %v3861 = vadd.f32 %v563, %v3860
  %v3862 = vpop.f32.mrb[0].mxu0
  %v3863 = vadd.f32 %v568, %v3862
  %v3864 = vpop.f32.mrb[0].mxu0
  %v3865 = vadd.f32 %v568, %v3864
  %3866 = vmatprep.mubr.bf16.mxu0 %v647
  %3867 = vmatmul.mubr.bf16.gmra.mrb[0].mxu0 %v646
  %v3868 = vpop.f32.mrb[0].mxu0
  %v3869 = vadd.f32 %v573, %v3868
  %v3870 = vpop.f32.mrb[0].mxu0
  %v3871 = vadd.f32 %v573, %v3870
  %v3872 = vpop.f32.mrb[0].mxu0
  %v3873 = vadd.f32 %v578, %v3872
  %v3874 = vpop.f32.mrb[0].mxu0
  %v3875 = vadd.f32 %v578, %v3874
  %3876 = vmatprep.mubr.bf16.mxu0 %v651
  %3877 = vmatmul.mubr.bf16.gmra.mrb[0].mxu0 %v650
  %v3878 = vpop.f32.mrb[0].mxu0
  %v3879 = vadd.f32 %v583, %v3878
  %v3880 = vpop.f32.mrb[0].mxu0
  %v3881 = vadd.f32 %v583, %v3880
  %v3882 = vpop.f32.mrb[0].mxu0
  %v3883 = vadd.f32 %v588, %v3882
  %v3884 = vpop.f32.mrb[0].mxu0
  %v3885 = vadd.f32 %v588, %v3884
  %3886 = vdwg.mxu0
  %3887 = vmatprep.subr.bf16.mxu0 %v2471
  %3888 = vmatpush1.bf16.msra.mxu0 %v2470
  %3889 = vmatprep.subr.bf16.mxu0 %v2487
  %3890 = vmatpush1.bf16.msra.mxu0 %v2486
  %3891 = vmatprep.subr.bf16.mxu0 %v2503
  %3892 = vmatpush1.bf16.msra.mxu0 %v2502
  %3893 = vmatprep.subr.bf16.mxu0 %v2519
  %3894 = vmatpush1.bf16.msra.mxu0 %v2518
  %3895 = vmatprep.subr.bf16.mxu0 %v2535
  %3896 = vmatpush1.bf16.msra.mxu0 %v2534
  %3897 = vmatprep.subr.bf16.mxu0 %v2551
  %3898 = vmatpush1.bf16.msra.mxu0 %v2550
  %3899 = vmatprep.subr.bf16.mxu0 %v2567
  %3900 = vmatpush1.bf16.msra.mxu0 %v2566
  %3901 = vmatprep.subr.bf16.mxu0 %v2583
  %3902 = vmatpush1.bf16.msra.mxu0 %v2582
  %3903 = vmatprep.subr.bf16.mxu0 %v2599
  %3904 = vmatpush1.bf16.msra.mxu0 %v2598
  %3905 = vmatprep.subr.bf16.mxu0 %v2615
  %3906 = vmatpush1.bf16.msra.mxu0 %v2614
  %3907 = vmatprep.subr.bf16.mxu0 %v2631
  %3908 = vmatpush1.bf16.msra.mxu0 %v2630
  %3909 = vmatprep.subr.bf16.mxu0 %v2647
  %3910 = vmatpush1.bf16.msra.mxu0 %v2646
  %3911 = vmatprep.subr.bf16.mxu0 %v2663
  %3912 = vmatpush1.bf16.msra.mxu0 %v2662
  %3913 = vmatprep.subr.bf16.mxu0 %v2679
  %3914 = vmatpush1.bf16.msra.mxu0 %v2678
  %3915 = vmatprep.subr.bf16.mxu0 %v2695
  %3916 = vmatpush1.bf16.msra.mxu0 %v2694
  %3917 = vmatprep.subr.bf16.mxu0 %v2711
  %3918 = vmatpush1.bf16.msra.mxu0 %v2710
  %3919 = vmatprep.mubr.bf16.mxu0 %v641
  %3920 = vmatmul.mubr.bf16.gmra.mrb[0].mxu0 %v640
  %v3921 = vpop.f32.mrb[0].mxu0
  %v3922 = vadd.f32 %v3849, %v3921
  %v3923 = vpop.f32.mrb[0].mxu0
  %v3924 = vadd.f32 %v3851, %v3923
  %v3925 = vpop.f32.mrb[0].mxu0
  %v3926 = vadd.f32 %v3853, %v3925
  %v3927 = vpop.f32.mrb[0].mxu0
  %v3928 = vadd.f32 %v3855, %v3927
  %3929 = vmatprep.mubr.bf16.mxu0 %v645
  %3930 = vmatmul.mubr.bf16.gmra.mrb[0].mxu0 %v644
  %v3931 = vpop.f32.mrb[0].mxu0
  %v3932 = vadd.f32 %v3859, %v3931
  %v3933 = vpop.f32.mrb[0].mxu0
  %v3934 = vadd.f32 %v3861, %v3933
  %v3935 = vpop.f32.mrb[0].mxu0
  %v3936 = vadd.f32 %v3863, %v3935
  %v3937 = vpop.f32.mrb[0].mxu0
  %v3938 = vadd.f32 %v3865, %v3937
  %3939 = vmatprep.mubr.bf16.mxu0 %v649
  %3940 = vmatmul.mubr.bf16.gmra.mrb[0].mxu0 %v648
  %v3941 = vpop.f32.mrb[0].mxu0
  %v3942 = vadd.f32 %v3869, %v3941
  %v3943 = vpop.f32.mrb[0].mxu0
  %v3944 = vadd.f32 %v3871, %v3943
  %v3945 = vpop.f32.mrb[0].mxu0
  %v3946 = vadd.f32 %v3873, %v3945
  %v3947 = vpop.f32.mrb[0].mxu0
  %v3948 = vadd.f32 %v3875, %v3947
  %3949 = vmatprep.mubr.bf16.mxu0 %v653
  %3950 = vmatmul.mubr.bf16.gmra.mrb[0].mxu0 %v652
  %v3951 = vpop.f32.mrb[0].mxu0
  %v3952 = vadd.f32 %v3879, %v3951
  %v3953 = vpop.f32.mrb[0].mxu0
  %v3954 = vadd.f32 %v3881, %v3953
  %v3955 = vpop.f32.mrb[0].mxu0
  %v3956 = vadd.f32 %v3883, %v3955
  %v3957 = vpop.f32.mrb[0].mxu0
  %v3958 = vadd.f32 %v3885, %v3957
  %3959 = vdwg.mxu0
  %3960 = vmatprep.subr.bf16.mxu0 %v2217
  %3961 = vmatpush1.bf16.msra.mxu0 %v2216
  %3962 = vmatprep.subr.bf16.mxu0 %v2233
  %3963 = vmatpush1.bf16.msra.mxu0 %v2232
  %3964 = vmatprep.subr.bf16.mxu0 %v2249
  %3965 = vmatpush1.bf16.msra.mxu0 %v2248
  %3966 = vmatprep.subr.bf16.mxu0 %v2265
  %3967 = vmatpush1.bf16.msra.mxu0 %v2264
  %3968 = vmatprep.subr.bf16.mxu0 %v2281
  %3969 = vmatpush1.bf16.msra.mxu0 %v2280
  %3970 = vmatprep.subr.bf16.mxu0 %v2297
  %3971 = vmatpush1.bf16.msra.mxu0 %v2296
  %3972 = vmatprep.subr.bf16.mxu0 %v2313
  %3973 = vmatpush1.bf16.msra.mxu0 %v2312
  %3974 = vmatprep.subr.bf16.mxu0 %v2329
  %3975 = vmatpush1.bf16.msra.mxu0 %v2328
  %3976 = vmatprep.subr.bf16.mxu0 %v2345
  %3977 = vmatpush1.bf16.msra.mxu0 %v2344
  %3978 = vmatprep.subr.bf16.mxu0 %v2361
  %3979 = vmatpush1.bf16.msra.mxu0 %v2360
  %3980 = vmatprep.subr.bf16.mxu0 %v2377
  %3981 = vmatpush1.bf16.msra.mxu0 %v2376
  %3982 = vmatprep.subr.bf16.mxu0 %v2393
  %3983 = vmatpush1.bf16.msra.mxu0 %v2392
  %3984 = vmatprep.subr.bf16.mxu0 %v2409
  %3985 = vmatpush1.bf16.msra.mxu0 %v2408
  %3986 = vmatprep.subr.bf16.mxu0 %v2425
  %3987 = vmatpush1.bf16.msra.mxu0 %v2424
  %3988 = vmatprep.subr.bf16.mxu0 %v2441
  %3989 = vmatpush1.bf16.msra.mxu0 %v2440
  %3990 = vmatprep.subr.bf16.mxu0 %v2457
  %3991 = vmatpush1.bf16.msra.mxu0 %v2456
  %3992 = vmatprep.mubr.bf16.mxu0 %v639
  %3993 = vmatmul.mubr.bf16.gmra.mrb[0].mxu0 %v638
  %v3994 = vpop.f32.mrb[0].mxu0
  %v3995 = vadd.f32 %v553, %v3994
  %v3996 = vpop.f32.mrb[0].mxu0
  %v3997 = vadd.f32 %v553, %v3996
  %v3998 = vpop.f32.mrb[0].mxu0
  %v3999 = vadd.f32 %v558, %v3998
  %v4000 = vpop.f32.mrb[0].mxu0
  %v4001 = vadd.f32 %v558, %v4000
  %4002 = vmatprep.mubr.bf16.mxu0 %v643
  %4003 = vmatmul.mubr.bf16.gmra.mrb[0].mxu0 %v642
  %v4004 = vpop.f32.mrb[0].mxu0
  %v4005 = vadd.f32 %v563, %v4004
  %v4006 = vpop.f32.mrb[0].mxu0
  %v4007 = vadd.f32 %v563, %v4006
  %v4008 = vpop.f32.mrb[0].mxu0
  %v4009 = vadd.f32 %v568, %v4008
  %v4010 = vpop.f32.mrb[0].mxu0
  %v4011 = vadd.f32 %v568, %v4010
  %4012 = vmatprep.mubr.bf16.mxu0 %v647
  %4013 = vmatmul.mubr.bf16.gmra.mrb[0].mxu0 %v646
  %v4014 = vpop.f32.mrb[0].mxu0
  %v4015 = vadd.f32 %v573, %v4014
  %v4016 = vpop.f32.mrb[0].mxu0
  %v4017 = vadd.f32 %v573, %v4016
  %v4018 = vpop.f32.mrb[0].mxu0
  %v4019 = vadd.f32 %v578, %v4018
  %v4020 = vpop.f32.mrb[0].mxu0
  %v4021 = vadd.f32 %v578, %v4020
  %4022 = vmatprep.mubr.bf16.mxu0 %v651
  %4023 = vmatmul.mubr.bf16.gmra.mrb[0].mxu0 %v650
  %v4024 = vpop.f32.mrb[0].mxu0
  %v4025 = vadd.f32 %v583, %v4024
  %v4026 = vpop.f32.mrb[0].mxu0
  %v4027 = vadd.f32 %v583, %v4026
  %v4028 = vpop.f32.mrb[0].mxu0
  %v4029 = vadd.f32 %v588, %v4028
  %v4030 = vpop.f32.mrb[0].mxu0
  %v4031 = vadd.f32 %v588, %v4030
  %4032 = vdwg.mxu0
  %4033 = vmatprep.subr.bf16.mxu0 %v2473
  %4034 = vmatpush1.bf16.msra.mxu0 %v2472
  %4035 = vmatprep.subr.bf16.mxu0 %v2489
  %4036 = vmatpush1.bf16.msra.mxu0 %v2488
  %4037 = vmatprep.subr.bf16.mxu0 %v2505
  %4038 = vmatpush1.bf16.msra.mxu0 %v2504
  %4039 = vmatprep.subr.bf16.mxu0 %v2521
  %4040 = vmatpush1.bf16.msra.mxu0 %v2520
  %4041 = vmatprep.subr.bf16.mxu0 %v2537
  %4042 = vmatpush1.bf16.msra.mxu0 %v2536
  %4043 = vmatprep.subr.bf16.mxu0 %v2553
  %4044 = vmatpush1.bf16.msra.mxu0 %v2552
  %4045 = vmatprep.subr.bf16.mxu0 %v2569
  %4046 = vmatpush1.bf16.msra.mxu0 %v2568
  %4047 = vmatprep.subr.bf16.mxu0 %v2585
  %4048 = vmatpush1.bf16.msra.mxu0 %v2584
  %4049 = vmatprep.subr.bf16.mxu0 %v2601
  %4050 = vmatpush1.bf16.msra.mxu0 %v2600
  %4051 = vmatprep.subr.bf16.mxu0 %v2617
  %4052 = vmatpush1.bf16.msra.mxu0 %v2616
  %4053 = vmatprep.subr.bf16.mxu0 %v2633
  %4054 = vmatpush1.bf16.msra.mxu0 %v2632
  %4055 = vmatprep.subr.bf16.mxu0 %v2649
  %4056 = vmatpush1.bf16.msra.mxu0 %v2648
  %4057 = vmatprep.subr.bf16.mxu0 %v2665
  %4058 = vmatpush1.bf16.msra.mxu0 %v2664
  %4059 = vmatprep.subr.bf16.mxu0 %v2681
  %4060 = vmatpush1.bf16.msra.mxu0 %v2680
  %4061 = vmatprep.subr.bf16.mxu0 %v2697
  %4062 = vmatpush1.bf16.msra.mxu0 %v2696
  %4063 = vmatprep.subr.bf16.mxu0 %v2713
  %4064 = vmatpush1.bf16.msra.mxu0 %v2712
  %4065 = vmatprep.mubr.bf16.mxu0 %v641
  %4066 = vmatmul.mubr.bf16.gmra.mrb[0].mxu0 %v640
  %v4067 = vpop.f32.mrb[0].mxu0
  %v4068 = vadd.f32 %v3995, %v4067
  %v4069 = vpop.f32.mrb[0].mxu0
  %v4070 = vadd.f32 %v3997, %v4069
  %v4071 = vpop.f32.mrb[0].mxu0
  %v4072 = vadd.f32 %v3999, %v4071
  %v4073 = vpop.f32.mrb[0].mxu0
  %v4074 = vadd.f32 %v4001, %v4073
  %4075 = vmatprep.mubr.bf16.mxu0 %v645
  %4076 = vmatmul.mubr.bf16.gmra.mrb[0].mxu0 %v644
  %v4077 = vpop.f32.mrb[0].mxu0
  %v4078 = vadd.f32 %v4005, %v4077
  %v4079 = vpop.f32.mrb[0].mxu0
  %v4080 = vadd.f32 %v4007, %v4079
  %v4081 = vpop.f32.mrb[0].mxu0
  %v4082 = vadd.f32 %v4009, %v4081
  %v4083 = vpop.f32.mrb[0].mxu0
  %v4084 = vadd.f32 %v4011, %v4083
  %4085 = vmatprep.mubr.bf16.mxu0 %v649
  %4086 = vmatmul.mubr.bf16.gmra.mrb[0].mxu0 %v648
  %v4087 = vpop.f32.mrb[0].mxu0
  %v4088 = vadd.f32 %v4015, %v4087
  %v4089 = vpop.f32.mrb[0].mxu0
  %v4090 = vadd.f32 %v4017, %v4089
  %v4091 = vpop.f32.mrb[0].mxu0
  %v4092 = vadd.f32 %v4019, %v4091
  %v4093 = vpop.f32.mrb[0].mxu0
  %v4094 = vadd.f32 %v4021, %v4093
  %4095 = vmatprep.mubr.bf16.mxu0 %v653
  %4096 = vmatmul.mubr.bf16.gmra.mrb[0].mxu0 %v652
  %v4097 = vpop.f32.mrb[0].mxu0
  %v4098 = vadd.f32 %v4025, %v4097
  %v4099 = vpop.f32.mrb[0].mxu0
  %v4100 = vadd.f32 %v4027, %v4099
  %v4101 = vpop.f32.mrb[0].mxu0
  %v4102 = vadd.f32 %v4029, %v4101
  %v4103 = vpop.f32.mrb[0].mxu0
  %v4104 = vadd.f32 %v4031, %v4103
  %4105 = vdwg.mxu0
  %4106 = vmatprep.subr.bf16.mxu0 %v2219
  %4107 = vmatpush1.bf16.msra.mxu0 %v2218
  %4108 = vmatprep.subr.bf16.mxu0 %v2235
  %4109 = vmatpush1.bf16.msra.mxu0 %v2234
  %4110 = vmatprep.subr.bf16.mxu0 %v2251
  %4111 = vmatpush1.bf16.msra.mxu0 %v2250
  %4112 = vmatprep.subr.bf16.mxu0 %v2267
  %4113 = vmatpush1.bf16.msra.mxu0 %v2266
  %4114 = vmatprep.subr.bf16.mxu0 %v2283
  %4115 = vmatpush1.bf16.msra.mxu0 %v2282
  %4116 = vmatprep.subr.bf16.mxu0 %v2299
  %4117 = vmatpush1.bf16.msra.mxu0 %v2298
  %4118 = vmatprep.subr.bf16.mxu0 %v2315
  %4119 = vmatpush1.bf16.msra.mxu0 %v2314
  %4120 = vmatprep.subr.bf16.mxu0 %v2331
  %4121 = vmatpush1.bf16.msra.mxu0 %v2330
  %4122 = vmatprep.subr.bf16.mxu0 %v2347
  %4123 = vmatpush1.bf16.msra.mxu0 %v2346
  %4124 = vmatprep.subr.bf16.mxu0 %v2363
  %4125 = vmatpush1.bf16.msra.mxu0 %v2362
  %4126 = vmatprep.subr.bf16.mxu0 %v2379
  %4127 = vmatpush1.bf16.msra.mxu0 %v2378
  %4128 = vmatprep.subr.bf16.mxu0 %v2395
  %4129 = vmatpush1.bf16.msra.mxu0 %v2394
  %4130 = vmatprep.subr.bf16.mxu0 %v2411
  %4131 = vmatpush1.bf16.msra.mxu0 %v2410
  %4132 = vmatprep.subr.bf16.mxu0 %v2427
  %4133 = vmatpush1.bf16.msra.mxu0 %v2426
  %4134 = vmatprep.subr.bf16.mxu0 %v2443
  %4135 = vmatpush1.bf16.msra.mxu0 %v2442
  %4136 = vmatprep.subr.bf16.mxu0 %v2459
  %4137 = vmatpush1.bf16.msra.mxu0 %v2458
  %4138 = vmatprep.mubr.bf16.mxu0 %v639
  %4139 = vmatmul.mubr.bf16.gmra.mrb[0].mxu0 %v638
  %v4140 = vpop.f32.mrb[0].mxu0
  %v4141 = vadd.f32 %v553, %v4140
  %v4142 = vpop.f32.mrb[0].mxu0
  %v4143 = vadd.f32 %v553, %v4142
  %v4144 = vpop.f32.mrb[0].mxu0
  %v4145 = vadd.f32 %v558, %v4144
  %v4146 = vpop.f32.mrb[0].mxu0
  %v4147 = vadd.f32 %v558, %v4146
  %4148 = vmatprep.mubr.bf16.mxu0 %v643
  %4149 = vmatmul.mubr.bf16.gmra.mrb[0].mxu0 %v642
  %v4150 = vpop.f32.mrb[0].mxu0
  %v4151 = vadd.f32 %v563, %v4150
  %v4152 = vpop.f32.mrb[0].mxu0
  %v4153 = vadd.f32 %v563, %v4152
  %v4154 = vpop.f32.mrb[0].mxu0
  %v4155 = vadd.f32 %v568, %v4154
  %v4156 = vpop.f32.mrb[0].mxu0
  %v4157 = vadd.f32 %v568, %v4156
  %4158 = vmatprep.mubr.bf16.mxu0 %v647
  %4159 = vmatmul.mubr.bf16.gmra.mrb[0].mxu0 %v646
  %v4160 = vpop.f32.mrb[0].mxu0
  %v4161 = vadd.f32 %v573, %v4160
  %v4162 = vpop.f32.mrb[0].mxu0
  %v4163 = vadd.f32 %v573, %v4162
  %v4164 = vpop.f32.mrb[0].mxu0
  %v4165 = vadd.f32 %v578, %v4164
  %v4166 = vpop.f32.mrb[0].mxu0
  %v4167 = vadd.f32 %v578, %v4166
  %4168 = vmatprep.mubr.bf16.mxu0 %v651
  %4169 = vmatmul.mubr.bf16.gmra.mrb[0].mxu0 %v650
  %v4170 = vpop.f32.mrb[0].mxu0
  %v4171 = vadd.f32 %v583, %v4170
  %v4172 = vpop.f32.mrb[0].mxu0
  %v4173 = vadd.f32 %v583, %v4172
  %v4174 = vpop.f32.mrb[0].mxu0
  %v4175 = vadd.f32 %v588, %v4174
  %v4176 = vpop.f32.mrb[0].mxu0
  %v4177 = vadd.f32 %v588, %v4176
  %4178 = vdwg.mxu0
  %4179 = vmatprep.subr.bf16.mxu0 %v2475
  %4180 = vmatpush1.bf16.msra.mxu0 %v2474
  %4181 = vmatprep.subr.bf16.mxu0 %v2491
  %4182 = vmatpush1.bf16.msra.mxu0 %v2490
  %4183 = vmatprep.subr.bf16.mxu0 %v2507
  %4184 = vmatpush1.bf16.msra.mxu0 %v2506
  %4185 = vmatprep.subr.bf16.mxu0 %v2523
  %4186 = vmatpush1.bf16.msra.mxu0 %v2522
  %4187 = vmatprep.subr.bf16.mxu0 %v2539
  %4188 = vmatpush1.bf16.msra.mxu0 %v2538
  %4189 = vmatprep.subr.bf16.mxu0 %v2555
  %4190 = vmatpush1.bf16.msra.mxu0 %v2554
  %4191 = vmatprep.subr.bf16.mxu0 %v2571
  %4192 = vmatpush1.bf16.msra.mxu0 %v2570
  %4193 = vmatprep.subr.bf16.mxu0 %v2587
  %4194 = vmatpush1.bf16.msra.mxu0 %v2586
  %4195 = vmatprep.subr.bf16.mxu0 %v2603
  %4196 = vmatpush1.bf16.msra.mxu0 %v2602
  %4197 = vmatprep.subr.bf16.mxu0 %v2619
  %4198 = vmatpush1.bf16.msra.mxu0 %v2618
  %4199 = vmatprep.subr.bf16.mxu0 %v2635
  %4200 = vmatpush1.bf16.msra.mxu0 %v2634
  %4201 = vmatprep.subr.bf16.mxu0 %v2651
  %4202 = vmatpush1.bf16.msra.mxu0 %v2650
  %4203 = vmatprep.subr.bf16.mxu0 %v2667
  %4204 = vmatpush1.bf16.msra.mxu0 %v2666
  %4205 = vmatprep.subr.bf16.mxu0 %v2683
  %4206 = vmatpush1.bf16.msra.mxu0 %v2682
  %4207 = vmatprep.subr.bf16.mxu0 %v2699
  %4208 = vmatpush1.bf16.msra.mxu0 %v2698
  %4209 = vmatprep.subr.bf16.mxu0 %v2715
  %4210 = vmatpush1.bf16.msra.mxu0 %v2714
  %4211 = vmatprep.mubr.bf16.mxu0 %v641
  %4212 = vmatmul.mubr.bf16.gmra.mrb[0].mxu0 %v640
  %v4213 = vpop.f32.mrb[0].mxu0
  %v4214 = vadd.f32 %v4141, %v4213
  %v4215 = vpop.f32.mrb[0].mxu0
  %v4216 = vadd.f32 %v4143, %v4215
  %v4217 = vpop.f32.mrb[0].mxu0
  %v4218 = vadd.f32 %v4145, %v4217
  %v4219 = vpop.f32.mrb[0].mxu0
  %v4220 = vadd.f32 %v4147, %v4219
  %4221 = vmatprep.mubr.bf16.mxu0 %v645
  %4222 = vmatmul.mubr.bf16.gmra.mrb[0].mxu0 %v644
  %v4223 = vpop.f32.mrb[0].mxu0
  %v4224 = vadd.f32 %v4151, %v4223
  %v4225 = vpop.f32.mrb[0].mxu0
  %v4226 = vadd.f32 %v4153, %v4225
  %v4227 = vpop.f32.mrb[0].mxu0
  %v4228 = vadd.f32 %v4155, %v4227
  %v4229 = vpop.f32.mrb[0].mxu0
  %v4230 = vadd.f32 %v4157, %v4229
  %4231 = vmatprep.mubr.bf16.mxu0 %v649
  %4232 = vmatmul.mubr.bf16.gmra.mrb[0].mxu0 %v648
  %v4233 = vpop.f32.mrb[0].mxu0
  %v4234 = vadd.f32 %v4161, %v4233
  %v4235 = vpop.f32.mrb[0].mxu0
  %v4236 = vadd.f32 %v4163, %v4235
  %v4237 = vpop.f32.mrb[0].mxu0
  %v4238 = vadd.f32 %v4165, %v4237
  %v4239 = vpop.f32.mrb[0].mxu0
  %v4240 = vadd.f32 %v4167, %v4239
  %4241 = vmatprep.mubr.bf16.mxu0 %v653
  %4242 = vmatmul.mubr.bf16.gmra.mrb[0].mxu0 %v652
  %v4243 = vpop.f32.mrb[0].mxu0
  %v4244 = vadd.f32 %v4171, %v4243
  %v4245 = vpop.f32.mrb[0].mxu0
  %v4246 = vadd.f32 %v4173, %v4245
  %v4247 = vpop.f32.mrb[0].mxu0
  %v4248 = vadd.f32 %v4175, %v4247
  %v4249 = vpop.f32.mrb[0].mxu0
  %v4250 = vadd.f32 %v4177, %v4249
  %4251 = vdwg.mxu0
  %4252 = vmatprep.subr.bf16.mxu0 %v2221
  %4253 = vmatpush1.bf16.msra.mxu0 %v2220
  %4254 = vmatprep.subr.bf16.mxu0 %v2237
  %4255 = vmatpush1.bf16.msra.mxu0 %v2236
  %4256 = vmatprep.subr.bf16.mxu0 %v2253
  %4257 = vmatpush1.bf16.msra.mxu0 %v2252
  %4258 = vmatprep.subr.bf16.mxu0 %v2269
  %4259 = vmatpush1.bf16.msra.mxu0 %v2268
  %4260 = vmatprep.subr.bf16.mxu0 %v2285
  %4261 = vmatpush1.bf16.msra.mxu0 %v2284
  %4262 = vmatprep.subr.bf16.mxu0 %v2301
  %4263 = vmatpush1.bf16.msra.mxu0 %v2300
  %4264 = vmatprep.subr.bf16.mxu0 %v2317
  %4265 = vmatpush1.bf16.msra.mxu0 %v2316
  %4266 = vmatprep.subr.bf16.mxu0 %v2333
  %4267 = vmatpush1.bf16.msra.mxu0 %v2332
  %4268 = vmatprep.subr.bf16.mxu0 %v2349
  %4269 = vmatpush1.bf16.msra.mxu0 %v2348
  %4270 = vmatprep.subr.bf16.mxu0 %v2365
  %4271 = vmatpush1.bf16.msra.mxu0 %v2364
  %4272 = vmatprep.subr.bf16.mxu0 %v2381
  %4273 = vmatpush1.bf16.msra.mxu0 %v2380
  %4274 = vmatprep.subr.bf16.mxu0 %v2397
  %4275 = vmatpush1.bf16.msra.mxu0 %v2396
  %4276 = vmatprep.subr.bf16.mxu0 %v2413
  %4277 = vmatpush1.bf16.msra.mxu0 %v2412
  %4278 = vmatprep.subr.bf16.mxu0 %v2429
  %4279 = vmatpush1.bf16.msra.mxu0 %v2428
  %4280 = vmatprep.subr.bf16.mxu0 %v2445
  %4281 = vmatpush1.bf16.msra.mxu0 %v2444
  %4282 = vmatprep.subr.bf16.mxu0 %v2461
  %4283 = vmatpush1.bf16.msra.mxu0 %v2460
  %4284 = vmatprep.mubr.bf16.mxu0 %v639
  %4285 = vmatmul.mubr.bf16.gmra.mrb[0].mxu0 %v638
  %v4286 = vpop.f32.mrb[0].mxu0
  %v4287 = vadd.f32 %v553, %v4286
  %v4288 = vpop.f32.mrb[0].mxu0
  %v4289 = vadd.f32 %v553, %v4288
  %v4290 = vpop.f32.mrb[0].mxu0
  %v4291 = vadd.f32 %v558, %v4290
  %v4292 = vpop.f32.mrb[0].mxu0
  %v4293 = vadd.f32 %v558, %v4292
  %4294 = vmatprep.mubr.bf16.mxu0 %v643
  %4295 = vmatmul.mubr.bf16.gmra.mrb[0].mxu0 %v642
  %v4296 = vpop.f32.mrb[0].mxu0
  %v4297 = vadd.f32 %v563, %v4296
  %v4298 = vpop.f32.mrb[0].mxu0
  %v4299 = vadd.f32 %v563, %v4298
  %v4300 = vpop.f32.mrb[0].mxu0
  %v4301 = vadd.f32 %v568, %v4300
  %v4302 = vpop.f32.mrb[0].mxu0
  %v4303 = vadd.f32 %v568, %v4302
  %4304 = vmatprep.mubr.bf16.mxu0 %v647
  %4305 = vmatmul.mubr.bf16.gmra.mrb[0].mxu0 %v646
  %v4306 = vpop.f32.mrb[0].mxu0
  %v4307 = vadd.f32 %v573, %v4306
  %v4308 = vpop.f32.mrb[0].mxu0
  %v4309 = vadd.f32 %v573, %v4308
  %v4310 = vpop.f32.mrb[0].mxu0
  %v4311 = vadd.f32 %v578, %v4310
  %v4312 = vpop.f32.mrb[0].mxu0
  %v4313 = vadd.f32 %v578, %v4312
  %4314 = vmatprep.mubr.bf16.mxu0 %v651
  %4315 = vmatmul.mubr.bf16.gmra.mrb[0].mxu0 %v650
  %v4316 = vpop.f32.mrb[0].mxu0
  %v4317 = vadd.f32 %v583, %v4316
  %v4318 = vpop.f32.mrb[0].mxu0
  %v4319 = vadd.f32 %v583, %v4318
  %v4320 = vpop.f32.mrb[0].mxu0
  %v4321 = vadd.f32 %v588, %v4320
  %v4322 = vpop.f32.mrb[0].mxu0
  %v4323 = vadd.f32 %v588, %v4322
  %4324 = vdwg.mxu0
  %4325 = vmatprep.subr.bf16.mxu0 %v2477
  %4326 = vmatpush1.bf16.msra.mxu0 %v2476
  %4327 = vmatprep.subr.bf16.mxu0 %v2493
  %4328 = vmatpush1.bf16.msra.mxu0 %v2492
  %4329 = vmatprep.subr.bf16.mxu0 %v2509
  %4330 = vmatpush1.bf16.msra.mxu0 %v2508
  %4331 = vmatprep.subr.bf16.mxu0 %v2525
  %4332 = vmatpush1.bf16.msra.mxu0 %v2524
  %4333 = vmatprep.subr.bf16.mxu0 %v2541
  %4334 = vmatpush1.bf16.msra.mxu0 %v2540
  %4335 = vmatprep.subr.bf16.mxu0 %v2557
  %4336 = vmatpush1.bf16.msra.mxu0 %v2556
  %4337 = vmatprep.subr.bf16.mxu0 %v2573
  %4338 = vmatpush1.bf16.msra.mxu0 %v2572
  %4339 = vmatprep.subr.bf16.mxu0 %v2589
  %4340 = vmatpush1.bf16.msra.mxu0 %v2588
  %4341 = vmatprep.subr.bf16.mxu0 %v2605
  %4342 = vmatpush1.bf16.msra.mxu0 %v2604
  %4343 = vmatprep.subr.bf16.mxu0 %v2621
  %4344 = vmatpush1.bf16.msra.mxu0 %v2620
  %4345 = vmatprep.subr.bf16.mxu0 %v2637
  %4346 = vmatpush1.bf16.msra.mxu0 %v2636
  %4347 = vmatprep.subr.bf16.mxu0 %v2653
  %4348 = vmatpush1.bf16.msra.mxu0 %v2652
  %4349 = vmatprep.subr.bf16.mxu0 %v2669
  %4350 = vmatpush1.bf16.msra.mxu0 %v2668
  %4351 = vmatprep.subr.bf16.mxu0 %v2685
  %4352 = vmatpush1.bf16.msra.mxu0 %v2684
  %4353 = vmatprep.subr.bf16.mxu0 %v2701
  %4354 = vmatpush1.bf16.msra.mxu0 %v2700
  %4355 = vmatprep.subr.bf16.mxu0 %v2717
  %4356 = vmatpush1.bf16.msra.mxu0 %v2716
  %4357 = vmatprep.mubr.bf16.mxu0 %v641
  %4358 = vmatmul.mubr.bf16.gmra.mrb[0].mxu0 %v640
  %v4359 = vpop.f32.mrb[0].mxu0
  %v4360 = vadd.f32 %v4287, %v4359
  %v4361 = vpop.f32.mrb[0].mxu0
  %v4362 = vadd.f32 %v4289, %v4361
  %v4363 = vpop.f32.mrb[0].mxu0
  %v4364 = vadd.f32 %v4291, %v4363
  %v4365 = vpop.f32.mrb[0].mxu0
  %v4366 = vadd.f32 %v4293, %v4365
  %4367 = vmatprep.mubr.bf16.mxu0 %v645
  %4368 = vmatmul.mubr.bf16.gmra.mrb[0].mxu0 %v644
  %v4369 = vpop.f32.mrb[0].mxu0
  %v4370 = vadd.f32 %v4297, %v4369
  %v4371 = vpop.f32.mrb[0].mxu0
  %v4372 = vadd.f32 %v4299, %v4371
  %v4373 = vpop.f32.mrb[0].mxu0
  %v4374 = vadd.f32 %v4301, %v4373
  %v4375 = vpop.f32.mrb[0].mxu0
  %v4376 = vadd.f32 %v4303, %v4375
  %4377 = vmatprep.mubr.bf16.mxu0 %v649
  %4378 = vmatmul.mubr.bf16.gmra.mrb[0].mxu0 %v648
  %v4379 = vpop.f32.mrb[0].mxu0
  %v4380 = vadd.f32 %v4307, %v4379
  %v4381 = vpop.f32.mrb[0].mxu0
  %v4382 = vadd.f32 %v4309, %v4381
  %v4383 = vpop.f32.mrb[0].mxu0
  %v4384 = vadd.f32 %v4311, %v4383
  %v4385 = vpop.f32.mrb[0].mxu0
  %v4386 = vadd.f32 %v4313, %v4385
  %4387 = vmatprep.mubr.bf16.mxu0 %v653
  %4388 = vmatmul.mubr.bf16.gmra.mrb[0].mxu0 %v652
  %v4389 = vpop.f32.mrb[0].mxu0
  %v4390 = vadd.f32 %v4317, %v4389
  %v4391 = vpop.f32.mrb[0].mxu0
  %v4392 = vadd.f32 %v4319, %v4391
  %v4393 = vpop.f32.mrb[0].mxu0
  %v4394 = vadd.f32 %v4321, %v4393
  %v4395 = vpop.f32.mrb[0].mxu0
  %v4396 = vadd.f32 %v4323, %v4395
  %4397 = vdwg.mxu0
  %v4398 = vpack.c.bf16 %v3342, %v3338
  %v4399 = vpack.c.bf16 %v3344, %v3340
  %v4400 = vpack.c.bf16 %v3488, %v3484
  %v4401 = vpack.c.bf16 %v3490, %v3486
  %v4402 = vpack.c.bf16 %v3634, %v3630
  %v4403 = vpack.c.bf16 %v3636, %v3632
  %v4404 = vpack.c.bf16 %v3780, %v3776
  %v4405 = vpack.c.bf16 %v3782, %v3778
  %v4406 = vpack.c.bf16 %v3926, %v3922
  %v4407 = vpack.c.bf16 %v3928, %v3924
  %v4408 = vpack.c.bf16 %v4072, %v4068
  %v4409 = vpack.c.bf16 %v4074, %v4070
  %v4410 = vpack.c.bf16 %v4218, %v4214
  %v4411 = vpack.c.bf16 %v4220, %v4216
  %v4412 = vpack.c.bf16 %v4364, %v4360
  %v4413 = vpack.c.bf16 %v4366, %v4362
  %v4414 = vpack.c.bf16 %v3352, %v3348
  %v4415 = vpack.c.bf16 %v3354, %v3350
  %v4416 = vpack.c.bf16 %v3498, %v3494
  %v4417 = vpack.c.bf16 %v3500, %v3496
  %v4418 = vpack.c.bf16 %v3644, %v3640
  %v4419 = vpack.c.bf16 %v3646, %v3642
  %v4420 = vpack.c.bf16 %v3790, %v3786
  %v4421 = vpack.c.bf16 %v3792, %v3788
  %v4422 = vpack.c.bf16 %v3936, %v3932
  %v4423 = vpack.c.bf16 %v3938, %v3934
  %v4424 = vpack.c.bf16 %v4082, %v4078
  %v4425 = vpack.c.bf16 %v4084, %v4080
  %v4426 = vpack.c.bf16 %v4228, %v4224
  %v4427 = vpack.c.bf16 %v4230, %v4226
  %v4428 = vpack.c.bf16 %v4374, %v4370
  %v4429 = vpack.c.bf16 %v4376, %v4372
  %v4430 = vpack.c.bf16 %v3362, %v3358
  %v4431 = vpack.c.bf16 %v3364, %v3360
  %v4432 = vpack.c.bf16 %v3508, %v3504
  %v4433 = vpack.c.bf16 %v3510, %v3506
  %v4434 = vpack.c.bf16 %v3654, %v3650
  %v4435 = vpack.c.bf16 %v3656, %v3652
  %v4436 = vpack.c.bf16 %v3800, %v3796
  %v4437 = vpack.c.bf16 %v3802, %v3798
  %v4438 = vpack.c.bf16 %v3946, %v3942
  %v4439 = vpack.c.bf16 %v3948, %v3944
  %v4440 = vpack.c.bf16 %v4092, %v4088
  %v4441 = vpack.c.bf16 %v4094, %v4090
  %v4442 = vpack.c.bf16 %v4238, %v4234
  %v4443 = vpack.c.bf16 %v4240, %v4236
  %v4444 = vpack.c.bf16 %v4384, %v4380
  %v4445 = vpack.c.bf16 %v4386, %v4382
  %v4446 = vpack.c.bf16 %v3372, %v3368
  %v4447 = vpack.c.bf16 %v3374, %v3370
  %v4448 = vpack.c.bf16 %v3518, %v3514
  %v4449 = vpack.c.bf16 %v3520, %v3516
  %v4450 = vpack.c.bf16 %v3664, %v3660
  %v4451 = vpack.c.bf16 %v3666, %v3662
  %v4452 = vpack.c.bf16 %v3810, %v3806
  %v4453 = vpack.c.bf16 %v3812, %v3808
  %v4454 = vpack.c.bf16 %v3956, %v3952
  %v4455 = vpack.c.bf16 %v3958, %v3954
  %v4456 = vpack.c.bf16 %v4102, %v4098
  %v4457 = vpack.c.bf16 %v4104, %v4100
  %v4458 = vpack.c.bf16 %v4248, %v4244
  %v4459 = vpack.c.bf16 %v4250, %v4246
  %v4460 = vpack.c.bf16 %v4394, %v4390
  %v4461 = vpack.c.bf16 %v4396, %v4392
  %v4526 = vunpack.c.l.b16 %v4398
  %v4527 = vunpack.c.l.b16 %v4399
  %v4528 = vunpack.c.l.b16 %v4400
  %v4529 = vunpack.c.l.b16 %v4401
  %v4530 = vunpack.c.l.b16 %v4402
  %v4531 = vunpack.c.l.b16 %v4403
  %v4532 = vunpack.c.l.b16 %v4404
  %v4533 = vunpack.c.l.b16 %v4405
  %v4534 = vunpack.c.l.b16 %v4406
  %v4535 = vunpack.c.l.b16 %v4407
  %v4536 = vunpack.c.l.b16 %v4408
  %v4537 = vunpack.c.l.b16 %v4409
  %v4538 = vunpack.c.l.b16 %v4410
  %v4539 = vunpack.c.l.b16 %v4411
  %v4540 = vunpack.c.l.b16 %v4412
  %v4541 = vunpack.c.l.b16 %v4413
  %v4542 = vunpack.c.h.b16 %v4398
  %v4543 = vunpack.c.h.b16 %v4399
  %v4544 = vunpack.c.h.b16 %v4400
  %v4545 = vunpack.c.h.b16 %v4401
  %v4546 = vunpack.c.h.b16 %v4402
  %v4547 = vunpack.c.h.b16 %v4403
  %v4548 = vunpack.c.h.b16 %v4404
  %v4549 = vunpack.c.h.b16 %v4405
  %v4550 = vunpack.c.h.b16 %v4406
  %v4551 = vunpack.c.h.b16 %v4407
  %v4552 = vunpack.c.h.b16 %v4408
  %v4553 = vunpack.c.h.b16 %v4409
  %v4554 = vunpack.c.h.b16 %v4410
  %v4555 = vunpack.c.h.b16 %v4411
  %v4556 = vunpack.c.h.b16 %v4412
  %v4557 = vunpack.c.h.b16 %v4413
  %v4558 = vunpack.c.l.b16 %v4414
  %v4559 = vunpack.c.l.b16 %v4415
  %v4560 = vunpack.c.l.b16 %v4416
  %v4561 = vunpack.c.l.b16 %v4417
  %v4562 = vunpack.c.l.b16 %v4418
  %v4563 = vunpack.c.l.b16 %v4419
  %v4564 = vunpack.c.l.b16 %v4420
  %v4565 = vunpack.c.l.b16 %v4421
  %v4566 = vunpack.c.l.b16 %v4422
  %v4567 = vunpack.c.l.b16 %v4423
  %v4568 = vunpack.c.l.b16 %v4424
  %v4569 = vunpack.c.l.b16 %v4425
  %v4570 = vunpack.c.l.b16 %v4426
  %v4571 = vunpack.c.l.b16 %v4427
  %v4572 = vunpack.c.l.b16 %v4428
  %v4573 = vunpack.c.l.b16 %v4429
  %v4574 = vunpack.c.h.b16 %v4414
  %v4575 = vunpack.c.h.b16 %v4415
  %v4576 = vunpack.c.h.b16 %v4416
  %v4577 = vunpack.c.h.b16 %v4417
  %v4578 = vunpack.c.h.b16 %v4418
  %v4579 = vunpack.c.h.b16 %v4419
  %v4580 = vunpack.c.h.b16 %v4420
  %v4581 = vunpack.c.h.b16 %v4421
  %v4582 = vunpack.c.h.b16 %v4422
  %v4583 = vunpack.c.h.b16 %v4423
  %v4584 = vunpack.c.h.b16 %v4424
  %v4585 = vunpack.c.h.b16 %v4425
  %v4586 = vunpack.c.h.b16 %v4426
  %v4587 = vunpack.c.h.b16 %v4427
  %v4588 = vunpack.c.h.b16 %v4428
  %v4589 = vunpack.c.h.b16 %v4429
  %v4590 = vunpack.c.l.b16 %v4430
  %v4591 = vunpack.c.l.b16 %v4431
  %v4592 = vunpack.c.l.b16 %v4432
  %v4593 = vunpack.c.l.b16 %v4433
  %v4594 = vunpack.c.l.b16 %v4434
  %v4595 = vunpack.c.l.b16 %v4435
  %v4596 = vunpack.c.l.b16 %v4436
  %v4597 = vunpack.c.l.b16 %v4437
  %v4598 = vunpack.c.l.b16 %v4438
  %v4599 = vunpack.c.l.b16 %v4439
  %v4600 = vunpack.c.l.b16 %v4440
  %v4601 = vunpack.c.l.b16 %v4441
  %v4602 = vunpack.c.l.b16 %v4442
  %v4603 = vunpack.c.l.b16 %v4443
  %v4604 = vunpack.c.l.b16 %v4444
  %v4605 = vunpack.c.l.b16 %v4445
  %v4606 = vunpack.c.h.b16 %v4430
  %v4607 = vunpack.c.h.b16 %v4431
  %v4608 = vunpack.c.h.b16 %v4432
  %v4609 = vunpack.c.h.b16 %v4433
  %v4610 = vunpack.c.h.b16 %v4434
  %v4611 = vunpack.c.h.b16 %v4435
  %v4612 = vunpack.c.h.b16 %v4436
  %v4613 = vunpack.c.h.b16 %v4437
  %v4614 = vunpack.c.h.b16 %v4438
  %v4615 = vunpack.c.h.b16 %v4439
  %v4616 = vunpack.c.h.b16 %v4440
  %v4617 = vunpack.c.h.b16 %v4441
  %v4618 = vunpack.c.h.b16 %v4442
  %v4619 = vunpack.c.h.b16 %v4443
  %v4620 = vunpack.c.h.b16 %v4444
  %v4621 = vunpack.c.h.b16 %v4445
  %v4622 = vunpack.c.l.b16 %v4446
  %v4623 = vunpack.c.l.b16 %v4447
  %v4624 = vunpack.c.l.b16 %v4448
  %v4625 = vunpack.c.l.b16 %v4449
  %v4626 = vunpack.c.l.b16 %v4450
  %v4627 = vunpack.c.l.b16 %v4451
  %v4628 = vunpack.c.l.b16 %v4452
  %v4629 = vunpack.c.l.b16 %v4453
  %v4630 = vunpack.c.l.b16 %v4454
  %v4631 = vunpack.c.l.b16 %v4455
  %v4632 = vunpack.c.l.b16 %v4456
  %v4633 = vunpack.c.l.b16 %v4457
  %v4634 = vunpack.c.l.b16 %v4458
  %v4635 = vunpack.c.l.b16 %v4459
  %v4636 = vunpack.c.l.b16 %v4460
  %v4637 = vunpack.c.l.b16 %v4461
  %v4638 = vunpack.c.h.b16 %v4446
  %v4639 = vunpack.c.h.b16 %v4447
  %v4640 = vunpack.c.h.b16 %v4448
  %v4641 = vunpack.c.h.b16 %v4449
  %v4642 = vunpack.c.h.b16 %v4450
  %v4643 = vunpack.c.h.b16 %v4451
  %v4644 = vunpack.c.h.b16 %v4452
  %v4645 = vunpack.c.h.b16 %v4453
  %v4646 = vunpack.c.h.b16 %v4454
  %v4647 = vunpack.c.h.b16 %v4455
  %v4648 = vunpack.c.h.b16 %v4456
  %v4649 = vunpack.c.h.b16 %v4457
  %v4650 = vunpack.c.h.b16 %v4458
  %v4651 = vunpack.c.h.b16 %v4459
  %v4652 = vunpack.c.h.b16 %v4460
  %v4653 = vunpack.c.h.b16 %v4461
  %v4654 = vpack.c.b16 %v4527, %v4526
  %v4655 = vpack.c.b16 %v4529, %v4528
  %v4656 = vpack.c.b16 %v4531, %v4530
  %v4657 = vpack.c.b16 %v4533, %v4532
  %v4658 = vpack.c.b16 %v4535, %v4534
  %v4659 = vpack.c.b16 %v4537, %v4536
  %v4660 = vpack.c.b16 %v4539, %v4538
  %v4661 = vpack.c.b16 %v4541, %v4540
  %v4662 = vpack.c.b16 %v4543, %v4542
  %v4663 = vpack.c.b16 %v4545, %v4544
  %v4664 = vpack.c.b16 %v4547, %v4546
  %v4665 = vpack.c.b16 %v4549, %v4548
  %v4666 = vpack.c.b16 %v4551, %v4550
  %v4667 = vpack.c.b16 %v4553, %v4552
  %v4668 = vpack.c.b16 %v4555, %v4554
  %v4669 = vpack.c.b16 %v4557, %v4556
  %v4670 = vpack.c.b16 %v4559, %v4558
  %v4671 = vpack.c.b16 %v4561, %v4560
  %v4672 = vpack.c.b16 %v4563, %v4562
  %v4673 = vpack.c.b16 %v4565, %v4564
  %v4674 = vpack.c.b16 %v4567, %v4566
  %v4675 = vpack.c.b16 %v4569, %v4568
  %v4676 = vpack.c.b16 %v4571, %v4570
  %v4677 = vpack.c.b16 %v4573, %v4572
  %v4678 = vpack.c.b16 %v4575, %v4574
  %v4679 = vpack.c.b16 %v4577, %v4576
  %v4680 = vpack.c.b16 %v4579, %v4578
  %v4681 = vpack.c.b16 %v4581, %v4580
  %v4682 = vpack.c.b16 %v4583, %v4582
  %v4683 = vpack.c.b16 %v4585, %v4584
  %v4684 = vpack.c.b16 %v4587, %v4586
  %v4685 = vpack.c.b16 %v4589, %v4588
  %v4686 = vpack.c.b16 %v4591, %v4590
  %v4687 = vpack.c.b16 %v4593, %v4592
  %v4688 = vpack.c.b16 %v4595, %v4594
  %v4689 = vpack.c.b16 %v4597, %v4596
  %v4690 = vpack.c.b16 %v4599, %v4598
  %v4691 = vpack.c.b16 %v4601, %v4600
  %v4692 = vpack.c.b16 %v4603, %v4602
  %v4693 = vpack.c.b16 %v4605, %v4604
  %v4694 = vpack.c.b16 %v4607, %v4606
  %v4695 = vpack.c.b16 %v4609, %v4608
  %v4696 = vpack.c.b16 %v4611, %v4610
  %v4697 = vpack.c.b16 %v4613, %v4612
  %v4698 = vpack.c.b16 %v4615, %v4614
  %v4699 = vpack.c.b16 %v4617, %v4616
  %v4700 = vpack.c.b16 %v4619, %v4618
  %v4701 = vpack.c.b16 %v4621, %v4620
  %v4702 = vpack.c.b16 %v4623, %v4622
  %v4703 = vpack.c.b16 %v4625, %v4624
  %v4704 = vpack.c.b16 %v4627, %v4626
  %v4705 = vpack.c.b16 %v4629, %v4628
  %v4706 = vpack.c.b16 %v4631, %v4630
  %v4707 = vpack.c.b16 %v4633, %v4632
  %v4708 = vpack.c.b16 %v4635, %v4634
  %v4709 = vpack.c.b16 %v4637, %v4636
  %v4710 = vpack.c.b16 %v4639, %v4638
  %v4711 = vpack.c.b16 %v4641, %v4640
  %v4712 = vpack.c.b16 %v4643, %v4642
  %v4713 = vpack.c.b16 %v4645, %v4644
  %v4714 = vpack.c.b16 %v4647, %v4646
  %v4715 = vpack.c.b16 %v4649, %v4648
  %v4716 = vpack.c.b16 %v4651, %v4650
  %v4717 = vpack.c.b16 %v4653, %v4652
  %4782 = vst [vmem:[%s3] sm:$0xff] %v4654
  %4783 = vst [vmem:[%s3 + $0x8] sm:$0xff] %v4655
  %4784 = vst [vmem:[%s3 + $0x10] sm:$0xff] %v4656
  %4785 = vst [vmem:[%s3 + $0x18] sm:$0xff] %v4657
  %4786 = vst [vmem:[%s3 + $0x20] sm:$0xff] %v4658
  %4787 = vst [vmem:[%s3 + $0x28] sm:$0xff] %v4659
  %4788 = vst [vmem:[%s3 + $0x30] sm:$0xff] %v4660
  %4789 = vst [vmem:[%s3 + $0x38] sm:$0xff] %v4661
  %4790 = vst [vmem:[%s3 + $0x40] sm:$0xff] %v4662
  %4791 = vst [vmem:[%s3 + $0x48] sm:$0xff] %v4663
  %4792 = vst [vmem:[%s3 + $0x50] sm:$0xff] %v4664
  %4793 = vst [vmem:[%s3 + $0x58] sm:$0xff] %v4665
  %4794 = vst [vmem:[%s3 + $0x60] sm:$0xff] %v4666
  %4795 = vst [vmem:[%s3 + $0x68] sm:$0xff] %v4667
  %4796 = vst [vmem:[%s3 + $0x70] sm:$0xff] %v4668
  %4797 = vst [vmem:[%s3 + $0x78] sm:$0xff] %v4669
  %4798 = vst [vmem:[%s3 + $0x80] sm:$0xff] %v4670
  %4799 = vst [vmem:[%s3 + $0x88] sm:$0xff] %v4671
  %4800 = vst [vmem:[%s3 + $0x90] sm:$0xff] %v4672
  %4801 = vst [vmem:[%s3 + $0x98] sm:$0xff] %v4673
  %4802 = vst [vmem:[%s3 + $0xa0] sm:$0xff] %v4674
  %4803 = vst [vmem:[%s3 + $0xa8] sm:$0xff] %v4675
  %4804 = vst [vmem:[%s3 + $0xb0] sm:$0xff] %v4676
  %4805 = vst [vmem:[%s3 + $0xb8] sm:$0xff] %v4677
  %4806 = vst [vmem:[%s3 + $0xc0] sm:$0xff] %v4678
  %4807 = vst [vmem:[%s3 + $0xc8] sm:$0xff] %v4679
  %4808 = vst [vmem:[%s3 + $0xd0] sm:$0xff] %v4680
  %4809 = vst [vmem:[%s3 + $0xd8] sm:$0xff] %v4681
  %4810 = vst [vmem:[%s3 + $0xe0] sm:$0xff] %v4682
  %4811 = vst [vmem:[%s3 + $0xe8] sm:$0xff] %v4683
  %4812 = vst [vmem:[%s3 + $0xf0] sm:$0xff] %v4684
  %4813 = vst [vmem:[%s3 + $0xf8] sm:$0xff] %v4685
  %4814 = vst [vmem:[%s3 + $0x100] sm:$0xff] %v4686
  %4815 = vst [vmem:[%s3 + $0x108] sm:$0xff] %v4687
  %4816 = vst [vmem:[%s3 + $0x110] sm:$0xff] %v4688
  %4817 = vst [vmem:[%s3 + $0x118] sm:$0xff] %v4689
  %4818 = vst [vmem:[%s3 + $0x120] sm:$0xff] %v4690
  %4819 = vst [vmem:[%s3 + $0x128] sm:$0xff] %v4691
  %4820 = vst [vmem:[%s3 + $0x130] sm:$0xff] %v4692
  %4821 = vst [vmem:[%s3 + $0x138] sm:$0xff] %v4693
  %4822 = vst [vmem:[%s3 + $0x140] sm:$0xff] %v4694
  %4823 = vst [vmem:[%s3 + $0x148] sm:$0xff] %v4695
  %4824 = vst [vmem:[%s3 + $0x150] sm:$0xff] %v4696
  %4825 = vst [vmem:[%s3 + $0x158] sm:$0xff] %v4697
  %4826 = vst [vmem:[%s3 + $0x160] sm:$0xff] %v4698
  %4827 = vst [vmem:[%s3 + $0x168] sm:$0xff] %v4699
  %4828 = vst [vmem:[%s3 + $0x170] sm:$0xff] %v4700
  %4829 = vst [vmem:[%s3 + $0x178] sm:$0xff] %v4701
  %4830 = vst [vmem:[%s3 + $0x180] sm:$0xff] %v4702
  %4831 = vst [vmem:[%s3 + $0x188] sm:$0xff] %v4703
  %4832 = vst [vmem:[%s3 + $0x190] sm:$0xff] %v4704
  %4833 = vst [vmem:[%s3 + $0x198] sm:$0xff] %v4705
  %4834 = vst [vmem:[%s3 + $0x1a0] sm:$0xff] %v4706
  %4835 = vst [vmem:[%s3 + $0x1a8] sm:$0xff] %v4707
  %4836 = vst [vmem:[%s3 + $0x1b0] sm:$0xff] %v4708
  %4837 = vst [vmem:[%s3 + $0x1b8] sm:$0xff] %v4709
  %4838 = vst [vmem:[%s3 + $0x1c0] sm:$0xff] %v4710
  %4839 = vst [vmem:[%s3 + $0x1c8] sm:$0xff] %v4711
  %4840 = vst [vmem:[%s3 + $0x1d0] sm:$0xff] %v4712
  %4841 = vst [vmem:[%s3 + $0x1d8] sm:$0xff] %v4713
  %4842 = vst [vmem:[%s3 + $0x1e0] sm:$0xff] %v4714
  %4843 = vst [vmem:[%s3 + $0x1e8] sm:$0xff] %v4715
  %4844 = vst [vmem:[%s3 + $0x1f0] sm:$0xff] %v4716
  %4845 = vst [vmem:[%s3 + $0x1f8] sm:$0xff] %v4717
  // Predicated region
  $region14: #{statistic_network_x2c1.4} parent=0 // pred_check
    _
  $region15: #{statistic_network_x2c1.4} parent=0 // pred_check_branch
    %4847 = sbr.rel (0) target = $region17
  $region16: #{statistic_network_x2c1.4} parent=0 // pred_region
    _
  $region17: #{statistic_network_x2c1.4} parent=0 // pred_fallthru
    _
  // Predicated region
  $region18: #{statistic_network_x2c1.4} parent=0 // pred_check
    _
  $region19: #{statistic_network_x2c1.4} parent=0 // pred_check_branch
    %4849 = sbr.rel (0) target = $region21
  $region20: #{statistic_network_x2c1.4} parent=0 // pred_region
    _
  $region21: #{statistic_network_x2c1.4} parent=0 // pred_fallthru
    _

// kernel: squeeze.7
$region0: #{squeeze.7}
  %s0 = inlined_call_operand.vmem [shape: bf16[256], index: 0, kind: input, shape index: {}]
  %s1 = inlined_call_operand.vmem [shape: bf16[16,4,4], index: 1, kind: output, shape index: {}]
  $region1: #{squeeze.7} parent=0
    #allocation0 [shape = 'u8[65536]{0}', space=vmem, size = 0x10000, scoped, tag = 'scoped mem for output reshape']
    #allocation1 [shape = 'u8[4096]{0}', space=vmem, size = 0x1000, scoped, tag = 'scoped mem for input reshape']
    %s3 = smul.u32 1, 2
    %s4 = sshllo.u32 0, %s3
    %s5 = sshrl.u32 %s4, 1
    %s6 = sor.u32 %s4, %s5
    %s7 = sand.u32 %s6, 85
    %s8 = sshrl.u32 %s7, 1
    %s9 = sor.u32 %s7, %s8
    %s10 = sand.u32 51, %s9
    %s11 = sshrl.u32 %s10, 2
    %s12 = sor.u32 %s10, %s11
    %s13 = sand.u32 15, %s12
    %v14 = vld [vmem:[%s0] sm:%s13]
    %v15 = vunpack.c.l.bf16 %v14
    %v16 = vunpack.c.h.bf16 %v14
    %17 = vst [vmem:[#allocation1] sm:%s4] %v15
    %v18 = vld [vmem:[#allocation1] sm:$0x3]
    %vm19 = vcmask 31744
    %20 = vst.msk [vmem:[#allocation0] sm:$0x1] %vm19, %v18
    %s21 = scalar_lea.vmem [#allocation0], 63
    %22 = vst.msk [vmem:[%s21] sm:$0x2] %vm19, %v18
    %v23 = vld [vmem:[#allocation1] sm:$0x3]
    %24 = vrot.lane.b32.xlu0 %v23, 124
    %v25 = vpop.permute.xlu0 %24
    %vm26 = vcmask 31744
    %s27 = scalar_lea.vmem [#allocation0], 1
    %28 = vst.msk [vmem:[%s27] sm:$0x1] %vm26, %v25
    %s29 = scalar_lea.vmem [#allocation0], 64
    %30 = vst.msk [vmem:[%s29] sm:$0x2] %vm26, %v25
    %v31 = vld [vmem:[#allocation1] sm:$0x3]
    %32 = vrot.lane.b32.xlu0 %v31, 120
    %v33 = vpop.permute.xlu0 %32
    %vm34 = vcmask 31744
    %s35 = scalar_lea.vmem [#allocation0], 2
    %36 = vst.msk [vmem:[%s35] sm:$0x1] %vm34, %v33
    %s37 = scalar_lea.vmem [#allocation0], 65
    %38 = vst.msk [vmem:[%s37] sm:$0x2] %vm34, %v33
    %v39 = vld [vmem:[#allocation1] sm:$0x3]
    %40 = vrot.lane.b32.xlu0 %v39, 116
    %v41 = vpop.permute.xlu0 %40
    %vm42 = vcmask 31744
    %s43 = scalar_lea.vmem [#allocation0], 3
    %44 = vst.msk [vmem:[%s43] sm:$0x1] %vm42, %v41
    %s45 = scalar_lea.vmem [#allocation0], 66
    %46 = vst.msk [vmem:[%s45] sm:$0x2] %vm42, %v41
    %v47 = vld [vmem:[#allocation1] sm:$0x3]
    %48 = vrot.lane.b32.xlu0 %v47, 112
    %v49 = vpop.permute.xlu0 %48
    %vm50 = vcmask 31744
    %s51 = scalar_lea.vmem [#allocation0], 8
    %52 = vst.msk [vmem:[%s51] sm:$0x1] %vm50, %v49
    %s53 = scalar_lea.vmem [#allocation0], 71
    %54 = vst.msk [vmem:[%s53] sm:$0x2] %vm50, %v49
    %v55 = vld [vmem:[#allocation1] sm:$0x3]
    %56 = vrot.lane.b32.xlu0 %v55, 108
    %v57 = vpop.permute.xlu0 %56
    %vm58 = vcmask 31744
    %s59 = scalar_lea.vmem [#allocation0], 9
    %60 = vst.msk [vmem:[%s59] sm:$0x1] %vm58, %v57
    %s61 = scalar_lea.vmem [#allocation0], 72
    %62 = vst.msk [vmem:[%s61] sm:$0x2] %vm58, %v57
    %v63 = vld [vmem:[#allocation1] sm:$0x3]
    %64 = vrot.lane.b32.xlu0 %v63, 104
    %v65 = vpop.permute.xlu0 %64
    %vm66 = vcmask 31744
    %s67 = scalar_lea.vmem [#allocation0], 10
    %68 = vst.msk [vmem:[%s67] sm:$0x1] %vm66, %v65
    %s69 = scalar_lea.vmem [#allocation0], 73
    %70 = vst.msk [vmem:[%s69] sm:$0x2] %vm66, %v65
    %v71 = vld [vmem:[#allocation1] sm:$0x3]
    %72 = vrot.lane.b32.xlu0 %v71, 100
    %v73 = vpop.permute.xlu0 %72
    %vm74 = vcmask 31744
    %s75 = scalar_lea.vmem [#allocation0], 11
    %76 = vst.msk [vmem:[%s75] sm:$0x1] %vm74, %v73
    %s77 = scalar_lea.vmem [#allocation0], 74
    %78 = vst.msk [vmem:[%s77] sm:$0x2] %vm74, %v73
    %v79 = vld [vmem:[#allocation1] sm:$0x3]
    %80 = vrot.lane.b32.xlu0 %v79, 96
    %v81 = vpop.permute.xlu0 %80
    %vm82 = vcmask 31744
    %s83 = scalar_lea.vmem [#allocation0], 16
    %84 = vst.msk [vmem:[%s83] sm:$0x1] %vm82, %v81
    %s85 = scalar_lea.vmem [#allocation0], 79
    %86 = vst.msk [vmem:[%s85] sm:$0x2] %vm82, %v81
    %v87 = vld [vmem:[#allocation1] sm:$0x3]
    %88 = vrot.lane.b32.xlu0 %v87, 92
    %v89 = vpop.permute.xlu0 %88
    %vm90 = vcmask 31744
    %s91 = scalar_lea.vmem [#allocation0], 17
    %92 = vst.msk [vmem:[%s91] sm:$0x1] %vm90, %v89
    %s93 = scalar_lea.vmem [#allocation0], 80
    %94 = vst.msk [vmem:[%s93] sm:$0x2] %vm90, %v89
    %v95 = vld [vmem:[#allocation1] sm:$0x3]
    %96 = vrot.lane.b32.xlu0 %v95, 88
    %v97 = vpop.permute.xlu0 %96
    %vm98 = vcmask 31744
    %s99 = scalar_lea.vmem [#allocation0], 18
    %100 = vst.msk [vmem:[%s99] sm:$0x1] %vm98, %v97
    %s101 = scalar_lea.vmem [#allocation0], 81
    %102 = vst.msk [vmem:[%s101] sm:$0x2] %vm98, %v97
    %v103 = vld [vmem:[#allocation1] sm:$0x3]
    %104 = vrot.lane.b32.xlu0 %v103, 84
    %v105 = vpop.permute.xlu0 %104
    %vm106 = vcmask 31744
    %s107 = scalar_lea.vmem [#allocation0], 19
    %108 = vst.msk [vmem:[%s107] sm:$0x1] %vm106, %v105
    %s109 = scalar_lea.vmem [#allocation0], 82
    %110 = vst.msk [vmem:[%s109] sm:$0x2] %vm106, %v105
    %v111 = vld [vmem:[#allocation1] sm:$0x3]
    %112 = vrot.lane.b32.xlu0 %v111, 80
    %v113 = vpop.permute.xlu0 %112
    %vm114 = vcmask 31744
    %s115 = scalar_lea.vmem [#allocation0], 24
    %116 = vst.msk [vmem:[%s115] sm:$0x1] %vm114, %v113
    %s117 = scalar_lea.vmem [#allocation0], 87
    %118 = vst.msk [vmem:[%s117] sm:$0x2] %vm114, %v113
    %v119 = vld [vmem:[#allocation1] sm:$0x3]
    %120 = vrot.lane.b32.xlu0 %v119, 76
    %v121 = vpop.permute.xlu0 %120
    %vm122 = vcmask 31744
    %s123 = scalar_lea.vmem [#allocation0], 25
    %124 = vst.msk [vmem:[%s123] sm:$0x1] %vm122, %v121
    %s125 = scalar_lea.vmem [#allocation0], 88
    %126 = vst.msk [vmem:[%s125] sm:$0x2] %vm122, %v121
    %v127 = vld [vmem:[#allocation1] sm:$0x3]
    %128 = vrot.lane.b32.xlu0 %v127, 72
    %v129 = vpop.permute.xlu0 %128
    %vm130 = vcmask 31744
    %s131 = scalar_lea.vmem [#allocation0], 26
    %132 = vst.msk [vmem:[%s131] sm:$0x1] %vm130, %v129
    %s133 = scalar_lea.vmem [#allocation0], 89
    %134 = vst.msk [vmem:[%s133] sm:$0x2] %vm130, %v129
    %v135 = vld [vmem:[#allocation1] sm:$0x3]
    %136 = vrot.lane.b32.xlu0 %v135, 68
    %v137 = vpop.permute.xlu0 %136
    %vm138 = vcmask 31744
    %s139 = scalar_lea.vmem [#allocation0], 27
    %140 = vst.msk [vmem:[%s139] sm:$0x1] %vm138, %v137
    %s141 = scalar_lea.vmem [#allocation0], 90
    %142 = vst.msk [vmem:[%s141] sm:$0x2] %vm138, %v137
    %v143 = vld [vmem:[#allocation1] sm:$0x3]
    %144 = vrot.lane.b32.xlu0 %v143, 64
    %v145 = vpop.permute.xlu0 %144
    %vm146 = vcmask 31744
    %s147 = scalar_lea.vmem [#allocation0], 32
    %148 = vst.msk [vmem:[%s147] sm:$0x1] %vm146, %v145
    %s149 = scalar_lea.vmem [#allocation0], 95
    %150 = vst.msk [vmem:[%s149] sm:$0x2] %vm146, %v145
    %v151 = vld [vmem:[#allocation1] sm:$0x3]
    %152 = vrot.lane.b32.xlu0 %v151, 60
    %v153 = vpop.permute.xlu0 %152
    %vm154 = vcmask 31744
    %s155 = scalar_lea.vmem [#allocation0], 33
    %156 = vst.msk [vmem:[%s155] sm:$0x1] %vm154, %v153
    %s157 = scalar_lea.vmem [#allocation0], 96
    %158 = vst.msk [vmem:[%s157] sm:$0x2] %vm154, %v153
    %v159 = vld [vmem:[#allocation1] sm:$0x3]
    %160 = vrot.lane.b32.xlu0 %v159, 56
    %v161 = vpop.permute.xlu0 %160
    %vm162 = vcmask 31744
    %s163 = scalar_lea.vmem [#allocation0], 34
    %164 = vst.msk [vmem:[%s163] sm:$0x1] %vm162, %v161
    %s165 = scalar_lea.vmem [#allocation0], 97
    %166 = vst.msk [vmem:[%s165] sm:$0x2] %vm162, %v161
    %v167 = vld [vmem:[#allocation1] sm:$0x3]
    %168 = vrot.lane.b32.xlu0 %v167, 52
    %v169 = vpop.permute.xlu0 %168
    %vm170 = vcmask 31744
    %s171 = scalar_lea.vmem [#allocation0], 35
    %172 = vst.msk [vmem:[%s171] sm:$0x1] %vm170, %v169
    %s173 = scalar_lea.vmem [#allocation0], 98
    %174 = vst.msk [vmem:[%s173] sm:$0x2] %vm170, %v169
    %v175 = vld [vmem:[#allocation1] sm:$0x3]
    %176 = vrot.lane.b32.xlu0 %v175, 48
    %v177 = vpop.permute.xlu0 %176
    %vm178 = vcmask 31744
    %s179 = scalar_lea.vmem [#allocation0], 40
    %180 = vst.msk [vmem:[%s179] sm:$0x1] %vm178, %v177
    %s181 = scalar_lea.vmem [#allocation0], 103
    %182 = vst.msk [vmem:[%s181] sm:$0x2] %vm178, %v177
    %v183 = vld [vmem:[#allocation1] sm:$0x3]
    %184 = vrot.lane.b32.xlu0 %v183, 44
    %v185 = vpop.permute.xlu0 %184
    %vm186 = vcmask 31744
    %s187 = scalar_lea.vmem [#allocation0], 41
    %188 = vst.msk [vmem:[%s187] sm:$0x1] %vm186, %v185
    %s189 = scalar_lea.vmem [#allocation0], 104
    %190 = vst.msk [vmem:[%s189] sm:$0x2] %vm186, %v185
    %v191 = vld [vmem:[#allocation1] sm:$0x3]
    %192 = vrot.lane.b32.xlu0 %v191, 40
    %v193 = vpop.permute.xlu0 %192
    %vm194 = vcmask 31744
    %s195 = scalar_lea.vmem [#allocation0], 42
    %196 = vst.msk [vmem:[%s195] sm:$0x1] %vm194, %v193
    %s197 = scalar_lea.vmem [#allocation0], 105
    %198 = vst.msk [vmem:[%s197] sm:$0x2] %vm194, %v193
    %v199 = vld [vmem:[#allocation1] sm:$0x3]
    %200 = vrot.lane.b32.xlu0 %v199, 36
    %v201 = vpop.permute.xlu0 %200
    %vm202 = vcmask 31744
    %s203 = scalar_lea.vmem [#allocation0], 43
    %204 = vst.msk [vmem:[%s203] sm:$0x1] %vm202, %v201
    %s205 = scalar_lea.vmem [#allocation0], 106
    %206 = vst.msk [vmem:[%s205] sm:$0x2] %vm202, %v201
    %v207 = vld [vmem:[#allocation1] sm:$0x3]
    %208 = vrot.lane.b32.xlu0 %v207, 32
    %v209 = vpop.permute.xlu0 %208
    %vm210 = vcmask 31744
    %s211 = scalar_lea.vmem [#allocation0], 48
    %212 = vst.msk [vmem:[%s211] sm:$0x1] %vm210, %v209
    %s213 = scalar_lea.vmem [#allocation0], 111
    %214 = vst.msk [vmem:[%s213] sm:$0x2] %vm210, %v209
    %v215 = vld [vmem:[#allocation1] sm:$0x3]
    %216 = vrot.lane.b32.xlu0 %v215, 28
    %v217 = vpop.permute.xlu0 %216
    %vm218 = vcmask 31744
    %s219 = scalar_lea.vmem [#allocation0], 49
    %220 = vst.msk [vmem:[%s219] sm:$0x1] %vm218, %v217
    %s221 = scalar_lea.vmem [#allocation0], 112
    %222 = vst.msk [vmem:[%s221] sm:$0x2] %vm218, %v217
    %v223 = vld [vmem:[#allocation1] sm:$0x3]
    %224 = vrot.lane.b32.xlu0 %v223, 24
    %v225 = vpop.permute.xlu0 %224
    %vm226 = vcmask 31744
    %s227 = scalar_lea.vmem [#allocation0], 50
    %228 = vst.msk [vmem:[%s227] sm:$0x1] %vm226, %v225
    %s229 = scalar_lea.vmem [#allocation0], 113
    %230 = vst.msk [vmem:[%s229] sm:$0x2] %vm226, %v225
    %v231 = vld [vmem:[#allocation1] sm:$0x3]
    %232 = vrot.lane.b32.xlu0 %v231, 20
    %v233 = vpop.permute.xlu0 %232
    %vm234 = vcmask 31744
    %s235 = scalar_lea.vmem [#allocation0], 51
    %236 = vst.msk [vmem:[%s235] sm:$0x1] %vm234, %v233
    %s237 = scalar_lea.vmem [#allocation0], 114
    %238 = vst.msk [vmem:[%s237] sm:$0x2] %vm234, %v233
    %v239 = vld [vmem:[#allocation1] sm:$0x3]
    %240 = vrot.lane.b32.xlu0 %v239, 16
    %v241 = vpop.permute.xlu0 %240
    %vm242 = vcmask 31744
    %s243 = scalar_lea.vmem [#allocation0], 56
    %244 = vst.msk [vmem:[%s243] sm:$0x1] %vm242, %v241
    %s245 = scalar_lea.vmem [#allocation0], 119
    %246 = vst.msk [vmem:[%s245] sm:$0x2] %vm242, %v241
    %v247 = vld [vmem:[#allocation1] sm:$0x3]
    %248 = vrot.lane.b32.xlu0 %v247, 12
    %v249 = vpop.permute.xlu0 %248
    %vm250 = vcmask 31744
    %s251 = scalar_lea.vmem [#allocation0], 57
    %252 = vst.msk [vmem:[%s251] sm:$0x1] %vm250, %v249
    %s253 = scalar_lea.vmem [#allocation0], 120
    %254 = vst.msk [vmem:[%s253] sm:$0x2] %vm250, %v249
    %v255 = vld [vmem:[#allocation1] sm:$0x3]
    %256 = vrot.lane.b32.xlu0 %v255, 8
    %v257 = vpop.permute.xlu0 %256
    %vm258 = vcmask 31744
    %s259 = scalar_lea.vmem [#allocation0], 58
    %260 = vst.msk [vmem:[%s259] sm:$0x1] %vm258, %v257
    %s261 = scalar_lea.vmem [#allocation0], 121
    %262 = vst.msk [vmem:[%s261] sm:$0x2] %vm258, %v257
    %v263 = vld [vmem:[#allocation1] sm:$0x3]
    %264 = vrot.lane.b32.xlu0 %v263, 4
    %v265 = vpop.permute.xlu0 %264
    %vm266 = vcmask 31744
    %s267 = scalar_lea.vmem [#allocation0], 59
    %268 = vst.msk [vmem:[%s267] sm:$0x1] %vm266, %v265
    %s269 = scalar_lea.vmem [#allocation0], 122
    %270 = vst.msk [vmem:[%s269] sm:$0x2] %vm266, %v265
    %s272 = smul.u32 2, 2
    %s273 = sshllo.u32 0, %s272
    %s274 = sshrl.u32 %s272, 1
    %v275 = vld [vmem:[#allocation0] sm:%s273]
    %v276 = vpack.c.bf16 0.0, %v275
    %s277 = sshllo.u32 0, %s274
    %278 = vst [vmem:[%s1] sm:%s277] %v276
    %s279 = scalar_lea.vmem [#allocation0], 8
    %v280 = vld [vmem:[%s279] sm:%s273]
    %v281 = vpack.c.bf16 0.0, %v280
    %s282 = sshllo.u32 0, %s274
    %s283 = scalar_lea.vmem %s1, 2
    %284 = vst [vmem:[%s283] sm:%s282] %v281
    %s285 = scalar_lea.vmem [#allocation0], 16
    %v286 = vld [vmem:[%s285] sm:%s273]
    %v287 = vpack.c.bf16 0.0, %v286
    %s288 = sshllo.u32 0, %s274
    %s289 = smul.addr 2, 2
    %s290 = scalar_lea.vmem %s1, %s289
    %291 = vst [vmem:[%s290] sm:%s288] %v287
    %s292 = scalar_lea.vmem [#allocation0], 24
    %v293 = vld [vmem:[%s292] sm:%s273]
    %v294 = vpack.c.bf16 0.0, %v293
    %s295 = sshllo.u32 0, %s274
    %s296 = smul.addr 2, 3
    %s297 = scalar_lea.vmem %s1, %s296
    %298 = vst [vmem:[%s297] sm:%s295] %v294
    %s299 = scalar_lea.vmem [#allocation0], 32
    %v300 = vld [vmem:[%s299] sm:%s273]
    %v301 = vpack.c.bf16 0.0, %v300
    %s302 = sshllo.u32 0, %s274
    %s303 = smul.addr 2, 4
    %s304 = scalar_lea.vmem %s1, %s303
    %305 = vst [vmem:[%s304] sm:%s302] %v301
    %s306 = scalar_lea.vmem [#allocation0], 40
    %v307 = vld [vmem:[%s306] sm:%s273]
    %v308 = vpack.c.bf16 0.0, %v307
    %s309 = sshllo.u32 0, %s274
    %s310 = smul.addr 2, 5
    %s311 = scalar_lea.vmem %s1, %s310
    %312 = vst [vmem:[%s311] sm:%s309] %v308
    %s313 = scalar_lea.vmem [#allocation0], 48
    %v314 = vld [vmem:[%s313] sm:%s273]
    %v315 = vpack.c.bf16 0.0, %v314
    %s316 = sshllo.u32 0, %s274
    %s317 = smul.addr 2, 6
    %s318 = scalar_lea.vmem %s1, %s317
    %319 = vst [vmem:[%s318] sm:%s316] %v315
    %s320 = scalar_lea.vmem [#allocation0], 56
    %v321 = vld [vmem:[%s320] sm:%s273]
    %v322 = vpack.c.bf16 0.0, %v321
    %s323 = sshllo.u32 0, %s274
    %s324 = smul.addr 2, 7
    %s325 = scalar_lea.vmem %s1, %s324
    %326 = vst [vmem:[%s325] sm:%s323] %v322
    %s327 = scalar_lea.vmem [#allocation0], 64
    %v328 = vld [vmem:[%s327] sm:%s273]
    %v329 = vpack.c.bf16 0.0, %v328
    %s330 = sshllo.u32 0, %s274
    %s331 = smul.addr 2, 8
    %s332 = scalar_lea.vmem %s1, %s331
    %333 = vst [vmem:[%s332] sm:%s330] %v329
    %s334 = scalar_lea.vmem [#allocation0], 72
    %v335 = vld [vmem:[%s334] sm:%s273]
    %v336 = vpack.c.bf16 0.0, %v335
    %s337 = sshllo.u32 0, %s274
    %s338 = smul.addr 2, 9
    %s339 = scalar_lea.vmem %s1, %s338
    %340 = vst [vmem:[%s339] sm:%s337] %v336
    %s341 = scalar_lea.vmem [#allocation0], 80
    %v342 = vld [vmem:[%s341] sm:%s273]
    %v343 = vpack.c.bf16 0.0, %v342
    %s344 = sshllo.u32 0, %s274
    %s345 = smul.addr 2, 10
    %s346 = scalar_lea.vmem %s1, %s345
    %347 = vst [vmem:[%s346] sm:%s344] %v343
    %s348 = scalar_lea.vmem [#allocation0], 88
    %v349 = vld [vmem:[%s348] sm:%s273]
    %v350 = vpack.c.bf16 0.0, %v349
    %s351 = sshllo.u32 0, %s274
    %s352 = smul.addr 2, 11
    %s353 = scalar_lea.vmem %s1, %s352
    %354 = vst [vmem:[%s353] sm:%s351] %v350
    %s355 = scalar_lea.vmem [#allocation0], 96
    %v356 = vld [vmem:[%s355] sm:%s273]
    %v357 = vpack.c.bf16 0.0, %v356
    %s358 = sshllo.u32 0, %s274
    %s359 = smul.addr 2, 12
    %s360 = scalar_lea.vmem %s1, %s359
    %361 = vst [vmem:[%s360] sm:%s358] %v357
    %s362 = scalar_lea.vmem [#allocation0], 104
    %v363 = vld [vmem:[%s362] sm:%s273]
    %v364 = vpack.c.bf16 0.0, %v363
    %s365 = sshllo.u32 0, %s274
    %s366 = smul.addr 2, 13
    %s367 = scalar_lea.vmem %s1, %s366
    %368 = vst [vmem:[%s367] sm:%s365] %v364
    %s369 = scalar_lea.vmem [#allocation0], 112
    %v370 = vld [vmem:[%s369] sm:%s273]
    %v371 = vpack.c.bf16 0.0, %v370
    %s372 = sshllo.u32 0, %s274
    %s373 = smul.addr 2, 14
    %s374 = scalar_lea.vmem %s1, %s373
    %375 = vst [vmem:[%s374] sm:%s372] %v371
    %s376 = scalar_lea.vmem [#allocation0], 120
    %v377 = vld [vmem:[%s376] sm:%s273]
    %v378 = vpack.c.bf16 0.0, %v377
    %s379 = sshllo.u32 0, %s274
    %s380 = smul.addr 2, 15
    %s381 = scalar_lea.vmem %s1, %s380
    %382 = vst [vmem:[%s381] sm:%s379] %v378

// kernel: statistic_network_x2c1.5
$region0: #{statistic_network_x2c1.5}
  #allocation0 [shape = 'u32[]', space=smem, size = 0x4, offset = 0x4, fixed_abs, tag = 'smem constant byte address 0x4 - core index']
  #allocation1 [shape = 'u32[144,128]{1,0:T(1,128)}', space=vmem, size = 0x12000, scoped, tag = 'internal scratch']
  #allocation2 [shape = 'f32[1,1]{1,0:T(1,128)S(1)}', space=vmem, size = 0x200, scoped, tag = 'scoped memory for statistic_network_x2c1.5']
  %s0 = inlined_call_operand.vmem [shape: bf16[64,512], index: 0, kind: input, shape index: {}]
  %s1 = inlined_call_operand.vmem [shape: bf16[256,512], index: 1, kind: input, shape index: {}]
  %s2 = inlined_call_operand.vmem [shape: bf16[8,64], index: 2, kind: input, shape index: {}]
  %s3 = inlined_call_operand.vmem [shape: f32[8,1], index: 3, kind: input, shape index: {}]
  %s4 = inlined_call_operand.vmem [shape: bf16[32,256], index: 4, kind: input, shape index: {}]
  %s5 = inlined_call_operand.vmem [shape: f32[32,1], index: 5, kind: input, shape index: {}]
  %s6 = inlined_call_operand.vmem [shape: f32[8,256], index: 6, kind: input, shape index: {}]
  %s7 = inlined_call_operand.vmem [shape: f32[32,256], index: 7, kind: input, shape index: {}]
  %s8 = inlined_call_operand.<no memory space> [shape: f32[1,1], index: 8, kind: input, shape index: {}]
  %s9 = inlined_call_operand.vmem [shape: f32[2,1,1], index: 9, kind: output, shape index: {}]
  %s10 = sld [smem:[#allocation0]]
  $region145: #{statistic_network_x2c1.5} parent=0
    _
  %s12 = ssub.s32 1, %s10
  %s13 = scalar_select 0, %s12, %s10
  %v14 = vstv %s8
  %15 = vst [vmem:[#allocation2] sm:$0x1] %v14
  $region1: #{statistic_network_x2c1.5} parent=0
    #allocation3 [shape = 'u8[65536]{0}', space=vmem, size = 0x10000, scoped, tag = 'input window, operand 0']
    #allocation4 [shape = 'u8[262144]{0}', space=vmem, size = 0x40000, scoped, tag = 'input window, operand 1']
    loop: start=0, step=1, limit=4
    $region2: #{statistic_network_x2c1.5} parent=1 // loop_pre_header
      _
    $region3: #{statistic_network_x2c1.5} parent=1 // loop_header
      %s17 = sphi 0, %s21
      %p18 = scmp.ge.s32.totalorder %s17, 4
      %s27 = sphi 0, %s29
      %s30 = sphi 0, %s27
      %s31 = sphi 0, %s30
      %s47 = sphi 0, %s31
      %s53 = sphi 0, %s55
      %s56 = sphi 0, %s53
      %s57 = sphi 0, %s56
      %s73 = sphi 0, %s57
      %s77 = sphi 0, %s77
      %s79 = sphi 0, %s77
      %s80 = sphi 0, %s79
      %s94 = sphi 0, %s80
      %s98 = sphi 0, %s98
      %s100 = sphi 0, %s98
      %s101 = sphi 0, %s100
      %s115 = sphi 0, %s101
      %s119 = sphi 0, %s119
      %s121 = sphi 0, %s119
      %s122 = sphi 0, %s121
      %s136 = sphi 0, %s122
      %s140 = sphi 0, %s140
      %s142 = sphi 0, %s140
      %s143 = sphi 0, %s142
      %s157 = sphi 0, %s143
      %s161 = sphi 0, %s161
      %s163 = sphi 0, %s161
      %s164 = sphi 0, %s163
      %s178 = sphi 0, %s164
      %s182 = sphi 0, %s182
      %s184 = sphi 0, %s182
      %s185 = sphi 0, %s184
      %s199 = sphi 0, %s185
      %s203 = sphi 0, %s203
      %s205 = sphi 0, %s203
      %s206 = sphi 0, %s205
      %s220 = sphi 0, %s206
      %s226 = sphi 0, %s228
      %s229 = sphi 0, %s226
      %s230 = sphi 0, %s229
      %s246 = sphi 0, %s230
    $region4: #{statistic_network_x2c1.5} parent=1 // loop_header_branch
      %20 = sbr.rel (%p18) target = $region8
    $region5: #{statistic_network_x2c1.5} parent=1 // loop_body
      %s22 = ssub.s32 %s17, 1
      %s23 = ssub.s32 %s17, 2
      %s24 = sadd.s32 %s17, 1
      %s25 = ssub.s32 %s17, %s24
      %p26 = scmp.eq.s32.totalorder %s25, 0
      %s28 = sadd.s32 %s27, 1
      %s29 = scalar_select %p26, %s27, %s28
      %p32 = pneg %p26
      %p33 = scmp.eq.s32.totalorder %s17, 1
      %p34 = por %p32, %p33
      %p35 = scmp.ne.s32.totalorder %s27, %s30
      %p36 = scmp.eq.s32.totalorder %s17, 0
      %p37 = por %p35, %p36
      %p38 = scmp.ne.s32.totalorder %s27, %s30
      %p39 = scmp.eq.s32.totalorder %s22, 1
      %p40 = por %p38, %p39
      %p41 = scmp.ne.s32.totalorder %s30, %s31
      %p42 = scmp.eq.s32.totalorder %s22, 0
      %p43 = por %p41, %p42
      %p44 = scmp.ne.s32.totalorder %s30, %s31
      %p45 = scmp.eq.s32.totalorder %s23, 1
      %p46 = por %p44, %p45
      %p48 = scmp.ne.s32.totalorder %s31, %s47
      %p49 = scmp.eq.s32.totalorder %s23, 0
      %p50 = por %p48, %p49
      %s51 = ssub.s32 %s17, %s24
      %p52 = scmp.eq.s32.totalorder %s51, 0
      %s54 = sadd.s32 %s53, 1
      %s55 = scalar_select %p52, %s53, %s54
      %p58 = pneg %p52
      %p59 = scmp.eq.s32.totalorder %s17, 1
      %p60 = por %p58, %p59
      %p61 = scmp.ne.s32.totalorder %s53, %s56
      %p62 = scmp.eq.s32.totalorder %s17, 0
      %p63 = por %p61, %p62
      %p64 = scmp.ne.s32.totalorder %s53, %s56
      %p65 = scmp.eq.s32.totalorder %s22, 1
      %p66 = por %p64, %p65
      %p67 = scmp.ne.s32.totalorder %s56, %s57
      %p68 = scmp.eq.s32.totalorder %s22, 0
      %p69 = por %p67, %p68
      %p70 = scmp.ne.s32.totalorder %s56, %s57
      %p71 = scmp.eq.s32.totalorder %s23, 1
      %p72 = por %p70, %p71
      %p74 = scmp.ne.s32.totalorder %s57, %s73
      %p75 = scmp.eq.s32.totalorder %s23, 0
      %p76 = por %p74, %p75
      %s78 = sadd.s32 %s77, 1
      %p81 = scmp.eq.s32.totalorder %s17, 1
      %p82 = scmp.ne.s32.totalorder %s77, %s79
      %p83 = scmp.eq.s32.totalorder %s17, 0
      %p84 = por %p82, %p83
      %p85 = scmp.ne.s32.totalorder %s77, %s79
      %p86 = scmp.eq.s32.totalorder %s22, 1
      %p87 = por %p85, %p86
      %p88 = scmp.ne.s32.totalorder %s79, %s80
      %p89 = scmp.eq.s32.totalorder %s22, 0
      %p90 = por %p88, %p89
      %p91 = scmp.ne.s32.totalorder %s79, %s80
      %p92 = scmp.eq.s32.totalorder %s23, 1
      %p93 = por %p91, %p92
      %p95 = scmp.ne.s32.totalorder %s80, %s94
      %p96 = scmp.eq.s32.totalorder %s23, 0
      %p97 = por %p95, %p96
      %s99 = sadd.s32 %s98, 1
      %p102 = scmp.eq.s32.totalorder %s17, 1
      %p103 = scmp.ne.s32.totalorder %s98, %s100
      %p104 = scmp.eq.s32.totalorder %s17, 0
      %p105 = por %p103, %p104
      %p106 = scmp.ne.s32.totalorder %s98, %s100
      %p107 = scmp.eq.s32.totalorder %s22, 1
      %p108 = por %p106, %p107
      %p109 = scmp.ne.s32.totalorder %s100, %s101
      %p110 = scmp.eq.s32.totalorder %s22, 0
      %p111 = por %p109, %p110
      %p112 = scmp.ne.s32.totalorder %s100, %s101
      %p113 = scmp.eq.s32.totalorder %s23, 1
      %p114 = por %p112, %p113
      %p116 = scmp.ne.s32.totalorder %s101, %s115
      %p117 = scmp.eq.s32.totalorder %s23, 0
      %p118 = por %p116, %p117
      %s120 = sadd.s32 %s119, 1
      %p123 = scmp.eq.s32.totalorder %s17, 1
      %p124 = scmp.ne.s32.totalorder %s119, %s121
      %p125 = scmp.eq.s32.totalorder %s17, 0
      %p126 = por %p124, %p125
      %p127 = scmp.ne.s32.totalorder %s119, %s121
      %p128 = scmp.eq.s32.totalorder %s22, 1
      %p129 = por %p127, %p128
      %p130 = scmp.ne.s32.totalorder %s121, %s122
      %p131 = scmp.eq.s32.totalorder %s22, 0
      %p132 = por %p130, %p131
      %p133 = scmp.ne.s32.totalorder %s121, %s122
      %p134 = scmp.eq.s32.totalorder %s23, 1
      %p135 = por %p133, %p134
      %p137 = scmp.ne.s32.totalorder %s122, %s136
      %p138 = scmp.eq.s32.totalorder %s23, 0
      %p139 = por %p137, %p138
      %s141 = sadd.s32 %s140, 1
      %p144 = scmp.eq.s32.totalorder %s17, 1
      %p145 = scmp.ne.s32.totalorder %s140, %s142
      %p146 = scmp.eq.s32.totalorder %s17, 0
      %p147 = por %p145, %p146
      %p148 = scmp.ne.s32.totalorder %s140, %s142
      %p149 = scmp.eq.s32.totalorder %s22, 1
      %p150 = por %p148, %p149
      %p151 = scmp.ne.s32.totalorder %s142, %s143
      %p152 = scmp.eq.s32.totalorder %s22, 0
      %p153 = por %p151, %p152
      %p154 = scmp.ne.s32.totalorder %s142, %s143
      %p155 = scmp.eq.s32.totalorder %s23, 1
      %p156 = por %p154, %p155
      %p158 = scmp.ne.s32.totalorder %s143, %s157
      %p159 = scmp.eq.s32.totalorder %s23, 0
      %p160 = por %p158, %p159
      %s162 = sadd.s32 %s161, 1
      %p165 = scmp.eq.s32.totalorder %s17, 1
      %p166 = scmp.ne.s32.totalorder %s161, %s163
      %p167 = scmp.eq.s32.totalorder %s17, 0
      %p168 = por %p166, %p167
      %p169 = scmp.ne.s32.totalorder %s161, %s163
      %p170 = scmp.eq.s32.totalorder %s22, 1
      %p171 = por %p169, %p170
      %p172 = scmp.ne.s32.totalorder %s163, %s164
      %p173 = scmp.eq.s32.totalorder %s22, 0
      %p174 = por %p172, %p173
      %p175 = scmp.ne.s32.totalorder %s163, %s164
      %p176 = scmp.eq.s32.totalorder %s23, 1
      %p177 = por %p175, %p176
      %p179 = scmp.ne.s32.totalorder %s164, %s178
      %p180 = scmp.eq.s32.totalorder %s23, 0
      %p181 = por %p179, %p180
      %s183 = sadd.s32 %s182, 1
      %p186 = scmp.eq.s32.totalorder %s17, 1
      %p187 = scmp.ne.s32.totalorder %s182, %s184
      %p188 = scmp.eq.s32.totalorder %s17, 0
      %p189 = por %p187, %p188
      %p190 = scmp.ne.s32.totalorder %s182, %s184
      %p191 = scmp.eq.s32.totalorder %s22, 1
      %p192 = por %p190, %p191
      %p193 = scmp.ne.s32.totalorder %s184, %s185
      %p194 = scmp.eq.s32.totalorder %s22, 0
      %p195 = por %p193, %p194
      %p196 = scmp.ne.s32.totalorder %s184, %s185
      %p197 = scmp.eq.s32.totalorder %s23, 1
      %p198 = por %p196, %p197
      %p200 = scmp.ne.s32.totalorder %s185, %s199
      %p201 = scmp.eq.s32.totalorder %s23, 0
      %p202 = por %p200, %p201
      %s204 = sadd.s32 %s203, 1
      %p207 = scmp.eq.s32.totalorder %s17, 1
      %p208 = scmp.ne.s32.totalorder %s203, %s205
      %p209 = scmp.eq.s32.totalorder %s17, 0
      %p210 = por %p208, %p209
      %p211 = scmp.ne.s32.totalorder %s203, %s205
      %p212 = scmp.eq.s32.totalorder %s22, 1
      %p213 = por %p211, %p212
      %p214 = scmp.ne.s32.totalorder %s205, %s206
      %p215 = scmp.eq.s32.totalorder %s22, 0
      %p216 = por %p214, %p215
      %p217 = scmp.ne.s32.totalorder %s205, %s206
      %p218 = scmp.eq.s32.totalorder %s23, 1
      %p219 = por %p217, %p218
      %p221 = scmp.ne.s32.totalorder %s206, %s220
      %p222 = scmp.eq.s32.totalorder %s23, 0
      %p223 = por %p221, %p222
      %s224 = ssub.s32 %s17, %s24
      %p225 = scmp.eq.s32.totalorder %s224, 0
      %s227 = sadd.s32 %s226, 1
      %s228 = scalar_select %p225, %s226, %s227
      %p231 = pneg %p225
      %p232 = scmp.eq.s32.totalorder %s17, 1
      %p233 = por %p231, %p232
      %p234 = scmp.ne.s32.totalorder %s226, %s229
      %p235 = scmp.eq.s32.totalorder %s17, 0
      %p236 = por %p234, %p235
      %p237 = scmp.ne.s32.totalorder %s226, %s229
      %p238 = scmp.eq.s32.totalorder %s22, 1
      %p239 = por %p237, %p238
      %p240 = scmp.ne.s32.totalorder %s229, %s230
      %p241 = scmp.eq.s32.totalorder %s22, 0
      %p242 = por %p240, %p241
      %p243 = scmp.ne.s32.totalorder %s229, %s230
      %p244 = scmp.eq.s32.totalorder %s23, 1
      %p245 = por %p243, %p244
      %p247 = scmp.ne.s32.totalorder %s230, %s246
      %p248 = scmp.eq.s32.totalorder %s23, 0
      %p249 = por %p247, %p248
      %p250 = scmp.le.s32.totalorder 1, %s17
      %p251 = scmp.lt.s32.totalorder %s17, 3
      %p252 = pnand %p250, %p251
      %p253 = pneg %p252
      // Predicated region
      $region9: #{statistic_network_x2c1.5} parent=5 // pred_check
        _
      $region10: #{statistic_network_x2c1.5} parent=5 // pred_check_branch
        %255 = sbr.rel (%p252) target = $region12
      $region11: #{statistic_network_x2c1.5} parent=5 // pred_region
        %s256 = ssub.s32 %s17, 1
        // Predicated region
        $region13: #{statistic_network_x2c1.5} parent=11 // pred_check
          %p257 = pneg %p90
        $region14: #{statistic_network_x2c1.5} parent=11 // pred_check_branch
          %259 = sbr.rel (%p257) target = $region16
        $region15: #{statistic_network_x2c1.5} parent=11 // pred_region
          _
        $region16: #{statistic_network_x2c1.5} parent=11 // pred_fallthru
          _
        // Predicated region
        $region17: #{statistic_network_x2c1.5} parent=11 // pred_check
          %p260 = pneg %p111
        $region18: #{statistic_network_x2c1.5} parent=11 // pred_check_branch
          %262 = sbr.rel (%p260) target = $region20
        $region19: #{statistic_network_x2c1.5} parent=11 // pred_region
          _
        $region20: #{statistic_network_x2c1.5} parent=11 // pred_fallthru
          _
        // Predicated region
        $region21: #{statistic_network_x2c1.5} parent=11 // pred_check
          %p263 = pneg %p132
        $region22: #{statistic_network_x2c1.5} parent=11 // pred_check_branch
          %265 = sbr.rel (%p263) target = $region24
        $region23: #{statistic_network_x2c1.5} parent=11 // pred_region
          _
        $region24: #{statistic_network_x2c1.5} parent=11 // pred_fallthru
          _
        // Predicated region
        $region25: #{statistic_network_x2c1.5} parent=11 // pred_check
          %p266 = pneg %p153
        $region26: #{statistic_network_x2c1.5} parent=11 // pred_check_branch
          %268 = sbr.rel (%p266) target = $region28
        $region27: #{statistic_network_x2c1.5} parent=11 // pred_region
          _
        $region28: #{statistic_network_x2c1.5} parent=11 // pred_fallthru
          _
        // Predicated region
        $region29: #{statistic_network_x2c1.5} parent=11 // pred_check
          %p269 = pneg %p174
        $region30: #{statistic_network_x2c1.5} parent=11 // pred_check_branch
          %271 = sbr.rel (%p269) target = $region32
        $region31: #{statistic_network_x2c1.5} parent=11 // pred_region
          _
        $region32: #{statistic_network_x2c1.5} parent=11 // pred_fallthru
          _
        // Predicated region
        $region33: #{statistic_network_x2c1.5} parent=11 // pred_check
          %p272 = pneg %p195
        $region34: #{statistic_network_x2c1.5} parent=11 // pred_check_branch
          %274 = sbr.rel (%p272) target = $region36
        $region35: #{statistic_network_x2c1.5} parent=11 // pred_region
          _
        $region36: #{statistic_network_x2c1.5} parent=11 // pred_fallthru
          _
        // Predicated region
        $region37: #{statistic_network_x2c1.5} parent=11 // pred_check
          %p275 = pneg %p216
        $region38: #{statistic_network_x2c1.5} parent=11 // pred_check_branch
          %277 = sbr.rel (%p275) target = $region40
        $region39: #{statistic_network_x2c1.5} parent=11 // pred_region
          _
        $region40: #{statistic_network_x2c1.5} parent=11 // pred_fallthru
          _
      $region12: #{statistic_network_x2c1.5} parent=5 // pred_fallthru
        _
      %p278 = scmp.lt.s32.totalorder %s17, 2
      // Predicated region
      $region41: #{statistic_network_x2c1.5} parent=5 // pred_check
        %p279 = pneg %p278
      $region42: #{statistic_network_x2c1.5} parent=5 // pred_check_branch
        %281 = sbr.rel (%p279) target = $region44
      $region43: #{statistic_network_x2c1.5} parent=5 // pred_region
        // Predicated region
        $region45: #{statistic_network_x2c1.5} parent=43 // pred_check
          %p282 = pneg %p37
        $region46: #{statistic_network_x2c1.5} parent=43 // pred_check_branch
          %284 = sbr.rel (%p282) target = $region48
        $region47: #{statistic_network_x2c1.5} parent=43 // pred_region
          %s285 = sand.u32 %s27, 1
          %s286 = sand.u32 %s27, 1
          %s287 = smul.addr %s286, 64
          %s288 = scalar_lea.vmem [#allocation3], %s287
          %s289 = smul.u32 2, %s17
          %s290 = smul.addr %s289, 4
          %s291 = scalar_lea.vmem %s0, %s290
          // Predicated region
          $region49: #{statistic_network_x2c1.5} parent=47 // pred_check
            _
          $region50: #{statistic_network_x2c1.5} parent=47 // pred_check_branch
            %293 = sbr.rel (0) target = $region52
          $region51: #{statistic_network_x2c1.5} parent=47 // pred_region
            // Predicated region
            $region53: #{statistic_network_x2c1.5} parent=51 // pred_check
              _
            $region54: #{statistic_network_x2c1.5} parent=51 // pred_check_branch
              %295 = sbr.rel (0) target = $region56
            $region55: #{statistic_network_x2c1.5} parent=51 // pred_region
              // Predicated region
              $region68: #{statistic_network_x2c1.5} parent=55 // pred_check
                _
              $region69: #{statistic_network_x2c1.5} parent=55 // pred_check_branch
                %324 = sbr.rel (0) target = $region71
              $region70: #{statistic_network_x2c1.5} parent=55 // pred_region
                loop: start=0, step=1, limit=1
                $region72: #{statistic_network_x2c1.5} parent=70 // loop_pre_header
                  _
                $region73: #{statistic_network_x2c1.5} parent=70 // loop_header
                  %s326 = sphi 0, %s330
                  %p327 = scmp.ge.s32.totalorder %s326, 1
                  %s331 = sphi %s291, %s291
                  %s332 = sphi %s288, %s288
                $region74: #{statistic_network_x2c1.5} parent=70 // loop_header_branch
                  %329 = sbr.rel (%p327) target = $region78
                $region75: #{statistic_network_x2c1.5} parent=70 // loop_body
                  %v333 = vld [vmem:[%s331] sm:$0xff]
                  %334 = vst [vmem:[%s332] sm:$0xff] %v333
                  %v335 = vld [vmem:[%s331 + $0x10] sm:$0xff]
                  %336 = vst [vmem:[%s332 + $0x8] sm:$0xff] %v335
                  %v337 = vld [vmem:[%s331 + $0x20] sm:$0xff]
                  %338 = vst [vmem:[%s332 + $0x10] sm:$0xff] %v337
                  %v339 = vld [vmem:[%s331 + $0x30] sm:$0xff]
                  %340 = vst [vmem:[%s332 + $0x18] sm:$0xff] %v339
                  %v341 = vld [vmem:[%s331 + $0x40] sm:$0xff]
                  %342 = vst [vmem:[%s332 + $0x20] sm:$0xff] %v341
                  %v343 = vld [vmem:[%s331 + $0x50] sm:$0xff]
                  %344 = vst [vmem:[%s332 + $0x28] sm:$0xff] %v343
                  %v345 = vld [vmem:[%s331 + $0x60] sm:$0xff]
                  %346 = vst [vmem:[%s332 + $0x30] sm:$0xff] %v345
                  %v347 = vld [vmem:[%s331 + $0x70] sm:$0xff]
                  %348 = vst [vmem:[%s332 + $0x38] sm:$0xff] %v347
                $region76: #{statistic_network_x2c1.5} parent=70 // loop_footer
                  %s330 = sadd.s32 1, %s326
                $region77: #{statistic_network_x2c1.5} parent=70 // loop_footer_branch
                  %325 = sbr.rel target = $region73
                $region78: #{statistic_network_x2c1.5} parent=70 // loop_exit
                  _
              $region71: #{statistic_network_x2c1.5} parent=55 // pred_fallthru
                _
              // Predicated region
              $region79: #{statistic_network_x2c1.5} parent=55 // pred_check
                _
              $region80: #{statistic_network_x2c1.5} parent=55 // pred_check_branch
                %350 = sbr.rel target = $region82
              $region81: #{statistic_network_x2c1.5} parent=55 // pred_region
                _
              $region82: #{statistic_network_x2c1.5} parent=55 // pred_fallthru
                _
            $region56: #{statistic_network_x2c1.5} parent=51 // pred_fallthru
              _
            // Predicated region
            $region57: #{statistic_network_x2c1.5} parent=51 // pred_check
              _
            $region58: #{statistic_network_x2c1.5} parent=51 // pred_check_branch
              %297 = sbr.rel target = $region60
            $region59: #{statistic_network_x2c1.5} parent=51 // pred_region
              loop: start=0, step=1, limit=1
              $region61: #{statistic_network_x2c1.5} parent=59 // loop_pre_header
                _
              $region62: #{statistic_network_x2c1.5} parent=59 // loop_header
                %s300 = sphi 0, %s304
                %p301 = scmp.ge.s32.totalorder %s300, 1
                %s305 = sphi %s291, %s291
                %s306 = sphi %s288, %s288
              $region63: #{statistic_network_x2c1.5} parent=59 // loop_header_branch
                %303 = sbr.rel (%p301) target = $region67
              $region64: #{statistic_network_x2c1.5} parent=59 // loop_body
                %v307 = vld [vmem:[%s305] sm:$0xff]
                %308 = vst [vmem:[%s306] sm:$0xff] %v307
                %v309 = vld [vmem:[%s305 + $0x10] sm:$0xff]
                %310 = vst [vmem:[%s306 + $0x8] sm:$0xff] %v309
                %v311 = vld [vmem:[%s305 + $0x20] sm:$0xff]
                %312 = vst [vmem:[%s306 + $0x10] sm:$0xff] %v311
                %v313 = vld [vmem:[%s305 + $0x30] sm:$0xff]
                %314 = vst [vmem:[%s306 + $0x18] sm:$0xff] %v313
                %v315 = vld [vmem:[%s305 + $0x40] sm:$0xff]
                %316 = vst [vmem:[%s306 + $0x20] sm:$0xff] %v315
                %v317 = vld [vmem:[%s305 + $0x50] sm:$0xff]
                %318 = vst [vmem:[%s306 + $0x28] sm:$0xff] %v317
                %v319 = vld [vmem:[%s305 + $0x60] sm:$0xff]
                %320 = vst [vmem:[%s306 + $0x30] sm:$0xff] %v319
                %v321 = vld [vmem:[%s305 + $0x70] sm:$0xff]
                %322 = vst [vmem:[%s306 + $0x38] sm:$0xff] %v321
              $region65: #{statistic_network_x2c1.5} parent=59 // loop_footer
                %s304 = sadd.s32 1, %s300
              $region66: #{statistic_network_x2c1.5} parent=59 // loop_footer_branch
                %299 = sbr.rel target = $region62
              $region67: #{statistic_network_x2c1.5} parent=59 // loop_exit
                _
            $region60: #{statistic_network_x2c1.5} parent=51 // pred_fallthru
              _
          $region52: #{statistic_network_x2c1.5} parent=47 // pred_fallthru
            _
          %351 = vnop
        $region48: #{statistic_network_x2c1.5} parent=43 // pred_fallthru
          _
        // Predicated region
        $region83: #{statistic_network_x2c1.5} parent=43 // pred_check
          %p352 = pneg %p63
        $region84: #{statistic_network_x2c1.5} parent=43 // pred_check_branch
          %354 = sbr.rel (%p352) target = $region86
        $region85: #{statistic_network_x2c1.5} parent=43 // pred_region
          %s355 = sand.u32 %s53, 1
          %s356 = sand.u32 %s53, 1
          %s357 = smul.addr %s356, 256
          %s358 = scalar_lea.vmem [#allocation4], %s357
          %s359 = smul.u32 2, %s17
          %s360 = smul.addr %s359, 4
          %s361 = scalar_lea.vmem %s1, %s360
          // Predicated region
          $region87: #{statistic_network_x2c1.5} parent=85 // pred_check
            _
          $region88: #{statistic_network_x2c1.5} parent=85 // pred_check_branch
            %363 = sbr.rel (0) target = $region90
          $region89: #{statistic_network_x2c1.5} parent=85 // pred_region
            // Predicated region
            $region91: #{statistic_network_x2c1.5} parent=89 // pred_check
              _
            $region92: #{statistic_network_x2c1.5} parent=89 // pred_check_branch
              %365 = sbr.rel (0) target = $region94
            $region93: #{statistic_network_x2c1.5} parent=89 // pred_region
              // Predicated region
              $region106: #{statistic_network_x2c1.5} parent=93 // pred_check
                _
              $region107: #{statistic_network_x2c1.5} parent=93 // pred_check_branch
                %442 = sbr.rel (0) target = $region109
              $region108: #{statistic_network_x2c1.5} parent=93 // pred_region
                loop: start=0, step=1, limit=1
                $region110: #{statistic_network_x2c1.5} parent=108 // loop_pre_header
                  _
                $region111: #{statistic_network_x2c1.5} parent=108 // loop_header
                  %s444 = sphi 0, %s448
                  %p445 = scmp.ge.s32.totalorder %s444, 1
                  %s449 = sphi %s361, %s361
                  %s450 = sphi %s358, %s358
                $region112: #{statistic_network_x2c1.5} parent=108 // loop_header_branch
                  %447 = sbr.rel (%p445) target = $region116
                $region113: #{statistic_network_x2c1.5} parent=108 // loop_body
                  %v451 = vld [vmem:[%s449] sm:$0xff]
                  %452 = vst [vmem:[%s450] sm:$0xff] %v451
                  %v453 = vld [vmem:[%s449 + $0x10] sm:$0xff]
                  %454 = vst [vmem:[%s450 + $0x8] sm:$0xff] %v453
                  %v455 = vld [vmem:[%s449 + $0x20] sm:$0xff]
                  %456 = vst [vmem:[%s450 + $0x10] sm:$0xff] %v455
                  %v457 = vld [vmem:[%s449 + $0x30] sm:$0xff]
                  %458 = vst [vmem:[%s450 + $0x18] sm:$0xff] %v457
                  %v459 = vld [vmem:[%s449 + $0x40] sm:$0xff]
                  %460 = vst [vmem:[%s450 + $0x20] sm:$0xff] %v459
                  %v461 = vld [vmem:[%s449 + $0x50] sm:$0xff]
                  %462 = vst [vmem:[%s450 + $0x28] sm:$0xff] %v461
                  %v463 = vld [vmem:[%s449 + $0x60] sm:$0xff]
                  %464 = vst [vmem:[%s450 + $0x30] sm:$0xff] %v463
                  %v465 = vld [vmem:[%s449 + $0x70] sm:$0xff]
                  %466 = vst [vmem:[%s450 + $0x38] sm:$0xff] %v465
                  %v467 = vld [vmem:[%s449 + $0x80] sm:$0xff]
                  %468 = vst [vmem:[%s450 + $0x40] sm:$0xff] %v467
                  %v469 = vld [vmem:[%s449 + $0x90] sm:$0xff]
                  %470 = vst [vmem:[%s450 + $0x48] sm:$0xff] %v469
                  %v471 = vld [vmem:[%s449 + $0xa0] sm:$0xff]
                  %472 = vst [vmem:[%s450 + $0x50] sm:$0xff] %v471
                  %v473 = vld [vmem:[%s449 + $0xb0] sm:$0xff]
                  %474 = vst [vmem:[%s450 + $0x58] sm:$0xff] %v473
                  %v475 = vld [vmem:[%s449 + $0xc0] sm:$0xff]
                  %476 = vst [vmem:[%s450 + $0x60] sm:$0xff] %v475
                  %v477 = vld [vmem:[%s449 + $0xd0] sm:$0xff]
                  %478 = vst [vmem:[%s450 + $0x68] sm:$0xff] %v477
                  %v479 = vld [vmem:[%s449 + $0xe0] sm:$0xff]
                  %480 = vst [vmem:[%s450 + $0x70] sm:$0xff] %v479
                  %v481 = vld [vmem:[%s449 + $0xf0] sm:$0xff]
                  %482 = vst [vmem:[%s450 + $0x78] sm:$0xff] %v481
                  %v483 = vld [vmem:[%s449 + $0x100] sm:$0xff]
                  %484 = vst [vmem:[%s450 + $0x80] sm:$0xff] %v483
                  %v485 = vld [vmem:[%s449 + $0x110] sm:$0xff]
                  %486 = vst [vmem:[%s450 + $0x88] sm:$0xff] %v485
                  %v487 = vld [vmem:[%s449 + $0x120] sm:$0xff]
                  %488 = vst [vmem:[%s450 + $0x90] sm:$0xff] %v487
                  %v489 = vld [vmem:[%s449 + $0x130] sm:$0xff]
                  %490 = vst [vmem:[%s450 + $0x98] sm:$0xff] %v489
                  %v491 = vld [vmem:[%s449 + $0x140] sm:$0xff]
                  %492 = vst [vmem:[%s450 + $0xa0] sm:$0xff] %v491
                  %v493 = vld [vmem:[%s449 + $0x150] sm:$0xff]
                  %494 = vst [vmem:[%s450 + $0xa8] sm:$0xff] %v493
                  %v495 = vld [vmem:[%s449 + $0x160] sm:$0xff]
                  %496 = vst [vmem:[%s450 + $0xb0] sm:$0xff] %v495
                  %v497 = vld [vmem:[%s449 + $0x170] sm:$0xff]
                  %498 = vst [vmem:[%s450 + $0xb8] sm:$0xff] %v497
                  %v499 = vld [vmem:[%s449 + $0x180] sm:$0xff]
                  %500 = vst [vmem:[%s450 + $0xc0] sm:$0xff] %v499
                  %v501 = vld [vmem:[%s449 + $0x190] sm:$0xff]
                  %502 = vst [vmem:[%s450 + $0xc8] sm:$0xff] %v501
                  %v503 = vld [vmem:[%s449 + $0x1a0] sm:$0xff]
                  %504 = vst [vmem:[%s450 + $0xd0] sm:$0xff] %v503
                  %v505 = vld [vmem:[%s449 + $0x1b0] sm:$0xff]
                  %506 = vst [vmem:[%s450 + $0xd8] sm:$0xff] %v505
                  %v507 = vld [vmem:[%s449 + $0x1c0] sm:$0xff]
                  %508 = vst [vmem:[%s450 + $0xe0] sm:$0xff] %v507
                  %v509 = vld [vmem:[%s449 + $0x1d0] sm:$0xff]
                  %510 = vst [vmem:[%s450 + $0xe8] sm:$0xff] %v509
                  %v511 = vld [vmem:[%s449 + $0x1e0] sm:$0xff]
                  %512 = vst [vmem:[%s450 + $0xf0] sm:$0xff] %v511
                  %v513 = vld [vmem:[%s449 + $0x1f0] sm:$0xff]
                  %514 = vst [vmem:[%s450 + $0xf8] sm:$0xff] %v513
                $region114: #{statistic_network_x2c1.5} parent=108 // loop_footer
                  %s448 = sadd.s32 1, %s444
                $region115: #{statistic_network_x2c1.5} parent=108 // loop_footer_branch
                  %443 = sbr.rel target = $region111
                $region116: #{statistic_network_x2c1.5} parent=108 // loop_exit
                  _
              $region109: #{statistic_network_x2c1.5} parent=93 // pred_fallthru
                _
              // Predicated region
              $region117: #{statistic_network_x2c1.5} parent=93 // pred_check
                _
              $region118: #{statistic_network_x2c1.5} parent=93 // pred_check_branch
                %516 = sbr.rel target = $region120
              $region119: #{statistic_network_x2c1.5} parent=93 // pred_region
                _
              $region120: #{statistic_network_x2c1.5} parent=93 // pred_fallthru
                _
            $region94: #{statistic_network_x2c1.5} parent=89 // pred_fallthru
              _
            // Predicated region
            $region95: #{statistic_network_x2c1.5} parent=89 // pred_check
              _
            $region96: #{statistic_network_x2c1.5} parent=89 // pred_check_branch
              %367 = sbr.rel target = $region98
            $region97: #{statistic_network_x2c1.5} parent=89 // pred_region
              loop: start=0, step=1, limit=1
              $region99: #{statistic_network_x2c1.5} parent=97 // loop_pre_header
                _
              $region100: #{statistic_network_x2c1.5} parent=97 // loop_header
                %s370 = sphi 0, %s374
                %p371 = scmp.ge.s32.totalorder %s370, 1
                %s375 = sphi %s361, %s361
                %s376 = sphi %s358, %s358
              $region101: #{statistic_network_x2c1.5} parent=97 // loop_header_branch
                %373 = sbr.rel (%p371) target = $region105
              $region102: #{statistic_network_x2c1.5} parent=97 // loop_body
                %v377 = vld [vmem:[%s375] sm:$0xff]
                %378 = vst [vmem:[%s376] sm:$0xff] %v377
                %v379 = vld [vmem:[%s375 + $0x10] sm:$0xff]
                %380 = vst [vmem:[%s376 + $0x8] sm:$0xff] %v379
                %v381 = vld [vmem:[%s375 + $0x20] sm:$0xff]
                %382 = vst [vmem:[%s376 + $0x10] sm:$0xff] %v381
                %v383 = vld [vmem:[%s375 + $0x30] sm:$0xff]
                %384 = vst [vmem:[%s376 + $0x18] sm:$0xff] %v383
                %v385 = vld [vmem:[%s375 + $0x40] sm:$0xff]
                %386 = vst [vmem:[%s376 + $0x20] sm:$0xff] %v385
                %v387 = vld [vmem:[%s375 + $0x50] sm:$0xff]
                %388 = vst [vmem:[%s376 + $0x28] sm:$0xff] %v387
                %v389 = vld [vmem:[%s375 + $0x60] sm:$0xff]
                %390 = vst [vmem:[%s376 + $0x30] sm:$0xff] %v389
                %v391 = vld [vmem:[%s375 + $0x70] sm:$0xff]
                %392 = vst [vmem:[%s376 + $0x38] sm:$0xff] %v391
                %v393 = vld [vmem:[%s375 + $0x80] sm:$0xff]
                %394 = vst [vmem:[%s376 + $0x40] sm:$0xff] %v393
                %v395 = vld [vmem:[%s375 + $0x90] sm:$0xff]
                %396 = vst [vmem:[%s376 + $0x48] sm:$0xff] %v395
                %v397 = vld [vmem:[%s375 + $0xa0] sm:$0xff]
                %398 = vst [vmem:[%s376 + $0x50] sm:$0xff] %v397
                %v399 = vld [vmem:[%s375 + $0xb0] sm:$0xff]
                %400 = vst [vmem:[%s376 + $0x58] sm:$0xff] %v399
                %v401 = vld [vmem:[%s375 + $0xc0] sm:$0xff]
                %402 = vst [vmem:[%s376 + $0x60] sm:$0xff] %v401
                %v403 = vld [vmem:[%s375 + $0xd0] sm:$0xff]
                %404 = vst [vmem:[%s376 + $0x68] sm:$0xff] %v403
                %v405 = vld [vmem:[%s375 + $0xe0] sm:$0xff]
                %406 = vst [vmem:[%s376 + $0x70] sm:$0xff] %v405
                %v407 = vld [vmem:[%s375 + $0xf0] sm:$0xff]
                %408 = vst [vmem:[%s376 + $0x78] sm:$0xff] %v407
                %v409 = vld [vmem:[%s375 + $0x100] sm:$0xff]
                %410 = vst [vmem:[%s376 + $0x80] sm:$0xff] %v409
                %v411 = vld [vmem:[%s375 + $0x110] sm:$0xff]
                %412 = vst [vmem:[%s376 + $0x88] sm:$0xff] %v411
                %v413 = vld [vmem:[%s375 + $0x120] sm:$0xff]
                %414 = vst [vmem:[%s376 + $0x90] sm:$0xff] %v413
                %v415 = vld [vmem:[%s375 + $0x130] sm:$0xff]
                %416 = vst [vmem:[%s376 + $0x98] sm:$0xff] %v415
                %v417 = vld [vmem:[%s375 + $0x140] sm:$0xff]
                %418 = vst [vmem:[%s376 + $0xa0] sm:$0xff] %v417
                %v419 = vld [vmem:[%s375 + $0x150] sm:$0xff]
                %420 = vst [vmem:[%s376 + $0xa8] sm:$0xff] %v419
                %v421 = vld [vmem:[%s375 + $0x160] sm:$0xff]
                %422 = vst [vmem:[%s376 + $0xb0] sm:$0xff] %v421
                %v423 = vld [vmem:[%s375 + $0x170] sm:$0xff]
                %424 = vst [vmem:[%s376 + $0xb8] sm:$0xff] %v423
                %v425 = vld [vmem:[%s375 + $0x180] sm:$0xff]
                %426 = vst [vmem:[%s376 + $0xc0] sm:$0xff] %v425
                %v427 = vld [vmem:[%s375 + $0x190] sm:$0xff]
                %428 = vst [vmem:[%s376 + $0xc8] sm:$0xff] %v427
                %v429 = vld [vmem:[%s375 + $0x1a0] sm:$0xff]
                %430 = vst [vmem:[%s376 + $0xd0] sm:$0xff] %v429
                %v431 = vld [vmem:[%s375 + $0x1b0] sm:$0xff]
                %432 = vst [vmem:[%s376 + $0xd8] sm:$0xff] %v431
                %v433 = vld [vmem:[%s375 + $0x1c0] sm:$0xff]
                %434 = vst [vmem:[%s376 + $0xe0] sm:$0xff] %v433
                %v435 = vld [vmem:[%s375 + $0x1d0] sm:$0xff]
                %436 = vst [vmem:[%s376 + $0xe8] sm:$0xff] %v435
                %v437 = vld [vmem:[%s375 + $0x1e0] sm:$0xff]
                %438 = vst [vmem:[%s376 + $0xf0] sm:$0xff] %v437
                %v439 = vld [vmem:[%s375 + $0x1f0] sm:$0xff]
                %440 = vst [vmem:[%s376 + $0xf8] sm:$0xff] %v439
              $region103: #{statistic_network_x2c1.5} parent=97 // loop_footer
                %s374 = sadd.s32 1, %s370
              $region104: #{statistic_network_x2c1.5} parent=97 // loop_footer_branch
                %369 = sbr.rel target = $region100
              $region105: #{statistic_network_x2c1.5} parent=97 // loop_exit
                _
            $region98: #{statistic_network_x2c1.5} parent=89 // pred_fallthru
              _
          $region90: #{statistic_network_x2c1.5} parent=85 // pred_fallthru
            _
          %517 = vnop
        $region86: #{statistic_network_x2c1.5} parent=43 // pred_fallthru
          _
      $region44: #{statistic_network_x2c1.5} parent=5 // pred_fallthru
        _
      %p518 = scmp.le.s32.totalorder 1, %s17
      %p519 = scmp.lt.s32.totalorder %s17, 3
      %p520 = pnand %p518, %p519
      %p521 = pneg %p520
      // Predicated region
      $region121: #{statistic_network_x2c1.5} parent=5 // pred_check
        _
      $region122: #{statistic_network_x2c1.5} parent=5 // pred_check_branch
        %523 = sbr.rel (%p520) target = $region124
      $region123: #{statistic_network_x2c1.5} parent=5 // pred_region
        %s524 = ssub.s32 %s17, 1
        %s525 = sand.u32 %s30, 1
        %s526 = sand.u32 %s30, 1
        %s527 = smul.addr %s526, 64
        %s528 = scalar_lea.vmem [#allocation3], %s527
        // Predicated region
        $region125: #{statistic_network_x2c1.5} parent=123 // pred_check
          %p529 = pneg %p43
        $region126: #{statistic_network_x2c1.5} parent=123 // pred_check_branch
          %531 = sbr.rel (%p529) target = $region128
        $region127: #{statistic_network_x2c1.5} parent=123 // pred_region
          _
        $region128: #{statistic_network_x2c1.5} parent=123 // pred_fallthru
          _
        %s532 = sand.u32 %s56, 1
        %s533 = sand.u32 %s56, 1
        %s534 = smul.addr %s533, 256
        %s535 = scalar_lea.vmem [#allocation4], %s534
        // Predicated region
        $region129: #{statistic_network_x2c1.5} parent=123 // pred_check
          %p536 = pneg %p69
        $region130: #{statistic_network_x2c1.5} parent=123 // pred_check_branch
          %538 = sbr.rel (%p536) target = $region132
        $region131: #{statistic_network_x2c1.5} parent=123 // pred_region
          _
        $region132: #{statistic_network_x2c1.5} parent=123 // pred_fallthru
          _
        %s539 = sand.u32 %s30, 1
        %s540 = sand.u32 %s30, 1
        %s541 = smul.addr %s540, 64
        %s542 = scalar_lea.vmem [#allocation3], %s541
        %p543 = pneg %p43
        %p544 = pneg %p40
        %s545 = sand.u32 %s56, 1
        %s546 = sand.u32 %s56, 1
        %s547 = smul.addr %s546, 256
        %s548 = scalar_lea.vmem [#allocation4], %s547
        %p549 = pneg %p69
        %p550 = pneg %p66
        %p551 = pneg %p90
        %p552 = pneg %p87
        %p553 = pneg %p111
        %p554 = pneg %p108
        %p555 = pneg %p132
        %p556 = pneg %p129
        %p557 = pneg %p153
        %p558 = pneg %p150
        %p559 = pneg %p174
        %p560 = pneg %p171
        %p561 = pneg %p195
        %p562 = pneg %p192
        %p563 = pneg %p216
        %p564 = pneg %p213
        %p565 = pneg %p242
        %p566 = pneg %p239
        %p567 = scmp.lt.s32.totalorder %s22, 1
        %s568 = scalar_select %p567, %s22, 1
        %s569 = scalar_lea.vmem %s9, %s568
        %s570 = smul.u32 2, %s22
        %s571 = smul.u32 2, %s22
        %p572 = scmp.lt.s32.totalorder %s22, 1
        %s573 = scalar_select %p572, %s22, 1
        %s574 = scalar_lea.vmem %s9, %s573
        %v576 = vld [vmem:[%s2] sm:$0xf]
        %v577 = vld [vmem:[%s528] sm:$0xff]
        %v578 = vld [vmem:[%s528 + $0x8] sm:$0xff]
        %v579 = vld [vmem:[%s528 + $0x10] sm:$0xff]
        %v580 = vld [vmem:[%s528 + $0x18] sm:$0xff]
        %v581 = vld [vmem:[%s528 + $0x20] sm:$0xff]
        %v582 = vld [vmem:[%s528 + $0x28] sm:$0xff]
        %v583 = vld [vmem:[%s528 + $0x30] sm:$0xff]
        %v584 = vld [vmem:[%s528 + $0x38] sm:$0xff]
        %v585 = vld [vmem:[%s3] sm:$0xff]
        %587 = vset.pattern.permute.xlu0 0
        %588 = vperm.xlu0 %587, %v585
        %v589 = vpop.permute.xlu0 %588
        %v599 = vunpack.c.l.b16 %v577
        %v600 = vunpack.c.h.b16 %v577
        %v601 = vunpack.c.l.b16 %v578
        %v602 = vunpack.c.h.b16 %v578
        %v603 = vunpack.c.l.b16 %v579
        %v604 = vunpack.c.h.b16 %v579
        %v605 = vunpack.c.l.b16 %v580
        %v606 = vunpack.c.h.b16 %v580
        %v607 = vunpack.c.l.b16 %v581
        %v608 = vunpack.c.h.b16 %v581
        %v609 = vunpack.c.l.b16 %v582
        %v610 = vunpack.c.h.b16 %v582
        %v611 = vunpack.c.l.b16 %v583
        %v612 = vunpack.c.h.b16 %v583
        %v613 = vunpack.c.l.b16 %v584
        %v614 = vunpack.c.h.b16 %v584
        %v615 = vpack.c.b16 %v601, %v599
        %v616 = vpack.c.b16 %v602, %v600
        %v617 = vpack.c.b16 %v605, %v603
        %v618 = vpack.c.b16 %v606, %v604
        %v619 = vpack.c.b16 %v609, %v607
        %v620 = vpack.c.b16 %v610, %v608
        %v621 = vpack.c.b16 %v613, %v611
        %v622 = vpack.c.b16 %v614, %v612
        %vm631 = vcmask 523264
        %v633 = vsel %vm631, %v576, 0
        %635 = vmatprep.subr.bf16.mxu0 %v616
        %636 = vmatpush1.bf16.msra.mxu0 %v615
        %637 = vmatprep.subr.bf16.mxu0 %v618
        %638 = vmatpush1.bf16.msra.mxu0 %v617
        %639 = vmatprep.subr.bf16.mxu0 %v620
        %640 = vmatpush1.bf16.msra.mxu0 %v619
        %641 = vmatprep.subr.bf16.mxu0 %v622
        %642 = vmatpush1.bf16.msra.mxu0 %v621
        %643 = vmatprep.subr.bf16.mxu0 0
        %644 = vmatpush1.bf16.msra.mxu0 0
        %645 = vmatprep.subr.bf16.mxu0 0
        %646 = vmatpush1.bf16.msra.mxu0 0
        %647 = vmatprep.subr.bf16.mxu0 0
        %648 = vmatpush1.bf16.msra.mxu0 0
        %649 = vmatprep.subr.bf16.mxu0 0
        %650 = vmatpush1.bf16.msra.mxu0 0
        %651 = vmatprep.subr.bf16.mxu0 0
        %652 = vmatpush1.bf16.msra.mxu0 0
        %653 = vmatprep.subr.bf16.mxu0 0
        %654 = vmatpush1.bf16.msra.mxu0 0
        %655 = vmatprep.subr.bf16.mxu0 0
        %656 = vmatpush1.bf16.msra.mxu0 0
        %657 = vmatprep.subr.bf16.mxu0 0
        %658 = vmatpush1.bf16.msra.mxu0 0
        %659 = vmatprep.subr.bf16.mxu0 0
        %660 = vmatpush1.bf16.msra.mxu0 0
        %661 = vmatprep.subr.bf16.mxu0 0
        %662 = vmatpush1.bf16.msra.mxu0 0
        %663 = vmatprep.subr.bf16.mxu0 0
        %664 = vmatpush1.bf16.msra.mxu0 0
        %665 = vmatprep.subr.bf16.mxu0 0
        %666 = vmatpush1.bf16.msra.mxu0 0
        %667 = vmatprep.mubr.bf16.mxu0 0
        %668 = vmatmul.mubr.bf16.gmra.mrb[0].mxu0 %v633
        %v669 = vpop.f32.mrb[0].mxu0
        %v670 = vadd.f32 %v589, %v669
        %v671 = vpop.f32.mrb[0].mxu0
        %v672 = vadd.f32 %v589, %v671
        %v673 = vpop.f32.mrb[0].mxu0
        %v674 = vpop.f32.mrb[0].mxu0
        %675 = vdwg.mxu0
        %v676 = vld [vmem:[%s4] sm:$0xff]
        %v677 = vld [vmem:[%s4 + $0x8] sm:$0xff]
        %v678 = vld [vmem:[%s4 + $0x10] sm:$0xff]
        %v679 = vld [vmem:[%s4 + $0x18] sm:$0xff]
        %v680 = vld [vmem:[%s535] sm:$0xff]
        %v681 = vld [vmem:[%s535 + $0x8] sm:$0xff]
        %v682 = vld [vmem:[%s535 + $0x10] sm:$0xff]
        %v683 = vld [vmem:[%s535 + $0x18] sm:$0xff]
        %v684 = vld [vmem:[%s535 + $0x20] sm:$0xff]
        %v685 = vld [vmem:[%s535 + $0x28] sm:$0xff]
        %v686 = vld [vmem:[%s535 + $0x30] sm:$0xff]
        %v687 = vld [vmem:[%s535 + $0x38] sm:$0xff]
        %v688 = vld [vmem:[%s535 + $0x40] sm:$0xff]
        %v689 = vld [vmem:[%s535 + $0x48] sm:$0xff]
        %v690 = vld [vmem:[%s535 + $0x50] sm:$0xff]
        %v691 = vld [vmem:[%s535 + $0x58] sm:$0xff]
        %v692 = vld [vmem:[%s535 + $0x60] sm:$0xff]
        %v693 = vld [vmem:[%s535 + $0x68] sm:$0xff]
        %v694 = vld [vmem:[%s535 + $0x70] sm:$0xff]
        %v695 = vld [vmem:[%s535 + $0x78] sm:$0xff]
        %v696 = vld [vmem:[%s535 + $0x80] sm:$0xff]
        %v697 = vld [vmem:[%s535 + $0x88] sm:$0xff]
        %v698 = vld [vmem:[%s535 + $0x90] sm:$0xff]
        %v699 = vld [vmem:[%s535 + $0x98] sm:$0xff]
        %v700 = vld [vmem:[%s535 + $0xa0] sm:$0xff]
        %v701 = vld [vmem:[%s535 + $0xa8] sm:$0xff]
        %v702 = vld [vmem:[%s535 + $0xb0] sm:$0xff]
        %v703 = vld [vmem:[%s535 + $0xb8] sm:$0xff]
        %v704 = vld [vmem:[%s535 + $0xc0] sm:$0xff]
        %v705 = vld [vmem:[%s535 + $0xc8] sm:$0xff]
        %v706 = vld [vmem:[%s535 + $0xd0] sm:$0xff]
        %v707 = vld [vmem:[%s535 + $0xd8] sm:$0xff]
        %v708 = vld [vmem:[%s535 + $0xe0] sm:$0xff]
        %v709 = vld [vmem:[%s535 + $0xe8] sm:$0xff]
        %v710 = vld [vmem:[%s535 + $0xf0] sm:$0xff]
        %v711 = vld [vmem:[%s535 + $0xf8] sm:$0xff]
        %v712 = vld [vmem:[%s5] sm:$0xff]
        %v713 = vld [vmem:[%s5 + $0x8] sm:$0xff]
        %v714 = vld [vmem:[%s5 + $0x10] sm:$0xff]
        %v715 = vld [vmem:[%s5 + $0x18] sm:$0xff]
        %717 = vset.pattern.permute.xlu0 0
        %718 = vperm.xlu0 %717, %v712
        %v719 = vpop.permute.xlu0 %718
        %722 = vset.pattern.permute.xlu0 0
        %723 = vperm.xlu0 %722, %v713
        %v724 = vpop.permute.xlu0 %723
        %727 = vset.pattern.permute.xlu0 0
        %728 = vperm.xlu0 %727, %v714
        %v729 = vpop.permute.xlu0 %728
        %732 = vset.pattern.permute.xlu0 0
        %733 = vperm.xlu0 %732, %v715
        %v734 = vpop.permute.xlu0 %733
        %v740 = vunpack.c.l.b16 %v676
        %v741 = vunpack.c.h.b16 %v676
        %v742 = vunpack.c.l.b16 %v677
        %v743 = vunpack.c.h.b16 %v677
        %v744 = vunpack.c.l.b16 %v678
        %v745 = vunpack.c.h.b16 %v678
        %v746 = vunpack.c.l.b16 %v679
        %v747 = vunpack.c.h.b16 %v679
        %v748 = vpack.c.b16 %v742, %v740
        %v749 = vpack.c.b16 %v743, %v741
        %v750 = vpack.c.b16 %v746, %v744
        %v751 = vpack.c.b16 %v747, %v745
        %v788 = vunpack.c.l.b16 %v680
        %v789 = vunpack.c.h.b16 %v680
        %v790 = vunpack.c.l.b16 %v681
        %v791 = vunpack.c.h.b16 %v681
        %v792 = vunpack.c.l.b16 %v682
        %v793 = vunpack.c.h.b16 %v682
        %v794 = vunpack.c.l.b16 %v683
        %v795 = vunpack.c.h.b16 %v683
        %v796 = vunpack.c.l.b16 %v684
        %v797 = vunpack.c.h.b16 %v684
        %v798 = vunpack.c.l.b16 %v685
        %v799 = vunpack.c.h.b16 %v685
        %v800 = vunpack.c.l.b16 %v686
        %v801 = vunpack.c.h.b16 %v686
        %v802 = vunpack.c.l.b16 %v687
        %v803 = vunpack.c.h.b16 %v687
        %v804 = vunpack.c.l.b16 %v688
        %v805 = vunpack.c.h.b16 %v688
        %v806 = vunpack.c.l.b16 %v689
        %v807 = vunpack.c.h.b16 %v689
        %v808 = vunpack.c.l.b16 %v690
        %v809 = vunpack.c.h.b16 %v690
        %v810 = vunpack.c.l.b16 %v691
        %v811 = vunpack.c.h.b16 %v691
        %v812 = vunpack.c.l.b16 %v692
        %v813 = vunpack.c.h.b16 %v692
        %v814 = vunpack.c.l.b16 %v693
        %v815 = vunpack.c.h.b16 %v693
        %v816 = vunpack.c.l.b16 %v694
        %v817 = vunpack.c.h.b16 %v694
        %v818 = vunpack.c.l.b16 %v695
        %v819 = vunpack.c.h.b16 %v695
        %v820 = vunpack.c.l.b16 %v696
        %v821 = vunpack.c.h.b16 %v696
        %v822 = vunpack.c.l.b16 %v697
        %v823 = vunpack.c.h.b16 %v697
        %v824 = vunpack.c.l.b16 %v698
        %v825 = vunpack.c.h.b16 %v698
        %v826 = vunpack.c.l.b16 %v699
        %v827 = vunpack.c.h.b16 %v699
        %v828 = vunpack.c.l.b16 %v700
        %v829 = vunpack.c.h.b16 %v700
        %v830 = vunpack.c.l.b16 %v701
        %v831 = vunpack.c.h.b16 %v701
        %v832 = vunpack.c.l.b16 %v702
        %v833 = vunpack.c.h.b16 %v702
        %v834 = vunpack.c.l.b16 %v703
        %v835 = vunpack.c.h.b16 %v703
        %v836 = vunpack.c.l.b16 %v704
        %v837 = vunpack.c.h.b16 %v704
        %v838 = vunpack.c.l.b16 %v705
        %v839 = vunpack.c.h.b16 %v705
        %v840 = vunpack.c.l.b16 %v706
        %v841 = vunpack.c.h.b16 %v706
        %v842 = vunpack.c.l.b16 %v707
        %v843 = vunpack.c.h.b16 %v707
        %v844 = vunpack.c.l.b16 %v708
        %v845 = vunpack.c.h.b16 %v708
        %v846 = vunpack.c.l.b16 %v709
        %v847 = vunpack.c.h.b16 %v709
        %v848 = vunpack.c.l.b16 %v710
        %v849 = vunpack.c.h.b16 %v710
        %v850 = vunpack.c.l.b16 %v711
        %v851 = vunpack.c.h.b16 %v711
        %v852 = vpack.c.b16 %v790, %v788
        %v853 = vpack.c.b16 %v791, %v789
        %v854 = vpack.c.b16 %v794, %v792
        %v855 = vpack.c.b16 %v795, %v793
        %v856 = vpack.c.b16 %v798, %v796
        %v857 = vpack.c.b16 %v799, %v797
        %v858 = vpack.c.b16 %v802, %v800
        %v859 = vpack.c.b16 %v803, %v801
        %v860 = vpack.c.b16 %v806, %v804
        %v861 = vpack.c.b16 %v807, %v805
        %v862 = vpack.c.b16 %v810, %v808
        %v863 = vpack.c.b16 %v811, %v809
        %v864 = vpack.c.b16 %v814, %v812
        %v865 = vpack.c.b16 %v815, %v813
        %v866 = vpack.c.b16 %v818, %v816
        %v867 = vpack.c.b16 %v819, %v817
        %v868 = vpack.c.b16 %v822, %v820
        %v869 = vpack.c.b16 %v823, %v821
        %v870 = vpack.c.b16 %v826, %v824
        %v871 = vpack.c.b16 %v827, %v825
        %v872 = vpack.c.b16 %v830, %v828
        %v873 = vpack.c.b16 %v831, %v829
        %v874 = vpack.c.b16 %v834, %v832
        %v875 = vpack.c.b16 %v835, %v833
        %v876 = vpack.c.b16 %v838, %v836
        %v877 = vpack.c.b16 %v839, %v837
        %v878 = vpack.c.b16 %v842, %v840
        %v879 = vpack.c.b16 %v843, %v841
        %v880 = vpack.c.b16 %v846, %v844
        %v881 = vpack.c.b16 %v847, %v845
        %v882 = vpack.c.b16 %v850, %v848
        %v883 = vpack.c.b16 %v851, %v849
        %916 = vmatprep.subr.bf16.mxu0 %v853
        %917 = vmatpush1.bf16.msra.mxu0 %v852
        %918 = vmatprep.subr.bf16.mxu0 %v855
        %919 = vmatpush1.bf16.msra.mxu0 %v854
        %920 = vmatprep.subr.bf16.mxu0 %v857
        %921 = vmatpush1.bf16.msra.mxu0 %v856
        %922 = vmatprep.subr.bf16.mxu0 %v859
        %923 = vmatpush1.bf16.msra.mxu0 %v858
        %924 = vmatprep.subr.bf16.mxu0 %v861
        %925 = vmatpush1.bf16.msra.mxu0 %v860
        %926 = vmatprep.subr.bf16.mxu0 %v863
        %927 = vmatpush1.bf16.msra.mxu0 %v862
        %928 = vmatprep.subr.bf16.mxu0 %v865
        %929 = vmatpush1.bf16.msra.mxu0 %v864
        %930 = vmatprep.subr.bf16.mxu0 %v867
        %931 = vmatpush1.bf16.msra.mxu0 %v866
        %932 = vmatprep.subr.bf16.mxu0 %v869
        %933 = vmatpush1.bf16.msra.mxu0 %v868
        %934 = vmatprep.subr.bf16.mxu0 %v871
        %935 = vmatpush1.bf16.msra.mxu0 %v870
        %936 = vmatprep.subr.bf16.mxu0 %v873
        %937 = vmatpush1.bf16.msra.mxu0 %v872
        %938 = vmatprep.subr.bf16.mxu0 %v875
        %939 = vmatpush1.bf16.msra.mxu0 %v874
        %940 = vmatprep.subr.bf16.mxu0 %v877
        %941 = vmatpush1.bf16.msra.mxu0 %v876
        %942 = vmatprep.subr.bf16.mxu0 %v879
        %943 = vmatpush1.bf16.msra.mxu0 %v878
        %944 = vmatprep.subr.bf16.mxu0 %v881
        %945 = vmatpush1.bf16.msra.mxu0 %v880
        %946 = vmatprep.subr.bf16.mxu0 %v883
        %947 = vmatpush1.bf16.msra.mxu0 %v882
        %948 = vmatprep.mubr.bf16.mxu0 %v749
        %949 = vmatmul.mubr.bf16.gmra.mrb[0].mxu0 %v748
        %v950 = vpop.f32.mrb[0].mxu0
        %v951 = vadd.f32 %v719, %v950
        %v952 = vpop.f32.mrb[0].mxu0
        %v953 = vadd.f32 %v719, %v952
        %v954 = vpop.f32.mrb[0].mxu0
        %v955 = vadd.f32 %v724, %v954
        %v956 = vpop.f32.mrb[0].mxu0
        %v957 = vadd.f32 %v724, %v956
        %958 = vmatprep.mubr.bf16.mxu0 %v751
        %959 = vmatmul.mubr.bf16.gmra.mrb[0].mxu0 %v750
        %v960 = vpop.f32.mrb[0].mxu0
        %v961 = vadd.f32 %v729, %v960
        %v962 = vpop.f32.mrb[0].mxu0
        %v963 = vadd.f32 %v729, %v962
        %v964 = vpop.f32.mrb[0].mxu0
        %v965 = vadd.f32 %v734, %v964
        %v966 = vpop.f32.mrb[0].mxu0
        %v967 = vadd.f32 %v734, %v966
        %968 = vdwg.mxu0
        %v969 = vld [vmem:[%s6] sm:$0xff]
        %v970 = vld [vmem:[%s6 + $0x8] sm:$0xff]
        %v971 = vmul.f32 %v969, %v670
        %v972 = vmul.f32 %v970, %v672
        %v973 = vadd.f32 %v971, %v972
        %974 = vadd.xlane.f32.xlu0 %v973
        %v975 = vpop.xlane.xlu0 %974
        %v976 = vld [vmem:[%s7] sm:$0xff]
        %v977 = vld [vmem:[%s7 + $0x8] sm:$0xff]
        %v978 = vld [vmem:[%s7 + $0x10] sm:$0xff]
        %v979 = vld [vmem:[%s7 + $0x18] sm:$0xff]
        %v980 = vld [vmem:[%s7 + $0x20] sm:$0xff]
        %v981 = vld [vmem:[%s7 + $0x28] sm:$0xff]
        %v982 = vld [vmem:[%s7 + $0x30] sm:$0xff]
        %v983 = vld [vmem:[%s7 + $0x38] sm:$0xff]
        %v984 = vmul.f32 %v976, %v951
        %v985 = vmul.f32 %v977, %v953
        %v986 = vmul.f32 %v978, %v955
        %v987 = vmul.f32 %v979, %v957
        %v988 = vmul.f32 %v980, %v961
        %v989 = vmul.f32 %v981, %v963
        %v990 = vmul.f32 %v982, %v965
        %v991 = vmul.f32 %v983, %v967
        %v992 = vadd.f32 %v984, %v985
        %993 = vadd.xlane.f32.xlu0 %v992
        %v994 = vpop.xlane.xlu0 %993
        %v995 = vadd.f32 %v986, %v987
        %996 = vadd.xlane.f32.xlu0 %v995
        %v997 = vpop.xlane.xlu0 %996
        %v998 = vadd.f32 %v988, %v989
        %999 = vadd.xlane.f32.xlu0 %v998
        %v1000 = vpop.xlane.xlu0 %999
        %v1001 = vadd.f32 %v990, %v991
        %1002 = vadd.xlane.f32.xlu0 %v1001
        %v1003 = vpop.xlane.xlu0 %1002
        %v1004 = vrot.slane %v975, 4
        %v1005 = vadd.f32 %v975, %v1004
        %v1006 = vrot.slane %v1005, 2
        %v1007 = vadd.f32 %v1005, %v1006
        %v1008 = vrot.slane %v1007, 1
        %v1009 = vadd.f32 %v1007, %v1008
        %v1010 = vadd.f32 %v994, %v997
        %v1011 = vadd.f32 %v1010, %v1000
        %v1012 = vadd.f32 %v1011, %v1003
        %v1013 = vrot.slane %v1012, 4
        %v1014 = vadd.f32 %v1012, %v1013
        %v1015 = vrot.slane %v1014, 2
        %v1016 = vadd.f32 %v1014, %v1015
        %v1017 = vrot.slane %v1016, 1
        %v1018 = vadd.f32 %v1016, %v1017
        %v1019 = vadd.f32 %v1009, %v1018
        %v1020 = vld [vmem:[#allocation2] sm:$0x1]
        %v1021 = vadd.f32 %v1019, %v1020
        %vm1022 = vcmask 0
        %1023 = vst.msk [vmem:[%s574] sm:$0x1] %vm1022, %v1021
        %p1024 = scmp.lt.s32.totalorder %s22, 1
        %s1025 = scalar_select %p1024, %s22, 1
        %s1026 = scalar_lea.vmem %s9, %s1025
        // Predicated region
        $region133: #{statistic_network_x2c1.5} parent=123 // pred_check
          %p1027 = pneg %p239
        $region134: #{statistic_network_x2c1.5} parent=123 // pred_check_branch
          %1029 = sbr.rel (%p1027) target = $region136
        $region135: #{statistic_network_x2c1.5} parent=123 // pred_region
          _
        $region136: #{statistic_network_x2c1.5} parent=123 // pred_fallthru
          _
      $region124: #{statistic_network_x2c1.5} parent=5 // pred_fallthru
        _
      %p1030 = scmp.le.s32.totalorder 2, %s17
      // Predicated region
      $region137: #{statistic_network_x2c1.5} parent=5 // pred_check
        %p1031 = pneg %p1030
      $region138: #{statistic_network_x2c1.5} parent=5 // pred_check_branch
        %1033 = sbr.rel (%p1031) target = $region140
      $region139: #{statistic_network_x2c1.5} parent=5 // pred_region
        %s1034 = ssub.s32 %s17, 2
        // Predicated region
        $region141: #{statistic_network_x2c1.5} parent=139 // pred_check
          %p1035 = pneg %p245
        $region142: #{statistic_network_x2c1.5} parent=139 // pred_check_branch
          %1037 = sbr.rel (%p1035) target = $region144
        $region143: #{statistic_network_x2c1.5} parent=139 // pred_region
          %p1038 = scmp.lt.s32.totalorder %s23, 1
          %s1039 = scalar_select %p1038, %s23, 1
          %s1040 = scalar_lea.vmem %s9, %s1039
        $region144: #{statistic_network_x2c1.5} parent=139 // pred_fallthru
          _
      $region140: #{statistic_network_x2c1.5} parent=5 // pred_fallthru
        _
    $region6: #{statistic_network_x2c1.5} parent=1 // loop_footer
      %s21 = sadd.s32 1, %s17
    $region7: #{statistic_network_x2c1.5} parent=1 // loop_footer_branch
      %16 = sbr.rel target = $region3
    $region8: #{statistic_network_x2c1.5} parent=1 // loop_exit
      _

</llo_original>
